<compile_context>
chip_gen: v7x
topology: tpu7x:2x2x1
jax: 0.10.0
libtpu: 0.0.40
codegen_flags: <defaults>
</compile_context>

<pallas_src>
import math

import jax
import jax.numpy as jnp
from jax.experimental import pallas as pl
from jax.experimental.pallas import tpu as pltpu


# ----------------------------------------------------------------------------
# small helpers
# ----------------------------------------------------------------------------
def _round_up(x, m):
    return (x + m - 1) // m * m


def _max_lane_tile_for_budget(bytes_per_lane, vmem_budget_bytes=8 << 20,
                              hard_cap=16384):
    """Largest 128-multiple lane tile whose per-grid-step VMEM footprint stays
    under `vmem_budget_bytes` (comfortably below the default scoped-VMEM limit
    on v5e (16 MiB) / v6e / v7x (32 MiB)), hard-capped at 16384 lanes."""
    t = int(vmem_budget_bytes // max(int(bytes_per_lane), 1))
    t = (t // 128) * 128
    return max(128, min(t, hard_cap))


def _pick_lane_tile(m_pad, max_tile, min_steps=2):
    """Largest 128-multiple divisor of m_pad (<= max_tile) giving at least
    `min_steps` grid steps along the lane axis (keeps DMA/compute pipelining
    and v7x megacore sharding alive).  Tiny levels fall back to a single
    full-extent — but still 128-multiple, unmasked-store — block; the batch
    grid axis still provides parallel steps there."""
    assert m_pad % 128 == 0
    cap = min(max_tile, m_pad)
    for t in range(cap - cap % 128, 127, -128):
        if m_pad % t == 0 and m_pad // t >= min_steps:
            return t
    return min(m_pad, cap)


def _avg_pool3d_by2(x):
    """Average pool NCDHW by 2 in each spatial dim (plain-JAX glue; XLA fuses
    the reshape+mean into a single pass over x).  Pooling by 2 repeatedly is
    exactly pooling by 2**i once.
    # TODO(synk): fuse this 2x2x2 pool into the level-(i-1) fused Pallas kernel
    # as a second output to drop the extra (c_in-channel) HBM pass per level.
    """
    n, c, d, h, w = x.shape
    x = x.reshape(n, c, d // 2, 2, h // 2, 2, w // 2, 2)
    return x.mean(axis=(3, 5, 7))


# ----------------------------------------------------------------------------
# Pallas kernel 1: fused  (1x1x1 enc conv + ReLU)  ->  (1x1x1 input_proj conv)
# Channels-first: x tile is (C_in, TM), output tile is (C_hid, TM).
# The enc intermediate stays in vregs/VMEM and is never written to HBM.
# ----------------------------------------------------------------------------
def _fused_enc_proj_kernel(x_ref, we_ref, be_ref, wp_ref, bp_ref, o_ref):
    # x : (C_in, TM)        we: (C_enc, C_in)   be: (C_enc, 1)
    # wp: (C_hid, C_enc)    bp: (C_hid, 1)      o : (C_hid, TM)
    enc = jnp.dot(we_ref[...], x_ref[...], preferred_element_type=jnp.float32)
    enc = jnp.maximum(enc + be_ref[...], 0.0)
    out = jnp.dot(wp_ref[...], enc, preferred_element_type=jnp.float32)
    o_ref[...] = (out + bp_ref[...]).astype(o_ref.dtype)


def fused_enc_proj(x_ncdhw, w_enc_t, b_enc, w_proj_t, b_proj,
                   out_dtype=jnp.bfloat16):
    """relu(conv1x1x1_enc(x)) followed by conv1x1x1_proj, in one pallas_call.

    x_ncdhw : (N, C_in, D, H, W)
    w_enc_t : (C_enc, C_in)     b_enc  : (C_enc,)
    w_proj_t: (C_hid, C_enc)    b_proj : (C_hid,)
    returns : (N, C_hid, D, H, W) in `out_dtype`
    """
    n, c_in, d, h, w = x_ncdhw.shape
    m = d * h * w
    m_pad = _round_up(m, 128)                       # lane-dense, unmasked stores
    c_enc = w_enc_t.shape[0]
    c_hid = w_proj_t.shape[0]
    out_bytes = jnp.dtype(out_dtype).itemsize

    x_flat = x_ncdhw.reshape(n, c_in, m)            # pure view, no transpose
    if m_pad != m:
        x_flat = jnp.pad(x_flat, ((0, 0), (0, 0), (0, m_pad - m)))

    # Per-lane VMEM bytes: double-buffered input + double-buffered output
    # + f32 enc intermediate + f32 pre-cast output temp.
    bytes_per_lane = 2 * c_in * 4 + 2 * c_hid * out_bytes + c_enc * 4 + c_hid * 4
    tm = _pick_lane_tile(m_pad, _max_lane_tile_for_budget(bytes_per_lane),
                         min_steps=2)

    # TODO(synk): if xprof shows exposed input DMA on v7x, add
    # pipeline_mode=pl.Buffered(3) on the x BlockSpec only (input is tiny).
    out = pl.pallas_call(
        _fused_enc_proj_kernel,
        out_shape=jax.ShapeDtypeStruct((n, c_hid, m_pad), out_dtype),
        grid=(n, m_pad // tm),
        in_specs=[
            pl.BlockSpec((None, c_in, tm), lambda b, i: (b, 0, i)),
            pl.BlockSpec((c_enc, c_in), lambda b, i: (0, 0)),
            pl.BlockSpec((c_enc, 1), lambda b, i: (0, 0)),
            pl.BlockSpec((c_hid, c_enc), lambda b, i: (0, 0)),
            pl.BlockSpec((c_hid, 1), lambda b, i: (0, 0)),
        ],
        out_specs=pl.BlockSpec((None, c_hid, tm), lambda b, i: (b, 0, i)),
        compiler_params=pltpu.CompilerParams(
            dimension_semantics=("parallel", "parallel")),
    )(x_flat, w_enc_t, b_enc.reshape(c_enc, 1), w_proj_t, b_proj.reshape(c_hid, 1))

    if m_pad != m:
        out = out[:, :, :m]
    return out.reshape(n, c_hid, d, h, w)


# ----------------------------------------------------------------------------
# Pallas kernel 2: 3D sinusoidal positional embedding, channels-first (C, M).
# Coordinates are precomputed on the wrapper (exact, no in-kernel int/float
# division); the kernel does the (1/dim_t) outer product + sin.  Computed once
# per level shape at model init and cached.
# ----------------------------------------------------------------------------
def _sin_pos_emb_kernel(coord_ref, inv_ref, o_ref):
    # coord: (3, TM) normalized coords * 2*pi      inv: (npf_pad, 1) = 1/dim_t
    # o    : (3*npf_pad, TM)
    npf_pad = inv_ref.shape[0]
    inv = inv_ref[...]
    parity = jax.lax.broadcasted_iota(jnp.int32, (npf_pad, 1), 0) & 1
    phase = parity.astype(jnp.float32) * (0.5 * math.pi)    # cos(a) = sin(a+pi/2)
    for a in range(3):                                      # z, y, x axis blocks
        angle = coord_ref[a:a + 1, :] * inv + phase         # (npf_pad, TM)
        o_ref[a * npf_pad:(a + 1) * npf_pad, :] = jnp.sin(angle)


def sinusoidal_pos_emb_volume(d, h, w, num_pos_feats, temperature=10000.0):
    """Returns (1, 3*num_pos_feats, D, H, W) sinusoidal positional embedding.

    # TODO(synk): confirm the exact normalization / sin-cos channel ordering of
    # the reference get_3d_sinusoidal_pos_emb (DETR variants differ); this uses
    # coord/(dim-1)*2*pi with even->sin / odd->cos interleaving per axis (z,y,x).
    """
    m = d * h * w
    m_pad = _round_up(m, 128)
    npf = num_pos_feats
    npf_pad = _round_up(npf, 8)             # 8-aligned sublane slices in-kernel
    c_pos_pad = 3 * npf_pad

    # normalized voxel coordinates * 2*pi, channels-first (3, M): exact, cheap,
    # init-time only (cached), so no in-kernel index decomposition is needed.
    two_pi = 2.0 * math.pi
    zi = jnp.arange(d, dtype=jnp.float32) * (two_pi / max(d - 1, 1))
    yi = jnp.arange(h, dtype=jnp.float32) * (two_pi / max(h - 1, 1))
    xi = jnp.arange(w, dtype=jnp.float32) * (two_pi / max(w - 1, 1))
    coords = jnp.stack([
        jnp.broadcast_to(zi[:, None, None], (d, h, w)),
        jnp.broadcast_to(yi[None, :, None], (d, h, w)),
        jnp.broadcast_to(xi[None, None, :], (d, h, w)),
    ], axis=0).reshape(3, m)
    if m_pad != m:
        coords = jnp.pad(coords, ((0, 0), (0, m_pad - m)))

    idx = jnp.arange(npf, dtype=jnp.float32)
    dim_t = temperature ** (2.0 * jnp.floor(idx / 2.0) / npf)
    inv = 1.0 / dim_t
    if npf_pad != npf:
        inv = jnp.concatenate([inv, jnp.zeros((npf_pad - npf,), jnp.float32)])
    inv_dim_t = inv.reshape(npf_pad, 1)

    bytes_per_lane = 2 * 3 * 4 + 2 * c_pos_pad * 4 + c_pos_pad * 4
    tm = _pick_lane_tile(
        m_pad, _max_lane_tile_for_budget(bytes_per_lane, hard_cap=8192),
        min_steps=2)

    emb = pl.pallas_call(
        _sin_pos_emb_kernel,
        out_shape=jax.ShapeDtypeStruct((c_pos_pad, m_pad), jnp.float32),
        grid=(m_pad // tm,),
        in_specs=[
            pl.BlockSpec((3, tm), lambda i: (0, i)),
            pl.BlockSpec((npf_pad, 1), lambda i: (0, 0)),
        ],
        out_specs=pl.BlockSpec((c_pos_pad, tm), lambda i: (0, i)),
        compiler_params=pltpu.CompilerParams(dimension_semantics=("parallel",)),
    )(coords, inv_dim_t)

    if npf_pad != npf:      # drop the per-axis sublane padding (init-time only)
        emb = jnp.concatenate(
            [emb[a * npf_pad:a * npf_pad + npf] for a in range(3)], axis=0)
    if m_pad != m:
        emb = emb[:, :m]
    # channels already leading and M is z-major -> pure reshape, no transpose
    return emb.reshape(1, 3 * npf, d, h, w)


# ----------------------------------------------------------------------------
# Backbone
# ----------------------------------------------------------------------------
class _NS:
    def __init__(self, **kw):
        self.__dict__.update(kw)


class BaseBackbonePallas:
    """JAX/Pallas equivalent of Base_Backbone.forward."""

    def __init__(self, cfg, key, feature_dtype=jnp.bfloat16):
        self.cfg = cfg
        self.src_patch_size = cfg.DATA.PATCH_SIZE
        self.output_hidden_dim = cfg.MODEL.HIDDEN_DIM
        self.num_levels = cfg.MODEL.NUM_FEATURE_LEVELS
        # bf16 feature writeback halves the dominant HBM store traffic of the
        # fused kernel; pass feature_dtype=jnp.float32 for exact f32 semantics.
        self.feature_dtype = feature_dtype
        in_ch = cfg.DATA.IN_CHANNELS
        enc_channels = cfg.MODEL.ENC_CHANNELS

        keys = jax.random.split(key, 2 * self.num_levels)
        self.enc_params = []          # (C_enc, C_in) weights, (C_enc,) bias
        self.input_proj_params = []   # (C_hid, C_enc) weights, (C_hid,) bias
        for i in range(self.num_levels):
            c = enc_channels[i]
            w_enc = jax.random.normal(keys[2 * i], (c, in_ch), jnp.float32) / jnp.sqrt(in_ch)
            b_enc = jnp.zeros((c,), jnp.float32)
            w_proj = (jax.random.normal(keys[2 * i + 1], (self.output_hidden_dim, c),
                                        jnp.float32) / jnp.sqrt(c))
            b_proj = jnp.zeros((self.output_hidden_dim,), jnp.float32)
            self.enc_params.append((w_enc, b_enc))
            self.input_proj_params.append((w_proj, b_proj))

        # Positional embeddings are input-independent: build them ONCE here and
        # keep them in a persistent cache, so the steady-state forward path
        # never re-runs the pos-emb pallas_call chain.
        self._pos_cache = {}
        num_pos_feats = self.output_hidden_dim // 3
        shape = tuple(int(s) for s in self.src_patch_size)
        for _ in range(self.num_levels):
            self._pos_cache[shape] = sinusoidal_pos_emb_volume(
                *shape, num_pos_feats=num_pos_feats)
            shape = tuple(s // 2 for s in shape)

    # concrete stand-in for the abstract UNET encoder, fused with input_proj:
    # level i = hierarchical avg-pool by 2, then (pointwise conv + ReLU) and the
    # per-level input_proj 1x1x1 conv inside one Pallas kernel.
    def encode_and_project(self, x):
        feats, shapes = [], []
        xi = x
        for i in range(self.num_levels):
            if i > 0:
                xi = _avg_pool3d_by2(xi)
            (we, be) = self.enc_params[i]
            (wp, bp) = self.input_proj_params[i]
            feats.append(fused_enc_proj(xi, we, be, wp, bp,
                                        out_dtype=self.feature_dtype))
            shapes.append(tuple(int(s) for s in xi.shape[-3:]))
        return feats, shapes

    def get_positional_embeddings(self, feat_shapes, vessel_dists=None):
        if vessel_dists is not None:
            # TODO(synk): vessel_dists branch (trilinear upsample + vessel
            # distance channel, num_pos_feats = hidden//4) not implemented.
            raise NotImplementedError("vessel_dists positional embedding")
        num_pos_feats = self.output_hidden_dim // 3
        pos_embs = []
        for s in feat_shapes:
            if s not in self._pos_cache:            # persistent, input-independent
                self._pos_cache[s] = sinusoidal_pos_emb_volume(
                    *s, num_pos_feats=num_pos_feats)
            pos_embs.append(self._pos_cache[s])
        return pos_embs

    def forward(self, x, vessel_dists=None):
        """x: (N, C, D, H, W) -> (multiscale_feats, multiscale_pos_embs)."""
        multiscale_feats, shapes = self.encode_and_project(x)
        multiscale_pos_embs = self.get_positional_embeddings(shapes, vessel_dists)
        return (multiscale_feats, multiscale_pos_embs)


# ----------------------------------------------------------------------------
if __name__ == "__main__":
    cfg = _NS(
        DATA=_NS(PATCH_SIZE=(16, 16, 16), IN_CHANNELS=4),
        MODEL=_NS(HIDDEN_DIM=48, NUM_FEATURE_LEVELS=3, ENC_CHANNELS=[8, 16, 32]),
    )

    key = jax.random.PRNGKey(0)
    k_param, k_x = jax.random.split(key)

    model = BaseBackbonePallas(cfg, k_param)
    x = jax.random.normal(k_x, (2, 4, 16, 16, 16), jnp.float32)  # (N, C, D, H, W)

    feats, pos_embs = model.forward(x)
    jax.block_until_ready(feats)
    jax.block_until_ready(pos_embs)

    # shape sanity: feats[i] -> (2, 48, 16/2^i, ...), pos_embs[i] -> (1, 48, ...)
    assert all(f.shape[0] == 2 and f.shape[1] == cfg.MODEL.HIDDEN_DIM for f in feats)
    assert all(f.dtype == model.feature_dtype for f in feats)
    assert all(p.shape[1] == 3 * (cfg.MODEL.HIDDEN_DIM // 3) for p in pos_embs)
    assert all(f.shape[-3:] == p.shape[-3:] for f, p in zip(feats, pos_embs))
    assert all(bool(jnp.all(jnp.isfinite(f.astype(jnp.float32)))) for f in feats)
    assert all(bool(jnp.all(jnp.isfinite(p))) for p in pos_embs)

    print("KERNEL_OK")
</pallas_src>

<mosaic_0001>
module attributes {stable_mosaic.version = 11 : i64} {
  func.func @_sin_pos_emb_kernel(%arg0: i32, %arg1: memref<3x2048xf32, #tpu.memory_space<vmem>>, %arg2: memref<16x1xf32, #tpu.memory_space<vmem>>, %arg3: memref<48x2048xf32, #tpu.memory_space<vmem>>) attributes {dimension_semantics = [#tpu.dimension_semantics<parallel>], iteration_bounds = array<i64: 2>, scalar_prefetch = 0 : i64, scratch_operands = 0 : i64, tpu.core_type = #tpu.core_type<tc>, window_params = [{transform_indices = @transform_0, window_bounds = array<i64: 3, 2048>}, {pipeline_mode = #tpu.pipeline_mode<synchronous>, transform_indices = @transform_1, window_bounds = array<i64: 16, 1>}, {transform_indices = @transform_2, window_bounds = array<i64: 48, 2048>}]} {
    %c0 = arith.constant 0 : index
    %c0_0 = arith.constant 0 : index
    %0 = vector.load %arg2[%c0, %c0_0] : memref<16x1xf32, #tpu.memory_space<vmem>>, vector<16x1xf32>
    %1 = tpu.iota {dimensions = array<i32: 0>} : vector<16x1xi32>
    %c1_i32 = arith.constant 1 : i32
    %2 = vector.broadcast %c1_i32 : i32 to vector<16x1xi32>
    %3 = arith.andi %1, %2 : vector<16x1xi32>
    %4 = arith.sitofp %3 : vector<16x1xi32> to vector<16x1xf32>
    %cst = arith.constant 1.57079637 : f32
    %5 = vector.broadcast %cst : f32 to vector<16x1xf32>
    %6 = arith.mulf %4, %5 : vector<16x1xf32>
    %c0_1 = arith.constant 0 : index
    %c0_2 = arith.constant 0 : index
    %7 = vector.load %arg1[%c0_1, %c0_2] : memref<3x2048xf32, #tpu.memory_space<vmem>>, vector<1x2048xf32>
    %8 = vector.broadcast %7 : vector<1x2048xf32> to vector<16x2048xf32>
    %9 = vector.broadcast %0 : vector<16x1xf32> to vector<16x2048xf32>
    %10 = arith.mulf %8, %9 : vector<16x2048xf32>
    %11 = vector.broadcast %6 : vector<16x1xf32> to vector<16x2048xf32>
    %12 = arith.addf %10, %11 : vector<16x2048xf32>
    %13 = math.sin %12 : vector<16x2048xf32>
    %c0_3 = arith.constant 0 : index
    %c0_4 = arith.constant 0 : index
    %14 = vector.load %arg3[%c0_3, %c0_4] : memref<48x2048xf32, #tpu.memory_space<vmem>>, vector<16x2048xf32>
    tpu.vector_store %arg3[%c0_3, %c0_4], %13 {strides = array<i32>} : memref<48x2048xf32, #tpu.memory_space<vmem>>, vector<16x2048xf32>,
    %c1 = arith.constant 1 : index
    %c0_5 = arith.constant 0 : index
    %15 = vector.load %arg1[%c1, %c0_5] : memref<3x2048xf32, #tpu.memory_space<vmem>>, vector<1x2048xf32>
    %16 = vector.broadcast %15 : vector<1x2048xf32> to vector<16x2048xf32>
    %17 = vector.broadcast %0 : vector<16x1xf32> to vector<16x2048xf32>
    %18 = arith.mulf %16, %17 : vector<16x2048xf32>
    %19 = vector.broadcast %6 : vector<16x1xf32> to vector<16x2048xf32>
    %20 = arith.addf %18, %19 : vector<16x2048xf32>
    %21 = math.sin %20 : vector<16x2048xf32>
    %c16 = arith.constant 16 : index
    %c0_6 = arith.constant 0 : index
    %22 = vector.load %arg3[%c16, %c0_6] : memref<48x2048xf32, #tpu.memory_space<vmem>>, vector<16x2048xf32>
    tpu.vector_store %arg3[%c16, %c0_6], %21 {strides = array<i32>} : memref<48x2048xf32, #tpu.memory_space<vmem>>, vector<16x2048xf32>,
    %c2 = arith.constant 2 : index
    %c0_7 = arith.constant 0 : index
    %23 = vector.load %arg1[%c2, %c0_7] : memref<3x2048xf32, #tpu.memory_space<vmem>>, vector<1x2048xf32>
    %24 = vector.broadcast %23 : vector<1x2048xf32> to vector<16x2048xf32>
    %25 = vector.broadcast %0 : vector<16x1xf32> to vector<16x2048xf32>
    %26 = arith.mulf %24, %25 : vector<16x2048xf32>
    %27 = vector.broadcast %6 : vector<16x1xf32> to vector<16x2048xf32>
    %28 = arith.addf %26, %27 : vector<16x2048xf32>
    %29 = math.sin %28 : vector<16x2048xf32>
    %c32 = arith.constant 32 : index
    %c0_8 = arith.constant 0 : index
    %30 = vector.load %arg3[%c32, %c0_8] : memref<48x2048xf32, #tpu.memory_space<vmem>>, vector<16x2048xf32>
    tpu.vector_store %arg3[%c32, %c0_8], %29 {strides = array<i32>} : memref<48x2048xf32, #tpu.memory_space<vmem>>, vector<16x2048xf32>,
    return
  }
  func.func @transform_0(%arg0: i32) -> (i32, i32) {
    %c0_i32 = arith.constant 0 : i32
    %c0_i32_0 = arith.constant 0 : i32
    return %c0_i32, %arg0 : i32, i32
  }
  func.func @transform_1(%arg0: i32) -> (i32, i32) {
    %c0_i32 = arith.constant 0 : i32
    %c0_i32_0 = arith.constant 0 : i32
    %c0_i32_1 = arith.constant 0 : i32
    return %c0_i32, %c0_i32_0 : i32, i32
  }
  func.func @transform_2(%arg0: i32) -> (i32, i32) {
    %c0_i32 = arith.constant 0 : i32
    %c0_i32_0 = arith.constant 0 : i32
    return %c0_i32, %arg0 : i32, i32
  }
}

</mosaic_0001>

<llo_original>
// kernel: tpu_custom_call.1
$region0: #{tpu_custom_call.1}
  #allocation0 [shape = 'u32[]', space=smem, size = 0x4, offset = 0x4, fixed_abs, tag = 'smem constant byte address 0x4 - core index']
  #allocation1 [shape = 'u32[144,128]{1,0:T(1,128)}', space=vmem, size = 0x12000, scoped, tag = 'internal scratch']
  %s0 = inlined_call_operand.hbm [shape: f32[3,4096], index: 0, kind: input, shape index: {}]
  %s1 = inlined_call_operand.vmem [shape: f32[16,1], index: 1, kind: input, shape index: {}]
  %s2 = inlined_call_operand.hbm [shape: f32[48,4096], index: 2, kind: output, shape index: {}]
  %s3 = sld [smem:[#allocation0]]
  $region45: #{tpu_custom_call.1} parent=0
    _
  %s5 = ssub.s32 1, %s3
  %s6 = scalar_select 0, %s5, %s3
  $region1: #{tpu_custom_call.1} parent=0
    #allocation2 [shape = 'u8[65536]{0}', space=vmem, size = 0x10000, scoped, tag = 'input window, operand 0']
    #allocation3 [shape = 's32[2]{0}', space=sflag, size = 0x8, scoped, tag = 'scoped memory for tpu_custom_call.1']
    #allocation4 [shape = 's32[2]{0}', space=sflag, size = 0x8, scoped, tag = 'scoped memory for tpu_custom_call.1']
    #allocation5 [shape = 'u8[786432]{0}', space=vmem, size = 0xc0000, scoped, tag = 'output window, operand 0']
    %7 = vsyncpa [#allocation3], 0
    %s8 = scalar_lea.sflag [#allocation3], 1
    %9 = vsyncpa %s8, 0
    %10 = vsyncpa [#allocation4], 0
    %s11 = scalar_lea.sflag [#allocation4], 1
    %12 = vsyncpa %s11, 0
    loop: start=0, step=1, limit=4
    $region2: #{tpu_custom_call.1} parent=1 // loop_pre_header
      _
    $region3: #{tpu_custom_call.1} parent=1 // loop_header
      %s14 = sphi 0, %s18
      %p15 = scmp.ge.s32.totalorder %s14, 4
      %s24 = sphi 0, %s26
      %s27 = sphi 0, %s24
      %s28 = sphi 0, %s27
      %s44 = sphi 0, %s28
      %s48 = sphi 0, %s48
      %s50 = sphi 0, %s48
      %s51 = sphi 0, %s50
      %s65 = sphi 0, %s51
      %s71 = sphi 0, %s73
      %s74 = sphi 0, %s71
      %s75 = sphi 0, %s74
      %s91 = sphi 0, %s75
    $region4: #{tpu_custom_call.1} parent=1 // loop_header_branch
      %17 = sbr.rel (%p15) target = $region8
    $region5: #{tpu_custom_call.1} parent=1 // loop_body
      %s19 = ssub.s32 %s14, 1
      %s20 = ssub.s32 %s14, 2
      %s21 = sadd.s32 %s14, 1
      %s22 = ssub.s32 %s14, %s21
      %p23 = scmp.eq.s32.totalorder %s22, 0
      %s25 = sadd.s32 %s24, 1
      %s26 = scalar_select %p23, %s24, %s25
      %p29 = pneg %p23
      %p30 = scmp.eq.s32.totalorder %s14, 1
      %p31 = por %p29, %p30
      %p32 = scmp.ne.s32.totalorder %s24, %s27
      %p33 = scmp.eq.s32.totalorder %s14, 0
      %p34 = por %p32, %p33
      %p35 = scmp.ne.s32.totalorder %s24, %s27
      %p36 = scmp.eq.s32.totalorder %s19, 1
      %p37 = por %p35, %p36
      %p38 = scmp.ne.s32.totalorder %s27, %s28
      %p39 = scmp.eq.s32.totalorder %s19, 0
      %p40 = por %p38, %p39
      %p41 = scmp.ne.s32.totalorder %s27, %s28
      %p42 = scmp.eq.s32.totalorder %s20, 1
      %p43 = por %p41, %p42
      %p45 = scmp.ne.s32.totalorder %s28, %s44
      %p46 = scmp.eq.s32.totalorder %s20, 0
      %p47 = por %p45, %p46
      %s49 = sadd.s32 %s48, 1
      %p52 = scmp.eq.s32.totalorder %s14, 1
      %p53 = scmp.ne.s32.totalorder %s48, %s50
      %p54 = scmp.eq.s32.totalorder %s14, 0
      %p55 = por %p53, %p54
      %p56 = scmp.ne.s32.totalorder %s48, %s50
      %p57 = scmp.eq.s32.totalorder %s19, 1
      %p58 = por %p56, %p57
      %p59 = scmp.ne.s32.totalorder %s50, %s51
      %p60 = scmp.eq.s32.totalorder %s19, 0
      %p61 = por %p59, %p60
      %p62 = scmp.ne.s32.totalorder %s50, %s51
      %p63 = scmp.eq.s32.totalorder %s20, 1
      %p64 = por %p62, %p63
      %p66 = scmp.ne.s32.totalorder %s51, %s65
      %p67 = scmp.eq.s32.totalorder %s20, 0
      %p68 = por %p66, %p67
      %s69 = ssub.s32 %s14, %s21
      %p70 = scmp.eq.s32.totalorder %s69, 0
      %s72 = sadd.s32 %s71, 1
      %s73 = scalar_select %p70, %s71, %s72
      %p76 = pneg %p70
      %p77 = scmp.eq.s32.totalorder %s14, 1
      %p78 = por %p76, %p77
      %p79 = scmp.ne.s32.totalorder %s71, %s74
      %p80 = scmp.eq.s32.totalorder %s14, 0
      %p81 = por %p79, %p80
      %p82 = scmp.ne.s32.totalorder %s71, %s74
      %p83 = scmp.eq.s32.totalorder %s19, 1
      %p84 = por %p82, %p83
      %p85 = scmp.ne.s32.totalorder %s74, %s75
      %p86 = scmp.eq.s32.totalorder %s19, 0
      %p87 = por %p85, %p86
      %p88 = scmp.ne.s32.totalorder %s74, %s75
      %p89 = scmp.eq.s32.totalorder %s20, 1
      %p90 = por %p88, %p89
      %p92 = scmp.ne.s32.totalorder %s75, %s91
      %p93 = scmp.eq.s32.totalorder %s20, 0
      %p94 = por %p92, %p93
      %p95 = scmp.le.s32.totalorder 1, %s14
      %p96 = scmp.lt.s32.totalorder %s14, 3
      %p97 = pnand %p95, %p96
      %p98 = pneg %p97
      // Predicated region
      $region9: #{tpu_custom_call.1} parent=5 // pred_check
        _
      $region10: #{tpu_custom_call.1} parent=5 // pred_check_branch
        %100 = sbr.rel (%p97) target = $region12
      $region11: #{tpu_custom_call.1} parent=5 // pred_region
        %s101 = ssub.s32 %s14, 1
        // Predicated region
        $region13: #{tpu_custom_call.1} parent=11 // pred_check
          %p102 = pneg %p61
        $region14: #{tpu_custom_call.1} parent=11 // pred_check_branch
          %104 = sbr.rel (%p102) target = $region16
        $region15: #{tpu_custom_call.1} parent=11 // pred_region
          _
        $region16: #{tpu_custom_call.1} parent=11 // pred_fallthru
          _
      $region12: #{tpu_custom_call.1} parent=5 // pred_fallthru
        _
      %p105 = scmp.lt.s32.totalorder %s14, 2
      // Predicated region
      $region17: #{tpu_custom_call.1} parent=5 // pred_check
        %p106 = pneg %p105
      $region18: #{tpu_custom_call.1} parent=5 // pred_check_branch
        %108 = sbr.rel (%p106) target = $region20
      $region19: #{tpu_custom_call.1} parent=5 // pred_region
        // Predicated region
        $region21: #{tpu_custom_call.1} parent=19 // pred_check
          %p109 = pneg %p34
        $region22: #{tpu_custom_call.1} parent=19 // pred_check_branch
          %111 = sbr.rel (%p109) target = $region24
        $region23: #{tpu_custom_call.1} parent=19 // pred_region
          %s112 = sand.u32 %s24, 1
          %s113 = scalar_lea.sflag [#allocation3], %s112
          %s114 = sand.u32 %s24, 1
          %s115 = smul.addr %s114, 64
          %s116 = scalar_lea.vmem [#allocation2], %s115
          %s117 = smul.u32 16, %s14
          %s119 = ssub.s32 1024, 1024
          %120 = vsyncadd %s113, %s119
          %s121 = smul.addr %s117, 64
          %s122 = scalar_lea.hbm %s0, %s121
          %s124 = sshll.u32 %s116, 4
          %s125 = int_to_ptr.vmem [resolvable:$true] %s124
          %127 = dma.hbm_to_vmem [thread:$0]  %s122, 1024, %s125, %s113
        $region24: #{tpu_custom_call.1} parent=19 // pred_fallthru
          _
      $region20: #{tpu_custom_call.1} parent=5 // pred_fallthru
        _
      %p128 = scmp.le.s32.totalorder 1, %s14
      %p129 = scmp.lt.s32.totalorder %s14, 3
      %p130 = pnand %p128, %p129
      %p131 = pneg %p130
      // Predicated region
      $region25: #{tpu_custom_call.1} parent=5 // pred_check
        _
      $region26: #{tpu_custom_call.1} parent=5 // pred_check_branch
        %133 = sbr.rel (%p130) target = $region28
      $region27: #{tpu_custom_call.1} parent=5 // pred_region
        %s134 = ssub.s32 %s14, 1
        %s135 = sand.u32 %s27, 1
        %s136 = scalar_lea.sflag [#allocation3], %s135
        %s137 = sand.u32 %s27, 1
        %s138 = smul.addr %s137, 64
        %s139 = scalar_lea.vmem [#allocation2], %s138
        // Predicated region
        $region29: #{tpu_custom_call.1} parent=27 // pred_check
          %p140 = pneg %p40
        $region30: #{tpu_custom_call.1} parent=27 // pred_check_branch
          %142 = sbr.rel (%p140) target = $region32
        $region31: #{tpu_custom_call.1} parent=27 // pred_region
          %143 = dma.done %s136, 1024
        $region32: #{tpu_custom_call.1} parent=27 // pred_fallthru
          _
        %s144 = sand.u32 %s27, 1
        %s145 = scalar_lea.sflag [#allocation3], %s144
        %s146 = sand.u32 %s27, 1
        %s147 = smul.addr %s146, 64
        %s148 = scalar_lea.vmem [#allocation2], %s147
        %p149 = pneg %p40
        %p150 = pneg %p37
        %p151 = pneg %p61
        %p152 = pneg %p58
        %p153 = pneg %p87
        %p154 = pneg %p84
        %s155 = sand.u32 %s74, 1
        %s156 = scalar_lea.sflag [#allocation4], %s155
        %s157 = sand.u32 %s74, 1
        %s158 = smul.addr %s157, 768
        %s159 = scalar_lea.vmem [#allocation5], %s158
        %s160 = smul.u32 16, %s19
        %s161 = smul.u32 16, %s19
        %v162 = vld [vmem:[%s1] sm:$0xff]
        %v163 = vld [vmem:[%s1 + $0x8] sm:$0xff]
        %v164 = vlaneseq
        %v165 = vshrl.u32 %v164, 7
        %v166 = vadd.s32 %v165, 8
        %v167 = vand.u32 %v165, 1
        %v168 = vand.u32 %v166, 1
        %v169 = vcvt.s32.f32 %v167
        %v170 = vcvt.s32.f32 %v168
        %v171 = vmul.f32 %v169, 1.5707964
        %v172 = vmul.f32 %v170, 1.5707964
        %v173 = vld [vmem:[%s139] ss:$4 sm:$0xff]
        %s174 = scalar_lea.vmem %s139, 32 [#allocation2]
        %v175 = vld [vmem:[%s174] ss:$4 sm:$0xff]
        %v178 = vlaneseq
        %v179 = vshrl.u32 %v178, 7
        %v180 = vsub.s32 0, %v179
        %v181 = vrot.slane %v173, %v180
        %v182 = vlaneseq
        %v183 = vshrl.u32 %v182, 7
        %v184 = vsub.s32 1, %v183
        %v185 = vrot.slane %v173, %v184
        %v186 = vlaneseq
        %v187 = vshrl.u32 %v186, 7
        %v188 = vsub.s32 2, %v187
        %v189 = vrot.slane %v173, %v188
        %v190 = vlaneseq
        %v191 = vshrl.u32 %v190, 7
        %v192 = vsub.s32 3, %v191
        %v193 = vrot.slane %v173, %v192
        %v194 = vlaneseq
        %v195 = vshrl.u32 %v194, 7
        %v196 = vsub.s32 4, %v195
        %v197 = vrot.slane %v173, %v196
        %v198 = vlaneseq
        %v199 = vshrl.u32 %v198, 7
        %v200 = vsub.s32 5, %v199
        %v201 = vrot.slane %v173, %v200
        %v202 = vlaneseq
        %v203 = vshrl.u32 %v202, 7
        %v204 = vsub.s32 6, %v203
        %v205 = vrot.slane %v173, %v204
        %v206 = vlaneseq
        %v207 = vshrl.u32 %v206, 7
        %v208 = vsub.s32 7, %v207
        %v209 = vrot.slane %v173, %v208
        %v210 = vlaneseq
        %v211 = vshrl.u32 %v210, 7
        %v212 = vsub.s32 0, %v211
        %v213 = vrot.slane %v175, %v212
        %v214 = vlaneseq
        %v215 = vshrl.u32 %v214, 7
        %v216 = vsub.s32 1, %v215
        %v217 = vrot.slane %v175, %v216
        %v218 = vlaneseq
        %v219 = vshrl.u32 %v218, 7
        %v220 = vsub.s32 2, %v219
        %v221 = vrot.slane %v175, %v220
        %v222 = vlaneseq
        %v223 = vshrl.u32 %v222, 7
        %v224 = vsub.s32 3, %v223
        %v225 = vrot.slane %v175, %v224
        %v226 = vlaneseq
        %v227 = vshrl.u32 %v226, 7
        %v228 = vsub.s32 4, %v227
        %v229 = vrot.slane %v175, %v228
        %v230 = vlaneseq
        %v231 = vshrl.u32 %v230, 7
        %v232 = vsub.s32 5, %v231
        %v233 = vrot.slane %v175, %v232
        %v234 = vlaneseq
        %v235 = vshrl.u32 %v234, 7
        %v236 = vsub.s32 6, %v235
        %v237 = vrot.slane %v175, %v236
        %v238 = vlaneseq
        %v239 = vshrl.u32 %v238, 7
        %v240 = vsub.s32 7, %v239
        %v241 = vrot.slane %v175, %v240
        %259 = vset.pattern.permute.xlu0 0
        %260 = vperm.xlu0 %259, %v162
        %v261 = vpop.permute.xlu0 %260
        %264 = vset.pattern.permute.xlu0 0
        %265 = vperm.xlu0 %264, %v163
        %v266 = vpop.permute.xlu0 %265
        %v268 = vmul.f32 %v181, %v261
        %v269 = vmul.f32 %v185, %v261
        %v270 = vmul.f32 %v189, %v261
        %v271 = vmul.f32 %v193, %v261
        %v272 = vmul.f32 %v197, %v261
        %v273 = vmul.f32 %v201, %v261
        %v274 = vmul.f32 %v205, %v261
        %v275 = vmul.f32 %v209, %v261
        %v276 = vmul.f32 %v213, %v261
        %v277 = vmul.f32 %v217, %v261
        %v278 = vmul.f32 %v221, %v261
        %v279 = vmul.f32 %v225, %v261
        %v280 = vmul.f32 %v229, %v261
        %v281 = vmul.f32 %v233, %v261
        %v282 = vmul.f32 %v237, %v261
        %v283 = vmul.f32 %v241, %v261
        %v284 = vmul.f32 %v181, %v266
        %v285 = vmul.f32 %v185, %v266
        %v286 = vmul.f32 %v189, %v266
        %v287 = vmul.f32 %v193, %v266
        %v288 = vmul.f32 %v197, %v266
        %v289 = vmul.f32 %v201, %v266
        %v290 = vmul.f32 %v205, %v266
        %v291 = vmul.f32 %v209, %v266
        %v292 = vmul.f32 %v213, %v266
        %v293 = vmul.f32 %v217, %v266
        %v294 = vmul.f32 %v221, %v266
        %v295 = vmul.f32 %v225, %v266
        %v296 = vmul.f32 %v229, %v266
        %v297 = vmul.f32 %v233, %v266
        %v298 = vmul.f32 %v237, %v266
        %v299 = vmul.f32 %v241, %v266
        %v300 = vadd.f32 %v268, %v171
        %v301 = vadd.f32 %v269, %v171
        %v302 = vadd.f32 %v270, %v171
        %v303 = vadd.f32 %v271, %v171
        %v304 = vadd.f32 %v272, %v171
        %v305 = vadd.f32 %v273, %v171
        %v306 = vadd.f32 %v274, %v171
        %v307 = vadd.f32 %v275, %v171
        %v308 = vadd.f32 %v276, %v171
        %v309 = vadd.f32 %v277, %v171
        %v310 = vadd.f32 %v278, %v171
        %v311 = vadd.f32 %v279, %v171
        %v312 = vadd.f32 %v280, %v171
        %v313 = vadd.f32 %v281, %v171
        %v314 = vadd.f32 %v282, %v171
        %v315 = vadd.f32 %v283, %v171
        %v316 = vadd.f32 %v284, %v172
        %v317 = vadd.f32 %v285, %v172
        %v318 = vadd.f32 %v286, %v172
        %v319 = vadd.f32 %v287, %v172
        %v320 = vadd.f32 %v288, %v172
        %v321 = vadd.f32 %v289, %v172
        %v322 = vadd.f32 %v290, %v172
        %v323 = vadd.f32 %v291, %v172
        %v324 = vadd.f32 %v292, %v172
        %v325 = vadd.f32 %v293, %v172
        %v326 = vadd.f32 %v294, %v172
        %v327 = vadd.f32 %v295, %v172
        %v328 = vadd.f32 %v296, %v172
        %v329 = vadd.f32 %v297, %v172
        %v330 = vadd.f32 %v298, %v172
        %v331 = vadd.f32 %v299, %v172
        %v332 = vand.u32 2147483647, %v300
        %vm333 = vcmp.le.f32.partialorder %v332, 0.7853982
        %vm334 = vcmp.lt.s32.totalorder %v300, 0
        %v335 = vand.u32 %v300, 2139095040
        %v336 = vshrl.u32 %v335, 23
        %v337 = vsub.s32 %v336, 127
        %v338 = vand.u32 2147483647, %v300
        %v339 = vand.u32 %v338, 8388607
        %v340 = vor.u32 %v339, 8388608
        %v341 = vsub.s32 0, %v340
        %v342 = vadd.s32 %v337, 1
        %vm343 = vcmp.gt.s32.totalorder %v342, 0
        %v344 = vsel %vm343, %v342, 0
        %v345 = vshrl.u32 %v344, 5
        %v346 = vand.u32 %v344, 31
        %v347 = vsub.s32 32, %v346
        %v348 = vshrl.u32 683565275, %v347
        %v349 = vshll.u32 683565275, %v346
        %v350 = vshrl.u32 2475754826, %v347
        %v351 = vor.u32 %v349, %v350
        %v352 = vshll.u32 2475754826, %v346
        %v353 = vshrl.u32 2131351028, %v347
        %v354 = vor.u32 %v352, %v353
        %v355 = vshll.u32 2131351028, %v346
        %v356 = vshrl.u32 2102212464, %v347
        %v357 = vor.u32 %v355, %v356
        %v358 = vshll.u32 2102212464, %v346
        %v359 = vshrl.u32 920167782, %v347
        %v360 = vor.u32 %v358, %v359
        %v361 = vshll.u32 920167782, %v346
        %v362 = vshrl.u32 1326507024, %v347
        %v363 = vor.u32 %v361, %v362
        %vm364 = vcmp.lt.s32.totalorder %v345, 1
        %vm365 = vcmp.lt.s32.totalorder %v345, 2
        %vm366 = vcmp.lt.s32.totalorder %v345, 3
        %vm367 = vcmp.lt.s32.totalorder %v345, 4
        %v368 = vsel %vm364, %v348, %v351
        %v369 = vsel %vm367, %v357, 2102212464
        %v370 = vsel %vm366, %v354, %v369
        %v371 = vsel %vm365, %v368, %v370
        %v372 = vsel %vm364, %v351, %v354
        %v373 = vsel %vm367, %v360, 920167782
        %v374 = vsel %vm366, %v357, %v373
        %v375 = vsel %vm365, %v372, %v374
        %v376 = vsel %vm364, %v354, %v357
        %v377 = vsel %vm367, %v363, 1326507024
        %v378 = vsel %vm366, %v360, %v377
        %v379 = vsel %vm365, %v376, %v378
        %v380 = vshll.u32 %v340, 8
        %v381 = vmul.u32.u64.compose %v380, %v379
        %v382 = vextract.low.u32 %v381
        %v383 = vextract.high.u32 %v381
        %v384 = vmul.u32.u64.compose %v380, %v375
        %v385 = vextract.low.u32 %v384
        %v386 = vextract.high.u32 %v384
        %v387 = vmul.u32 %v380, %v371
        %v388 = vadd.s32 %v383, %v385
        %vm389 = vc.u32 %v383, %v385
        %v390 = vadd.s32 %v386, 1
        %v391 = vsel %vm389, %v390, %v386
        %v392 = vadd.s32 %v387, %v391
        %v393 = vadd.s32 %v392, 536870912
        %v394 = vshrl.u32 %v393, 30
        %v395 = vshll.u32 %v394, 30
        %v396 = vsub.s32 %v392, %v395
        %vm397 = vcmp.lt.s32.totalorder %v396, 0
        %v398 = vsub.s32 0, %v396
        %v399 = vsel %vm397, %v398, %v396
        %v400 = vclz %v399
        %v401 = vsub.s32 %v400, 2
        %vm402 = vcmp.gt.s32.totalorder 0, %v401
        %v403 = vsel %vm402, 0, %v401
        %v404 = vsub.s32 32, %v403
        %v405 = vshll.u32 %v396, %v403
        %v406 = vshrl.u32 %v388, %v404
        %v407 = vor.u32 %v405, %v406
        %v408 = vsub.s32 4294967266, %v403
        %v409 = vadd.s32 %v408, 127
        %v410 = vshll.u32 %v409, 23
        %v411 = vor.u32 4788187, %v410
        %v412 = vand.u32 2147483647, %v411
        %v414 = vcvt.s32.f32 %v407
        %v415 = vmul.f32 %v414, %v412
        %v416 = vxor.u32 %v415, 2147483648
        %v417 = vsel %vm334, %v416, %v415
        %v418 = vsub.s32 4, %v394
        %v419 = vsel %vm334, %v418, %v394
        %v420 = vsel %vm333, %v300, %v417
        %v421 = vsel %vm333, 0, %v419
        %v422 = vcosq.f32.pop %v420
        %v423 = vsinq.f32.pop %v420
        %vm424 = vweird.f32 %v300
        %v425 = vadd.s32 %v421, 3
        %v426 = vand.u32 %v425, 3
        %vm427 = vcmp.lt.s32.totalorder %v426, 2
        %vm428 = vcmp.eq.s32.totalorder %v426, 0
        %v429 = vxor.u32 %v423, 2147483648
        %v430 = vsel %vm428, %v422, %v429
        %vm431 = vcmp.eq.s32.totalorder %v426, 2
        %v432 = vxor.u32 %v422, 2147483648
        %v433 = vsel %vm431, %v432, %v423
        %v434 = vsel %vm427, %v430, %v433
        %v435 = vsel %vm424, nan, %v434
        %v436 = vand.u32 2147483647, %v301
        %vm437 = vcmp.le.f32.partialorder %v436, 0.7853982
        %vm438 = vcmp.lt.s32.totalorder %v301, 0
        %v439 = vand.u32 %v301, 2139095040
        %v440 = vshrl.u32 %v439, 23
        %v441 = vsub.s32 %v440, 127
        %v442 = vand.u32 2147483647, %v301
        %v443 = vand.u32 %v442, 8388607
        %v444 = vor.u32 %v443, 8388608
        %v445 = vsub.s32 0, %v444
        %v446 = vadd.s32 %v441, 1
        %vm447 = vcmp.gt.s32.totalorder %v446, 0
        %v448 = vsel %vm447, %v446, 0
        %v449 = vshrl.u32 %v448, 5
        %v450 = vand.u32 %v448, 31
        %v451 = vsub.s32 32, %v450
        %v452 = vshrl.u32 683565275, %v451
        %v453 = vshll.u32 683565275, %v450
        %v454 = vshrl.u32 2475754826, %v451
        %v455 = vor.u32 %v453, %v454
        %v456 = vshll.u32 2475754826, %v450
        %v457 = vshrl.u32 2131351028, %v451
        %v458 = vor.u32 %v456, %v457
        %v459 = vshll.u32 2131351028, %v450
        %v460 = vshrl.u32 2102212464, %v451
        %v461 = vor.u32 %v459, %v460
        %v462 = vshll.u32 2102212464, %v450
        %v463 = vshrl.u32 920167782, %v451
        %v464 = vor.u32 %v462, %v463
        %v465 = vshll.u32 920167782, %v450
        %v466 = vshrl.u32 1326507024, %v451
        %v467 = vor.u32 %v465, %v466
        %vm468 = vcmp.lt.s32.totalorder %v449, 1
        %vm469 = vcmp.lt.s32.totalorder %v449, 2
        %vm470 = vcmp.lt.s32.totalorder %v449, 3
        %vm471 = vcmp.lt.s32.totalorder %v449, 4
        %v472 = vsel %vm468, %v452, %v455
        %v473 = vsel %vm471, %v461, 2102212464
        %v474 = vsel %vm470, %v458, %v473
        %v475 = vsel %vm469, %v472, %v474
        %v476 = vsel %vm468, %v455, %v458
        %v477 = vsel %vm471, %v464, 920167782
        %v478 = vsel %vm470, %v461, %v477
        %v479 = vsel %vm469, %v476, %v478
        %v480 = vsel %vm468, %v458, %v461
        %v481 = vsel %vm471, %v467, 1326507024
        %v482 = vsel %vm470, %v464, %v481
        %v483 = vsel %vm469, %v480, %v482
        %v484 = vshll.u32 %v444, 8
        %v485 = vmul.u32.u64.compose %v484, %v483
        %v486 = vextract.low.u32 %v485
        %v487 = vextract.high.u32 %v485
        %v488 = vmul.u32.u64.compose %v484, %v479
        %v489 = vextract.low.u32 %v488
        %v490 = vextract.high.u32 %v488
        %v491 = vmul.u32 %v484, %v475
        %v492 = vadd.s32 %v487, %v489
        %vm493 = vc.u32 %v487, %v489
        %v494 = vadd.s32 %v490, 1
        %v495 = vsel %vm493, %v494, %v490
        %v496 = vadd.s32 %v491, %v495
        %v497 = vadd.s32 %v496, 536870912
        %v498 = vshrl.u32 %v497, 30
        %v499 = vshll.u32 %v498, 30
        %v500 = vsub.s32 %v496, %v499
        %vm501 = vcmp.lt.s32.totalorder %v500, 0
        %v502 = vsub.s32 0, %v500
        %v503 = vsel %vm501, %v502, %v500
        %v504 = vclz %v503
        %v505 = vsub.s32 %v504, 2
        %vm506 = vcmp.gt.s32.totalorder 0, %v505
        %v507 = vsel %vm506, 0, %v505
        %v508 = vsub.s32 32, %v507
        %v509 = vshll.u32 %v500, %v507
        %v510 = vshrl.u32 %v492, %v508
        %v511 = vor.u32 %v509, %v510
        %v512 = vsub.s32 4294967266, %v507
        %v513 = vadd.s32 %v512, 127
        %v514 = vshll.u32 %v513, 23
        %v515 = vor.u32 4788187, %v514
        %v516 = vand.u32 2147483647, %v515
        %v518 = vcvt.s32.f32 %v511
        %v519 = vmul.f32 %v518, %v516
        %v520 = vxor.u32 %v519, 2147483648
        %v521 = vsel %vm438, %v520, %v519
        %v522 = vsub.s32 4, %v498
        %v523 = vsel %vm438, %v522, %v498
        %v524 = vsel %vm437, %v301, %v521
        %v525 = vsel %vm437, 0, %v523
        %v526 = vcosq.f32.pop %v524
        %v527 = vsinq.f32.pop %v524
        %vm528 = vweird.f32 %v301
        %v529 = vadd.s32 %v525, 3
        %v530 = vand.u32 %v529, 3
        %vm531 = vcmp.lt.s32.totalorder %v530, 2
        %vm532 = vcmp.eq.s32.totalorder %v530, 0
        %v533 = vxor.u32 %v527, 2147483648
        %v534 = vsel %vm532, %v526, %v533
        %vm535 = vcmp.eq.s32.totalorder %v530, 2
        %v536 = vxor.u32 %v526, 2147483648
        %v537 = vsel %vm535, %v536, %v527
        %v538 = vsel %vm531, %v534, %v537
        %v539 = vsel %vm528, nan, %v538
        %v540 = vand.u32 2147483647, %v302
        %vm541 = vcmp.le.f32.partialorder %v540, 0.7853982
        %vm542 = vcmp.lt.s32.totalorder %v302, 0
        %v543 = vand.u32 %v302, 2139095040
        %v544 = vshrl.u32 %v543, 23
        %v545 = vsub.s32 %v544, 127
        %v546 = vand.u32 2147483647, %v302
        %v547 = vand.u32 %v546, 8388607
        %v548 = vor.u32 %v547, 8388608
        %v549 = vsub.s32 0, %v548
        %v550 = vadd.s32 %v545, 1
        %vm551 = vcmp.gt.s32.totalorder %v550, 0
        %v552 = vsel %vm551, %v550, 0
        %v553 = vshrl.u32 %v552, 5
        %v554 = vand.u32 %v552, 31
        %v555 = vsub.s32 32, %v554
        %v556 = vshrl.u32 683565275, %v555
        %v557 = vshll.u32 683565275, %v554
        %v558 = vshrl.u32 2475754826, %v555
        %v559 = vor.u32 %v557, %v558
        %v560 = vshll.u32 2475754826, %v554
        %v561 = vshrl.u32 2131351028, %v555
        %v562 = vor.u32 %v560, %v561
        %v563 = vshll.u32 2131351028, %v554
        %v564 = vshrl.u32 2102212464, %v555
        %v565 = vor.u32 %v563, %v564
        %v566 = vshll.u32 2102212464, %v554
        %v567 = vshrl.u32 920167782, %v555
        %v568 = vor.u32 %v566, %v567
        %v569 = vshll.u32 920167782, %v554
        %v570 = vshrl.u32 1326507024, %v555
        %v571 = vor.u32 %v569, %v570
        %vm572 = vcmp.lt.s32.totalorder %v553, 1
        %vm573 = vcmp.lt.s32.totalorder %v553, 2
        %vm574 = vcmp.lt.s32.totalorder %v553, 3
        %vm575 = vcmp.lt.s32.totalorder %v553, 4
        %v576 = vsel %vm572, %v556, %v559
        %v577 = vsel %vm575, %v565, 2102212464
        %v578 = vsel %vm574, %v562, %v577
        %v579 = vsel %vm573, %v576, %v578
        %v580 = vsel %vm572, %v559, %v562
        %v581 = vsel %vm575, %v568, 920167782
        %v582 = vsel %vm574, %v565, %v581
        %v583 = vsel %vm573, %v580, %v582
        %v584 = vsel %vm572, %v562, %v565
        %v585 = vsel %vm575, %v571, 1326507024
        %v586 = vsel %vm574, %v568, %v585
        %v587 = vsel %vm573, %v584, %v586
        %v588 = vshll.u32 %v548, 8
        %v589 = vmul.u32.u64.compose %v588, %v587
        %v590 = vextract.low.u32 %v589
        %v591 = vextract.high.u32 %v589
        %v592 = vmul.u32.u64.compose %v588, %v583
        %v593 = vextract.low.u32 %v592
        %v594 = vextract.high.u32 %v592
        %v595 = vmul.u32 %v588, %v579
        %v596 = vadd.s32 %v591, %v593
        %vm597 = vc.u32 %v591, %v593
        %v598 = vadd.s32 %v594, 1
        %v599 = vsel %vm597, %v598, %v594
        %v600 = vadd.s32 %v595, %v599
        %v601 = vadd.s32 %v600, 536870912
        %v602 = vshrl.u32 %v601, 30
        %v603 = vshll.u32 %v602, 30
        %v604 = vsub.s32 %v600, %v603
        %vm605 = vcmp.lt.s32.totalorder %v604, 0
        %v606 = vsub.s32 0, %v604
        %v607 = vsel %vm605, %v606, %v604
        %v608 = vclz %v607
        %v609 = vsub.s32 %v608, 2
        %vm610 = vcmp.gt.s32.totalorder 0, %v609
        %v611 = vsel %vm610, 0, %v609
        %v612 = vsub.s32 32, %v611
        %v613 = vshll.u32 %v604, %v611
        %v614 = vshrl.u32 %v596, %v612
        %v615 = vor.u32 %v613, %v614
        %v616 = vsub.s32 4294967266, %v611
        %v617 = vadd.s32 %v616, 127
        %v618 = vshll.u32 %v617, 23
        %v619 = vor.u32 4788187, %v618
        %v620 = vand.u32 2147483647, %v619
        %v622 = vcvt.s32.f32 %v615
        %v623 = vmul.f32 %v622, %v620
        %v624 = vxor.u32 %v623, 2147483648
        %v625 = vsel %vm542, %v624, %v623
        %v626 = vsub.s32 4, %v602
        %v627 = vsel %vm542, %v626, %v602
        %v628 = vsel %vm541, %v302, %v625
        %v629 = vsel %vm541, 0, %v627
        %v630 = vcosq.f32.pop %v628
        %v631 = vsinq.f32.pop %v628
        %vm632 = vweird.f32 %v302
        %v633 = vadd.s32 %v629, 3
        %v634 = vand.u32 %v633, 3
        %vm635 = vcmp.lt.s32.totalorder %v634, 2
        %vm636 = vcmp.eq.s32.totalorder %v634, 0
        %v637 = vxor.u32 %v631, 2147483648
        %v638 = vsel %vm636, %v630, %v637
        %vm639 = vcmp.eq.s32.totalorder %v634, 2
        %v640 = vxor.u32 %v630, 2147483648
        %v641 = vsel %vm639, %v640, %v631
        %v642 = vsel %vm635, %v638, %v641
        %v643 = vsel %vm632, nan, %v642
        %v644 = vand.u32 2147483647, %v303
        %vm645 = vcmp.le.f32.partialorder %v644, 0.7853982
        %vm646 = vcmp.lt.s32.totalorder %v303, 0
        %v647 = vand.u32 %v303, 2139095040
        %v648 = vshrl.u32 %v647, 23
        %v649 = vsub.s32 %v648, 127
        %v650 = vand.u32 2147483647, %v303
        %v651 = vand.u32 %v650, 8388607
        %v652 = vor.u32 %v651, 8388608
        %v653 = vsub.s32 0, %v652
        %v654 = vadd.s32 %v649, 1
        %vm655 = vcmp.gt.s32.totalorder %v654, 0
        %v656 = vsel %vm655, %v654, 0
        %v657 = vshrl.u32 %v656, 5
        %v658 = vand.u32 %v656, 31
        %v659 = vsub.s32 32, %v658
        %v660 = vshrl.u32 683565275, %v659
        %v661 = vshll.u32 683565275, %v658
        %v662 = vshrl.u32 2475754826, %v659
        %v663 = vor.u32 %v661, %v662
        %v664 = vshll.u32 2475754826, %v658
        %v665 = vshrl.u32 2131351028, %v659
        %v666 = vor.u32 %v664, %v665
        %v667 = vshll.u32 2131351028, %v658
        %v668 = vshrl.u32 2102212464, %v659
        %v669 = vor.u32 %v667, %v668
        %v670 = vshll.u32 2102212464, %v658
        %v671 = vshrl.u32 920167782, %v659
        %v672 = vor.u32 %v670, %v671
        %v673 = vshll.u32 920167782, %v658
        %v674 = vshrl.u32 1326507024, %v659
        %v675 = vor.u32 %v673, %v674
        %vm676 = vcmp.lt.s32.totalorder %v657, 1
        %vm677 = vcmp.lt.s32.totalorder %v657, 2
        %vm678 = vcmp.lt.s32.totalorder %v657, 3
        %vm679 = vcmp.lt.s32.totalorder %v657, 4
        %v680 = vsel %vm676, %v660, %v663
        %v681 = vsel %vm679, %v669, 2102212464
        %v682 = vsel %vm678, %v666, %v681
        %v683 = vsel %vm677, %v680, %v682
        %v684 = vsel %vm676, %v663, %v666
        %v685 = vsel %vm679, %v672, 920167782
        %v686 = vsel %vm678, %v669, %v685
        %v687 = vsel %vm677, %v684, %v686
        %v688 = vsel %vm676, %v666, %v669
        %v689 = vsel %vm679, %v675, 1326507024
        %v690 = vsel %vm678, %v672, %v689
        %v691 = vsel %vm677, %v688, %v690
        %v692 = vshll.u32 %v652, 8
        %v693 = vmul.u32.u64.compose %v692, %v691
        %v694 = vextract.low.u32 %v693
        %v695 = vextract.high.u32 %v693
        %v696 = vmul.u32.u64.compose %v692, %v687
        %v697 = vextract.low.u32 %v696
        %v698 = vextract.high.u32 %v696
        %v699 = vmul.u32 %v692, %v683
        %v700 = vadd.s32 %v695, %v697
        %vm701 = vc.u32 %v695, %v697
        %v702 = vadd.s32 %v698, 1
        %v703 = vsel %vm701, %v702, %v698
        %v704 = vadd.s32 %v699, %v703
        %v705 = vadd.s32 %v704, 536870912
        %v706 = vshrl.u32 %v705, 30
        %v707 = vshll.u32 %v706, 30
        %v708 = vsub.s32 %v704, %v707
        %vm709 = vcmp.lt.s32.totalorder %v708, 0
        %v710 = vsub.s32 0, %v708
        %v711 = vsel %vm709, %v710, %v708
        %v712 = vclz %v711
        %v713 = vsub.s32 %v712, 2
        %vm714 = vcmp.gt.s32.totalorder 0, %v713
        %v715 = vsel %vm714, 0, %v713
        %v716 = vsub.s32 32, %v715
        %v717 = vshll.u32 %v708, %v715
        %v718 = vshrl.u32 %v700, %v716
        %v719 = vor.u32 %v717, %v718
        %v720 = vsub.s32 4294967266, %v715
        %v721 = vadd.s32 %v720, 127
        %v722 = vshll.u32 %v721, 23
        %v723 = vor.u32 4788187, %v722
        %v724 = vand.u32 2147483647, %v723
        %v726 = vcvt.s32.f32 %v719
        %v727 = vmul.f32 %v726, %v724
        %v728 = vxor.u32 %v727, 2147483648
        %v729 = vsel %vm646, %v728, %v727
        %v730 = vsub.s32 4, %v706
        %v731 = vsel %vm646, %v730, %v706
        %v732 = vsel %vm645, %v303, %v729
        %v733 = vsel %vm645, 0, %v731
        %v734 = vcosq.f32.pop %v732
        %v735 = vsinq.f32.pop %v732
        %vm736 = vweird.f32 %v303
        %v737 = vadd.s32 %v733, 3
        %v738 = vand.u32 %v737, 3
        %vm739 = vcmp.lt.s32.totalorder %v738, 2
        %vm740 = vcmp.eq.s32.totalorder %v738, 0
        %v741 = vxor.u32 %v735, 2147483648
        %v742 = vsel %vm740, %v734, %v741
        %vm743 = vcmp.eq.s32.totalorder %v738, 2
        %v744 = vxor.u32 %v734, 2147483648
        %v745 = vsel %vm743, %v744, %v735
        %v746 = vsel %vm739, %v742, %v745
        %v747 = vsel %vm736, nan, %v746
        %v748 = vand.u32 2147483647, %v304
        %vm749 = vcmp.le.f32.partialorder %v748, 0.7853982
        %vm750 = vcmp.lt.s32.totalorder %v304, 0
        %v751 = vand.u32 %v304, 2139095040
        %v752 = vshrl.u32 %v751, 23
        %v753 = vsub.s32 %v752, 127
        %v754 = vand.u32 2147483647, %v304
        %v755 = vand.u32 %v754, 8388607
        %v756 = vor.u32 %v755, 8388608
        %v757 = vsub.s32 0, %v756
        %v758 = vadd.s32 %v753, 1
        %vm759 = vcmp.gt.s32.totalorder %v758, 0
        %v760 = vsel %vm759, %v758, 0
        %v761 = vshrl.u32 %v760, 5
        %v762 = vand.u32 %v760, 31
        %v763 = vsub.s32 32, %v762
        %v764 = vshrl.u32 683565275, %v763
        %v765 = vshll.u32 683565275, %v762
        %v766 = vshrl.u32 2475754826, %v763
        %v767 = vor.u32 %v765, %v766
        %v768 = vshll.u32 2475754826, %v762
        %v769 = vshrl.u32 2131351028, %v763
        %v770 = vor.u32 %v768, %v769
        %v771 = vshll.u32 2131351028, %v762
        %v772 = vshrl.u32 2102212464, %v763
        %v773 = vor.u32 %v771, %v772
        %v774 = vshll.u32 2102212464, %v762
        %v775 = vshrl.u32 920167782, %v763
        %v776 = vor.u32 %v774, %v775
        %v777 = vshll.u32 920167782, %v762
        %v778 = vshrl.u32 1326507024, %v763
        %v779 = vor.u32 %v777, %v778
        %vm780 = vcmp.lt.s32.totalorder %v761, 1
        %vm781 = vcmp.lt.s32.totalorder %v761, 2
        %vm782 = vcmp.lt.s32.totalorder %v761, 3
        %vm783 = vcmp.lt.s32.totalorder %v761, 4
        %v784 = vsel %vm780, %v764, %v767
        %v785 = vsel %vm783, %v773, 2102212464
        %v786 = vsel %vm782, %v770, %v785
        %v787 = vsel %vm781, %v784, %v786
        %v788 = vsel %vm780, %v767, %v770
        %v789 = vsel %vm783, %v776, 920167782
        %v790 = vsel %vm782, %v773, %v789
        %v791 = vsel %vm781, %v788, %v790
        %v792 = vsel %vm780, %v770, %v773
        %v793 = vsel %vm783, %v779, 1326507024
        %v794 = vsel %vm782, %v776, %v793
        %v795 = vsel %vm781, %v792, %v794
        %v796 = vshll.u32 %v756, 8
        %v797 = vmul.u32.u64.compose %v796, %v795
        %v798 = vextract.low.u32 %v797
        %v799 = vextract.high.u32 %v797
        %v800 = vmul.u32.u64.compose %v796, %v791
        %v801 = vextract.low.u32 %v800
        %v802 = vextract.high.u32 %v800
        %v803 = vmul.u32 %v796, %v787
        %v804 = vadd.s32 %v799, %v801
        %vm805 = vc.u32 %v799, %v801
        %v806 = vadd.s32 %v802, 1
        %v807 = vsel %vm805, %v806, %v802
        %v808 = vadd.s32 %v803, %v807
        %v809 = vadd.s32 %v808, 536870912
        %v810 = vshrl.u32 %v809, 30
        %v811 = vshll.u32 %v810, 30
        %v812 = vsub.s32 %v808, %v811
        %vm813 = vcmp.lt.s32.totalorder %v812, 0
        %v814 = vsub.s32 0, %v812
        %v815 = vsel %vm813, %v814, %v812
        %v816 = vclz %v815
        %v817 = vsub.s32 %v816, 2
        %vm818 = vcmp.gt.s32.totalorder 0, %v817
        %v819 = vsel %vm818, 0, %v817
        %v820 = vsub.s32 32, %v819
        %v821 = vshll.u32 %v812, %v819
        %v822 = vshrl.u32 %v804, %v820
        %v823 = vor.u32 %v821, %v822
        %v824 = vsub.s32 4294967266, %v819
        %v825 = vadd.s32 %v824, 127
        %v826 = vshll.u32 %v825, 23
        %v827 = vor.u32 4788187, %v826
        %v828 = vand.u32 2147483647, %v827
        %v830 = vcvt.s32.f32 %v823
        %v831 = vmul.f32 %v830, %v828
        %v832 = vxor.u32 %v831, 2147483648
        %v833 = vsel %vm750, %v832, %v831
        %v834 = vsub.s32 4, %v810
        %v835 = vsel %vm750, %v834, %v810
        %v836 = vsel %vm749, %v304, %v833
        %v837 = vsel %vm749, 0, %v835
        %v838 = vcosq.f32.pop %v836
        %v839 = vsinq.f32.pop %v836
        %vm840 = vweird.f32 %v304
        %v841 = vadd.s32 %v837, 3
        %v842 = vand.u32 %v841, 3
        %vm843 = vcmp.lt.s32.totalorder %v842, 2
        %vm844 = vcmp.eq.s32.totalorder %v842, 0
        %v845 = vxor.u32 %v839, 2147483648
        %v846 = vsel %vm844, %v838, %v845
        %vm847 = vcmp.eq.s32.totalorder %v842, 2
        %v848 = vxor.u32 %v838, 2147483648
        %v849 = vsel %vm847, %v848, %v839
        %v850 = vsel %vm843, %v846, %v849
        %v851 = vsel %vm840, nan, %v850
        %v852 = vand.u32 2147483647, %v305
        %vm853 = vcmp.le.f32.partialorder %v852, 0.7853982
        %vm854 = vcmp.lt.s32.totalorder %v305, 0
        %v855 = vand.u32 %v305, 2139095040
        %v856 = vshrl.u32 %v855, 23
        %v857 = vsub.s32 %v856, 127
        %v858 = vand.u32 2147483647, %v305
        %v859 = vand.u32 %v858, 8388607
        %v860 = vor.u32 %v859, 8388608
        %v861 = vsub.s32 0, %v860
        %v862 = vadd.s32 %v857, 1
        %vm863 = vcmp.gt.s32.totalorder %v862, 0
        %v864 = vsel %vm863, %v862, 0
        %v865 = vshrl.u32 %v864, 5
        %v866 = vand.u32 %v864, 31
        %v867 = vsub.s32 32, %v866
        %v868 = vshrl.u32 683565275, %v867
        %v869 = vshll.u32 683565275, %v866
        %v870 = vshrl.u32 2475754826, %v867
        %v871 = vor.u32 %v869, %v870
        %v872 = vshll.u32 2475754826, %v866
        %v873 = vshrl.u32 2131351028, %v867
        %v874 = vor.u32 %v872, %v873
        %v875 = vshll.u32 2131351028, %v866
        %v876 = vshrl.u32 2102212464, %v867
        %v877 = vor.u32 %v875, %v876
        %v878 = vshll.u32 2102212464, %v866
        %v879 = vshrl.u32 920167782, %v867
        %v880 = vor.u32 %v878, %v879
        %v881 = vshll.u32 920167782, %v866
        %v882 = vshrl.u32 1326507024, %v867
        %v883 = vor.u32 %v881, %v882
        %vm884 = vcmp.lt.s32.totalorder %v865, 1
        %vm885 = vcmp.lt.s32.totalorder %v865, 2
        %vm886 = vcmp.lt.s32.totalorder %v865, 3
        %vm887 = vcmp.lt.s32.totalorder %v865, 4
        %v888 = vsel %vm884, %v868, %v871
        %v889 = vsel %vm887, %v877, 2102212464
        %v890 = vsel %vm886, %v874, %v889
        %v891 = vsel %vm885, %v888, %v890
        %v892 = vsel %vm884, %v871, %v874
        %v893 = vsel %vm887, %v880, 920167782
        %v894 = vsel %vm886, %v877, %v893
        %v895 = vsel %vm885, %v892, %v894
        %v896 = vsel %vm884, %v874, %v877
        %v897 = vsel %vm887, %v883, 1326507024
        %v898 = vsel %vm886, %v880, %v897
        %v899 = vsel %vm885, %v896, %v898
        %v900 = vshll.u32 %v860, 8
        %v901 = vmul.u32.u64.compose %v900, %v899
        %v902 = vextract.low.u32 %v901
        %v903 = vextract.high.u32 %v901
        %v904 = vmul.u32.u64.compose %v900, %v895
        %v905 = vextract.low.u32 %v904
        %v906 = vextract.high.u32 %v904
        %v907 = vmul.u32 %v900, %v891
        %v908 = vadd.s32 %v903, %v905
        %vm909 = vc.u32 %v903, %v905
        %v910 = vadd.s32 %v906, 1
        %v911 = vsel %vm909, %v910, %v906
        %v912 = vadd.s32 %v907, %v911
        %v913 = vadd.s32 %v912, 536870912
        %v914 = vshrl.u32 %v913, 30
        %v915 = vshll.u32 %v914, 30
        %v916 = vsub.s32 %v912, %v915
        %vm917 = vcmp.lt.s32.totalorder %v916, 0
        %v918 = vsub.s32 0, %v916
        %v919 = vsel %vm917, %v918, %v916
        %v920 = vclz %v919
        %v921 = vsub.s32 %v920, 2
        %vm922 = vcmp.gt.s32.totalorder 0, %v921
        %v923 = vsel %vm922, 0, %v921
        %v924 = vsub.s32 32, %v923
        %v925 = vshll.u32 %v916, %v923
        %v926 = vshrl.u32 %v908, %v924
        %v927 = vor.u32 %v925, %v926
        %v928 = vsub.s32 4294967266, %v923
        %v929 = vadd.s32 %v928, 127
        %v930 = vshll.u32 %v929, 23
        %v931 = vor.u32 4788187, %v930
        %v932 = vand.u32 2147483647, %v931
        %v934 = vcvt.s32.f32 %v927
        %v935 = vmul.f32 %v934, %v932
        %v936 = vxor.u32 %v935, 2147483648
        %v937 = vsel %vm854, %v936, %v935
        %v938 = vsub.s32 4, %v914
        %v939 = vsel %vm854, %v938, %v914
        %v940 = vsel %vm853, %v305, %v937
        %v941 = vsel %vm853, 0, %v939
        %v942 = vcosq.f32.pop %v940
        %v943 = vsinq.f32.pop %v940
        %vm944 = vweird.f32 %v305
        %v945 = vadd.s32 %v941, 3
        %v946 = vand.u32 %v945, 3
        %vm947 = vcmp.lt.s32.totalorder %v946, 2
        %vm948 = vcmp.eq.s32.totalorder %v946, 0
        %v949 = vxor.u32 %v943, 2147483648
        %v950 = vsel %vm948, %v942, %v949
        %vm951 = vcmp.eq.s32.totalorder %v946, 2
        %v952 = vxor.u32 %v942, 2147483648
        %v953 = vsel %vm951, %v952, %v943
        %v954 = vsel %vm947, %v950, %v953
        %v955 = vsel %vm944, nan, %v954
        %v956 = vand.u32 2147483647, %v306
        %vm957 = vcmp.le.f32.partialorder %v956, 0.7853982
        %vm958 = vcmp.lt.s32.totalorder %v306, 0
        %v959 = vand.u32 %v306, 2139095040
        %v960 = vshrl.u32 %v959, 23
        %v961 = vsub.s32 %v960, 127
        %v962 = vand.u32 2147483647, %v306
        %v963 = vand.u32 %v962, 8388607
        %v964 = vor.u32 %v963, 8388608
        %v965 = vsub.s32 0, %v964
        %v966 = vadd.s32 %v961, 1
        %vm967 = vcmp.gt.s32.totalorder %v966, 0
        %v968 = vsel %vm967, %v966, 0
        %v969 = vshrl.u32 %v968, 5
        %v970 = vand.u32 %v968, 31
        %v971 = vsub.s32 32, %v970
        %v972 = vshrl.u32 683565275, %v971
        %v973 = vshll.u32 683565275, %v970
        %v974 = vshrl.u32 2475754826, %v971
        %v975 = vor.u32 %v973, %v974
        %v976 = vshll.u32 2475754826, %v970
        %v977 = vshrl.u32 2131351028, %v971
        %v978 = vor.u32 %v976, %v977
        %v979 = vshll.u32 2131351028, %v970
        %v980 = vshrl.u32 2102212464, %v971
        %v981 = vor.u32 %v979, %v980
        %v982 = vshll.u32 2102212464, %v970
        %v983 = vshrl.u32 920167782, %v971
        %v984 = vor.u32 %v982, %v983
        %v985 = vshll.u32 920167782, %v970
        %v986 = vshrl.u32 1326507024, %v971
        %v987 = vor.u32 %v985, %v986
        %vm988 = vcmp.lt.s32.totalorder %v969, 1
        %vm989 = vcmp.lt.s32.totalorder %v969, 2
        %vm990 = vcmp.lt.s32.totalorder %v969, 3
        %vm991 = vcmp.lt.s32.totalorder %v969, 4
        %v992 = vsel %vm988, %v972, %v975
        %v993 = vsel %vm991, %v981, 2102212464
        %v994 = vsel %vm990, %v978, %v993
        %v995 = vsel %vm989, %v992, %v994
        %v996 = vsel %vm988, %v975, %v978
        %v997 = vsel %vm991, %v984, 920167782
        %v998 = vsel %vm990, %v981, %v997
        %v999 = vsel %vm989, %v996, %v998
        %v1000 = vsel %vm988, %v978, %v981
        %v1001 = vsel %vm991, %v987, 1326507024
        %v1002 = vsel %vm990, %v984, %v1001
        %v1003 = vsel %vm989, %v1000, %v1002
        %v1004 = vshll.u32 %v964, 8
        %v1005 = vmul.u32.u64.compose %v1004, %v1003
        %v1006 = vextract.low.u32 %v1005
        %v1007 = vextract.high.u32 %v1005
        %v1008 = vmul.u32.u64.compose %v1004, %v999
        %v1009 = vextract.low.u32 %v1008
        %v1010 = vextract.high.u32 %v1008
        %v1011 = vmul.u32 %v1004, %v995
        %v1012 = vadd.s32 %v1007, %v1009
        %vm1013 = vc.u32 %v1007, %v1009
        %v1014 = vadd.s32 %v1010, 1
        %v1015 = vsel %vm1013, %v1014, %v1010
        %v1016 = vadd.s32 %v1011, %v1015
        %v1017 = vadd.s32 %v1016, 536870912
        %v1018 = vshrl.u32 %v1017, 30
        %v1019 = vshll.u32 %v1018, 30
        %v1020 = vsub.s32 %v1016, %v1019
        %vm1021 = vcmp.lt.s32.totalorder %v1020, 0
        %v1022 = vsub.s32 0, %v1020
        %v1023 = vsel %vm1021, %v1022, %v1020
        %v1024 = vclz %v1023
        %v1025 = vsub.s32 %v1024, 2
        %vm1026 = vcmp.gt.s32.totalorder 0, %v1025
        %v1027 = vsel %vm1026, 0, %v1025
        %v1028 = vsub.s32 32, %v1027
        %v1029 = vshll.u32 %v1020, %v1027
        %v1030 = vshrl.u32 %v1012, %v1028
        %v1031 = vor.u32 %v1029, %v1030
        %v1032 = vsub.s32 4294967266, %v1027
        %v1033 = vadd.s32 %v1032, 127
        %v1034 = vshll.u32 %v1033, 23
        %v1035 = vor.u32 4788187, %v1034
        %v1036 = vand.u32 2147483647, %v1035
        %v1038 = vcvt.s32.f32 %v1031
        %v1039 = vmul.f32 %v1038, %v1036
        %v1040 = vxor.u32 %v1039, 2147483648
        %v1041 = vsel %vm958, %v1040, %v1039
        %v1042 = vsub.s32 4, %v1018
        %v1043 = vsel %vm958, %v1042, %v1018
        %v1044 = vsel %vm957, %v306, %v1041
        %v1045 = vsel %vm957, 0, %v1043
        %v1046 = vcosq.f32.pop %v1044
        %v1047 = vsinq.f32.pop %v1044
        %vm1048 = vweird.f32 %v306
        %v1049 = vadd.s32 %v1045, 3
        %v1050 = vand.u32 %v1049, 3
        %vm1051 = vcmp.lt.s32.totalorder %v1050, 2
        %vm1052 = vcmp.eq.s32.totalorder %v1050, 0
        %v1053 = vxor.u32 %v1047, 2147483648
        %v1054 = vsel %vm1052, %v1046, %v1053
        %vm1055 = vcmp.eq.s32.totalorder %v1050, 2
        %v1056 = vxor.u32 %v1046, 2147483648
        %v1057 = vsel %vm1055, %v1056, %v1047
        %v1058 = vsel %vm1051, %v1054, %v1057
        %v1059 = vsel %vm1048, nan, %v1058
        %v1060 = vand.u32 2147483647, %v307
        %vm1061 = vcmp.le.f32.partialorder %v1060, 0.7853982
        %vm1062 = vcmp.lt.s32.totalorder %v307, 0
        %v1063 = vand.u32 %v307, 2139095040
        %v1064 = vshrl.u32 %v1063, 23
        %v1065 = vsub.s32 %v1064, 127
        %v1066 = vand.u32 2147483647, %v307
        %v1067 = vand.u32 %v1066, 8388607
        %v1068 = vor.u32 %v1067, 8388608
        %v1069 = vsub.s32 0, %v1068
        %v1070 = vadd.s32 %v1065, 1
        %vm1071 = vcmp.gt.s32.totalorder %v1070, 0
        %v1072 = vsel %vm1071, %v1070, 0
        %v1073 = vshrl.u32 %v1072, 5
        %v1074 = vand.u32 %v1072, 31
        %v1075 = vsub.s32 32, %v1074
        %v1076 = vshrl.u32 683565275, %v1075
        %v1077 = vshll.u32 683565275, %v1074
        %v1078 = vshrl.u32 2475754826, %v1075
        %v1079 = vor.u32 %v1077, %v1078
        %v1080 = vshll.u32 2475754826, %v1074
        %v1081 = vshrl.u32 2131351028, %v1075
        %v1082 = vor.u32 %v1080, %v1081
        %v1083 = vshll.u32 2131351028, %v1074
        %v1084 = vshrl.u32 2102212464, %v1075
        %v1085 = vor.u32 %v1083, %v1084
        %v1086 = vshll.u32 2102212464, %v1074
        %v1087 = vshrl.u32 920167782, %v1075
        %v1088 = vor.u32 %v1086, %v1087
        %v1089 = vshll.u32 920167782, %v1074
        %v1090 = vshrl.u32 1326507024, %v1075
        %v1091 = vor.u32 %v1089, %v1090
        %vm1092 = vcmp.lt.s32.totalorder %v1073, 1
        %vm1093 = vcmp.lt.s32.totalorder %v1073, 2
        %vm1094 = vcmp.lt.s32.totalorder %v1073, 3
        %vm1095 = vcmp.lt.s32.totalorder %v1073, 4
        %v1096 = vsel %vm1092, %v1076, %v1079
        %v1097 = vsel %vm1095, %v1085, 2102212464
        %v1098 = vsel %vm1094, %v1082, %v1097
        %v1099 = vsel %vm1093, %v1096, %v1098
        %v1100 = vsel %vm1092, %v1079, %v1082
        %v1101 = vsel %vm1095, %v1088, 920167782
        %v1102 = vsel %vm1094, %v1085, %v1101
        %v1103 = vsel %vm1093, %v1100, %v1102
        %v1104 = vsel %vm1092, %v1082, %v1085
        %v1105 = vsel %vm1095, %v1091, 1326507024
        %v1106 = vsel %vm1094, %v1088, %v1105
        %v1107 = vsel %vm1093, %v1104, %v1106
        %v1108 = vshll.u32 %v1068, 8
        %v1109 = vmul.u32.u64.compose %v1108, %v1107
        %v1110 = vextract.low.u32 %v1109
        %v1111 = vextract.high.u32 %v1109
        %v1112 = vmul.u32.u64.compose %v1108, %v1103
        %v1113 = vextract.low.u32 %v1112
        %v1114 = vextract.high.u32 %v1112
        %v1115 = vmul.u32 %v1108, %v1099
        %v1116 = vadd.s32 %v1111, %v1113
        %vm1117 = vc.u32 %v1111, %v1113
        %v1118 = vadd.s32 %v1114, 1
        %v1119 = vsel %vm1117, %v1118, %v1114
        %v1120 = vadd.s32 %v1115, %v1119
        %v1121 = vadd.s32 %v1120, 536870912
        %v1122 = vshrl.u32 %v1121, 30
        %v1123 = vshll.u32 %v1122, 30
        %v1124 = vsub.s32 %v1120, %v1123
        %vm1125 = vcmp.lt.s32.totalorder %v1124, 0
        %v1126 = vsub.s32 0, %v1124
        %v1127 = vsel %vm1125, %v1126, %v1124
        %v1128 = vclz %v1127
        %v1129 = vsub.s32 %v1128, 2
        %vm1130 = vcmp.gt.s32.totalorder 0, %v1129
        %v1131 = vsel %vm1130, 0, %v1129
        %v1132 = vsub.s32 32, %v1131
        %v1133 = vshll.u32 %v1124, %v1131
        %v1134 = vshrl.u32 %v1116, %v1132
        %v1135 = vor.u32 %v1133, %v1134
        %v1136 = vsub.s32 4294967266, %v1131
        %v1137 = vadd.s32 %v1136, 127
        %v1138 = vshll.u32 %v1137, 23
        %v1139 = vor.u32 4788187, %v1138
        %v1140 = vand.u32 2147483647, %v1139
        %v1142 = vcvt.s32.f32 %v1135
        %v1143 = vmul.f32 %v1142, %v1140
        %v1144 = vxor.u32 %v1143, 2147483648
        %v1145 = vsel %vm1062, %v1144, %v1143
        %v1146 = vsub.s32 4, %v1122
        %v1147 = vsel %vm1062, %v1146, %v1122
        %v1148 = vsel %vm1061, %v307, %v1145
        %v1149 = vsel %vm1061, 0, %v1147
        %v1150 = vcosq.f32.pop %v1148
        %v1151 = vsinq.f32.pop %v1148
        %vm1152 = vweird.f32 %v307
        %v1153 = vadd.s32 %v1149, 3
        %v1154 = vand.u32 %v1153, 3
        %vm1155 = vcmp.lt.s32.totalorder %v1154, 2
        %vm1156 = vcmp.eq.s32.totalorder %v1154, 0
        %v1157 = vxor.u32 %v1151, 2147483648
        %v1158 = vsel %vm1156, %v1150, %v1157
        %vm1159 = vcmp.eq.s32.totalorder %v1154, 2
        %v1160 = vxor.u32 %v1150, 2147483648
        %v1161 = vsel %vm1159, %v1160, %v1151
        %v1162 = vsel %vm1155, %v1158, %v1161
        %v1163 = vsel %vm1152, nan, %v1162
        %v1164 = vand.u32 2147483647, %v308
        %vm1165 = vcmp.le.f32.partialorder %v1164, 0.7853982
        %vm1166 = vcmp.lt.s32.totalorder %v308, 0
        %v1167 = vand.u32 %v308, 2139095040
        %v1168 = vshrl.u32 %v1167, 23
        %v1169 = vsub.s32 %v1168, 127
        %v1170 = vand.u32 2147483647, %v308
        %v1171 = vand.u32 %v1170, 8388607
        %v1172 = vor.u32 %v1171, 8388608
        %v1173 = vsub.s32 0, %v1172
        %v1174 = vadd.s32 %v1169, 1
        %vm1175 = vcmp.gt.s32.totalorder %v1174, 0
        %v1176 = vsel %vm1175, %v1174, 0
        %v1177 = vshrl.u32 %v1176, 5
        %v1178 = vand.u32 %v1176, 31
        %v1179 = vsub.s32 32, %v1178
        %v1180 = vshrl.u32 683565275, %v1179
        %v1181 = vshll.u32 683565275, %v1178
        %v1182 = vshrl.u32 2475754826, %v1179
        %v1183 = vor.u32 %v1181, %v1182
        %v1184 = vshll.u32 2475754826, %v1178
        %v1185 = vshrl.u32 2131351028, %v1179
        %v1186 = vor.u32 %v1184, %v1185
        %v1187 = vshll.u32 2131351028, %v1178
        %v1188 = vshrl.u32 2102212464, %v1179
        %v1189 = vor.u32 %v1187, %v1188
        %v1190 = vshll.u32 2102212464, %v1178
        %v1191 = vshrl.u32 920167782, %v1179
        %v1192 = vor.u32 %v1190, %v1191
        %v1193 = vshll.u32 920167782, %v1178
        %v1194 = vshrl.u32 1326507024, %v1179
        %v1195 = vor.u32 %v1193, %v1194
        %vm1196 = vcmp.lt.s32.totalorder %v1177, 1
        %vm1197 = vcmp.lt.s32.totalorder %v1177, 2
        %vm1198 = vcmp.lt.s32.totalorder %v1177, 3
        %vm1199 = vcmp.lt.s32.totalorder %v1177, 4
        %v1200 = vsel %vm1196, %v1180, %v1183
        %v1201 = vsel %vm1199, %v1189, 2102212464
        %v1202 = vsel %vm1198, %v1186, %v1201
        %v1203 = vsel %vm1197, %v1200, %v1202
        %v1204 = vsel %vm1196, %v1183, %v1186
        %v1205 = vsel %vm1199, %v1192, 920167782
        %v1206 = vsel %vm1198, %v1189, %v1205
        %v1207 = vsel %vm1197, %v1204, %v1206
        %v1208 = vsel %vm1196, %v1186, %v1189
        %v1209 = vsel %vm1199, %v1195, 1326507024
        %v1210 = vsel %vm1198, %v1192, %v1209
        %v1211 = vsel %vm1197, %v1208, %v1210
        %v1212 = vshll.u32 %v1172, 8
        %v1213 = vmul.u32.u64.compose %v1212, %v1211
        %v1214 = vextract.low.u32 %v1213
        %v1215 = vextract.high.u32 %v1213
        %v1216 = vmul.u32.u64.compose %v1212, %v1207
        %v1217 = vextract.low.u32 %v1216
        %v1218 = vextract.high.u32 %v1216
        %v1219 = vmul.u32 %v1212, %v1203
        %v1220 = vadd.s32 %v1215, %v1217
        %vm1221 = vc.u32 %v1215, %v1217
        %v1222 = vadd.s32 %v1218, 1
        %v1223 = vsel %vm1221, %v1222, %v1218
        %v1224 = vadd.s32 %v1219, %v1223
        %v1225 = vadd.s32 %v1224, 536870912
        %v1226 = vshrl.u32 %v1225, 30
        %v1227 = vshll.u32 %v1226, 30
        %v1228 = vsub.s32 %v1224, %v1227
        %vm1229 = vcmp.lt.s32.totalorder %v1228, 0
        %v1230 = vsub.s32 0, %v1228
        %v1231 = vsel %vm1229, %v1230, %v1228
        %v1232 = vclz %v1231
        %v1233 = vsub.s32 %v1232, 2
        %vm1234 = vcmp.gt.s32.totalorder 0, %v1233
        %v1235 = vsel %vm1234, 0, %v1233
        %v1236 = vsub.s32 32, %v1235
        %v1237 = vshll.u32 %v1228, %v1235
        %v1238 = vshrl.u32 %v1220, %v1236
        %v1239 = vor.u32 %v1237, %v1238
        %v1240 = vsub.s32 4294967266, %v1235
        %v1241 = vadd.s32 %v1240, 127
        %v1242 = vshll.u32 %v1241, 23
        %v1243 = vor.u32 4788187, %v1242
        %v1244 = vand.u32 2147483647, %v1243
        %v1246 = vcvt.s32.f32 %v1239
        %v1247 = vmul.f32 %v1246, %v1244
        %v1248 = vxor.u32 %v1247, 2147483648
        %v1249 = vsel %vm1166, %v1248, %v1247
        %v1250 = vsub.s32 4, %v1226
        %v1251 = vsel %vm1166, %v1250, %v1226
        %v1252 = vsel %vm1165, %v308, %v1249
        %v1253 = vsel %vm1165, 0, %v1251
        %v1254 = vcosq.f32.pop %v1252
        %v1255 = vsinq.f32.pop %v1252
        %vm1256 = vweird.f32 %v308
        %v1257 = vadd.s32 %v1253, 3
        %v1258 = vand.u32 %v1257, 3
        %vm1259 = vcmp.lt.s32.totalorder %v1258, 2
        %vm1260 = vcmp.eq.s32.totalorder %v1258, 0
        %v1261 = vxor.u32 %v1255, 2147483648
        %v1262 = vsel %vm1260, %v1254, %v1261
        %vm1263 = vcmp.eq.s32.totalorder %v1258, 2
        %v1264 = vxor.u32 %v1254, 2147483648
        %v1265 = vsel %vm1263, %v1264, %v1255
        %v1266 = vsel %vm1259, %v1262, %v1265
        %v1267 = vsel %vm1256, nan, %v1266
        %v1268 = vand.u32 2147483647, %v309
        %vm1269 = vcmp.le.f32.partialorder %v1268, 0.7853982
        %vm1270 = vcmp.lt.s32.totalorder %v309, 0
        %v1271 = vand.u32 %v309, 2139095040
        %v1272 = vshrl.u32 %v1271, 23
        %v1273 = vsub.s32 %v1272, 127
        %v1274 = vand.u32 2147483647, %v309
        %v1275 = vand.u32 %v1274, 8388607
        %v1276 = vor.u32 %v1275, 8388608
        %v1277 = vsub.s32 0, %v1276
        %v1278 = vadd.s32 %v1273, 1
        %vm1279 = vcmp.gt.s32.totalorder %v1278, 0
        %v1280 = vsel %vm1279, %v1278, 0
        %v1281 = vshrl.u32 %v1280, 5
        %v1282 = vand.u32 %v1280, 31
        %v1283 = vsub.s32 32, %v1282
        %v1284 = vshrl.u32 683565275, %v1283
        %v1285 = vshll.u32 683565275, %v1282
        %v1286 = vshrl.u32 2475754826, %v1283
        %v1287 = vor.u32 %v1285, %v1286
        %v1288 = vshll.u32 2475754826, %v1282
        %v1289 = vshrl.u32 2131351028, %v1283
        %v1290 = vor.u32 %v1288, %v1289
        %v1291 = vshll.u32 2131351028, %v1282
        %v1292 = vshrl.u32 2102212464, %v1283
        %v1293 = vor.u32 %v1291, %v1292
        %v1294 = vshll.u32 2102212464, %v1282
        %v1295 = vshrl.u32 920167782, %v1283
        %v1296 = vor.u32 %v1294, %v1295
        %v1297 = vshll.u32 920167782, %v1282
        %v1298 = vshrl.u32 1326507024, %v1283
        %v1299 = vor.u32 %v1297, %v1298
        %vm1300 = vcmp.lt.s32.totalorder %v1281, 1
        %vm1301 = vcmp.lt.s32.totalorder %v1281, 2
        %vm1302 = vcmp.lt.s32.totalorder %v1281, 3
        %vm1303 = vcmp.lt.s32.totalorder %v1281, 4
        %v1304 = vsel %vm1300, %v1284, %v1287
        %v1305 = vsel %vm1303, %v1293, 2102212464
        %v1306 = vsel %vm1302, %v1290, %v1305
        %v1307 = vsel %vm1301, %v1304, %v1306
        %v1308 = vsel %vm1300, %v1287, %v1290
        %v1309 = vsel %vm1303, %v1296, 920167782
        %v1310 = vsel %vm1302, %v1293, %v1309
        %v1311 = vsel %vm1301, %v1308, %v1310
        %v1312 = vsel %vm1300, %v1290, %v1293
        %v1313 = vsel %vm1303, %v1299, 1326507024
        %v1314 = vsel %vm1302, %v1296, %v1313
        %v1315 = vsel %vm1301, %v1312, %v1314
        %v1316 = vshll.u32 %v1276, 8
        %v1317 = vmul.u32.u64.compose %v1316, %v1315
        %v1318 = vextract.low.u32 %v1317
        %v1319 = vextract.high.u32 %v1317
        %v1320 = vmul.u32.u64.compose %v1316, %v1311
        %v1321 = vextract.low.u32 %v1320
        %v1322 = vextract.high.u32 %v1320
        %v1323 = vmul.u32 %v1316, %v1307
        %v1324 = vadd.s32 %v1319, %v1321
        %vm1325 = vc.u32 %v1319, %v1321
        %v1326 = vadd.s32 %v1322, 1
        %v1327 = vsel %vm1325, %v1326, %v1322
        %v1328 = vadd.s32 %v1323, %v1327
        %v1329 = vadd.s32 %v1328, 536870912
        %v1330 = vshrl.u32 %v1329, 30
        %v1331 = vshll.u32 %v1330, 30
        %v1332 = vsub.s32 %v1328, %v1331
        %vm1333 = vcmp.lt.s32.totalorder %v1332, 0
        %v1334 = vsub.s32 0, %v1332
        %v1335 = vsel %vm1333, %v1334, %v1332
        %v1336 = vclz %v1335
        %v1337 = vsub.s32 %v1336, 2
        %vm1338 = vcmp.gt.s32.totalorder 0, %v1337
        %v1339 = vsel %vm1338, 0, %v1337
        %v1340 = vsub.s32 32, %v1339
        %v1341 = vshll.u32 %v1332, %v1339
        %v1342 = vshrl.u32 %v1324, %v1340
        %v1343 = vor.u32 %v1341, %v1342
        %v1344 = vsub.s32 4294967266, %v1339
        %v1345 = vadd.s32 %v1344, 127
        %v1346 = vshll.u32 %v1345, 23
        %v1347 = vor.u32 4788187, %v1346
        %v1348 = vand.u32 2147483647, %v1347
        %v1350 = vcvt.s32.f32 %v1343
        %v1351 = vmul.f32 %v1350, %v1348
        %v1352 = vxor.u32 %v1351, 2147483648
        %v1353 = vsel %vm1270, %v1352, %v1351
        %v1354 = vsub.s32 4, %v1330
        %v1355 = vsel %vm1270, %v1354, %v1330
        %v1356 = vsel %vm1269, %v309, %v1353
        %v1357 = vsel %vm1269, 0, %v1355
        %v1358 = vcosq.f32.pop %v1356
        %v1359 = vsinq.f32.pop %v1356
        %vm1360 = vweird.f32 %v309
        %v1361 = vadd.s32 %v1357, 3
        %v1362 = vand.u32 %v1361, 3
        %vm1363 = vcmp.lt.s32.totalorder %v1362, 2
        %vm1364 = vcmp.eq.s32.totalorder %v1362, 0
        %v1365 = vxor.u32 %v1359, 2147483648
        %v1366 = vsel %vm1364, %v1358, %v1365
        %vm1367 = vcmp.eq.s32.totalorder %v1362, 2
        %v1368 = vxor.u32 %v1358, 2147483648
        %v1369 = vsel %vm1367, %v1368, %v1359
        %v1370 = vsel %vm1363, %v1366, %v1369
        %v1371 = vsel %vm1360, nan, %v1370
        %v1372 = vand.u32 2147483647, %v310
        %vm1373 = vcmp.le.f32.partialorder %v1372, 0.7853982
        %vm1374 = vcmp.lt.s32.totalorder %v310, 0
        %v1375 = vand.u32 %v310, 2139095040
        %v1376 = vshrl.u32 %v1375, 23
        %v1377 = vsub.s32 %v1376, 127
        %v1378 = vand.u32 2147483647, %v310
        %v1379 = vand.u32 %v1378, 8388607
        %v1380 = vor.u32 %v1379, 8388608
        %v1381 = vsub.s32 0, %v1380
        %v1382 = vadd.s32 %v1377, 1
        %vm1383 = vcmp.gt.s32.totalorder %v1382, 0
        %v1384 = vsel %vm1383, %v1382, 0
        %v1385 = vshrl.u32 %v1384, 5
        %v1386 = vand.u32 %v1384, 31
        %v1387 = vsub.s32 32, %v1386
        %v1388 = vshrl.u32 683565275, %v1387
        %v1389 = vshll.u32 683565275, %v1386
        %v1390 = vshrl.u32 2475754826, %v1387
        %v1391 = vor.u32 %v1389, %v1390
        %v1392 = vshll.u32 2475754826, %v1386
        %v1393 = vshrl.u32 2131351028, %v1387
        %v1394 = vor.u32 %v1392, %v1393
        %v1395 = vshll.u32 2131351028, %v1386
        %v1396 = vshrl.u32 2102212464, %v1387
        %v1397 = vor.u32 %v1395, %v1396
        %v1398 = vshll.u32 2102212464, %v1386
        %v1399 = vshrl.u32 920167782, %v1387
        %v1400 = vor.u32 %v1398, %v1399
        %v1401 = vshll.u32 920167782, %v1386
        %v1402 = vshrl.u32 1326507024, %v1387
        %v1403 = vor.u32 %v1401, %v1402
        %vm1404 = vcmp.lt.s32.totalorder %v1385, 1
        %vm1405 = vcmp.lt.s32.totalorder %v1385, 2
        %vm1406 = vcmp.lt.s32.totalorder %v1385, 3
        %vm1407 = vcmp.lt.s32.totalorder %v1385, 4
        %v1408 = vsel %vm1404, %v1388, %v1391
        %v1409 = vsel %vm1407, %v1397, 2102212464
        %v1410 = vsel %vm1406, %v1394, %v1409
        %v1411 = vsel %vm1405, %v1408, %v1410
        %v1412 = vsel %vm1404, %v1391, %v1394
        %v1413 = vsel %vm1407, %v1400, 920167782
        %v1414 = vsel %vm1406, %v1397, %v1413
        %v1415 = vsel %vm1405, %v1412, %v1414
        %v1416 = vsel %vm1404, %v1394, %v1397
        %v1417 = vsel %vm1407, %v1403, 1326507024
        %v1418 = vsel %vm1406, %v1400, %v1417
        %v1419 = vsel %vm1405, %v1416, %v1418
        %v1420 = vshll.u32 %v1380, 8
        %v1421 = vmul.u32.u64.compose %v1420, %v1419
        %v1422 = vextract.low.u32 %v1421
        %v1423 = vextract.high.u32 %v1421
        %v1424 = vmul.u32.u64.compose %v1420, %v1415
        %v1425 = vextract.low.u32 %v1424
        %v1426 = vextract.high.u32 %v1424
        %v1427 = vmul.u32 %v1420, %v1411
        %v1428 = vadd.s32 %v1423, %v1425
        %vm1429 = vc.u32 %v1423, %v1425
        %v1430 = vadd.s32 %v1426, 1
        %v1431 = vsel %vm1429, %v1430, %v1426
        %v1432 = vadd.s32 %v1427, %v1431
        %v1433 = vadd.s32 %v1432, 536870912
        %v1434 = vshrl.u32 %v1433, 30
        %v1435 = vshll.u32 %v1434, 30
        %v1436 = vsub.s32 %v1432, %v1435
        %vm1437 = vcmp.lt.s32.totalorder %v1436, 0
        %v1438 = vsub.s32 0, %v1436
        %v1439 = vsel %vm1437, %v1438, %v1436
        %v1440 = vclz %v1439
        %v1441 = vsub.s32 %v1440, 2
        %vm1442 = vcmp.gt.s32.totalorder 0, %v1441
        %v1443 = vsel %vm1442, 0, %v1441
        %v1444 = vsub.s32 32, %v1443
        %v1445 = vshll.u32 %v1436, %v1443
        %v1446 = vshrl.u32 %v1428, %v1444
        %v1447 = vor.u32 %v1445, %v1446
        %v1448 = vsub.s32 4294967266, %v1443
        %v1449 = vadd.s32 %v1448, 127
        %v1450 = vshll.u32 %v1449, 23
        %v1451 = vor.u32 4788187, %v1450
        %v1452 = vand.u32 2147483647, %v1451
        %v1454 = vcvt.s32.f32 %v1447
        %v1455 = vmul.f32 %v1454, %v1452
        %v1456 = vxor.u32 %v1455, 2147483648
        %v1457 = vsel %vm1374, %v1456, %v1455
        %v1458 = vsub.s32 4, %v1434
        %v1459 = vsel %vm1374, %v1458, %v1434
        %v1460 = vsel %vm1373, %v310, %v1457
        %v1461 = vsel %vm1373, 0, %v1459
        %v1462 = vcosq.f32.pop %v1460
        %v1463 = vsinq.f32.pop %v1460
        %vm1464 = vweird.f32 %v310
        %v1465 = vadd.s32 %v1461, 3
        %v1466 = vand.u32 %v1465, 3
        %vm1467 = vcmp.lt.s32.totalorder %v1466, 2
        %vm1468 = vcmp.eq.s32.totalorder %v1466, 0
        %v1469 = vxor.u32 %v1463, 2147483648
        %v1470 = vsel %vm1468, %v1462, %v1469
        %vm1471 = vcmp.eq.s32.totalorder %v1466, 2
        %v1472 = vxor.u32 %v1462, 2147483648
        %v1473 = vsel %vm1471, %v1472, %v1463
        %v1474 = vsel %vm1467, %v1470, %v1473
        %v1475 = vsel %vm1464, nan, %v1474
        %v1476 = vand.u32 2147483647, %v311
        %vm1477 = vcmp.le.f32.partialorder %v1476, 0.7853982
        %vm1478 = vcmp.lt.s32.totalorder %v311, 0
        %v1479 = vand.u32 %v311, 2139095040
        %v1480 = vshrl.u32 %v1479, 23
        %v1481 = vsub.s32 %v1480, 127
        %v1482 = vand.u32 2147483647, %v311
        %v1483 = vand.u32 %v1482, 8388607
        %v1484 = vor.u32 %v1483, 8388608
        %v1485 = vsub.s32 0, %v1484
        %v1486 = vadd.s32 %v1481, 1
        %vm1487 = vcmp.gt.s32.totalorder %v1486, 0
        %v1488 = vsel %vm1487, %v1486, 0
        %v1489 = vshrl.u32 %v1488, 5
        %v1490 = vand.u32 %v1488, 31
        %v1491 = vsub.s32 32, %v1490
        %v1492 = vshrl.u32 683565275, %v1491
        %v1493 = vshll.u32 683565275, %v1490
        %v1494 = vshrl.u32 2475754826, %v1491
        %v1495 = vor.u32 %v1493, %v1494
        %v1496 = vshll.u32 2475754826, %v1490
        %v1497 = vshrl.u32 2131351028, %v1491
        %v1498 = vor.u32 %v1496, %v1497
        %v1499 = vshll.u32 2131351028, %v1490
        %v1500 = vshrl.u32 2102212464, %v1491
        %v1501 = vor.u32 %v1499, %v1500
        %v1502 = vshll.u32 2102212464, %v1490
        %v1503 = vshrl.u32 920167782, %v1491
        %v1504 = vor.u32 %v1502, %v1503
        %v1505 = vshll.u32 920167782, %v1490
        %v1506 = vshrl.u32 1326507024, %v1491
        %v1507 = vor.u32 %v1505, %v1506
        %vm1508 = vcmp.lt.s32.totalorder %v1489, 1
        %vm1509 = vcmp.lt.s32.totalorder %v1489, 2
        %vm1510 = vcmp.lt.s32.totalorder %v1489, 3
        %vm1511 = vcmp.lt.s32.totalorder %v1489, 4
        %v1512 = vsel %vm1508, %v1492, %v1495
        %v1513 = vsel %vm1511, %v1501, 2102212464
        %v1514 = vsel %vm1510, %v1498, %v1513
        %v1515 = vsel %vm1509, %v1512, %v1514
        %v1516 = vsel %vm1508, %v1495, %v1498
        %v1517 = vsel %vm1511, %v1504, 920167782
        %v1518 = vsel %vm1510, %v1501, %v1517
        %v1519 = vsel %vm1509, %v1516, %v1518
        %v1520 = vsel %vm1508, %v1498, %v1501
        %v1521 = vsel %vm1511, %v1507, 1326507024
        %v1522 = vsel %vm1510, %v1504, %v1521
        %v1523 = vsel %vm1509, %v1520, %v1522
        %v1524 = vshll.u32 %v1484, 8
        %v1525 = vmul.u32.u64.compose %v1524, %v1523
        %v1526 = vextract.low.u32 %v1525
        %v1527 = vextract.high.u32 %v1525
        %v1528 = vmul.u32.u64.compose %v1524, %v1519
        %v1529 = vextract.low.u32 %v1528
        %v1530 = vextract.high.u32 %v1528
        %v1531 = vmul.u32 %v1524, %v1515
        %v1532 = vadd.s32 %v1527, %v1529
        %vm1533 = vc.u32 %v1527, %v1529
        %v1534 = vadd.s32 %v1530, 1
        %v1535 = vsel %vm1533, %v1534, %v1530
        %v1536 = vadd.s32 %v1531, %v1535
        %v1537 = vadd.s32 %v1536, 536870912
        %v1538 = vshrl.u32 %v1537, 30
        %v1539 = vshll.u32 %v1538, 30
        %v1540 = vsub.s32 %v1536, %v1539
        %vm1541 = vcmp.lt.s32.totalorder %v1540, 0
        %v1542 = vsub.s32 0, %v1540
        %v1543 = vsel %vm1541, %v1542, %v1540
        %v1544 = vclz %v1543
        %v1545 = vsub.s32 %v1544, 2
        %vm1546 = vcmp.gt.s32.totalorder 0, %v1545
        %v1547 = vsel %vm1546, 0, %v1545
        %v1548 = vsub.s32 32, %v1547
        %v1549 = vshll.u32 %v1540, %v1547
        %v1550 = vshrl.u32 %v1532, %v1548
        %v1551 = vor.u32 %v1549, %v1550
        %v1552 = vsub.s32 4294967266, %v1547
        %v1553 = vadd.s32 %v1552, 127
        %v1554 = vshll.u32 %v1553, 23
        %v1555 = vor.u32 4788187, %v1554
        %v1556 = vand.u32 2147483647, %v1555
        %v1558 = vcvt.s32.f32 %v1551
        %v1559 = vmul.f32 %v1558, %v1556
        %v1560 = vxor.u32 %v1559, 2147483648
        %v1561 = vsel %vm1478, %v1560, %v1559
        %v1562 = vsub.s32 4, %v1538
        %v1563 = vsel %vm1478, %v1562, %v1538
        %v1564 = vsel %vm1477, %v311, %v1561
        %v1565 = vsel %vm1477, 0, %v1563
        %v1566 = vcosq.f32.pop %v1564
        %v1567 = vsinq.f32.pop %v1564
        %vm1568 = vweird.f32 %v311
        %v1569 = vadd.s32 %v1565, 3
        %v1570 = vand.u32 %v1569, 3
        %vm1571 = vcmp.lt.s32.totalorder %v1570, 2
        %vm1572 = vcmp.eq.s32.totalorder %v1570, 0
        %v1573 = vxor.u32 %v1567, 2147483648
        %v1574 = vsel %vm1572, %v1566, %v1573
        %vm1575 = vcmp.eq.s32.totalorder %v1570, 2
        %v1576 = vxor.u32 %v1566, 2147483648
        %v1577 = vsel %vm1575, %v1576, %v1567
        %v1578 = vsel %vm1571, %v1574, %v1577
        %v1579 = vsel %vm1568, nan, %v1578
        %v1580 = vand.u32 2147483647, %v312
        %vm1581 = vcmp.le.f32.partialorder %v1580, 0.7853982
        %vm1582 = vcmp.lt.s32.totalorder %v312, 0
        %v1583 = vand.u32 %v312, 2139095040
        %v1584 = vshrl.u32 %v1583, 23
        %v1585 = vsub.s32 %v1584, 127
        %v1586 = vand.u32 2147483647, %v312
        %v1587 = vand.u32 %v1586, 8388607
        %v1588 = vor.u32 %v1587, 8388608
        %v1589 = vsub.s32 0, %v1588
        %v1590 = vadd.s32 %v1585, 1
        %vm1591 = vcmp.gt.s32.totalorder %v1590, 0
        %v1592 = vsel %vm1591, %v1590, 0
        %v1593 = vshrl.u32 %v1592, 5
        %v1594 = vand.u32 %v1592, 31
        %v1595 = vsub.s32 32, %v1594
        %v1596 = vshrl.u32 683565275, %v1595
        %v1597 = vshll.u32 683565275, %v1594
        %v1598 = vshrl.u32 2475754826, %v1595
        %v1599 = vor.u32 %v1597, %v1598
        %v1600 = vshll.u32 2475754826, %v1594
        %v1601 = vshrl.u32 2131351028, %v1595
        %v1602 = vor.u32 %v1600, %v1601
        %v1603 = vshll.u32 2131351028, %v1594
        %v1604 = vshrl.u32 2102212464, %v1595
        %v1605 = vor.u32 %v1603, %v1604
        %v1606 = vshll.u32 2102212464, %v1594
        %v1607 = vshrl.u32 920167782, %v1595
        %v1608 = vor.u32 %v1606, %v1607
        %v1609 = vshll.u32 920167782, %v1594
        %v1610 = vshrl.u32 1326507024, %v1595
        %v1611 = vor.u32 %v1609, %v1610
        %vm1612 = vcmp.lt.s32.totalorder %v1593, 1
        %vm1613 = vcmp.lt.s32.totalorder %v1593, 2
        %vm1614 = vcmp.lt.s32.totalorder %v1593, 3
        %vm1615 = vcmp.lt.s32.totalorder %v1593, 4
        %v1616 = vsel %vm1612, %v1596, %v1599
        %v1617 = vsel %vm1615, %v1605, 2102212464
        %v1618 = vsel %vm1614, %v1602, %v1617
        %v1619 = vsel %vm1613, %v1616, %v1618
        %v1620 = vsel %vm1612, %v1599, %v1602
        %v1621 = vsel %vm1615, %v1608, 920167782
        %v1622 = vsel %vm1614, %v1605, %v1621
        %v1623 = vsel %vm1613, %v1620, %v1622
        %v1624 = vsel %vm1612, %v1602, %v1605
        %v1625 = vsel %vm1615, %v1611, 1326507024
        %v1626 = vsel %vm1614, %v1608, %v1625
        %v1627 = vsel %vm1613, %v1624, %v1626
        %v1628 = vshll.u32 %v1588, 8
        %v1629 = vmul.u32.u64.compose %v1628, %v1627
        %v1630 = vextract.low.u32 %v1629
        %v1631 = vextract.high.u32 %v1629
        %v1632 = vmul.u32.u64.compose %v1628, %v1623
        %v1633 = vextract.low.u32 %v1632
        %v1634 = vextract.high.u32 %v1632
        %v1635 = vmul.u32 %v1628, %v1619
        %v1636 = vadd.s32 %v1631, %v1633
        %vm1637 = vc.u32 %v1631, %v1633
        %v1638 = vadd.s32 %v1634, 1
        %v1639 = vsel %vm1637, %v1638, %v1634
        %v1640 = vadd.s32 %v1635, %v1639
        %v1641 = vadd.s32 %v1640, 536870912
        %v1642 = vshrl.u32 %v1641, 30
        %v1643 = vshll.u32 %v1642, 30
        %v1644 = vsub.s32 %v1640, %v1643
        %vm1645 = vcmp.lt.s32.totalorder %v1644, 0
        %v1646 = vsub.s32 0, %v1644
        %v1647 = vsel %vm1645, %v1646, %v1644
        %v1648 = vclz %v1647
        %v1649 = vsub.s32 %v1648, 2
        %vm1650 = vcmp.gt.s32.totalorder 0, %v1649
        %v1651 = vsel %vm1650, 0, %v1649
        %v1652 = vsub.s32 32, %v1651
        %v1653 = vshll.u32 %v1644, %v1651
        %v1654 = vshrl.u32 %v1636, %v1652
        %v1655 = vor.u32 %v1653, %v1654
        %v1656 = vsub.s32 4294967266, %v1651
        %v1657 = vadd.s32 %v1656, 127
        %v1658 = vshll.u32 %v1657, 23
        %v1659 = vor.u32 4788187, %v1658
        %v1660 = vand.u32 2147483647, %v1659
        %v1662 = vcvt.s32.f32 %v1655
        %v1663 = vmul.f32 %v1662, %v1660
        %v1664 = vxor.u32 %v1663, 2147483648
        %v1665 = vsel %vm1582, %v1664, %v1663
        %v1666 = vsub.s32 4, %v1642
        %v1667 = vsel %vm1582, %v1666, %v1642
        %v1668 = vsel %vm1581, %v312, %v1665
        %v1669 = vsel %vm1581, 0, %v1667
        %v1670 = vcosq.f32.pop %v1668
        %v1671 = vsinq.f32.pop %v1668
        %vm1672 = vweird.f32 %v312
        %v1673 = vadd.s32 %v1669, 3
        %v1674 = vand.u32 %v1673, 3
        %vm1675 = vcmp.lt.s32.totalorder %v1674, 2
        %vm1676 = vcmp.eq.s32.totalorder %v1674, 0
        %v1677 = vxor.u32 %v1671, 2147483648
        %v1678 = vsel %vm1676, %v1670, %v1677
        %vm1679 = vcmp.eq.s32.totalorder %v1674, 2
        %v1680 = vxor.u32 %v1670, 2147483648
        %v1681 = vsel %vm1679, %v1680, %v1671
        %v1682 = vsel %vm1675, %v1678, %v1681
        %v1683 = vsel %vm1672, nan, %v1682
        %v1684 = vand.u32 2147483647, %v313
        %vm1685 = vcmp.le.f32.partialorder %v1684, 0.7853982
        %vm1686 = vcmp.lt.s32.totalorder %v313, 0
        %v1687 = vand.u32 %v313, 2139095040
        %v1688 = vshrl.u32 %v1687, 23
        %v1689 = vsub.s32 %v1688, 127
        %v1690 = vand.u32 2147483647, %v313
        %v1691 = vand.u32 %v1690, 8388607
        %v1692 = vor.u32 %v1691, 8388608
        %v1693 = vsub.s32 0, %v1692
        %v1694 = vadd.s32 %v1689, 1
        %vm1695 = vcmp.gt.s32.totalorder %v1694, 0
        %v1696 = vsel %vm1695, %v1694, 0
        %v1697 = vshrl.u32 %v1696, 5
        %v1698 = vand.u32 %v1696, 31
        %v1699 = vsub.s32 32, %v1698
        %v1700 = vshrl.u32 683565275, %v1699
        %v1701 = vshll.u32 683565275, %v1698
        %v1702 = vshrl.u32 2475754826, %v1699
        %v1703 = vor.u32 %v1701, %v1702
        %v1704 = vshll.u32 2475754826, %v1698
        %v1705 = vshrl.u32 2131351028, %v1699
        %v1706 = vor.u32 %v1704, %v1705
        %v1707 = vshll.u32 2131351028, %v1698
        %v1708 = vshrl.u32 2102212464, %v1699
        %v1709 = vor.u32 %v1707, %v1708
        %v1710 = vshll.u32 2102212464, %v1698
        %v1711 = vshrl.u32 920167782, %v1699
        %v1712 = vor.u32 %v1710, %v1711
        %v1713 = vshll.u32 920167782, %v1698
        %v1714 = vshrl.u32 1326507024, %v1699
        %v1715 = vor.u32 %v1713, %v1714
        %vm1716 = vcmp.lt.s32.totalorder %v1697, 1
        %vm1717 = vcmp.lt.s32.totalorder %v1697, 2
        %vm1718 = vcmp.lt.s32.totalorder %v1697, 3
        %vm1719 = vcmp.lt.s32.totalorder %v1697, 4
        %v1720 = vsel %vm1716, %v1700, %v1703
        %v1721 = vsel %vm1719, %v1709, 2102212464
        %v1722 = vsel %vm1718, %v1706, %v1721
        %v1723 = vsel %vm1717, %v1720, %v1722
        %v1724 = vsel %vm1716, %v1703, %v1706
        %v1725 = vsel %vm1719, %v1712, 920167782
        %v1726 = vsel %vm1718, %v1709, %v1725
        %v1727 = vsel %vm1717, %v1724, %v1726
        %v1728 = vsel %vm1716, %v1706, %v1709
        %v1729 = vsel %vm1719, %v1715, 1326507024
        %v1730 = vsel %vm1718, %v1712, %v1729
        %v1731 = vsel %vm1717, %v1728, %v1730
        %v1732 = vshll.u32 %v1692, 8
        %v1733 = vmul.u32.u64.compose %v1732, %v1731
        %v1734 = vextract.low.u32 %v1733
        %v1735 = vextract.high.u32 %v1733
        %v1736 = vmul.u32.u64.compose %v1732, %v1727
        %v1737 = vextract.low.u32 %v1736
        %v1738 = vextract.high.u32 %v1736
        %v1739 = vmul.u32 %v1732, %v1723
        %v1740 = vadd.s32 %v1735, %v1737
        %vm1741 = vc.u32 %v1735, %v1737
        %v1742 = vadd.s32 %v1738, 1
        %v1743 = vsel %vm1741, %v1742, %v1738
        %v1744 = vadd.s32 %v1739, %v1743
        %v1745 = vadd.s32 %v1744, 536870912
        %v1746 = vshrl.u32 %v1745, 30
        %v1747 = vshll.u32 %v1746, 30
        %v1748 = vsub.s32 %v1744, %v1747
        %vm1749 = vcmp.lt.s32.totalorder %v1748, 0
        %v1750 = vsub.s32 0, %v1748
        %v1751 = vsel %vm1749, %v1750, %v1748
        %v1752 = vclz %v1751
        %v1753 = vsub.s32 %v1752, 2
        %vm1754 = vcmp.gt.s32.totalorder 0, %v1753
        %v1755 = vsel %vm1754, 0, %v1753
        %v1756 = vsub.s32 32, %v1755
        %v1757 = vshll.u32 %v1748, %v1755
        %v1758 = vshrl.u32 %v1740, %v1756
        %v1759 = vor.u32 %v1757, %v1758
        %v1760 = vsub.s32 4294967266, %v1755
        %v1761 = vadd.s32 %v1760, 127
        %v1762 = vshll.u32 %v1761, 23
        %v1763 = vor.u32 4788187, %v1762
        %v1764 = vand.u32 2147483647, %v1763
        %v1766 = vcvt.s32.f32 %v1759
        %v1767 = vmul.f32 %v1766, %v1764
        %v1768 = vxor.u32 %v1767, 2147483648
        %v1769 = vsel %vm1686, %v1768, %v1767
        %v1770 = vsub.s32 4, %v1746
        %v1771 = vsel %vm1686, %v1770, %v1746
        %v1772 = vsel %vm1685, %v313, %v1769
        %v1773 = vsel %vm1685, 0, %v1771
        %v1774 = vcosq.f32.pop %v1772
        %v1775 = vsinq.f32.pop %v1772
        %vm1776 = vweird.f32 %v313
        %v1777 = vadd.s32 %v1773, 3
        %v1778 = vand.u32 %v1777, 3
        %vm1779 = vcmp.lt.s32.totalorder %v1778, 2
        %vm1780 = vcmp.eq.s32.totalorder %v1778, 0
        %v1781 = vxor.u32 %v1775, 2147483648
        %v1782 = vsel %vm1780, %v1774, %v1781
        %vm1783 = vcmp.eq.s32.totalorder %v1778, 2
        %v1784 = vxor.u32 %v1774, 2147483648
        %v1785 = vsel %vm1783, %v1784, %v1775
        %v1786 = vsel %vm1779, %v1782, %v1785
        %v1787 = vsel %vm1776, nan, %v1786
        %v1788 = vand.u32 2147483647, %v314
        %vm1789 = vcmp.le.f32.partialorder %v1788, 0.7853982
        %vm1790 = vcmp.lt.s32.totalorder %v314, 0
        %v1791 = vand.u32 %v314, 2139095040
        %v1792 = vshrl.u32 %v1791, 23
        %v1793 = vsub.s32 %v1792, 127
        %v1794 = vand.u32 2147483647, %v314
        %v1795 = vand.u32 %v1794, 8388607
        %v1796 = vor.u32 %v1795, 8388608
        %v1797 = vsub.s32 0, %v1796
        %v1798 = vadd.s32 %v1793, 1
        %vm1799 = vcmp.gt.s32.totalorder %v1798, 0
        %v1800 = vsel %vm1799, %v1798, 0
        %v1801 = vshrl.u32 %v1800, 5
        %v1802 = vand.u32 %v1800, 31
        %v1803 = vsub.s32 32, %v1802
        %v1804 = vshrl.u32 683565275, %v1803
        %v1805 = vshll.u32 683565275, %v1802
        %v1806 = vshrl.u32 2475754826, %v1803
        %v1807 = vor.u32 %v1805, %v1806
        %v1808 = vshll.u32 2475754826, %v1802
        %v1809 = vshrl.u32 2131351028, %v1803
        %v1810 = vor.u32 %v1808, %v1809
        %v1811 = vshll.u32 2131351028, %v1802
        %v1812 = vshrl.u32 2102212464, %v1803
        %v1813 = vor.u32 %v1811, %v1812
        %v1814 = vshll.u32 2102212464, %v1802
        %v1815 = vshrl.u32 920167782, %v1803
        %v1816 = vor.u32 %v1814, %v1815
        %v1817 = vshll.u32 920167782, %v1802
        %v1818 = vshrl.u32 1326507024, %v1803
        %v1819 = vor.u32 %v1817, %v1818
        %vm1820 = vcmp.lt.s32.totalorder %v1801, 1
        %vm1821 = vcmp.lt.s32.totalorder %v1801, 2
        %vm1822 = vcmp.lt.s32.totalorder %v1801, 3
        %vm1823 = vcmp.lt.s32.totalorder %v1801, 4
        %v1824 = vsel %vm1820, %v1804, %v1807
        %v1825 = vsel %vm1823, %v1813, 2102212464
        %v1826 = vsel %vm1822, %v1810, %v1825
        %v1827 = vsel %vm1821, %v1824, %v1826
        %v1828 = vsel %vm1820, %v1807, %v1810
        %v1829 = vsel %vm1823, %v1816, 920167782
        %v1830 = vsel %vm1822, %v1813, %v1829
        %v1831 = vsel %vm1821, %v1828, %v1830
        %v1832 = vsel %vm1820, %v1810, %v1813
        %v1833 = vsel %vm1823, %v1819, 1326507024
        %v1834 = vsel %vm1822, %v1816, %v1833
        %v1835 = vsel %vm1821, %v1832, %v1834
        %v1836 = vshll.u32 %v1796, 8
        %v1837 = vmul.u32.u64.compose %v1836, %v1835
        %v1838 = vextract.low.u32 %v1837
        %v1839 = vextract.high.u32 %v1837
        %v1840 = vmul.u32.u64.compose %v1836, %v1831
        %v1841 = vextract.low.u32 %v1840
        %v1842 = vextract.high.u32 %v1840
        %v1843 = vmul.u32 %v1836, %v1827
        %v1844 = vadd.s32 %v1839, %v1841
        %vm1845 = vc.u32 %v1839, %v1841
        %v1846 = vadd.s32 %v1842, 1
        %v1847 = vsel %vm1845, %v1846, %v1842
        %v1848 = vadd.s32 %v1843, %v1847
        %v1849 = vadd.s32 %v1848, 536870912
        %v1850 = vshrl.u32 %v1849, 30
        %v1851 = vshll.u32 %v1850, 30
        %v1852 = vsub.s32 %v1848, %v1851
        %vm1853 = vcmp.lt.s32.totalorder %v1852, 0
        %v1854 = vsub.s32 0, %v1852
        %v1855 = vsel %vm1853, %v1854, %v1852
        %v1856 = vclz %v1855
        %v1857 = vsub.s32 %v1856, 2
        %vm1858 = vcmp.gt.s32.totalorder 0, %v1857
        %v1859 = vsel %vm1858, 0, %v1857
        %v1860 = vsub.s32 32, %v1859
        %v1861 = vshll.u32 %v1852, %v1859
        %v1862 = vshrl.u32 %v1844, %v1860
        %v1863 = vor.u32 %v1861, %v1862
        %v1864 = vsub.s32 4294967266, %v1859
        %v1865 = vadd.s32 %v1864, 127
        %v1866 = vshll.u32 %v1865, 23
        %v1867 = vor.u32 4788187, %v1866
        %v1868 = vand.u32 2147483647, %v1867
        %v1870 = vcvt.s32.f32 %v1863
        %v1871 = vmul.f32 %v1870, %v1868
        %v1872 = vxor.u32 %v1871, 2147483648
        %v1873 = vsel %vm1790, %v1872, %v1871
        %v1874 = vsub.s32 4, %v1850
        %v1875 = vsel %vm1790, %v1874, %v1850
        %v1876 = vsel %vm1789, %v314, %v1873
        %v1877 = vsel %vm1789, 0, %v1875
        %v1878 = vcosq.f32.pop %v1876
        %v1879 = vsinq.f32.pop %v1876
        %vm1880 = vweird.f32 %v314
        %v1881 = vadd.s32 %v1877, 3
        %v1882 = vand.u32 %v1881, 3
        %vm1883 = vcmp.lt.s32.totalorder %v1882, 2
        %vm1884 = vcmp.eq.s32.totalorder %v1882, 0
        %v1885 = vxor.u32 %v1879, 2147483648
        %v1886 = vsel %vm1884, %v1878, %v1885
        %vm1887 = vcmp.eq.s32.totalorder %v1882, 2
        %v1888 = vxor.u32 %v1878, 2147483648
        %v1889 = vsel %vm1887, %v1888, %v1879
        %v1890 = vsel %vm1883, %v1886, %v1889
        %v1891 = vsel %vm1880, nan, %v1890
        %v1892 = vand.u32 2147483647, %v315
        %vm1893 = vcmp.le.f32.partialorder %v1892, 0.7853982
        %vm1894 = vcmp.lt.s32.totalorder %v315, 0
        %v1895 = vand.u32 %v315, 2139095040
        %v1896 = vshrl.u32 %v1895, 23
        %v1897 = vsub.s32 %v1896, 127
        %v1898 = vand.u32 2147483647, %v315
        %v1899 = vand.u32 %v1898, 8388607
        %v1900 = vor.u32 %v1899, 8388608
        %v1901 = vsub.s32 0, %v1900
        %v1902 = vadd.s32 %v1897, 1
        %vm1903 = vcmp.gt.s32.totalorder %v1902, 0
        %v1904 = vsel %vm1903, %v1902, 0
        %v1905 = vshrl.u32 %v1904, 5
        %v1906 = vand.u32 %v1904, 31
        %v1907 = vsub.s32 32, %v1906
        %v1908 = vshrl.u32 683565275, %v1907
        %v1909 = vshll.u32 683565275, %v1906
        %v1910 = vshrl.u32 2475754826, %v1907
        %v1911 = vor.u32 %v1909, %v1910
        %v1912 = vshll.u32 2475754826, %v1906
        %v1913 = vshrl.u32 2131351028, %v1907
        %v1914 = vor.u32 %v1912, %v1913
        %v1915 = vshll.u32 2131351028, %v1906
        %v1916 = vshrl.u32 2102212464, %v1907
        %v1917 = vor.u32 %v1915, %v1916
        %v1918 = vshll.u32 2102212464, %v1906
        %v1919 = vshrl.u32 920167782, %v1907
        %v1920 = vor.u32 %v1918, %v1919
        %v1921 = vshll.u32 920167782, %v1906
        %v1922 = vshrl.u32 1326507024, %v1907
        %v1923 = vor.u32 %v1921, %v1922
        %vm1924 = vcmp.lt.s32.totalorder %v1905, 1
        %vm1925 = vcmp.lt.s32.totalorder %v1905, 2
        %vm1926 = vcmp.lt.s32.totalorder %v1905, 3
        %vm1927 = vcmp.lt.s32.totalorder %v1905, 4
        %v1928 = vsel %vm1924, %v1908, %v1911
        %v1929 = vsel %vm1927, %v1917, 2102212464
        %v1930 = vsel %vm1926, %v1914, %v1929
        %v1931 = vsel %vm1925, %v1928, %v1930
        %v1932 = vsel %vm1924, %v1911, %v1914
        %v1933 = vsel %vm1927, %v1920, 920167782
        %v1934 = vsel %vm1926, %v1917, %v1933
        %v1935 = vsel %vm1925, %v1932, %v1934
        %v1936 = vsel %vm1924, %v1914, %v1917
        %v1937 = vsel %vm1927, %v1923, 1326507024
        %v1938 = vsel %vm1926, %v1920, %v1937
        %v1939 = vsel %vm1925, %v1936, %v1938
        %v1940 = vshll.u32 %v1900, 8
        %v1941 = vmul.u32.u64.compose %v1940, %v1939
        %v1942 = vextract.low.u32 %v1941
        %v1943 = vextract.high.u32 %v1941
        %v1944 = vmul.u32.u64.compose %v1940, %v1935
        %v1945 = vextract.low.u32 %v1944
        %v1946 = vextract.high.u32 %v1944
        %v1947 = vmul.u32 %v1940, %v1931
        %v1948 = vadd.s32 %v1943, %v1945
        %vm1949 = vc.u32 %v1943, %v1945
        %v1950 = vadd.s32 %v1946, 1
        %v1951 = vsel %vm1949, %v1950, %v1946
        %v1952 = vadd.s32 %v1947, %v1951
        %v1953 = vadd.s32 %v1952, 536870912
        %v1954 = vshrl.u32 %v1953, 30
        %v1955 = vshll.u32 %v1954, 30
        %v1956 = vsub.s32 %v1952, %v1955
        %vm1957 = vcmp.lt.s32.totalorder %v1956, 0
        %v1958 = vsub.s32 0, %v1956
        %v1959 = vsel %vm1957, %v1958, %v1956
        %v1960 = vclz %v1959
        %v1961 = vsub.s32 %v1960, 2
        %vm1962 = vcmp.gt.s32.totalorder 0, %v1961
        %v1963 = vsel %vm1962, 0, %v1961
        %v1964 = vsub.s32 32, %v1963
        %v1965 = vshll.u32 %v1956, %v1963
        %v1966 = vshrl.u32 %v1948, %v1964
        %v1967 = vor.u32 %v1965, %v1966
        %v1968 = vsub.s32 4294967266, %v1963
        %v1969 = vadd.s32 %v1968, 127
        %v1970 = vshll.u32 %v1969, 23
        %v1971 = vor.u32 4788187, %v1970
        %v1972 = vand.u32 2147483647, %v1971
        %v1974 = vcvt.s32.f32 %v1967
        %v1975 = vmul.f32 %v1974, %v1972
        %v1976 = vxor.u32 %v1975, 2147483648
        %v1977 = vsel %vm1894, %v1976, %v1975
        %v1978 = vsub.s32 4, %v1954
        %v1979 = vsel %vm1894, %v1978, %v1954
        %v1980 = vsel %vm1893, %v315, %v1977
        %v1981 = vsel %vm1893, 0, %v1979
        %v1982 = vcosq.f32.pop %v1980
        %v1983 = vsinq.f32.pop %v1980
        %vm1984 = vweird.f32 %v315
        %v1985 = vadd.s32 %v1981, 3
        %v1986 = vand.u32 %v1985, 3
        %vm1987 = vcmp.lt.s32.totalorder %v1986, 2
        %vm1988 = vcmp.eq.s32.totalorder %v1986, 0
        %v1989 = vxor.u32 %v1983, 2147483648
        %v1990 = vsel %vm1988, %v1982, %v1989
        %vm1991 = vcmp.eq.s32.totalorder %v1986, 2
        %v1992 = vxor.u32 %v1982, 2147483648
        %v1993 = vsel %vm1991, %v1992, %v1983
        %v1994 = vsel %vm1987, %v1990, %v1993
        %v1995 = vsel %vm1984, nan, %v1994
        %v1996 = vand.u32 2147483647, %v316
        %vm1997 = vcmp.le.f32.partialorder %v1996, 0.7853982
        %vm1998 = vcmp.lt.s32.totalorder %v316, 0
        %v1999 = vand.u32 %v316, 2139095040
        %v2000 = vshrl.u32 %v1999, 23
        %v2001 = vsub.s32 %v2000, 127
        %v2002 = vand.u32 2147483647, %v316
        %v2003 = vand.u32 %v2002, 8388607
        %v2004 = vor.u32 %v2003, 8388608
        %v2005 = vsub.s32 0, %v2004
        %v2006 = vadd.s32 %v2001, 1
        %vm2007 = vcmp.gt.s32.totalorder %v2006, 0
        %v2008 = vsel %vm2007, %v2006, 0
        %v2009 = vshrl.u32 %v2008, 5
        %v2010 = vand.u32 %v2008, 31
        %v2011 = vsub.s32 32, %v2010
        %v2012 = vshrl.u32 683565275, %v2011
        %v2013 = vshll.u32 683565275, %v2010
        %v2014 = vshrl.u32 2475754826, %v2011
        %v2015 = vor.u32 %v2013, %v2014
        %v2016 = vshll.u32 2475754826, %v2010
        %v2017 = vshrl.u32 2131351028, %v2011
        %v2018 = vor.u32 %v2016, %v2017
        %v2019 = vshll.u32 2131351028, %v2010
        %v2020 = vshrl.u32 2102212464, %v2011
        %v2021 = vor.u32 %v2019, %v2020
        %v2022 = vshll.u32 2102212464, %v2010
        %v2023 = vshrl.u32 920167782, %v2011
        %v2024 = vor.u32 %v2022, %v2023
        %v2025 = vshll.u32 920167782, %v2010
        %v2026 = vshrl.u32 1326507024, %v2011
        %v2027 = vor.u32 %v2025, %v2026
        %vm2028 = vcmp.lt.s32.totalorder %v2009, 1
        %vm2029 = vcmp.lt.s32.totalorder %v2009, 2
        %vm2030 = vcmp.lt.s32.totalorder %v2009, 3
        %vm2031 = vcmp.lt.s32.totalorder %v2009, 4
        %v2032 = vsel %vm2028, %v2012, %v2015
        %v2033 = vsel %vm2031, %v2021, 2102212464
        %v2034 = vsel %vm2030, %v2018, %v2033
        %v2035 = vsel %vm2029, %v2032, %v2034
        %v2036 = vsel %vm2028, %v2015, %v2018
        %v2037 = vsel %vm2031, %v2024, 920167782
        %v2038 = vsel %vm2030, %v2021, %v2037
        %v2039 = vsel %vm2029, %v2036, %v2038
        %v2040 = vsel %vm2028, %v2018, %v2021
        %v2041 = vsel %vm2031, %v2027, 1326507024
        %v2042 = vsel %vm2030, %v2024, %v2041
        %v2043 = vsel %vm2029, %v2040, %v2042
        %v2044 = vshll.u32 %v2004, 8
        %v2045 = vmul.u32.u64.compose %v2044, %v2043
        %v2046 = vextract.low.u32 %v2045
        %v2047 = vextract.high.u32 %v2045
        %v2048 = vmul.u32.u64.compose %v2044, %v2039
        %v2049 = vextract.low.u32 %v2048
        %v2050 = vextract.high.u32 %v2048
        %v2051 = vmul.u32 %v2044, %v2035
        %v2052 = vadd.s32 %v2047, %v2049
        %vm2053 = vc.u32 %v2047, %v2049
        %v2054 = vadd.s32 %v2050, 1
        %v2055 = vsel %vm2053, %v2054, %v2050
        %v2056 = vadd.s32 %v2051, %v2055
        %v2057 = vadd.s32 %v2056, 536870912
        %v2058 = vshrl.u32 %v2057, 30
        %v2059 = vshll.u32 %v2058, 30
        %v2060 = vsub.s32 %v2056, %v2059
        %vm2061 = vcmp.lt.s32.totalorder %v2060, 0
        %v2062 = vsub.s32 0, %v2060
        %v2063 = vsel %vm2061, %v2062, %v2060
        %v2064 = vclz %v2063
        %v2065 = vsub.s32 %v2064, 2
        %vm2066 = vcmp.gt.s32.totalorder 0, %v2065
        %v2067 = vsel %vm2066, 0, %v2065
        %v2068 = vsub.s32 32, %v2067
        %v2069 = vshll.u32 %v2060, %v2067
        %v2070 = vshrl.u32 %v2052, %v2068
        %v2071 = vor.u32 %v2069, %v2070
        %v2072 = vsub.s32 4294967266, %v2067
        %v2073 = vadd.s32 %v2072, 127
        %v2074 = vshll.u32 %v2073, 23
        %v2075 = vor.u32 4788187, %v2074
        %v2076 = vand.u32 2147483647, %v2075
        %v2078 = vcvt.s32.f32 %v2071
        %v2079 = vmul.f32 %v2078, %v2076
        %v2080 = vxor.u32 %v2079, 2147483648
        %v2081 = vsel %vm1998, %v2080, %v2079
        %v2082 = vsub.s32 4, %v2058
        %v2083 = vsel %vm1998, %v2082, %v2058
        %v2084 = vsel %vm1997, %v316, %v2081
        %v2085 = vsel %vm1997, 0, %v2083
        %v2086 = vcosq.f32.pop %v2084
        %v2087 = vsinq.f32.pop %v2084
        %vm2088 = vweird.f32 %v316
        %v2089 = vadd.s32 %v2085, 3
        %v2090 = vand.u32 %v2089, 3
        %vm2091 = vcmp.lt.s32.totalorder %v2090, 2
        %vm2092 = vcmp.eq.s32.totalorder %v2090, 0
        %v2093 = vxor.u32 %v2087, 2147483648
        %v2094 = vsel %vm2092, %v2086, %v2093
        %vm2095 = vcmp.eq.s32.totalorder %v2090, 2
        %v2096 = vxor.u32 %v2086, 2147483648
        %v2097 = vsel %vm2095, %v2096, %v2087
        %v2098 = vsel %vm2091, %v2094, %v2097
        %v2099 = vsel %vm2088, nan, %v2098
        %v2100 = vand.u32 2147483647, %v317
        %vm2101 = vcmp.le.f32.partialorder %v2100, 0.7853982
        %vm2102 = vcmp.lt.s32.totalorder %v317, 0
        %v2103 = vand.u32 %v317, 2139095040
        %v2104 = vshrl.u32 %v2103, 23
        %v2105 = vsub.s32 %v2104, 127
        %v2106 = vand.u32 2147483647, %v317
        %v2107 = vand.u32 %v2106, 8388607
        %v2108 = vor.u32 %v2107, 8388608
        %v2109 = vsub.s32 0, %v2108
        %v2110 = vadd.s32 %v2105, 1
        %vm2111 = vcmp.gt.s32.totalorder %v2110, 0
        %v2112 = vsel %vm2111, %v2110, 0
        %v2113 = vshrl.u32 %v2112, 5
        %v2114 = vand.u32 %v2112, 31
        %v2115 = vsub.s32 32, %v2114
        %v2116 = vshrl.u32 683565275, %v2115
        %v2117 = vshll.u32 683565275, %v2114
        %v2118 = vshrl.u32 2475754826, %v2115
        %v2119 = vor.u32 %v2117, %v2118
        %v2120 = vshll.u32 2475754826, %v2114
        %v2121 = vshrl.u32 2131351028, %v2115
        %v2122 = vor.u32 %v2120, %v2121
        %v2123 = vshll.u32 2131351028, %v2114
        %v2124 = vshrl.u32 2102212464, %v2115
        %v2125 = vor.u32 %v2123, %v2124
        %v2126 = vshll.u32 2102212464, %v2114
        %v2127 = vshrl.u32 920167782, %v2115
        %v2128 = vor.u32 %v2126, %v2127
        %v2129 = vshll.u32 920167782, %v2114
        %v2130 = vshrl.u32 1326507024, %v2115
        %v2131 = vor.u32 %v2129, %v2130
        %vm2132 = vcmp.lt.s32.totalorder %v2113, 1
        %vm2133 = vcmp.lt.s32.totalorder %v2113, 2
        %vm2134 = vcmp.lt.s32.totalorder %v2113, 3
        %vm2135 = vcmp.lt.s32.totalorder %v2113, 4
        %v2136 = vsel %vm2132, %v2116, %v2119
        %v2137 = vsel %vm2135, %v2125, 2102212464
        %v2138 = vsel %vm2134, %v2122, %v2137
        %v2139 = vsel %vm2133, %v2136, %v2138
        %v2140 = vsel %vm2132, %v2119, %v2122
        %v2141 = vsel %vm2135, %v2128, 920167782
        %v2142 = vsel %vm2134, %v2125, %v2141
        %v2143 = vsel %vm2133, %v2140, %v2142
        %v2144 = vsel %vm2132, %v2122, %v2125
        %v2145 = vsel %vm2135, %v2131, 1326507024
        %v2146 = vsel %vm2134, %v2128, %v2145
        %v2147 = vsel %vm2133, %v2144, %v2146
        %v2148 = vshll.u32 %v2108, 8
        %v2149 = vmul.u32.u64.compose %v2148, %v2147
        %v2150 = vextract.low.u32 %v2149
        %v2151 = vextract.high.u32 %v2149
        %v2152 = vmul.u32.u64.compose %v2148, %v2143
        %v2153 = vextract.low.u32 %v2152
        %v2154 = vextract.high.u32 %v2152
        %v2155 = vmul.u32 %v2148, %v2139
        %v2156 = vadd.s32 %v2151, %v2153
        %vm2157 = vc.u32 %v2151, %v2153
        %v2158 = vadd.s32 %v2154, 1
        %v2159 = vsel %vm2157, %v2158, %v2154
        %v2160 = vadd.s32 %v2155, %v2159
        %v2161 = vadd.s32 %v2160, 536870912
        %v2162 = vshrl.u32 %v2161, 30
        %v2163 = vshll.u32 %v2162, 30
        %v2164 = vsub.s32 %v2160, %v2163
        %vm2165 = vcmp.lt.s32.totalorder %v2164, 0
        %v2166 = vsub.s32 0, %v2164
        %v2167 = vsel %vm2165, %v2166, %v2164
        %v2168 = vclz %v2167
        %v2169 = vsub.s32 %v2168, 2
        %vm2170 = vcmp.gt.s32.totalorder 0, %v2169
        %v2171 = vsel %vm2170, 0, %v2169
        %v2172 = vsub.s32 32, %v2171
        %v2173 = vshll.u32 %v2164, %v2171
        %v2174 = vshrl.u32 %v2156, %v2172
        %v2175 = vor.u32 %v2173, %v2174
        %v2176 = vsub.s32 4294967266, %v2171
        %v2177 = vadd.s32 %v2176, 127
        %v2178 = vshll.u32 %v2177, 23
        %v2179 = vor.u32 4788187, %v2178
        %v2180 = vand.u32 2147483647, %v2179
        %v2182 = vcvt.s32.f32 %v2175
        %v2183 = vmul.f32 %v2182, %v2180
        %v2184 = vxor.u32 %v2183, 2147483648
        %v2185 = vsel %vm2102, %v2184, %v2183
        %v2186 = vsub.s32 4, %v2162
        %v2187 = vsel %vm2102, %v2186, %v2162
        %v2188 = vsel %vm2101, %v317, %v2185
        %v2189 = vsel %vm2101, 0, %v2187
        %v2190 = vcosq.f32.pop %v2188
        %v2191 = vsinq.f32.pop %v2188
        %vm2192 = vweird.f32 %v317
        %v2193 = vadd.s32 %v2189, 3
        %v2194 = vand.u32 %v2193, 3
        %vm2195 = vcmp.lt.s32.totalorder %v2194, 2
        %vm2196 = vcmp.eq.s32.totalorder %v2194, 0
        %v2197 = vxor.u32 %v2191, 2147483648
        %v2198 = vsel %vm2196, %v2190, %v2197
        %vm2199 = vcmp.eq.s32.totalorder %v2194, 2
        %v2200 = vxor.u32 %v2190, 2147483648
        %v2201 = vsel %vm2199, %v2200, %v2191
        %v2202 = vsel %vm2195, %v2198, %v2201
        %v2203 = vsel %vm2192, nan, %v2202
        %v2204 = vand.u32 2147483647, %v318
        %vm2205 = vcmp.le.f32.partialorder %v2204, 0.7853982
        %vm2206 = vcmp.lt.s32.totalorder %v318, 0
        %v2207 = vand.u32 %v318, 2139095040
        %v2208 = vshrl.u32 %v2207, 23
        %v2209 = vsub.s32 %v2208, 127
        %v2210 = vand.u32 2147483647, %v318
        %v2211 = vand.u32 %v2210, 8388607
        %v2212 = vor.u32 %v2211, 8388608
        %v2213 = vsub.s32 0, %v2212
        %v2214 = vadd.s32 %v2209, 1
        %vm2215 = vcmp.gt.s32.totalorder %v2214, 0
        %v2216 = vsel %vm2215, %v2214, 0
        %v2217 = vshrl.u32 %v2216, 5
        %v2218 = vand.u32 %v2216, 31
        %v2219 = vsub.s32 32, %v2218
        %v2220 = vshrl.u32 683565275, %v2219
        %v2221 = vshll.u32 683565275, %v2218
        %v2222 = vshrl.u32 2475754826, %v2219
        %v2223 = vor.u32 %v2221, %v2222
        %v2224 = vshll.u32 2475754826, %v2218
        %v2225 = vshrl.u32 2131351028, %v2219
        %v2226 = vor.u32 %v2224, %v2225
        %v2227 = vshll.u32 2131351028, %v2218
        %v2228 = vshrl.u32 2102212464, %v2219
        %v2229 = vor.u32 %v2227, %v2228
        %v2230 = vshll.u32 2102212464, %v2218
        %v2231 = vshrl.u32 920167782, %v2219
        %v2232 = vor.u32 %v2230, %v2231
        %v2233 = vshll.u32 920167782, %v2218
        %v2234 = vshrl.u32 1326507024, %v2219
        %v2235 = vor.u32 %v2233, %v2234
        %vm2236 = vcmp.lt.s32.totalorder %v2217, 1
        %vm2237 = vcmp.lt.s32.totalorder %v2217, 2
        %vm2238 = vcmp.lt.s32.totalorder %v2217, 3
        %vm2239 = vcmp.lt.s32.totalorder %v2217, 4
        %v2240 = vsel %vm2236, %v2220, %v2223
        %v2241 = vsel %vm2239, %v2229, 2102212464
        %v2242 = vsel %vm2238, %v2226, %v2241
        %v2243 = vsel %vm2237, %v2240, %v2242
        %v2244 = vsel %vm2236, %v2223, %v2226
        %v2245 = vsel %vm2239, %v2232, 920167782
        %v2246 = vsel %vm2238, %v2229, %v2245
        %v2247 = vsel %vm2237, %v2244, %v2246
        %v2248 = vsel %vm2236, %v2226, %v2229
        %v2249 = vsel %vm2239, %v2235, 1326507024
        %v2250 = vsel %vm2238, %v2232, %v2249
        %v2251 = vsel %vm2237, %v2248, %v2250
        %v2252 = vshll.u32 %v2212, 8
        %v2253 = vmul.u32.u64.compose %v2252, %v2251
        %v2254 = vextract.low.u32 %v2253
        %v2255 = vextract.high.u32 %v2253
        %v2256 = vmul.u32.u64.compose %v2252, %v2247
        %v2257 = vextract.low.u32 %v2256
        %v2258 = vextract.high.u32 %v2256
        %v2259 = vmul.u32 %v2252, %v2243
        %v2260 = vadd.s32 %v2255, %v2257
        %vm2261 = vc.u32 %v2255, %v2257
        %v2262 = vadd.s32 %v2258, 1
        %v2263 = vsel %vm2261, %v2262, %v2258
        %v2264 = vadd.s32 %v2259, %v2263
        %v2265 = vadd.s32 %v2264, 536870912
        %v2266 = vshrl.u32 %v2265, 30
        %v2267 = vshll.u32 %v2266, 30
        %v2268 = vsub.s32 %v2264, %v2267
        %vm2269 = vcmp.lt.s32.totalorder %v2268, 0
        %v2270 = vsub.s32 0, %v2268
        %v2271 = vsel %vm2269, %v2270, %v2268
        %v2272 = vclz %v2271
        %v2273 = vsub.s32 %v2272, 2
        %vm2274 = vcmp.gt.s32.totalorder 0, %v2273
        %v2275 = vsel %vm2274, 0, %v2273
        %v2276 = vsub.s32 32, %v2275
        %v2277 = vshll.u32 %v2268, %v2275
        %v2278 = vshrl.u32 %v2260, %v2276
        %v2279 = vor.u32 %v2277, %v2278
        %v2280 = vsub.s32 4294967266, %v2275
        %v2281 = vadd.s32 %v2280, 127
        %v2282 = vshll.u32 %v2281, 23
        %v2283 = vor.u32 4788187, %v2282
        %v2284 = vand.u32 2147483647, %v2283
        %v2286 = vcvt.s32.f32 %v2279
        %v2287 = vmul.f32 %v2286, %v2284
        %v2288 = vxor.u32 %v2287, 2147483648
        %v2289 = vsel %vm2206, %v2288, %v2287
        %v2290 = vsub.s32 4, %v2266
        %v2291 = vsel %vm2206, %v2290, %v2266
        %v2292 = vsel %vm2205, %v318, %v2289
        %v2293 = vsel %vm2205, 0, %v2291
        %v2294 = vcosq.f32.pop %v2292
        %v2295 = vsinq.f32.pop %v2292
        %vm2296 = vweird.f32 %v318
        %v2297 = vadd.s32 %v2293, 3
        %v2298 = vand.u32 %v2297, 3
        %vm2299 = vcmp.lt.s32.totalorder %v2298, 2
        %vm2300 = vcmp.eq.s32.totalorder %v2298, 0
        %v2301 = vxor.u32 %v2295, 2147483648
        %v2302 = vsel %vm2300, %v2294, %v2301
        %vm2303 = vcmp.eq.s32.totalorder %v2298, 2
        %v2304 = vxor.u32 %v2294, 2147483648
        %v2305 = vsel %vm2303, %v2304, %v2295
        %v2306 = vsel %vm2299, %v2302, %v2305
        %v2307 = vsel %vm2296, nan, %v2306
        %v2308 = vand.u32 2147483647, %v319
        %vm2309 = vcmp.le.f32.partialorder %v2308, 0.7853982
        %vm2310 = vcmp.lt.s32.totalorder %v319, 0
        %v2311 = vand.u32 %v319, 2139095040
        %v2312 = vshrl.u32 %v2311, 23
        %v2313 = vsub.s32 %v2312, 127
        %v2314 = vand.u32 2147483647, %v319
        %v2315 = vand.u32 %v2314, 8388607
        %v2316 = vor.u32 %v2315, 8388608
        %v2317 = vsub.s32 0, %v2316
        %v2318 = vadd.s32 %v2313, 1
        %vm2319 = vcmp.gt.s32.totalorder %v2318, 0
        %v2320 = vsel %vm2319, %v2318, 0
        %v2321 = vshrl.u32 %v2320, 5
        %v2322 = vand.u32 %v2320, 31
        %v2323 = vsub.s32 32, %v2322
        %v2324 = vshrl.u32 683565275, %v2323
        %v2325 = vshll.u32 683565275, %v2322
        %v2326 = vshrl.u32 2475754826, %v2323
        %v2327 = vor.u32 %v2325, %v2326
        %v2328 = vshll.u32 2475754826, %v2322
        %v2329 = vshrl.u32 2131351028, %v2323
        %v2330 = vor.u32 %v2328, %v2329
        %v2331 = vshll.u32 2131351028, %v2322
        %v2332 = vshrl.u32 2102212464, %v2323
        %v2333 = vor.u32 %v2331, %v2332
        %v2334 = vshll.u32 2102212464, %v2322
        %v2335 = vshrl.u32 920167782, %v2323
        %v2336 = vor.u32 %v2334, %v2335
        %v2337 = vshll.u32 920167782, %v2322
        %v2338 = vshrl.u32 1326507024, %v2323
        %v2339 = vor.u32 %v2337, %v2338
        %vm2340 = vcmp.lt.s32.totalorder %v2321, 1
        %vm2341 = vcmp.lt.s32.totalorder %v2321, 2
        %vm2342 = vcmp.lt.s32.totalorder %v2321, 3
        %vm2343 = vcmp.lt.s32.totalorder %v2321, 4
        %v2344 = vsel %vm2340, %v2324, %v2327
        %v2345 = vsel %vm2343, %v2333, 2102212464
        %v2346 = vsel %vm2342, %v2330, %v2345
        %v2347 = vsel %vm2341, %v2344, %v2346
        %v2348 = vsel %vm2340, %v2327, %v2330
        %v2349 = vsel %vm2343, %v2336, 920167782
        %v2350 = vsel %vm2342, %v2333, %v2349
        %v2351 = vsel %vm2341, %v2348, %v2350
        %v2352 = vsel %vm2340, %v2330, %v2333
        %v2353 = vsel %vm2343, %v2339, 1326507024
        %v2354 = vsel %vm2342, %v2336, %v2353
        %v2355 = vsel %vm2341, %v2352, %v2354
        %v2356 = vshll.u32 %v2316, 8
        %v2357 = vmul.u32.u64.compose %v2356, %v2355
        %v2358 = vextract.low.u32 %v2357
        %v2359 = vextract.high.u32 %v2357
        %v2360 = vmul.u32.u64.compose %v2356, %v2351
        %v2361 = vextract.low.u32 %v2360
        %v2362 = vextract.high.u32 %v2360
        %v2363 = vmul.u32 %v2356, %v2347
        %v2364 = vadd.s32 %v2359, %v2361
        %vm2365 = vc.u32 %v2359, %v2361
        %v2366 = vadd.s32 %v2362, 1
        %v2367 = vsel %vm2365, %v2366, %v2362
        %v2368 = vadd.s32 %v2363, %v2367
        %v2369 = vadd.s32 %v2368, 536870912
        %v2370 = vshrl.u32 %v2369, 30
        %v2371 = vshll.u32 %v2370, 30
        %v2372 = vsub.s32 %v2368, %v2371
        %vm2373 = vcmp.lt.s32.totalorder %v2372, 0
        %v2374 = vsub.s32 0, %v2372
        %v2375 = vsel %vm2373, %v2374, %v2372
        %v2376 = vclz %v2375
        %v2377 = vsub.s32 %v2376, 2
        %vm2378 = vcmp.gt.s32.totalorder 0, %v2377
        %v2379 = vsel %vm2378, 0, %v2377
        %v2380 = vsub.s32 32, %v2379
        %v2381 = vshll.u32 %v2372, %v2379
        %v2382 = vshrl.u32 %v2364, %v2380
        %v2383 = vor.u32 %v2381, %v2382
        %v2384 = vsub.s32 4294967266, %v2379
        %v2385 = vadd.s32 %v2384, 127
        %v2386 = vshll.u32 %v2385, 23
        %v2387 = vor.u32 4788187, %v2386
        %v2388 = vand.u32 2147483647, %v2387
        %v2390 = vcvt.s32.f32 %v2383
        %v2391 = vmul.f32 %v2390, %v2388
        %v2392 = vxor.u32 %v2391, 2147483648
        %v2393 = vsel %vm2310, %v2392, %v2391
        %v2394 = vsub.s32 4, %v2370
        %v2395 = vsel %vm2310, %v2394, %v2370
        %v2396 = vsel %vm2309, %v319, %v2393
        %v2397 = vsel %vm2309, 0, %v2395
        %v2398 = vcosq.f32.pop %v2396
        %v2399 = vsinq.f32.pop %v2396
        %vm2400 = vweird.f32 %v319
        %v2401 = vadd.s32 %v2397, 3
        %v2402 = vand.u32 %v2401, 3
        %vm2403 = vcmp.lt.s32.totalorder %v2402, 2
        %vm2404 = vcmp.eq.s32.totalorder %v2402, 0
        %v2405 = vxor.u32 %v2399, 2147483648
        %v2406 = vsel %vm2404, %v2398, %v2405
        %vm2407 = vcmp.eq.s32.totalorder %v2402, 2
        %v2408 = vxor.u32 %v2398, 2147483648
        %v2409 = vsel %vm2407, %v2408, %v2399
        %v2410 = vsel %vm2403, %v2406, %v2409
        %v2411 = vsel %vm2400, nan, %v2410
        %v2412 = vand.u32 2147483647, %v320
        %vm2413 = vcmp.le.f32.partialorder %v2412, 0.7853982
        %vm2414 = vcmp.lt.s32.totalorder %v320, 0
        %v2415 = vand.u32 %v320, 2139095040
        %v2416 = vshrl.u32 %v2415, 23
        %v2417 = vsub.s32 %v2416, 127
        %v2418 = vand.u32 2147483647, %v320
        %v2419 = vand.u32 %v2418, 8388607
        %v2420 = vor.u32 %v2419, 8388608
        %v2421 = vsub.s32 0, %v2420
        %v2422 = vadd.s32 %v2417, 1
        %vm2423 = vcmp.gt.s32.totalorder %v2422, 0
        %v2424 = vsel %vm2423, %v2422, 0
        %v2425 = vshrl.u32 %v2424, 5
        %v2426 = vand.u32 %v2424, 31
        %v2427 = vsub.s32 32, %v2426
        %v2428 = vshrl.u32 683565275, %v2427
        %v2429 = vshll.u32 683565275, %v2426
        %v2430 = vshrl.u32 2475754826, %v2427
        %v2431 = vor.u32 %v2429, %v2430
        %v2432 = vshll.u32 2475754826, %v2426
        %v2433 = vshrl.u32 2131351028, %v2427
        %v2434 = vor.u32 %v2432, %v2433
        %v2435 = vshll.u32 2131351028, %v2426
        %v2436 = vshrl.u32 2102212464, %v2427
        %v2437 = vor.u32 %v2435, %v2436
        %v2438 = vshll.u32 2102212464, %v2426
        %v2439 = vshrl.u32 920167782, %v2427
        %v2440 = vor.u32 %v2438, %v2439
        %v2441 = vshll.u32 920167782, %v2426
        %v2442 = vshrl.u32 1326507024, %v2427
        %v2443 = vor.u32 %v2441, %v2442
        %vm2444 = vcmp.lt.s32.totalorder %v2425, 1
        %vm2445 = vcmp.lt.s32.totalorder %v2425, 2
        %vm2446 = vcmp.lt.s32.totalorder %v2425, 3
        %vm2447 = vcmp.lt.s32.totalorder %v2425, 4
        %v2448 = vsel %vm2444, %v2428, %v2431
        %v2449 = vsel %vm2447, %v2437, 2102212464
        %v2450 = vsel %vm2446, %v2434, %v2449
        %v2451 = vsel %vm2445, %v2448, %v2450
        %v2452 = vsel %vm2444, %v2431, %v2434
        %v2453 = vsel %vm2447, %v2440, 920167782
        %v2454 = vsel %vm2446, %v2437, %v2453
        %v2455 = vsel %vm2445, %v2452, %v2454
        %v2456 = vsel %vm2444, %v2434, %v2437
        %v2457 = vsel %vm2447, %v2443, 1326507024
        %v2458 = vsel %vm2446, %v2440, %v2457
        %v2459 = vsel %vm2445, %v2456, %v2458
        %v2460 = vshll.u32 %v2420, 8
        %v2461 = vmul.u32.u64.compose %v2460, %v2459
        %v2462 = vextract.low.u32 %v2461
        %v2463 = vextract.high.u32 %v2461
        %v2464 = vmul.u32.u64.compose %v2460, %v2455
        %v2465 = vextract.low.u32 %v2464
        %v2466 = vextract.high.u32 %v2464
        %v2467 = vmul.u32 %v2460, %v2451
        %v2468 = vadd.s32 %v2463, %v2465
        %vm2469 = vc.u32 %v2463, %v2465
        %v2470 = vadd.s32 %v2466, 1
        %v2471 = vsel %vm2469, %v2470, %v2466
        %v2472 = vadd.s32 %v2467, %v2471
        %v2473 = vadd.s32 %v2472, 536870912
        %v2474 = vshrl.u32 %v2473, 30
        %v2475 = vshll.u32 %v2474, 30
        %v2476 = vsub.s32 %v2472, %v2475
        %vm2477 = vcmp.lt.s32.totalorder %v2476, 0
        %v2478 = vsub.s32 0, %v2476
        %v2479 = vsel %vm2477, %v2478, %v2476
        %v2480 = vclz %v2479
        %v2481 = vsub.s32 %v2480, 2
        %vm2482 = vcmp.gt.s32.totalorder 0, %v2481
        %v2483 = vsel %vm2482, 0, %v2481
        %v2484 = vsub.s32 32, %v2483
        %v2485 = vshll.u32 %v2476, %v2483
        %v2486 = vshrl.u32 %v2468, %v2484
        %v2487 = vor.u32 %v2485, %v2486
        %v2488 = vsub.s32 4294967266, %v2483
        %v2489 = vadd.s32 %v2488, 127
        %v2490 = vshll.u32 %v2489, 23
        %v2491 = vor.u32 4788187, %v2490
        %v2492 = vand.u32 2147483647, %v2491
        %v2494 = vcvt.s32.f32 %v2487
        %v2495 = vmul.f32 %v2494, %v2492
        %v2496 = vxor.u32 %v2495, 2147483648
        %v2497 = vsel %vm2414, %v2496, %v2495
        %v2498 = vsub.s32 4, %v2474
        %v2499 = vsel %vm2414, %v2498, %v2474
        %v2500 = vsel %vm2413, %v320, %v2497
        %v2501 = vsel %vm2413, 0, %v2499
        %v2502 = vcosq.f32.pop %v2500
        %v2503 = vsinq.f32.pop %v2500
        %vm2504 = vweird.f32 %v320
        %v2505 = vadd.s32 %v2501, 3
        %v2506 = vand.u32 %v2505, 3
        %vm2507 = vcmp.lt.s32.totalorder %v2506, 2
        %vm2508 = vcmp.eq.s32.totalorder %v2506, 0
        %v2509 = vxor.u32 %v2503, 2147483648
        %v2510 = vsel %vm2508, %v2502, %v2509
        %vm2511 = vcmp.eq.s32.totalorder %v2506, 2
        %v2512 = vxor.u32 %v2502, 2147483648
        %v2513 = vsel %vm2511, %v2512, %v2503
        %v2514 = vsel %vm2507, %v2510, %v2513
        %v2515 = vsel %vm2504, nan, %v2514
        %v2516 = vand.u32 2147483647, %v321
        %vm2517 = vcmp.le.f32.partialorder %v2516, 0.7853982
        %vm2518 = vcmp.lt.s32.totalorder %v321, 0
        %v2519 = vand.u32 %v321, 2139095040
        %v2520 = vshrl.u32 %v2519, 23
        %v2521 = vsub.s32 %v2520, 127
        %v2522 = vand.u32 2147483647, %v321
        %v2523 = vand.u32 %v2522, 8388607
        %v2524 = vor.u32 %v2523, 8388608
        %v2525 = vsub.s32 0, %v2524
        %v2526 = vadd.s32 %v2521, 1
        %vm2527 = vcmp.gt.s32.totalorder %v2526, 0
        %v2528 = vsel %vm2527, %v2526, 0
        %v2529 = vshrl.u32 %v2528, 5
        %v2530 = vand.u32 %v2528, 31
        %v2531 = vsub.s32 32, %v2530
        %v2532 = vshrl.u32 683565275, %v2531
        %v2533 = vshll.u32 683565275, %v2530
        %v2534 = vshrl.u32 2475754826, %v2531
        %v2535 = vor.u32 %v2533, %v2534
        %v2536 = vshll.u32 2475754826, %v2530
        %v2537 = vshrl.u32 2131351028, %v2531
        %v2538 = vor.u32 %v2536, %v2537
        %v2539 = vshll.u32 2131351028, %v2530
        %v2540 = vshrl.u32 2102212464, %v2531
        %v2541 = vor.u32 %v2539, %v2540
        %v2542 = vshll.u32 2102212464, %v2530
        %v2543 = vshrl.u32 920167782, %v2531
        %v2544 = vor.u32 %v2542, %v2543
        %v2545 = vshll.u32 920167782, %v2530
        %v2546 = vshrl.u32 1326507024, %v2531
        %v2547 = vor.u32 %v2545, %v2546
        %vm2548 = vcmp.lt.s32.totalorder %v2529, 1
        %vm2549 = vcmp.lt.s32.totalorder %v2529, 2
        %vm2550 = vcmp.lt.s32.totalorder %v2529, 3
        %vm2551 = vcmp.lt.s32.totalorder %v2529, 4
        %v2552 = vsel %vm2548, %v2532, %v2535
        %v2553 = vsel %vm2551, %v2541, 2102212464
        %v2554 = vsel %vm2550, %v2538, %v2553
        %v2555 = vsel %vm2549, %v2552, %v2554
        %v2556 = vsel %vm2548, %v2535, %v2538
        %v2557 = vsel %vm2551, %v2544, 920167782
        %v2558 = vsel %vm2550, %v2541, %v2557
        %v2559 = vsel %vm2549, %v2556, %v2558
        %v2560 = vsel %vm2548, %v2538, %v2541
        %v2561 = vsel %vm2551, %v2547, 1326507024
        %v2562 = vsel %vm2550, %v2544, %v2561
        %v2563 = vsel %vm2549, %v2560, %v2562
        %v2564 = vshll.u32 %v2524, 8
        %v2565 = vmul.u32.u64.compose %v2564, %v2563
        %v2566 = vextract.low.u32 %v2565
        %v2567 = vextract.high.u32 %v2565
        %v2568 = vmul.u32.u64.compose %v2564, %v2559
        %v2569 = vextract.low.u32 %v2568
        %v2570 = vextract.high.u32 %v2568
        %v2571 = vmul.u32 %v2564, %v2555
        %v2572 = vadd.s32 %v2567, %v2569
        %vm2573 = vc.u32 %v2567, %v2569
        %v2574 = vadd.s32 %v2570, 1
        %v2575 = vsel %vm2573, %v2574, %v2570
        %v2576 = vadd.s32 %v2571, %v2575
        %v2577 = vadd.s32 %v2576, 536870912
        %v2578 = vshrl.u32 %v2577, 30
        %v2579 = vshll.u32 %v2578, 30
        %v2580 = vsub.s32 %v2576, %v2579
        %vm2581 = vcmp.lt.s32.totalorder %v2580, 0
        %v2582 = vsub.s32 0, %v2580
        %v2583 = vsel %vm2581, %v2582, %v2580
        %v2584 = vclz %v2583
        %v2585 = vsub.s32 %v2584, 2
        %vm2586 = vcmp.gt.s32.totalorder 0, %v2585
        %v2587 = vsel %vm2586, 0, %v2585
        %v2588 = vsub.s32 32, %v2587
        %v2589 = vshll.u32 %v2580, %v2587
        %v2590 = vshrl.u32 %v2572, %v2588
        %v2591 = vor.u32 %v2589, %v2590
        %v2592 = vsub.s32 4294967266, %v2587
        %v2593 = vadd.s32 %v2592, 127
        %v2594 = vshll.u32 %v2593, 23
        %v2595 = vor.u32 4788187, %v2594
        %v2596 = vand.u32 2147483647, %v2595
        %v2598 = vcvt.s32.f32 %v2591
        %v2599 = vmul.f32 %v2598, %v2596
        %v2600 = vxor.u32 %v2599, 2147483648
        %v2601 = vsel %vm2518, %v2600, %v2599
        %v2602 = vsub.s32 4, %v2578
        %v2603 = vsel %vm2518, %v2602, %v2578
        %v2604 = vsel %vm2517, %v321, %v2601
        %v2605 = vsel %vm2517, 0, %v2603
        %v2606 = vcosq.f32.pop %v2604
        %v2607 = vsinq.f32.pop %v2604
        %vm2608 = vweird.f32 %v321
        %v2609 = vadd.s32 %v2605, 3
        %v2610 = vand.u32 %v2609, 3
        %vm2611 = vcmp.lt.s32.totalorder %v2610, 2
        %vm2612 = vcmp.eq.s32.totalorder %v2610, 0
        %v2613 = vxor.u32 %v2607, 2147483648
        %v2614 = vsel %vm2612, %v2606, %v2613
        %vm2615 = vcmp.eq.s32.totalorder %v2610, 2
        %v2616 = vxor.u32 %v2606, 2147483648
        %v2617 = vsel %vm2615, %v2616, %v2607
        %v2618 = vsel %vm2611, %v2614, %v2617
        %v2619 = vsel %vm2608, nan, %v2618
        %v2620 = vand.u32 2147483647, %v322
        %vm2621 = vcmp.le.f32.partialorder %v2620, 0.7853982
        %vm2622 = vcmp.lt.s32.totalorder %v322, 0
        %v2623 = vand.u32 %v322, 2139095040
        %v2624 = vshrl.u32 %v2623, 23
        %v2625 = vsub.s32 %v2624, 127
        %v2626 = vand.u32 2147483647, %v322
        %v2627 = vand.u32 %v2626, 8388607
        %v2628 = vor.u32 %v2627, 8388608
        %v2629 = vsub.s32 0, %v2628
        %v2630 = vadd.s32 %v2625, 1
        %vm2631 = vcmp.gt.s32.totalorder %v2630, 0
        %v2632 = vsel %vm2631, %v2630, 0
        %v2633 = vshrl.u32 %v2632, 5
        %v2634 = vand.u32 %v2632, 31
        %v2635 = vsub.s32 32, %v2634
        %v2636 = vshrl.u32 683565275, %v2635
        %v2637 = vshll.u32 683565275, %v2634
        %v2638 = vshrl.u32 2475754826, %v2635
        %v2639 = vor.u32 %v2637, %v2638
        %v2640 = vshll.u32 2475754826, %v2634
        %v2641 = vshrl.u32 2131351028, %v2635
        %v2642 = vor.u32 %v2640, %v2641
        %v2643 = vshll.u32 2131351028, %v2634
        %v2644 = vshrl.u32 2102212464, %v2635
        %v2645 = vor.u32 %v2643, %v2644
        %v2646 = vshll.u32 2102212464, %v2634
        %v2647 = vshrl.u32 920167782, %v2635
        %v2648 = vor.u32 %v2646, %v2647
        %v2649 = vshll.u32 920167782, %v2634
        %v2650 = vshrl.u32 1326507024, %v2635
        %v2651 = vor.u32 %v2649, %v2650
        %vm2652 = vcmp.lt.s32.totalorder %v2633, 1
        %vm2653 = vcmp.lt.s32.totalorder %v2633, 2
        %vm2654 = vcmp.lt.s32.totalorder %v2633, 3
        %vm2655 = vcmp.lt.s32.totalorder %v2633, 4
        %v2656 = vsel %vm2652, %v2636, %v2639
        %v2657 = vsel %vm2655, %v2645, 2102212464
        %v2658 = vsel %vm2654, %v2642, %v2657
        %v2659 = vsel %vm2653, %v2656, %v2658
        %v2660 = vsel %vm2652, %v2639, %v2642
        %v2661 = vsel %vm2655, %v2648, 920167782
        %v2662 = vsel %vm2654, %v2645, %v2661
        %v2663 = vsel %vm2653, %v2660, %v2662
        %v2664 = vsel %vm2652, %v2642, %v2645
        %v2665 = vsel %vm2655, %v2651, 1326507024
        %v2666 = vsel %vm2654, %v2648, %v2665
        %v2667 = vsel %vm2653, %v2664, %v2666
        %v2668 = vshll.u32 %v2628, 8
        %v2669 = vmul.u32.u64.compose %v2668, %v2667
        %v2670 = vextract.low.u32 %v2669
        %v2671 = vextract.high.u32 %v2669
        %v2672 = vmul.u32.u64.compose %v2668, %v2663
        %v2673 = vextract.low.u32 %v2672
        %v2674 = vextract.high.u32 %v2672
        %v2675 = vmul.u32 %v2668, %v2659
        %v2676 = vadd.s32 %v2671, %v2673
        %vm2677 = vc.u32 %v2671, %v2673
        %v2678 = vadd.s32 %v2674, 1
        %v2679 = vsel %vm2677, %v2678, %v2674
        %v2680 = vadd.s32 %v2675, %v2679
        %v2681 = vadd.s32 %v2680, 536870912
        %v2682 = vshrl.u32 %v2681, 30
        %v2683 = vshll.u32 %v2682, 30
        %v2684 = vsub.s32 %v2680, %v2683
        %vm2685 = vcmp.lt.s32.totalorder %v2684, 0
        %v2686 = vsub.s32 0, %v2684
        %v2687 = vsel %vm2685, %v2686, %v2684
        %v2688 = vclz %v2687
        %v2689 = vsub.s32 %v2688, 2
        %vm2690 = vcmp.gt.s32.totalorder 0, %v2689
        %v2691 = vsel %vm2690, 0, %v2689
        %v2692 = vsub.s32 32, %v2691
        %v2693 = vshll.u32 %v2684, %v2691
        %v2694 = vshrl.u32 %v2676, %v2692
        %v2695 = vor.u32 %v2693, %v2694
        %v2696 = vsub.s32 4294967266, %v2691
        %v2697 = vadd.s32 %v2696, 127
        %v2698 = vshll.u32 %v2697, 23
        %v2699 = vor.u32 4788187, %v2698
        %v2700 = vand.u32 2147483647, %v2699
        %v2702 = vcvt.s32.f32 %v2695
        %v2703 = vmul.f32 %v2702, %v2700
        %v2704 = vxor.u32 %v2703, 2147483648
        %v2705 = vsel %vm2622, %v2704, %v2703
        %v2706 = vsub.s32 4, %v2682
        %v2707 = vsel %vm2622, %v2706, %v2682
        %v2708 = vsel %vm2621, %v322, %v2705
        %v2709 = vsel %vm2621, 0, %v2707
        %v2710 = vcosq.f32.pop %v2708
        %v2711 = vsinq.f32.pop %v2708
        %vm2712 = vweird.f32 %v322
        %v2713 = vadd.s32 %v2709, 3
        %v2714 = vand.u32 %v2713, 3
        %vm2715 = vcmp.lt.s32.totalorder %v2714, 2
        %vm2716 = vcmp.eq.s32.totalorder %v2714, 0
        %v2717 = vxor.u32 %v2711, 2147483648
        %v2718 = vsel %vm2716, %v2710, %v2717
        %vm2719 = vcmp.eq.s32.totalorder %v2714, 2
        %v2720 = vxor.u32 %v2710, 2147483648
        %v2721 = vsel %vm2719, %v2720, %v2711
        %v2722 = vsel %vm2715, %v2718, %v2721
        %v2723 = vsel %vm2712, nan, %v2722
        %v2724 = vand.u32 2147483647, %v323
        %vm2725 = vcmp.le.f32.partialorder %v2724, 0.7853982
        %vm2726 = vcmp.lt.s32.totalorder %v323, 0
        %v2727 = vand.u32 %v323, 2139095040
        %v2728 = vshrl.u32 %v2727, 23
        %v2729 = vsub.s32 %v2728, 127
        %v2730 = vand.u32 2147483647, %v323
        %v2731 = vand.u32 %v2730, 8388607
        %v2732 = vor.u32 %v2731, 8388608
        %v2733 = vsub.s32 0, %v2732
        %v2734 = vadd.s32 %v2729, 1
        %vm2735 = vcmp.gt.s32.totalorder %v2734, 0
        %v2736 = vsel %vm2735, %v2734, 0
        %v2737 = vshrl.u32 %v2736, 5
        %v2738 = vand.u32 %v2736, 31
        %v2739 = vsub.s32 32, %v2738
        %v2740 = vshrl.u32 683565275, %v2739
        %v2741 = vshll.u32 683565275, %v2738
        %v2742 = vshrl.u32 2475754826, %v2739
        %v2743 = vor.u32 %v2741, %v2742
        %v2744 = vshll.u32 2475754826, %v2738
        %v2745 = vshrl.u32 2131351028, %v2739
        %v2746 = vor.u32 %v2744, %v2745
        %v2747 = vshll.u32 2131351028, %v2738
        %v2748 = vshrl.u32 2102212464, %v2739
        %v2749 = vor.u32 %v2747, %v2748
        %v2750 = vshll.u32 2102212464, %v2738
        %v2751 = vshrl.u32 920167782, %v2739
        %v2752 = vor.u32 %v2750, %v2751
        %v2753 = vshll.u32 920167782, %v2738
        %v2754 = vshrl.u32 1326507024, %v2739
        %v2755 = vor.u32 %v2753, %v2754
        %vm2756 = vcmp.lt.s32.totalorder %v2737, 1
        %vm2757 = vcmp.lt.s32.totalorder %v2737, 2
        %vm2758 = vcmp.lt.s32.totalorder %v2737, 3
        %vm2759 = vcmp.lt.s32.totalorder %v2737, 4
        %v2760 = vsel %vm2756, %v2740, %v2743
        %v2761 = vsel %vm2759, %v2749, 2102212464
        %v2762 = vsel %vm2758, %v2746, %v2761
        %v2763 = vsel %vm2757, %v2760, %v2762
        %v2764 = vsel %vm2756, %v2743, %v2746
        %v2765 = vsel %vm2759, %v2752, 920167782
        %v2766 = vsel %vm2758, %v2749, %v2765
        %v2767 = vsel %vm2757, %v2764, %v2766
        %v2768 = vsel %vm2756, %v2746, %v2749
        %v2769 = vsel %vm2759, %v2755, 1326507024
        %v2770 = vsel %vm2758, %v2752, %v2769
        %v2771 = vsel %vm2757, %v2768, %v2770
        %v2772 = vshll.u32 %v2732, 8
        %v2773 = vmul.u32.u64.compose %v2772, %v2771
        %v2774 = vextract.low.u32 %v2773
        %v2775 = vextract.high.u32 %v2773
        %v2776 = vmul.u32.u64.compose %v2772, %v2767
        %v2777 = vextract.low.u32 %v2776
        %v2778 = vextract.high.u32 %v2776
        %v2779 = vmul.u32 %v2772, %v2763
        %v2780 = vadd.s32 %v2775, %v2777
        %vm2781 = vc.u32 %v2775, %v2777
        %v2782 = vadd.s32 %v2778, 1
        %v2783 = vsel %vm2781, %v2782, %v2778
        %v2784 = vadd.s32 %v2779, %v2783
        %v2785 = vadd.s32 %v2784, 536870912
        %v2786 = vshrl.u32 %v2785, 30
        %v2787 = vshll.u32 %v2786, 30
        %v2788 = vsub.s32 %v2784, %v2787
        %vm2789 = vcmp.lt.s32.totalorder %v2788, 0
        %v2790 = vsub.s32 0, %v2788
        %v2791 = vsel %vm2789, %v2790, %v2788
        %v2792 = vclz %v2791
        %v2793 = vsub.s32 %v2792, 2
        %vm2794 = vcmp.gt.s32.totalorder 0, %v2793
        %v2795 = vsel %vm2794, 0, %v2793
        %v2796 = vsub.s32 32, %v2795
        %v2797 = vshll.u32 %v2788, %v2795
        %v2798 = vshrl.u32 %v2780, %v2796
        %v2799 = vor.u32 %v2797, %v2798
        %v2800 = vsub.s32 4294967266, %v2795
        %v2801 = vadd.s32 %v2800, 127
        %v2802 = vshll.u32 %v2801, 23
        %v2803 = vor.u32 4788187, %v2802
        %v2804 = vand.u32 2147483647, %v2803
        %v2806 = vcvt.s32.f32 %v2799
        %v2807 = vmul.f32 %v2806, %v2804
        %v2808 = vxor.u32 %v2807, 2147483648
        %v2809 = vsel %vm2726, %v2808, %v2807
        %v2810 = vsub.s32 4, %v2786
        %v2811 = vsel %vm2726, %v2810, %v2786
        %v2812 = vsel %vm2725, %v323, %v2809
        %v2813 = vsel %vm2725, 0, %v2811
        %v2814 = vcosq.f32.pop %v2812
        %v2815 = vsinq.f32.pop %v2812
        %vm2816 = vweird.f32 %v323
        %v2817 = vadd.s32 %v2813, 3
        %v2818 = vand.u32 %v2817, 3
        %vm2819 = vcmp.lt.s32.totalorder %v2818, 2
        %vm2820 = vcmp.eq.s32.totalorder %v2818, 0
        %v2821 = vxor.u32 %v2815, 2147483648
        %v2822 = vsel %vm2820, %v2814, %v2821
        %vm2823 = vcmp.eq.s32.totalorder %v2818, 2
        %v2824 = vxor.u32 %v2814, 2147483648
        %v2825 = vsel %vm2823, %v2824, %v2815
        %v2826 = vsel %vm2819, %v2822, %v2825
        %v2827 = vsel %vm2816, nan, %v2826
        %v2828 = vand.u32 2147483647, %v324
        %vm2829 = vcmp.le.f32.partialorder %v2828, 0.7853982
        %vm2830 = vcmp.lt.s32.totalorder %v324, 0
        %v2831 = vand.u32 %v324, 2139095040
        %v2832 = vshrl.u32 %v2831, 23
        %v2833 = vsub.s32 %v2832, 127
        %v2834 = vand.u32 2147483647, %v324
        %v2835 = vand.u32 %v2834, 8388607
        %v2836 = vor.u32 %v2835, 8388608
        %v2837 = vsub.s32 0, %v2836
        %v2838 = vadd.s32 %v2833, 1
        %vm2839 = vcmp.gt.s32.totalorder %v2838, 0
        %v2840 = vsel %vm2839, %v2838, 0
        %v2841 = vshrl.u32 %v2840, 5
        %v2842 = vand.u32 %v2840, 31
        %v2843 = vsub.s32 32, %v2842
        %v2844 = vshrl.u32 683565275, %v2843
        %v2845 = vshll.u32 683565275, %v2842
        %v2846 = vshrl.u32 2475754826, %v2843
        %v2847 = vor.u32 %v2845, %v2846
        %v2848 = vshll.u32 2475754826, %v2842
        %v2849 = vshrl.u32 2131351028, %v2843
        %v2850 = vor.u32 %v2848, %v2849
        %v2851 = vshll.u32 2131351028, %v2842
        %v2852 = vshrl.u32 2102212464, %v2843
        %v2853 = vor.u32 %v2851, %v2852
        %v2854 = vshll.u32 2102212464, %v2842
        %v2855 = vshrl.u32 920167782, %v2843
        %v2856 = vor.u32 %v2854, %v2855
        %v2857 = vshll.u32 920167782, %v2842
        %v2858 = vshrl.u32 1326507024, %v2843
        %v2859 = vor.u32 %v2857, %v2858
        %vm2860 = vcmp.lt.s32.totalorder %v2841, 1
        %vm2861 = vcmp.lt.s32.totalorder %v2841, 2
        %vm2862 = vcmp.lt.s32.totalorder %v2841, 3
        %vm2863 = vcmp.lt.s32.totalorder %v2841, 4
        %v2864 = vsel %vm2860, %v2844, %v2847
        %v2865 = vsel %vm2863, %v2853, 2102212464
        %v2866 = vsel %vm2862, %v2850, %v2865
        %v2867 = vsel %vm2861, %v2864, %v2866
        %v2868 = vsel %vm2860, %v2847, %v2850
        %v2869 = vsel %vm2863, %v2856, 920167782
        %v2870 = vsel %vm2862, %v2853, %v2869
        %v2871 = vsel %vm2861, %v2868, %v2870
        %v2872 = vsel %vm2860, %v2850, %v2853
        %v2873 = vsel %vm2863, %v2859, 1326507024
        %v2874 = vsel %vm2862, %v2856, %v2873
        %v2875 = vsel %vm2861, %v2872, %v2874
        %v2876 = vshll.u32 %v2836, 8
        %v2877 = vmul.u32.u64.compose %v2876, %v2875
        %v2878 = vextract.low.u32 %v2877
        %v2879 = vextract.high.u32 %v2877
        %v2880 = vmul.u32.u64.compose %v2876, %v2871
        %v2881 = vextract.low.u32 %v2880
        %v2882 = vextract.high.u32 %v2880
        %v2883 = vmul.u32 %v2876, %v2867
        %v2884 = vadd.s32 %v2879, %v2881
        %vm2885 = vc.u32 %v2879, %v2881
        %v2886 = vadd.s32 %v2882, 1
        %v2887 = vsel %vm2885, %v2886, %v2882
        %v2888 = vadd.s32 %v2883, %v2887
        %v2889 = vadd.s32 %v2888, 536870912
        %v2890 = vshrl.u32 %v2889, 30
        %v2891 = vshll.u32 %v2890, 30
        %v2892 = vsub.s32 %v2888, %v2891
        %vm2893 = vcmp.lt.s32.totalorder %v2892, 0
        %v2894 = vsub.s32 0, %v2892
        %v2895 = vsel %vm2893, %v2894, %v2892
        %v2896 = vclz %v2895
        %v2897 = vsub.s32 %v2896, 2
        %vm2898 = vcmp.gt.s32.totalorder 0, %v2897
        %v2899 = vsel %vm2898, 0, %v2897
        %v2900 = vsub.s32 32, %v2899
        %v2901 = vshll.u32 %v2892, %v2899
        %v2902 = vshrl.u32 %v2884, %v2900
        %v2903 = vor.u32 %v2901, %v2902
        %v2904 = vsub.s32 4294967266, %v2899
        %v2905 = vadd.s32 %v2904, 127
        %v2906 = vshll.u32 %v2905, 23
        %v2907 = vor.u32 4788187, %v2906
        %v2908 = vand.u32 2147483647, %v2907
        %v2910 = vcvt.s32.f32 %v2903
        %v2911 = vmul.f32 %v2910, %v2908
        %v2912 = vxor.u32 %v2911, 2147483648
        %v2913 = vsel %vm2830, %v2912, %v2911
        %v2914 = vsub.s32 4, %v2890
        %v2915 = vsel %vm2830, %v2914, %v2890
        %v2916 = vsel %vm2829, %v324, %v2913
        %v2917 = vsel %vm2829, 0, %v2915
        %v2918 = vcosq.f32.pop %v2916
        %v2919 = vsinq.f32.pop %v2916
        %vm2920 = vweird.f32 %v324
        %v2921 = vadd.s32 %v2917, 3
        %v2922 = vand.u32 %v2921, 3
        %vm2923 = vcmp.lt.s32.totalorder %v2922, 2
        %vm2924 = vcmp.eq.s32.totalorder %v2922, 0
        %v2925 = vxor.u32 %v2919, 2147483648
        %v2926 = vsel %vm2924, %v2918, %v2925
        %vm2927 = vcmp.eq.s32.totalorder %v2922, 2
        %v2928 = vxor.u32 %v2918, 2147483648
        %v2929 = vsel %vm2927, %v2928, %v2919
        %v2930 = vsel %vm2923, %v2926, %v2929
        %v2931 = vsel %vm2920, nan, %v2930
        %v2932 = vand.u32 2147483647, %v325
        %vm2933 = vcmp.le.f32.partialorder %v2932, 0.7853982
        %vm2934 = vcmp.lt.s32.totalorder %v325, 0
        %v2935 = vand.u32 %v325, 2139095040
        %v2936 = vshrl.u32 %v2935, 23
        %v2937 = vsub.s32 %v2936, 127
        %v2938 = vand.u32 2147483647, %v325
        %v2939 = vand.u32 %v2938, 8388607
        %v2940 = vor.u32 %v2939, 8388608
        %v2941 = vsub.s32 0, %v2940
        %v2942 = vadd.s32 %v2937, 1
        %vm2943 = vcmp.gt.s32.totalorder %v2942, 0
        %v2944 = vsel %vm2943, %v2942, 0
        %v2945 = vshrl.u32 %v2944, 5
        %v2946 = vand.u32 %v2944, 31
        %v2947 = vsub.s32 32, %v2946
        %v2948 = vshrl.u32 683565275, %v2947
        %v2949 = vshll.u32 683565275, %v2946
        %v2950 = vshrl.u32 2475754826, %v2947
        %v2951 = vor.u32 %v2949, %v2950
        %v2952 = vshll.u32 2475754826, %v2946
        %v2953 = vshrl.u32 2131351028, %v2947
        %v2954 = vor.u32 %v2952, %v2953
        %v2955 = vshll.u32 2131351028, %v2946
        %v2956 = vshrl.u32 2102212464, %v2947
        %v2957 = vor.u32 %v2955, %v2956
        %v2958 = vshll.u32 2102212464, %v2946
        %v2959 = vshrl.u32 920167782, %v2947
        %v2960 = vor.u32 %v2958, %v2959
        %v2961 = vshll.u32 920167782, %v2946
        %v2962 = vshrl.u32 1326507024, %v2947
        %v2963 = vor.u32 %v2961, %v2962
        %vm2964 = vcmp.lt.s32.totalorder %v2945, 1
        %vm2965 = vcmp.lt.s32.totalorder %v2945, 2
        %vm2966 = vcmp.lt.s32.totalorder %v2945, 3
        %vm2967 = vcmp.lt.s32.totalorder %v2945, 4
        %v2968 = vsel %vm2964, %v2948, %v2951
        %v2969 = vsel %vm2967, %v2957, 2102212464
        %v2970 = vsel %vm2966, %v2954, %v2969
        %v2971 = vsel %vm2965, %v2968, %v2970
        %v2972 = vsel %vm2964, %v2951, %v2954
        %v2973 = vsel %vm2967, %v2960, 920167782
        %v2974 = vsel %vm2966, %v2957, %v2973
        %v2975 = vsel %vm2965, %v2972, %v2974
        %v2976 = vsel %vm2964, %v2954, %v2957
        %v2977 = vsel %vm2967, %v2963, 1326507024
        %v2978 = vsel %vm2966, %v2960, %v2977
        %v2979 = vsel %vm2965, %v2976, %v2978
        %v2980 = vshll.u32 %v2940, 8
        %v2981 = vmul.u32.u64.compose %v2980, %v2979
        %v2982 = vextract.low.u32 %v2981
        %v2983 = vextract.high.u32 %v2981
        %v2984 = vmul.u32.u64.compose %v2980, %v2975
        %v2985 = vextract.low.u32 %v2984
        %v2986 = vextract.high.u32 %v2984
        %v2987 = vmul.u32 %v2980, %v2971
        %v2988 = vadd.s32 %v2983, %v2985
        %vm2989 = vc.u32 %v2983, %v2985
        %v2990 = vadd.s32 %v2986, 1
        %v2991 = vsel %vm2989, %v2990, %v2986
        %v2992 = vadd.s32 %v2987, %v2991
        %v2993 = vadd.s32 %v2992, 536870912
        %v2994 = vshrl.u32 %v2993, 30
        %v2995 = vshll.u32 %v2994, 30
        %v2996 = vsub.s32 %v2992, %v2995
        %vm2997 = vcmp.lt.s32.totalorder %v2996, 0
        %v2998 = vsub.s32 0, %v2996
        %v2999 = vsel %vm2997, %v2998, %v2996
        %v3000 = vclz %v2999
        %v3001 = vsub.s32 %v3000, 2
        %vm3002 = vcmp.gt.s32.totalorder 0, %v3001
        %v3003 = vsel %vm3002, 0, %v3001
        %v3004 = vsub.s32 32, %v3003
        %v3005 = vshll.u32 %v2996, %v3003
        %v3006 = vshrl.u32 %v2988, %v3004
        %v3007 = vor.u32 %v3005, %v3006
        %v3008 = vsub.s32 4294967266, %v3003
        %v3009 = vadd.s32 %v3008, 127
        %v3010 = vshll.u32 %v3009, 23
        %v3011 = vor.u32 4788187, %v3010
        %v3012 = vand.u32 2147483647, %v3011
        %v3014 = vcvt.s32.f32 %v3007
        %v3015 = vmul.f32 %v3014, %v3012
        %v3016 = vxor.u32 %v3015, 2147483648
        %v3017 = vsel %vm2934, %v3016, %v3015
        %v3018 = vsub.s32 4, %v2994
        %v3019 = vsel %vm2934, %v3018, %v2994
        %v3020 = vsel %vm2933, %v325, %v3017
        %v3021 = vsel %vm2933, 0, %v3019
        %v3022 = vcosq.f32.pop %v3020
        %v3023 = vsinq.f32.pop %v3020
        %vm3024 = vweird.f32 %v325
        %v3025 = vadd.s32 %v3021, 3
        %v3026 = vand.u32 %v3025, 3
        %vm3027 = vcmp.lt.s32.totalorder %v3026, 2
        %vm3028 = vcmp.eq.s32.totalorder %v3026, 0
        %v3029 = vxor.u32 %v3023, 2147483648
        %v3030 = vsel %vm3028, %v3022, %v3029
        %vm3031 = vcmp.eq.s32.totalorder %v3026, 2
        %v3032 = vxor.u32 %v3022, 2147483648
        %v3033 = vsel %vm3031, %v3032, %v3023
        %v3034 = vsel %vm3027, %v3030, %v3033
        %v3035 = vsel %vm3024, nan, %v3034
        %v3036 = vand.u32 2147483647, %v326
        %vm3037 = vcmp.le.f32.partialorder %v3036, 0.7853982
        %vm3038 = vcmp.lt.s32.totalorder %v326, 0
        %v3039 = vand.u32 %v326, 2139095040
        %v3040 = vshrl.u32 %v3039, 23
        %v3041 = vsub.s32 %v3040, 127
        %v3042 = vand.u32 2147483647, %v326
        %v3043 = vand.u32 %v3042, 8388607
        %v3044 = vor.u32 %v3043, 8388608
        %v3045 = vsub.s32 0, %v3044
        %v3046 = vadd.s32 %v3041, 1
        %vm3047 = vcmp.gt.s32.totalorder %v3046, 0
        %v3048 = vsel %vm3047, %v3046, 0
        %v3049 = vshrl.u32 %v3048, 5
        %v3050 = vand.u32 %v3048, 31
        %v3051 = vsub.s32 32, %v3050
        %v3052 = vshrl.u32 683565275, %v3051
        %v3053 = vshll.u32 683565275, %v3050
        %v3054 = vshrl.u32 2475754826, %v3051
        %v3055 = vor.u32 %v3053, %v3054
        %v3056 = vshll.u32 2475754826, %v3050
        %v3057 = vshrl.u32 2131351028, %v3051
        %v3058 = vor.u32 %v3056, %v3057
        %v3059 = vshll.u32 2131351028, %v3050
        %v3060 = vshrl.u32 2102212464, %v3051
        %v3061 = vor.u32 %v3059, %v3060
        %v3062 = vshll.u32 2102212464, %v3050
        %v3063 = vshrl.u32 920167782, %v3051
        %v3064 = vor.u32 %v3062, %v3063
        %v3065 = vshll.u32 920167782, %v3050
        %v3066 = vshrl.u32 1326507024, %v3051
        %v3067 = vor.u32 %v3065, %v3066
        %vm3068 = vcmp.lt.s32.totalorder %v3049, 1
        %vm3069 = vcmp.lt.s32.totalorder %v3049, 2
        %vm3070 = vcmp.lt.s32.totalorder %v3049, 3
        %vm3071 = vcmp.lt.s32.totalorder %v3049, 4
        %v3072 = vsel %vm3068, %v3052, %v3055
        %v3073 = vsel %vm3071, %v3061, 2102212464
        %v3074 = vsel %vm3070, %v3058, %v3073
        %v3075 = vsel %vm3069, %v3072, %v3074
        %v3076 = vsel %vm3068, %v3055, %v3058
        %v3077 = vsel %vm3071, %v3064, 920167782
        %v3078 = vsel %vm3070, %v3061, %v3077
        %v3079 = vsel %vm3069, %v3076, %v3078
        %v3080 = vsel %vm3068, %v3058, %v3061
        %v3081 = vsel %vm3071, %v3067, 1326507024
        %v3082 = vsel %vm3070, %v3064, %v3081
        %v3083 = vsel %vm3069, %v3080, %v3082
        %v3084 = vshll.u32 %v3044, 8
        %v3085 = vmul.u32.u64.compose %v3084, %v3083
        %v3086 = vextract.low.u32 %v3085
        %v3087 = vextract.high.u32 %v3085
        %v3088 = vmul.u32.u64.compose %v3084, %v3079
        %v3089 = vextract.low.u32 %v3088
        %v3090 = vextract.high.u32 %v3088
        %v3091 = vmul.u32 %v3084, %v3075
        %v3092 = vadd.s32 %v3087, %v3089
        %vm3093 = vc.u32 %v3087, %v3089
        %v3094 = vadd.s32 %v3090, 1
        %v3095 = vsel %vm3093, %v3094, %v3090
        %v3096 = vadd.s32 %v3091, %v3095
        %v3097 = vadd.s32 %v3096, 536870912
        %v3098 = vshrl.u32 %v3097, 30
        %v3099 = vshll.u32 %v3098, 30
        %v3100 = vsub.s32 %v3096, %v3099
        %vm3101 = vcmp.lt.s32.totalorder %v3100, 0
        %v3102 = vsub.s32 0, %v3100
        %v3103 = vsel %vm3101, %v3102, %v3100
        %v3104 = vclz %v3103
        %v3105 = vsub.s32 %v3104, 2
        %vm3106 = vcmp.gt.s32.totalorder 0, %v3105
        %v3107 = vsel %vm3106, 0, %v3105
        %v3108 = vsub.s32 32, %v3107
        %v3109 = vshll.u32 %v3100, %v3107
        %v3110 = vshrl.u32 %v3092, %v3108
        %v3111 = vor.u32 %v3109, %v3110
        %v3112 = vsub.s32 4294967266, %v3107
        %v3113 = vadd.s32 %v3112, 127
        %v3114 = vshll.u32 %v3113, 23
        %v3115 = vor.u32 4788187, %v3114
        %v3116 = vand.u32 2147483647, %v3115
        %v3118 = vcvt.s32.f32 %v3111
        %v3119 = vmul.f32 %v3118, %v3116
        %v3120 = vxor.u32 %v3119, 2147483648
        %v3121 = vsel %vm3038, %v3120, %v3119
        %v3122 = vsub.s32 4, %v3098
        %v3123 = vsel %vm3038, %v3122, %v3098
        %v3124 = vsel %vm3037, %v326, %v3121
        %v3125 = vsel %vm3037, 0, %v3123
        %v3126 = vcosq.f32.pop %v3124
        %v3127 = vsinq.f32.pop %v3124
        %vm3128 = vweird.f32 %v326
        %v3129 = vadd.s32 %v3125, 3
        %v3130 = vand.u32 %v3129, 3
        %vm3131 = vcmp.lt.s32.totalorder %v3130, 2
        %vm3132 = vcmp.eq.s32.totalorder %v3130, 0
        %v3133 = vxor.u32 %v3127, 2147483648
        %v3134 = vsel %vm3132, %v3126, %v3133
        %vm3135 = vcmp.eq.s32.totalorder %v3130, 2
        %v3136 = vxor.u32 %v3126, 2147483648
        %v3137 = vsel %vm3135, %v3136, %v3127
        %v3138 = vsel %vm3131, %v3134, %v3137
        %v3139 = vsel %vm3128, nan, %v3138
        %v3140 = vand.u32 2147483647, %v327
        %vm3141 = vcmp.le.f32.partialorder %v3140, 0.7853982
        %vm3142 = vcmp.lt.s32.totalorder %v327, 0
        %v3143 = vand.u32 %v327, 2139095040
        %v3144 = vshrl.u32 %v3143, 23
        %v3145 = vsub.s32 %v3144, 127
        %v3146 = vand.u32 2147483647, %v327
        %v3147 = vand.u32 %v3146, 8388607
        %v3148 = vor.u32 %v3147, 8388608
        %v3149 = vsub.s32 0, %v3148
        %v3150 = vadd.s32 %v3145, 1
        %vm3151 = vcmp.gt.s32.totalorder %v3150, 0
        %v3152 = vsel %vm3151, %v3150, 0
        %v3153 = vshrl.u32 %v3152, 5
        %v3154 = vand.u32 %v3152, 31
        %v3155 = vsub.s32 32, %v3154
        %v3156 = vshrl.u32 683565275, %v3155
        %v3157 = vshll.u32 683565275, %v3154
        %v3158 = vshrl.u32 2475754826, %v3155
        %v3159 = vor.u32 %v3157, %v3158
        %v3160 = vshll.u32 2475754826, %v3154
        %v3161 = vshrl.u32 2131351028, %v3155
        %v3162 = vor.u32 %v3160, %v3161
        %v3163 = vshll.u32 2131351028, %v3154
        %v3164 = vshrl.u32 2102212464, %v3155
        %v3165 = vor.u32 %v3163, %v3164
        %v3166 = vshll.u32 2102212464, %v3154
        %v3167 = vshrl.u32 920167782, %v3155
        %v3168 = vor.u32 %v3166, %v3167
        %v3169 = vshll.u32 920167782, %v3154
        %v3170 = vshrl.u32 1326507024, %v3155
        %v3171 = vor.u32 %v3169, %v3170
        %vm3172 = vcmp.lt.s32.totalorder %v3153, 1
        %vm3173 = vcmp.lt.s32.totalorder %v3153, 2
        %vm3174 = vcmp.lt.s32.totalorder %v3153, 3
        %vm3175 = vcmp.lt.s32.totalorder %v3153, 4
        %v3176 = vsel %vm3172, %v3156, %v3159
        %v3177 = vsel %vm3175, %v3165, 2102212464
        %v3178 = vsel %vm3174, %v3162, %v3177
        %v3179 = vsel %vm3173, %v3176, %v3178
        %v3180 = vsel %vm3172, %v3159, %v3162
        %v3181 = vsel %vm3175, %v3168, 920167782
        %v3182 = vsel %vm3174, %v3165, %v3181
        %v3183 = vsel %vm3173, %v3180, %v3182
        %v3184 = vsel %vm3172, %v3162, %v3165
        %v3185 = vsel %vm3175, %v3171, 1326507024
        %v3186 = vsel %vm3174, %v3168, %v3185
        %v3187 = vsel %vm3173, %v3184, %v3186
        %v3188 = vshll.u32 %v3148, 8
        %v3189 = vmul.u32.u64.compose %v3188, %v3187
        %v3190 = vextract.low.u32 %v3189
        %v3191 = vextract.high.u32 %v3189
        %v3192 = vmul.u32.u64.compose %v3188, %v3183
        %v3193 = vextract.low.u32 %v3192
        %v3194 = vextract.high.u32 %v3192
        %v3195 = vmul.u32 %v3188, %v3179
        %v3196 = vadd.s32 %v3191, %v3193
        %vm3197 = vc.u32 %v3191, %v3193
        %v3198 = vadd.s32 %v3194, 1
        %v3199 = vsel %vm3197, %v3198, %v3194
        %v3200 = vadd.s32 %v3195, %v3199
        %v3201 = vadd.s32 %v3200, 536870912
        %v3202 = vshrl.u32 %v3201, 30
        %v3203 = vshll.u32 %v3202, 30
        %v3204 = vsub.s32 %v3200, %v3203
        %vm3205 = vcmp.lt.s32.totalorder %v3204, 0
        %v3206 = vsub.s32 0, %v3204
        %v3207 = vsel %vm3205, %v3206, %v3204
        %v3208 = vclz %v3207
        %v3209 = vsub.s32 %v3208, 2
        %vm3210 = vcmp.gt.s32.totalorder 0, %v3209
        %v3211 = vsel %vm3210, 0, %v3209
        %v3212 = vsub.s32 32, %v3211
        %v3213 = vshll.u32 %v3204, %v3211
        %v3214 = vshrl.u32 %v3196, %v3212
        %v3215 = vor.u32 %v3213, %v3214
        %v3216 = vsub.s32 4294967266, %v3211
        %v3217 = vadd.s32 %v3216, 127
        %v3218 = vshll.u32 %v3217, 23
        %v3219 = vor.u32 4788187, %v3218
        %v3220 = vand.u32 2147483647, %v3219
        %v3222 = vcvt.s32.f32 %v3215
        %v3223 = vmul.f32 %v3222, %v3220
        %v3224 = vxor.u32 %v3223, 2147483648
        %v3225 = vsel %vm3142, %v3224, %v3223
        %v3226 = vsub.s32 4, %v3202
        %v3227 = vsel %vm3142, %v3226, %v3202
        %v3228 = vsel %vm3141, %v327, %v3225
        %v3229 = vsel %vm3141, 0, %v3227
        %v3230 = vcosq.f32.pop %v3228
        %v3231 = vsinq.f32.pop %v3228
        %vm3232 = vweird.f32 %v327
        %v3233 = vadd.s32 %v3229, 3
        %v3234 = vand.u32 %v3233, 3
        %vm3235 = vcmp.lt.s32.totalorder %v3234, 2
        %vm3236 = vcmp.eq.s32.totalorder %v3234, 0
        %v3237 = vxor.u32 %v3231, 2147483648
        %v3238 = vsel %vm3236, %v3230, %v3237
        %vm3239 = vcmp.eq.s32.totalorder %v3234, 2
        %v3240 = vxor.u32 %v3230, 2147483648
        %v3241 = vsel %vm3239, %v3240, %v3231
        %v3242 = vsel %vm3235, %v3238, %v3241
        %v3243 = vsel %vm3232, nan, %v3242
        %v3244 = vand.u32 2147483647, %v328
        %vm3245 = vcmp.le.f32.partialorder %v3244, 0.7853982
        %vm3246 = vcmp.lt.s32.totalorder %v328, 0
        %v3247 = vand.u32 %v328, 2139095040
        %v3248 = vshrl.u32 %v3247, 23
        %v3249 = vsub.s32 %v3248, 127
        %v3250 = vand.u32 2147483647, %v328
        %v3251 = vand.u32 %v3250, 8388607
        %v3252 = vor.u32 %v3251, 8388608
        %v3253 = vsub.s32 0, %v3252
        %v3254 = vadd.s32 %v3249, 1
        %vm3255 = vcmp.gt.s32.totalorder %v3254, 0
        %v3256 = vsel %vm3255, %v3254, 0
        %v3257 = vshrl.u32 %v3256, 5
        %v3258 = vand.u32 %v3256, 31
        %v3259 = vsub.s32 32, %v3258
        %v3260 = vshrl.u32 683565275, %v3259
        %v3261 = vshll.u32 683565275, %v3258
        %v3262 = vshrl.u32 2475754826, %v3259
        %v3263 = vor.u32 %v3261, %v3262
        %v3264 = vshll.u32 2475754826, %v3258
        %v3265 = vshrl.u32 2131351028, %v3259
        %v3266 = vor.u32 %v3264, %v3265
        %v3267 = vshll.u32 2131351028, %v3258
        %v3268 = vshrl.u32 2102212464, %v3259
        %v3269 = vor.u32 %v3267, %v3268
        %v3270 = vshll.u32 2102212464, %v3258
        %v3271 = vshrl.u32 920167782, %v3259
        %v3272 = vor.u32 %v3270, %v3271
        %v3273 = vshll.u32 920167782, %v3258
        %v3274 = vshrl.u32 1326507024, %v3259
        %v3275 = vor.u32 %v3273, %v3274
        %vm3276 = vcmp.lt.s32.totalorder %v3257, 1
        %vm3277 = vcmp.lt.s32.totalorder %v3257, 2
        %vm3278 = vcmp.lt.s32.totalorder %v3257, 3
        %vm3279 = vcmp.lt.s32.totalorder %v3257, 4
        %v3280 = vsel %vm3276, %v3260, %v3263
        %v3281 = vsel %vm3279, %v3269, 2102212464
        %v3282 = vsel %vm3278, %v3266, %v3281
        %v3283 = vsel %vm3277, %v3280, %v3282
        %v3284 = vsel %vm3276, %v3263, %v3266
        %v3285 = vsel %vm3279, %v3272, 920167782
        %v3286 = vsel %vm3278, %v3269, %v3285
        %v3287 = vsel %vm3277, %v3284, %v3286
        %v3288 = vsel %vm3276, %v3266, %v3269
        %v3289 = vsel %vm3279, %v3275, 1326507024
        %v3290 = vsel %vm3278, %v3272, %v3289
        %v3291 = vsel %vm3277, %v3288, %v3290
        %v3292 = vshll.u32 %v3252, 8
        %v3293 = vmul.u32.u64.compose %v3292, %v3291
        %v3294 = vextract.low.u32 %v3293
        %v3295 = vextract.high.u32 %v3293
        %v3296 = vmul.u32.u64.compose %v3292, %v3287
        %v3297 = vextract.low.u32 %v3296
        %v3298 = vextract.high.u32 %v3296
        %v3299 = vmul.u32 %v3292, %v3283
        %v3300 = vadd.s32 %v3295, %v3297
        %vm3301 = vc.u32 %v3295, %v3297
        %v3302 = vadd.s32 %v3298, 1
        %v3303 = vsel %vm3301, %v3302, %v3298
        %v3304 = vadd.s32 %v3299, %v3303
        %v3305 = vadd.s32 %v3304, 536870912
        %v3306 = vshrl.u32 %v3305, 30
        %v3307 = vshll.u32 %v3306, 30
        %v3308 = vsub.s32 %v3304, %v3307
        %vm3309 = vcmp.lt.s32.totalorder %v3308, 0
        %v3310 = vsub.s32 0, %v3308
        %v3311 = vsel %vm3309, %v3310, %v3308
        %v3312 = vclz %v3311
        %v3313 = vsub.s32 %v3312, 2
        %vm3314 = vcmp.gt.s32.totalorder 0, %v3313
        %v3315 = vsel %vm3314, 0, %v3313
        %v3316 = vsub.s32 32, %v3315
        %v3317 = vshll.u32 %v3308, %v3315
        %v3318 = vshrl.u32 %v3300, %v3316
        %v3319 = vor.u32 %v3317, %v3318
        %v3320 = vsub.s32 4294967266, %v3315
        %v3321 = vadd.s32 %v3320, 127
        %v3322 = vshll.u32 %v3321, 23
        %v3323 = vor.u32 4788187, %v3322
        %v3324 = vand.u32 2147483647, %v3323
        %v3326 = vcvt.s32.f32 %v3319
        %v3327 = vmul.f32 %v3326, %v3324
        %v3328 = vxor.u32 %v3327, 2147483648
        %v3329 = vsel %vm3246, %v3328, %v3327
        %v3330 = vsub.s32 4, %v3306
        %v3331 = vsel %vm3246, %v3330, %v3306
        %v3332 = vsel %vm3245, %v328, %v3329
        %v3333 = vsel %vm3245, 0, %v3331
        %v3334 = vcosq.f32.pop %v3332
        %v3335 = vsinq.f32.pop %v3332
        %vm3336 = vweird.f32 %v328
        %v3337 = vadd.s32 %v3333, 3
        %v3338 = vand.u32 %v3337, 3
        %vm3339 = vcmp.lt.s32.totalorder %v3338, 2
        %vm3340 = vcmp.eq.s32.totalorder %v3338, 0
        %v3341 = vxor.u32 %v3335, 2147483648
        %v3342 = vsel %vm3340, %v3334, %v3341
        %vm3343 = vcmp.eq.s32.totalorder %v3338, 2
        %v3344 = vxor.u32 %v3334, 2147483648
        %v3345 = vsel %vm3343, %v3344, %v3335
        %v3346 = vsel %vm3339, %v3342, %v3345
        %v3347 = vsel %vm3336, nan, %v3346
        %v3348 = vand.u32 2147483647, %v329
        %vm3349 = vcmp.le.f32.partialorder %v3348, 0.7853982
        %vm3350 = vcmp.lt.s32.totalorder %v329, 0
        %v3351 = vand.u32 %v329, 2139095040
        %v3352 = vshrl.u32 %v3351, 23
        %v3353 = vsub.s32 %v3352, 127
        %v3354 = vand.u32 2147483647, %v329
        %v3355 = vand.u32 %v3354, 8388607
        %v3356 = vor.u32 %v3355, 8388608
        %v3357 = vsub.s32 0, %v3356
        %v3358 = vadd.s32 %v3353, 1
        %vm3359 = vcmp.gt.s32.totalorder %v3358, 0
        %v3360 = vsel %vm3359, %v3358, 0
        %v3361 = vshrl.u32 %v3360, 5
        %v3362 = vand.u32 %v3360, 31
        %v3363 = vsub.s32 32, %v3362
        %v3364 = vshrl.u32 683565275, %v3363
        %v3365 = vshll.u32 683565275, %v3362
        %v3366 = vshrl.u32 2475754826, %v3363
        %v3367 = vor.u32 %v3365, %v3366
        %v3368 = vshll.u32 2475754826, %v3362
        %v3369 = vshrl.u32 2131351028, %v3363
        %v3370 = vor.u32 %v3368, %v3369
        %v3371 = vshll.u32 2131351028, %v3362
        %v3372 = vshrl.u32 2102212464, %v3363
        %v3373 = vor.u32 %v3371, %v3372
        %v3374 = vshll.u32 2102212464, %v3362
        %v3375 = vshrl.u32 920167782, %v3363
        %v3376 = vor.u32 %v3374, %v3375
        %v3377 = vshll.u32 920167782, %v3362
        %v3378 = vshrl.u32 1326507024, %v3363
        %v3379 = vor.u32 %v3377, %v3378
        %vm3380 = vcmp.lt.s32.totalorder %v3361, 1
        %vm3381 = vcmp.lt.s32.totalorder %v3361, 2
        %vm3382 = vcmp.lt.s32.totalorder %v3361, 3
        %vm3383 = vcmp.lt.s32.totalorder %v3361, 4
        %v3384 = vsel %vm3380, %v3364, %v3367
        %v3385 = vsel %vm3383, %v3373, 2102212464
        %v3386 = vsel %vm3382, %v3370, %v3385
        %v3387 = vsel %vm3381, %v3384, %v3386
        %v3388 = vsel %vm3380, %v3367, %v3370
        %v3389 = vsel %vm3383, %v3376, 920167782
        %v3390 = vsel %vm3382, %v3373, %v3389
        %v3391 = vsel %vm3381, %v3388, %v3390
        %v3392 = vsel %vm3380, %v3370, %v3373
        %v3393 = vsel %vm3383, %v3379, 1326507024
        %v3394 = vsel %vm3382, %v3376, %v3393
        %v3395 = vsel %vm3381, %v3392, %v3394
        %v3396 = vshll.u32 %v3356, 8
        %v3397 = vmul.u32.u64.compose %v3396, %v3395
        %v3398 = vextract.low.u32 %v3397
        %v3399 = vextract.high.u32 %v3397
        %v3400 = vmul.u32.u64.compose %v3396, %v3391
        %v3401 = vextract.low.u32 %v3400
        %v3402 = vextract.high.u32 %v3400
        %v3403 = vmul.u32 %v3396, %v3387
        %v3404 = vadd.s32 %v3399, %v3401
        %vm3405 = vc.u32 %v3399, %v3401
        %v3406 = vadd.s32 %v3402, 1
        %v3407 = vsel %vm3405, %v3406, %v3402
        %v3408 = vadd.s32 %v3403, %v3407
        %v3409 = vadd.s32 %v3408, 536870912
        %v3410 = vshrl.u32 %v3409, 30
        %v3411 = vshll.u32 %v3410, 30
        %v3412 = vsub.s32 %v3408, %v3411
        %vm3413 = vcmp.lt.s32.totalorder %v3412, 0
        %v3414 = vsub.s32 0, %v3412
        %v3415 = vsel %vm3413, %v3414, %v3412
        %v3416 = vclz %v3415
        %v3417 = vsub.s32 %v3416, 2
        %vm3418 = vcmp.gt.s32.totalorder 0, %v3417
        %v3419 = vsel %vm3418, 0, %v3417
        %v3420 = vsub.s32 32, %v3419
        %v3421 = vshll.u32 %v3412, %v3419
        %v3422 = vshrl.u32 %v3404, %v3420
        %v3423 = vor.u32 %v3421, %v3422
        %v3424 = vsub.s32 4294967266, %v3419
        %v3425 = vadd.s32 %v3424, 127
        %v3426 = vshll.u32 %v3425, 23
        %v3427 = vor.u32 4788187, %v3426
        %v3428 = vand.u32 2147483647, %v3427
        %v3430 = vcvt.s32.f32 %v3423
        %v3431 = vmul.f32 %v3430, %v3428
        %v3432 = vxor.u32 %v3431, 2147483648
        %v3433 = vsel %vm3350, %v3432, %v3431
        %v3434 = vsub.s32 4, %v3410
        %v3435 = vsel %vm3350, %v3434, %v3410
        %v3436 = vsel %vm3349, %v329, %v3433
        %v3437 = vsel %vm3349, 0, %v3435
        %v3438 = vcosq.f32.pop %v3436
        %v3439 = vsinq.f32.pop %v3436
        %vm3440 = vweird.f32 %v329
        %v3441 = vadd.s32 %v3437, 3
        %v3442 = vand.u32 %v3441, 3
        %vm3443 = vcmp.lt.s32.totalorder %v3442, 2
        %vm3444 = vcmp.eq.s32.totalorder %v3442, 0
        %v3445 = vxor.u32 %v3439, 2147483648
        %v3446 = vsel %vm3444, %v3438, %v3445
        %vm3447 = vcmp.eq.s32.totalorder %v3442, 2
        %v3448 = vxor.u32 %v3438, 2147483648
        %v3449 = vsel %vm3447, %v3448, %v3439
        %v3450 = vsel %vm3443, %v3446, %v3449
        %v3451 = vsel %vm3440, nan, %v3450
        %v3452 = vand.u32 2147483647, %v330
        %vm3453 = vcmp.le.f32.partialorder %v3452, 0.7853982
        %vm3454 = vcmp.lt.s32.totalorder %v330, 0
        %v3455 = vand.u32 %v330, 2139095040
        %v3456 = vshrl.u32 %v3455, 23
        %v3457 = vsub.s32 %v3456, 127
        %v3458 = vand.u32 2147483647, %v330
        %v3459 = vand.u32 %v3458, 8388607
        %v3460 = vor.u32 %v3459, 8388608
        %v3461 = vsub.s32 0, %v3460
        %v3462 = vadd.s32 %v3457, 1
        %vm3463 = vcmp.gt.s32.totalorder %v3462, 0
        %v3464 = vsel %vm3463, %v3462, 0
        %v3465 = vshrl.u32 %v3464, 5
        %v3466 = vand.u32 %v3464, 31
        %v3467 = vsub.s32 32, %v3466
        %v3468 = vshrl.u32 683565275, %v3467
        %v3469 = vshll.u32 683565275, %v3466
        %v3470 = vshrl.u32 2475754826, %v3467
        %v3471 = vor.u32 %v3469, %v3470
        %v3472 = vshll.u32 2475754826, %v3466
        %v3473 = vshrl.u32 2131351028, %v3467
        %v3474 = vor.u32 %v3472, %v3473
        %v3475 = vshll.u32 2131351028, %v3466
        %v3476 = vshrl.u32 2102212464, %v3467
        %v3477 = vor.u32 %v3475, %v3476
        %v3478 = vshll.u32 2102212464, %v3466
        %v3479 = vshrl.u32 920167782, %v3467
        %v3480 = vor.u32 %v3478, %v3479
        %v3481 = vshll.u32 920167782, %v3466
        %v3482 = vshrl.u32 1326507024, %v3467
        %v3483 = vor.u32 %v3481, %v3482
        %vm3484 = vcmp.lt.s32.totalorder %v3465, 1
        %vm3485 = vcmp.lt.s32.totalorder %v3465, 2
        %vm3486 = vcmp.lt.s32.totalorder %v3465, 3
        %vm3487 = vcmp.lt.s32.totalorder %v3465, 4
        %v3488 = vsel %vm3484, %v3468, %v3471
        %v3489 = vsel %vm3487, %v3477, 2102212464
        %v3490 = vsel %vm3486, %v3474, %v3489
        %v3491 = vsel %vm3485, %v3488, %v3490
        %v3492 = vsel %vm3484, %v3471, %v3474
        %v3493 = vsel %vm3487, %v3480, 920167782
        %v3494 = vsel %vm3486, %v3477, %v3493
        %v3495 = vsel %vm3485, %v3492, %v3494
        %v3496 = vsel %vm3484, %v3474, %v3477
        %v3497 = vsel %vm3487, %v3483, 1326507024
        %v3498 = vsel %vm3486, %v3480, %v3497
        %v3499 = vsel %vm3485, %v3496, %v3498
        %v3500 = vshll.u32 %v3460, 8
        %v3501 = vmul.u32.u64.compose %v3500, %v3499
        %v3502 = vextract.low.u32 %v3501
        %v3503 = vextract.high.u32 %v3501
        %v3504 = vmul.u32.u64.compose %v3500, %v3495
        %v3505 = vextract.low.u32 %v3504
        %v3506 = vextract.high.u32 %v3504
        %v3507 = vmul.u32 %v3500, %v3491
        %v3508 = vadd.s32 %v3503, %v3505
        %vm3509 = vc.u32 %v3503, %v3505
        %v3510 = vadd.s32 %v3506, 1
        %v3511 = vsel %vm3509, %v3510, %v3506
        %v3512 = vadd.s32 %v3507, %v3511
        %v3513 = vadd.s32 %v3512, 536870912
        %v3514 = vshrl.u32 %v3513, 30
        %v3515 = vshll.u32 %v3514, 30
        %v3516 = vsub.s32 %v3512, %v3515
        %vm3517 = vcmp.lt.s32.totalorder %v3516, 0
        %v3518 = vsub.s32 0, %v3516
        %v3519 = vsel %vm3517, %v3518, %v3516
        %v3520 = vclz %v3519
        %v3521 = vsub.s32 %v3520, 2
        %vm3522 = vcmp.gt.s32.totalorder 0, %v3521
        %v3523 = vsel %vm3522, 0, %v3521
        %v3524 = vsub.s32 32, %v3523
        %v3525 = vshll.u32 %v3516, %v3523
        %v3526 = vshrl.u32 %v3508, %v3524
        %v3527 = vor.u32 %v3525, %v3526
        %v3528 = vsub.s32 4294967266, %v3523
        %v3529 = vadd.s32 %v3528, 127
        %v3530 = vshll.u32 %v3529, 23
        %v3531 = vor.u32 4788187, %v3530
        %v3532 = vand.u32 2147483647, %v3531
        %v3534 = vcvt.s32.f32 %v3527
        %v3535 = vmul.f32 %v3534, %v3532
        %v3536 = vxor.u32 %v3535, 2147483648
        %v3537 = vsel %vm3454, %v3536, %v3535
        %v3538 = vsub.s32 4, %v3514
        %v3539 = vsel %vm3454, %v3538, %v3514
        %v3540 = vsel %vm3453, %v330, %v3537
        %v3541 = vsel %vm3453, 0, %v3539
        %v3542 = vcosq.f32.pop %v3540
        %v3543 = vsinq.f32.pop %v3540
        %vm3544 = vweird.f32 %v330
        %v3545 = vadd.s32 %v3541, 3
        %v3546 = vand.u32 %v3545, 3
        %vm3547 = vcmp.lt.s32.totalorder %v3546, 2
        %vm3548 = vcmp.eq.s32.totalorder %v3546, 0
        %v3549 = vxor.u32 %v3543, 2147483648
        %v3550 = vsel %vm3548, %v3542, %v3549
        %vm3551 = vcmp.eq.s32.totalorder %v3546, 2
        %v3552 = vxor.u32 %v3542, 2147483648
        %v3553 = vsel %vm3551, %v3552, %v3543
        %v3554 = vsel %vm3547, %v3550, %v3553
        %v3555 = vsel %vm3544, nan, %v3554
        %v3556 = vand.u32 2147483647, %v331
        %vm3557 = vcmp.le.f32.partialorder %v3556, 0.7853982
        %vm3558 = vcmp.lt.s32.totalorder %v331, 0
        %v3559 = vand.u32 %v331, 2139095040
        %v3560 = vshrl.u32 %v3559, 23
        %v3561 = vsub.s32 %v3560, 127
        %v3562 = vand.u32 2147483647, %v331
        %v3563 = vand.u32 %v3562, 8388607
        %v3564 = vor.u32 %v3563, 8388608
        %v3565 = vsub.s32 0, %v3564
        %v3566 = vadd.s32 %v3561, 1
        %vm3567 = vcmp.gt.s32.totalorder %v3566, 0
        %v3568 = vsel %vm3567, %v3566, 0
        %v3569 = vshrl.u32 %v3568, 5
        %v3570 = vand.u32 %v3568, 31
        %v3571 = vsub.s32 32, %v3570
        %v3572 = vshrl.u32 683565275, %v3571
        %v3573 = vshll.u32 683565275, %v3570
        %v3574 = vshrl.u32 2475754826, %v3571
        %v3575 = vor.u32 %v3573, %v3574
        %v3576 = vshll.u32 2475754826, %v3570
        %v3577 = vshrl.u32 2131351028, %v3571
        %v3578 = vor.u32 %v3576, %v3577
        %v3579 = vshll.u32 2131351028, %v3570
        %v3580 = vshrl.u32 2102212464, %v3571
        %v3581 = vor.u32 %v3579, %v3580
        %v3582 = vshll.u32 2102212464, %v3570
        %v3583 = vshrl.u32 920167782, %v3571
        %v3584 = vor.u32 %v3582, %v3583
        %v3585 = vshll.u32 920167782, %v3570
        %v3586 = vshrl.u32 1326507024, %v3571
        %v3587 = vor.u32 %v3585, %v3586
        %vm3588 = vcmp.lt.s32.totalorder %v3569, 1
        %vm3589 = vcmp.lt.s32.totalorder %v3569, 2
        %vm3590 = vcmp.lt.s32.totalorder %v3569, 3
        %vm3591 = vcmp.lt.s32.totalorder %v3569, 4
        %v3592 = vsel %vm3588, %v3572, %v3575
        %v3593 = vsel %vm3591, %v3581, 2102212464
        %v3594 = vsel %vm3590, %v3578, %v3593
        %v3595 = vsel %vm3589, %v3592, %v3594
        %v3596 = vsel %vm3588, %v3575, %v3578
        %v3597 = vsel %vm3591, %v3584, 920167782
        %v3598 = vsel %vm3590, %v3581, %v3597
        %v3599 = vsel %vm3589, %v3596, %v3598
        %v3600 = vsel %vm3588, %v3578, %v3581
        %v3601 = vsel %vm3591, %v3587, 1326507024
        %v3602 = vsel %vm3590, %v3584, %v3601
        %v3603 = vsel %vm3589, %v3600, %v3602
        %v3604 = vshll.u32 %v3564, 8
        %v3605 = vmul.u32.u64.compose %v3604, %v3603
        %v3606 = vextract.low.u32 %v3605
        %v3607 = vextract.high.u32 %v3605
        %v3608 = vmul.u32.u64.compose %v3604, %v3599
        %v3609 = vextract.low.u32 %v3608
        %v3610 = vextract.high.u32 %v3608
        %v3611 = vmul.u32 %v3604, %v3595
        %v3612 = vadd.s32 %v3607, %v3609
        %vm3613 = vc.u32 %v3607, %v3609
        %v3614 = vadd.s32 %v3610, 1
        %v3615 = vsel %vm3613, %v3614, %v3610
        %v3616 = vadd.s32 %v3611, %v3615
        %v3617 = vadd.s32 %v3616, 536870912
        %v3618 = vshrl.u32 %v3617, 30
        %v3619 = vshll.u32 %v3618, 30
        %v3620 = vsub.s32 %v3616, %v3619
        %vm3621 = vcmp.lt.s32.totalorder %v3620, 0
        %v3622 = vsub.s32 0, %v3620
        %v3623 = vsel %vm3621, %v3622, %v3620
        %v3624 = vclz %v3623
        %v3625 = vsub.s32 %v3624, 2
        %vm3626 = vcmp.gt.s32.totalorder 0, %v3625
        %v3627 = vsel %vm3626, 0, %v3625
        %v3628 = vsub.s32 32, %v3627
        %v3629 = vshll.u32 %v3620, %v3627
        %v3630 = vshrl.u32 %v3612, %v3628
        %v3631 = vor.u32 %v3629, %v3630
        %v3632 = vsub.s32 4294967266, %v3627
        %v3633 = vadd.s32 %v3632, 127
        %v3634 = vshll.u32 %v3633, 23
        %v3635 = vor.u32 4788187, %v3634
        %v3636 = vand.u32 2147483647, %v3635
        %v3638 = vcvt.s32.f32 %v3631
        %v3639 = vmul.f32 %v3638, %v3636
        %v3640 = vxor.u32 %v3639, 2147483648
        %v3641 = vsel %vm3558, %v3640, %v3639
        %v3642 = vsub.s32 4, %v3618
        %v3643 = vsel %vm3558, %v3642, %v3618
        %v3644 = vsel %vm3557, %v331, %v3641
        %v3645 = vsel %vm3557, 0, %v3643
        %v3646 = vcosq.f32.pop %v3644
        %v3647 = vsinq.f32.pop %v3644
        %vm3648 = vweird.f32 %v331
        %v3649 = vadd.s32 %v3645, 3
        %v3650 = vand.u32 %v3649, 3
        %vm3651 = vcmp.lt.s32.totalorder %v3650, 2
        %vm3652 = vcmp.eq.s32.totalorder %v3650, 0
        %v3653 = vxor.u32 %v3647, 2147483648
        %v3654 = vsel %vm3652, %v3646, %v3653
        %vm3655 = vcmp.eq.s32.totalorder %v3650, 2
        %v3656 = vxor.u32 %v3646, 2147483648
        %v3657 = vsel %vm3655, %v3656, %v3647
        %v3658 = vsel %vm3651, %v3654, %v3657
        %v3659 = vsel %vm3648, nan, %v3658
        %3660 = vst [vmem:[%s159] sm:$0xff] %v435
        %3661 = vst [vmem:[%s159 + $0x8] sm:$0xff] %v539
        %3662 = vst [vmem:[%s159 + $0x10] sm:$0xff] %v643
        %3663 = vst [vmem:[%s159 + $0x18] sm:$0xff] %v747
        %3664 = vst [vmem:[%s159 + $0x20] sm:$0xff] %v851
        %3665 = vst [vmem:[%s159 + $0x28] sm:$0xff] %v955
        %3666 = vst [vmem:[%s159 + $0x30] sm:$0xff] %v1059
        %3667 = vst [vmem:[%s159 + $0x38] sm:$0xff] %v1163
        %3668 = vst [vmem:[%s159 + $0x40] sm:$0xff] %v1267
        %3669 = vst [vmem:[%s159 + $0x48] sm:$0xff] %v1371
        %3670 = vst [vmem:[%s159 + $0x50] sm:$0xff] %v1475
        %3671 = vst [vmem:[%s159 + $0x58] sm:$0xff] %v1579
        %3672 = vst [vmem:[%s159 + $0x60] sm:$0xff] %v1683
        %3673 = vst [vmem:[%s159 + $0x68] sm:$0xff] %v1787
        %3674 = vst [vmem:[%s159 + $0x70] sm:$0xff] %v1891
        %3675 = vst [vmem:[%s159 + $0x78] sm:$0xff] %v1995
        %3676 = vst [vmem:[%s159 + $0x80] sm:$0xff] %v2099
        %3677 = vst [vmem:[%s159 + $0x88] sm:$0xff] %v2203
        %3678 = vst [vmem:[%s159 + $0x90] sm:$0xff] %v2307
        %3679 = vst [vmem:[%s159 + $0x98] sm:$0xff] %v2411
        %3680 = vst [vmem:[%s159 + $0xa0] sm:$0xff] %v2515
        %3681 = vst [vmem:[%s159 + $0xa8] sm:$0xff] %v2619
        %3682 = vst [vmem:[%s159 + $0xb0] sm:$0xff] %v2723
        %3683 = vst [vmem:[%s159 + $0xb8] sm:$0xff] %v2827
        %3684 = vst [vmem:[%s159 + $0xc0] sm:$0xff] %v2931
        %3685 = vst [vmem:[%s159 + $0xc8] sm:$0xff] %v3035
        %3686 = vst [vmem:[%s159 + $0xd0] sm:$0xff] %v3139
        %3687 = vst [vmem:[%s159 + $0xd8] sm:$0xff] %v3243
        %3688 = vst [vmem:[%s159 + $0xe0] sm:$0xff] %v3347
        %3689 = vst [vmem:[%s159 + $0xe8] sm:$0xff] %v3451
        %3690 = vst [vmem:[%s159 + $0xf0] sm:$0xff] %v3555
        %3691 = vst [vmem:[%s159 + $0xf8] sm:$0xff] %v3659
        %s3692 = scalar_lea.vmem %s139, 1 [#allocation2]
        %v3693 = vld [vmem:[%s3692] ss:$4 sm:$0xff]
        %s3694 = scalar_lea.vmem %s139, 33 [#allocation2]
        %v3695 = vld [vmem:[%s3694] ss:$4 sm:$0xff]
        %v3698 = vlaneseq
        %v3699 = vshrl.u32 %v3698, 7
        %v3700 = vsub.s32 0, %v3699
        %v3701 = vrot.slane %v3693, %v3700
        %v3702 = vlaneseq
        %v3703 = vshrl.u32 %v3702, 7
        %v3704 = vsub.s32 1, %v3703
        %v3705 = vrot.slane %v3693, %v3704
        %v3706 = vlaneseq
        %v3707 = vshrl.u32 %v3706, 7
        %v3708 = vsub.s32 2, %v3707
        %v3709 = vrot.slane %v3693, %v3708
        %v3710 = vlaneseq
        %v3711 = vshrl.u32 %v3710, 7
        %v3712 = vsub.s32 3, %v3711
        %v3713 = vrot.slane %v3693, %v3712
        %v3714 = vlaneseq
        %v3715 = vshrl.u32 %v3714, 7
        %v3716 = vsub.s32 4, %v3715
        %v3717 = vrot.slane %v3693, %v3716
        %v3718 = vlaneseq
        %v3719 = vshrl.u32 %v3718, 7
        %v3720 = vsub.s32 5, %v3719
        %v3721 = vrot.slane %v3693, %v3720
        %v3722 = vlaneseq
        %v3723 = vshrl.u32 %v3722, 7
        %v3724 = vsub.s32 6, %v3723
        %v3725 = vrot.slane %v3693, %v3724
        %v3726 = vlaneseq
        %v3727 = vshrl.u32 %v3726, 7
        %v3728 = vsub.s32 7, %v3727
        %v3729 = vrot.slane %v3693, %v3728
        %v3730 = vlaneseq
        %v3731 = vshrl.u32 %v3730, 7
        %v3732 = vsub.s32 0, %v3731
        %v3733 = vrot.slane %v3695, %v3732
        %v3734 = vlaneseq
        %v3735 = vshrl.u32 %v3734, 7
        %v3736 = vsub.s32 1, %v3735
        %v3737 = vrot.slane %v3695, %v3736
        %v3738 = vlaneseq
        %v3739 = vshrl.u32 %v3738, 7
        %v3740 = vsub.s32 2, %v3739
        %v3741 = vrot.slane %v3695, %v3740
        %v3742 = vlaneseq
        %v3743 = vshrl.u32 %v3742, 7
        %v3744 = vsub.s32 3, %v3743
        %v3745 = vrot.slane %v3695, %v3744
        %v3746 = vlaneseq
        %v3747 = vshrl.u32 %v3746, 7
        %v3748 = vsub.s32 4, %v3747
        %v3749 = vrot.slane %v3695, %v3748
        %v3750 = vlaneseq
        %v3751 = vshrl.u32 %v3750, 7
        %v3752 = vsub.s32 5, %v3751
        %v3753 = vrot.slane %v3695, %v3752
        %v3754 = vlaneseq
        %v3755 = vshrl.u32 %v3754, 7
        %v3756 = vsub.s32 6, %v3755
        %v3757 = vrot.slane %v3695, %v3756
        %v3758 = vlaneseq
        %v3759 = vshrl.u32 %v3758, 7
        %v3760 = vsub.s32 7, %v3759
        %v3761 = vrot.slane %v3695, %v3760
        %v3778 = vmul.f32 %v3701, %v261
        %v3779 = vmul.f32 %v3705, %v261
        %v3780 = vmul.f32 %v3709, %v261
        %v3781 = vmul.f32 %v3713, %v261
        %v3782 = vmul.f32 %v3717, %v261
        %v3783 = vmul.f32 %v3721, %v261
        %v3784 = vmul.f32 %v3725, %v261
        %v3785 = vmul.f32 %v3729, %v261
        %v3786 = vmul.f32 %v3733, %v261
        %v3787 = vmul.f32 %v3737, %v261
        %v3788 = vmul.f32 %v3741, %v261
        %v3789 = vmul.f32 %v3745, %v261
        %v3790 = vmul.f32 %v3749, %v261
        %v3791 = vmul.f32 %v3753, %v261
        %v3792 = vmul.f32 %v3757, %v261
        %v3793 = vmul.f32 %v3761, %v261
        %v3794 = vmul.f32 %v3701, %v266
        %v3795 = vmul.f32 %v3705, %v266
        %v3796 = vmul.f32 %v3709, %v266
        %v3797 = vmul.f32 %v3713, %v266
        %v3798 = vmul.f32 %v3717, %v266
        %v3799 = vmul.f32 %v3721, %v266
        %v3800 = vmul.f32 %v3725, %v266
        %v3801 = vmul.f32 %v3729, %v266
        %v3802 = vmul.f32 %v3733, %v266
        %v3803 = vmul.f32 %v3737, %v266
        %v3804 = vmul.f32 %v3741, %v266
        %v3805 = vmul.f32 %v3745, %v266
        %v3806 = vmul.f32 %v3749, %v266
        %v3807 = vmul.f32 %v3753, %v266
        %v3808 = vmul.f32 %v3757, %v266
        %v3809 = vmul.f32 %v3761, %v266
        %v3810 = vadd.f32 %v3778, %v171
        %v3811 = vadd.f32 %v3779, %v171
        %v3812 = vadd.f32 %v3780, %v171
        %v3813 = vadd.f32 %v3781, %v171
        %v3814 = vadd.f32 %v3782, %v171
        %v3815 = vadd.f32 %v3783, %v171
        %v3816 = vadd.f32 %v3784, %v171
        %v3817 = vadd.f32 %v3785, %v171
        %v3818 = vadd.f32 %v3786, %v171
        %v3819 = vadd.f32 %v3787, %v171
        %v3820 = vadd.f32 %v3788, %v171
        %v3821 = vadd.f32 %v3789, %v171
        %v3822 = vadd.f32 %v3790, %v171
        %v3823 = vadd.f32 %v3791, %v171
        %v3824 = vadd.f32 %v3792, %v171
        %v3825 = vadd.f32 %v3793, %v171
        %v3826 = vadd.f32 %v3794, %v172
        %v3827 = vadd.f32 %v3795, %v172
        %v3828 = vadd.f32 %v3796, %v172
        %v3829 = vadd.f32 %v3797, %v172
        %v3830 = vadd.f32 %v3798, %v172
        %v3831 = vadd.f32 %v3799, %v172
        %v3832 = vadd.f32 %v3800, %v172
        %v3833 = vadd.f32 %v3801, %v172
        %v3834 = vadd.f32 %v3802, %v172
        %v3835 = vadd.f32 %v3803, %v172
        %v3836 = vadd.f32 %v3804, %v172
        %v3837 = vadd.f32 %v3805, %v172
        %v3838 = vadd.f32 %v3806, %v172
        %v3839 = vadd.f32 %v3807, %v172
        %v3840 = vadd.f32 %v3808, %v172
        %v3841 = vadd.f32 %v3809, %v172
        %v3842 = vand.u32 2147483647, %v3810
        %vm3843 = vcmp.le.f32.partialorder %v3842, 0.7853982
        %vm3844 = vcmp.lt.s32.totalorder %v3810, 0
        %v3845 = vand.u32 %v3810, 2139095040
        %v3846 = vshrl.u32 %v3845, 23
        %v3847 = vsub.s32 %v3846, 127
        %v3848 = vand.u32 2147483647, %v3810
        %v3849 = vand.u32 %v3848, 8388607
        %v3850 = vor.u32 %v3849, 8388608
        %v3851 = vsub.s32 0, %v3850
        %v3852 = vadd.s32 %v3847, 1
        %vm3853 = vcmp.gt.s32.totalorder %v3852, 0
        %v3854 = vsel %vm3853, %v3852, 0
        %v3855 = vshrl.u32 %v3854, 5
        %v3856 = vand.u32 %v3854, 31
        %v3857 = vsub.s32 32, %v3856
        %v3858 = vshrl.u32 683565275, %v3857
        %v3859 = vshll.u32 683565275, %v3856
        %v3860 = vshrl.u32 2475754826, %v3857
        %v3861 = vor.u32 %v3859, %v3860
        %v3862 = vshll.u32 2475754826, %v3856
        %v3863 = vshrl.u32 2131351028, %v3857
        %v3864 = vor.u32 %v3862, %v3863
        %v3865 = vshll.u32 2131351028, %v3856
        %v3866 = vshrl.u32 2102212464, %v3857
        %v3867 = vor.u32 %v3865, %v3866
        %v3868 = vshll.u32 2102212464, %v3856
        %v3869 = vshrl.u32 920167782, %v3857
        %v3870 = vor.u32 %v3868, %v3869
        %v3871 = vshll.u32 920167782, %v3856
        %v3872 = vshrl.u32 1326507024, %v3857
        %v3873 = vor.u32 %v3871, %v3872
        %vm3874 = vcmp.lt.s32.totalorder %v3855, 1
        %vm3875 = vcmp.lt.s32.totalorder %v3855, 2
        %vm3876 = vcmp.lt.s32.totalorder %v3855, 3
        %vm3877 = vcmp.lt.s32.totalorder %v3855, 4
        %v3878 = vsel %vm3874, %v3858, %v3861
        %v3879 = vsel %vm3877, %v3867, 2102212464
        %v3880 = vsel %vm3876, %v3864, %v3879
        %v3881 = vsel %vm3875, %v3878, %v3880
        %v3882 = vsel %vm3874, %v3861, %v3864
        %v3883 = vsel %vm3877, %v3870, 920167782
        %v3884 = vsel %vm3876, %v3867, %v3883
        %v3885 = vsel %vm3875, %v3882, %v3884
        %v3886 = vsel %vm3874, %v3864, %v3867
        %v3887 = vsel %vm3877, %v3873, 1326507024
        %v3888 = vsel %vm3876, %v3870, %v3887
        %v3889 = vsel %vm3875, %v3886, %v3888
        %v3890 = vshll.u32 %v3850, 8
        %v3891 = vmul.u32.u64.compose %v3890, %v3889
        %v3892 = vextract.low.u32 %v3891
        %v3893 = vextract.high.u32 %v3891
        %v3894 = vmul.u32.u64.compose %v3890, %v3885
        %v3895 = vextract.low.u32 %v3894
        %v3896 = vextract.high.u32 %v3894
        %v3897 = vmul.u32 %v3890, %v3881
        %v3898 = vadd.s32 %v3893, %v3895
        %vm3899 = vc.u32 %v3893, %v3895
        %v3900 = vadd.s32 %v3896, 1
        %v3901 = vsel %vm3899, %v3900, %v3896
        %v3902 = vadd.s32 %v3897, %v3901
        %v3903 = vadd.s32 %v3902, 536870912
        %v3904 = vshrl.u32 %v3903, 30
        %v3905 = vshll.u32 %v3904, 30
        %v3906 = vsub.s32 %v3902, %v3905
        %vm3907 = vcmp.lt.s32.totalorder %v3906, 0
        %v3908 = vsub.s32 0, %v3906
        %v3909 = vsel %vm3907, %v3908, %v3906
        %v3910 = vclz %v3909
        %v3911 = vsub.s32 %v3910, 2
        %vm3912 = vcmp.gt.s32.totalorder 0, %v3911
        %v3913 = vsel %vm3912, 0, %v3911
        %v3914 = vsub.s32 32, %v3913
        %v3915 = vshll.u32 %v3906, %v3913
        %v3916 = vshrl.u32 %v3898, %v3914
        %v3917 = vor.u32 %v3915, %v3916
        %v3918 = vsub.s32 4294967266, %v3913
        %v3919 = vadd.s32 %v3918, 127
        %v3920 = vshll.u32 %v3919, 23
        %v3921 = vor.u32 4788187, %v3920
        %v3922 = vand.u32 2147483647, %v3921
        %v3924 = vcvt.s32.f32 %v3917
        %v3925 = vmul.f32 %v3924, %v3922
        %v3926 = vxor.u32 %v3925, 2147483648
        %v3927 = vsel %vm3844, %v3926, %v3925
        %v3928 = vsub.s32 4, %v3904
        %v3929 = vsel %vm3844, %v3928, %v3904
        %v3930 = vsel %vm3843, %v3810, %v3927
        %v3931 = vsel %vm3843, 0, %v3929
        %v3932 = vcosq.f32.pop %v3930
        %v3933 = vsinq.f32.pop %v3930
        %vm3934 = vweird.f32 %v3810
        %v3935 = vadd.s32 %v3931, 3
        %v3936 = vand.u32 %v3935, 3
        %vm3937 = vcmp.lt.s32.totalorder %v3936, 2
        %vm3938 = vcmp.eq.s32.totalorder %v3936, 0
        %v3939 = vxor.u32 %v3933, 2147483648
        %v3940 = vsel %vm3938, %v3932, %v3939
        %vm3941 = vcmp.eq.s32.totalorder %v3936, 2
        %v3942 = vxor.u32 %v3932, 2147483648
        %v3943 = vsel %vm3941, %v3942, %v3933
        %v3944 = vsel %vm3937, %v3940, %v3943
        %v3945 = vsel %vm3934, nan, %v3944
        %v3946 = vand.u32 2147483647, %v3811
        %vm3947 = vcmp.le.f32.partialorder %v3946, 0.7853982
        %vm3948 = vcmp.lt.s32.totalorder %v3811, 0
        %v3949 = vand.u32 %v3811, 2139095040
        %v3950 = vshrl.u32 %v3949, 23
        %v3951 = vsub.s32 %v3950, 127
        %v3952 = vand.u32 2147483647, %v3811
        %v3953 = vand.u32 %v3952, 8388607
        %v3954 = vor.u32 %v3953, 8388608
        %v3955 = vsub.s32 0, %v3954
        %v3956 = vadd.s32 %v3951, 1
        %vm3957 = vcmp.gt.s32.totalorder %v3956, 0
        %v3958 = vsel %vm3957, %v3956, 0
        %v3959 = vshrl.u32 %v3958, 5
        %v3960 = vand.u32 %v3958, 31
        %v3961 = vsub.s32 32, %v3960
        %v3962 = vshrl.u32 683565275, %v3961
        %v3963 = vshll.u32 683565275, %v3960
        %v3964 = vshrl.u32 2475754826, %v3961
        %v3965 = vor.u32 %v3963, %v3964
        %v3966 = vshll.u32 2475754826, %v3960
        %v3967 = vshrl.u32 2131351028, %v3961
        %v3968 = vor.u32 %v3966, %v3967
        %v3969 = vshll.u32 2131351028, %v3960
        %v3970 = vshrl.u32 2102212464, %v3961
        %v3971 = vor.u32 %v3969, %v3970
        %v3972 = vshll.u32 2102212464, %v3960
        %v3973 = vshrl.u32 920167782, %v3961
        %v3974 = vor.u32 %v3972, %v3973
        %v3975 = vshll.u32 920167782, %v3960
        %v3976 = vshrl.u32 1326507024, %v3961
        %v3977 = vor.u32 %v3975, %v3976
        %vm3978 = vcmp.lt.s32.totalorder %v3959, 1
        %vm3979 = vcmp.lt.s32.totalorder %v3959, 2
        %vm3980 = vcmp.lt.s32.totalorder %v3959, 3
        %vm3981 = vcmp.lt.s32.totalorder %v3959, 4
        %v3982 = vsel %vm3978, %v3962, %v3965
        %v3983 = vsel %vm3981, %v3971, 2102212464
        %v3984 = vsel %vm3980, %v3968, %v3983
        %v3985 = vsel %vm3979, %v3982, %v3984
        %v3986 = vsel %vm3978, %v3965, %v3968
        %v3987 = vsel %vm3981, %v3974, 920167782
        %v3988 = vsel %vm3980, %v3971, %v3987
        %v3989 = vsel %vm3979, %v3986, %v3988
        %v3990 = vsel %vm3978, %v3968, %v3971
        %v3991 = vsel %vm3981, %v3977, 1326507024
        %v3992 = vsel %vm3980, %v3974, %v3991
        %v3993 = vsel %vm3979, %v3990, %v3992
        %v3994 = vshll.u32 %v3954, 8
        %v3995 = vmul.u32.u64.compose %v3994, %v3993
        %v3996 = vextract.low.u32 %v3995
        %v3997 = vextract.high.u32 %v3995
        %v3998 = vmul.u32.u64.compose %v3994, %v3989
        %v3999 = vextract.low.u32 %v3998
        %v4000 = vextract.high.u32 %v3998
        %v4001 = vmul.u32 %v3994, %v3985
        %v4002 = vadd.s32 %v3997, %v3999
        %vm4003 = vc.u32 %v3997, %v3999
        %v4004 = vadd.s32 %v4000, 1
        %v4005 = vsel %vm4003, %v4004, %v4000
        %v4006 = vadd.s32 %v4001, %v4005
        %v4007 = vadd.s32 %v4006, 536870912
        %v4008 = vshrl.u32 %v4007, 30
        %v4009 = vshll.u32 %v4008, 30
        %v4010 = vsub.s32 %v4006, %v4009
        %vm4011 = vcmp.lt.s32.totalorder %v4010, 0
        %v4012 = vsub.s32 0, %v4010
        %v4013 = vsel %vm4011, %v4012, %v4010
        %v4014 = vclz %v4013
        %v4015 = vsub.s32 %v4014, 2
        %vm4016 = vcmp.gt.s32.totalorder 0, %v4015
        %v4017 = vsel %vm4016, 0, %v4015
        %v4018 = vsub.s32 32, %v4017
        %v4019 = vshll.u32 %v4010, %v4017
        %v4020 = vshrl.u32 %v4002, %v4018
        %v4021 = vor.u32 %v4019, %v4020
        %v4022 = vsub.s32 4294967266, %v4017
        %v4023 = vadd.s32 %v4022, 127
        %v4024 = vshll.u32 %v4023, 23
        %v4025 = vor.u32 4788187, %v4024
        %v4026 = vand.u32 2147483647, %v4025
        %v4028 = vcvt.s32.f32 %v4021
        %v4029 = vmul.f32 %v4028, %v4026
        %v4030 = vxor.u32 %v4029, 2147483648
        %v4031 = vsel %vm3948, %v4030, %v4029
        %v4032 = vsub.s32 4, %v4008
        %v4033 = vsel %vm3948, %v4032, %v4008
        %v4034 = vsel %vm3947, %v3811, %v4031
        %v4035 = vsel %vm3947, 0, %v4033
        %v4036 = vcosq.f32.pop %v4034
        %v4037 = vsinq.f32.pop %v4034
        %vm4038 = vweird.f32 %v3811
        %v4039 = vadd.s32 %v4035, 3
        %v4040 = vand.u32 %v4039, 3
        %vm4041 = vcmp.lt.s32.totalorder %v4040, 2
        %vm4042 = vcmp.eq.s32.totalorder %v4040, 0
        %v4043 = vxor.u32 %v4037, 2147483648
        %v4044 = vsel %vm4042, %v4036, %v4043
        %vm4045 = vcmp.eq.s32.totalorder %v4040, 2
        %v4046 = vxor.u32 %v4036, 2147483648
        %v4047 = vsel %vm4045, %v4046, %v4037
        %v4048 = vsel %vm4041, %v4044, %v4047
        %v4049 = vsel %vm4038, nan, %v4048
        %v4050 = vand.u32 2147483647, %v3812
        %vm4051 = vcmp.le.f32.partialorder %v4050, 0.7853982
        %vm4052 = vcmp.lt.s32.totalorder %v3812, 0
        %v4053 = vand.u32 %v3812, 2139095040
        %v4054 = vshrl.u32 %v4053, 23
        %v4055 = vsub.s32 %v4054, 127
        %v4056 = vand.u32 2147483647, %v3812
        %v4057 = vand.u32 %v4056, 8388607
        %v4058 = vor.u32 %v4057, 8388608
        %v4059 = vsub.s32 0, %v4058
        %v4060 = vadd.s32 %v4055, 1
        %vm4061 = vcmp.gt.s32.totalorder %v4060, 0
        %v4062 = vsel %vm4061, %v4060, 0
        %v4063 = vshrl.u32 %v4062, 5
        %v4064 = vand.u32 %v4062, 31
        %v4065 = vsub.s32 32, %v4064
        %v4066 = vshrl.u32 683565275, %v4065
        %v4067 = vshll.u32 683565275, %v4064
        %v4068 = vshrl.u32 2475754826, %v4065
        %v4069 = vor.u32 %v4067, %v4068
        %v4070 = vshll.u32 2475754826, %v4064
        %v4071 = vshrl.u32 2131351028, %v4065
        %v4072 = vor.u32 %v4070, %v4071
        %v4073 = vshll.u32 2131351028, %v4064
        %v4074 = vshrl.u32 2102212464, %v4065
        %v4075 = vor.u32 %v4073, %v4074
        %v4076 = vshll.u32 2102212464, %v4064
        %v4077 = vshrl.u32 920167782, %v4065
        %v4078 = vor.u32 %v4076, %v4077
        %v4079 = vshll.u32 920167782, %v4064
        %v4080 = vshrl.u32 1326507024, %v4065
        %v4081 = vor.u32 %v4079, %v4080
        %vm4082 = vcmp.lt.s32.totalorder %v4063, 1
        %vm4083 = vcmp.lt.s32.totalorder %v4063, 2
        %vm4084 = vcmp.lt.s32.totalorder %v4063, 3
        %vm4085 = vcmp.lt.s32.totalorder %v4063, 4
        %v4086 = vsel %vm4082, %v4066, %v4069
        %v4087 = vsel %vm4085, %v4075, 2102212464
        %v4088 = vsel %vm4084, %v4072, %v4087
        %v4089 = vsel %vm4083, %v4086, %v4088
        %v4090 = vsel %vm4082, %v4069, %v4072
        %v4091 = vsel %vm4085, %v4078, 920167782
        %v4092 = vsel %vm4084, %v4075, %v4091
        %v4093 = vsel %vm4083, %v4090, %v4092
        %v4094 = vsel %vm4082, %v4072, %v4075
        %v4095 = vsel %vm4085, %v4081, 1326507024
        %v4096 = vsel %vm4084, %v4078, %v4095
        %v4097 = vsel %vm4083, %v4094, %v4096
        %v4098 = vshll.u32 %v4058, 8
        %v4099 = vmul.u32.u64.compose %v4098, %v4097
        %v4100 = vextract.low.u32 %v4099
        %v4101 = vextract.high.u32 %v4099
        %v4102 = vmul.u32.u64.compose %v4098, %v4093
        %v4103 = vextract.low.u32 %v4102
        %v4104 = vextract.high.u32 %v4102
        %v4105 = vmul.u32 %v4098, %v4089
        %v4106 = vadd.s32 %v4101, %v4103
        %vm4107 = vc.u32 %v4101, %v4103
        %v4108 = vadd.s32 %v4104, 1
        %v4109 = vsel %vm4107, %v4108, %v4104
        %v4110 = vadd.s32 %v4105, %v4109
        %v4111 = vadd.s32 %v4110, 536870912
        %v4112 = vshrl.u32 %v4111, 30
        %v4113 = vshll.u32 %v4112, 30
        %v4114 = vsub.s32 %v4110, %v4113
        %vm4115 = vcmp.lt.s32.totalorder %v4114, 0
        %v4116 = vsub.s32 0, %v4114
        %v4117 = vsel %vm4115, %v4116, %v4114
        %v4118 = vclz %v4117
        %v4119 = vsub.s32 %v4118, 2
        %vm4120 = vcmp.gt.s32.totalorder 0, %v4119
        %v4121 = vsel %vm4120, 0, %v4119
        %v4122 = vsub.s32 32, %v4121
        %v4123 = vshll.u32 %v4114, %v4121
        %v4124 = vshrl.u32 %v4106, %v4122
        %v4125 = vor.u32 %v4123, %v4124
        %v4126 = vsub.s32 4294967266, %v4121
        %v4127 = vadd.s32 %v4126, 127
        %v4128 = vshll.u32 %v4127, 23
        %v4129 = vor.u32 4788187, %v4128
        %v4130 = vand.u32 2147483647, %v4129
        %v4132 = vcvt.s32.f32 %v4125
        %v4133 = vmul.f32 %v4132, %v4130
        %v4134 = vxor.u32 %v4133, 2147483648
        %v4135 = vsel %vm4052, %v4134, %v4133
        %v4136 = vsub.s32 4, %v4112
        %v4137 = vsel %vm4052, %v4136, %v4112
        %v4138 = vsel %vm4051, %v3812, %v4135
        %v4139 = vsel %vm4051, 0, %v4137
        %v4140 = vcosq.f32.pop %v4138
        %v4141 = vsinq.f32.pop %v4138
        %vm4142 = vweird.f32 %v3812
        %v4143 = vadd.s32 %v4139, 3
        %v4144 = vand.u32 %v4143, 3
        %vm4145 = vcmp.lt.s32.totalorder %v4144, 2
        %vm4146 = vcmp.eq.s32.totalorder %v4144, 0
        %v4147 = vxor.u32 %v4141, 2147483648
        %v4148 = vsel %vm4146, %v4140, %v4147
        %vm4149 = vcmp.eq.s32.totalorder %v4144, 2
        %v4150 = vxor.u32 %v4140, 2147483648
        %v4151 = vsel %vm4149, %v4150, %v4141
        %v4152 = vsel %vm4145, %v4148, %v4151
        %v4153 = vsel %vm4142, nan, %v4152
        %v4154 = vand.u32 2147483647, %v3813
        %vm4155 = vcmp.le.f32.partialorder %v4154, 0.7853982
        %vm4156 = vcmp.lt.s32.totalorder %v3813, 0
        %v4157 = vand.u32 %v3813, 2139095040
        %v4158 = vshrl.u32 %v4157, 23
        %v4159 = vsub.s32 %v4158, 127
        %v4160 = vand.u32 2147483647, %v3813
        %v4161 = vand.u32 %v4160, 8388607
        %v4162 = vor.u32 %v4161, 8388608
        %v4163 = vsub.s32 0, %v4162
        %v4164 = vadd.s32 %v4159, 1
        %vm4165 = vcmp.gt.s32.totalorder %v4164, 0
        %v4166 = vsel %vm4165, %v4164, 0
        %v4167 = vshrl.u32 %v4166, 5
        %v4168 = vand.u32 %v4166, 31
        %v4169 = vsub.s32 32, %v4168
        %v4170 = vshrl.u32 683565275, %v4169
        %v4171 = vshll.u32 683565275, %v4168
        %v4172 = vshrl.u32 2475754826, %v4169
        %v4173 = vor.u32 %v4171, %v4172
        %v4174 = vshll.u32 2475754826, %v4168
        %v4175 = vshrl.u32 2131351028, %v4169
        %v4176 = vor.u32 %v4174, %v4175
        %v4177 = vshll.u32 2131351028, %v4168
        %v4178 = vshrl.u32 2102212464, %v4169
        %v4179 = vor.u32 %v4177, %v4178
        %v4180 = vshll.u32 2102212464, %v4168
        %v4181 = vshrl.u32 920167782, %v4169
        %v4182 = vor.u32 %v4180, %v4181
        %v4183 = vshll.u32 920167782, %v4168
        %v4184 = vshrl.u32 1326507024, %v4169
        %v4185 = vor.u32 %v4183, %v4184
        %vm4186 = vcmp.lt.s32.totalorder %v4167, 1
        %vm4187 = vcmp.lt.s32.totalorder %v4167, 2
        %vm4188 = vcmp.lt.s32.totalorder %v4167, 3
        %vm4189 = vcmp.lt.s32.totalorder %v4167, 4
        %v4190 = vsel %vm4186, %v4170, %v4173
        %v4191 = vsel %vm4189, %v4179, 2102212464
        %v4192 = vsel %vm4188, %v4176, %v4191
        %v4193 = vsel %vm4187, %v4190, %v4192
        %v4194 = vsel %vm4186, %v4173, %v4176
        %v4195 = vsel %vm4189, %v4182, 920167782
        %v4196 = vsel %vm4188, %v4179, %v4195
        %v4197 = vsel %vm4187, %v4194, %v4196
        %v4198 = vsel %vm4186, %v4176, %v4179
        %v4199 = vsel %vm4189, %v4185, 1326507024
        %v4200 = vsel %vm4188, %v4182, %v4199
        %v4201 = vsel %vm4187, %v4198, %v4200
        %v4202 = vshll.u32 %v4162, 8
        %v4203 = vmul.u32.u64.compose %v4202, %v4201
        %v4204 = vextract.low.u32 %v4203
        %v4205 = vextract.high.u32 %v4203
        %v4206 = vmul.u32.u64.compose %v4202, %v4197
        %v4207 = vextract.low.u32 %v4206
        %v4208 = vextract.high.u32 %v4206
        %v4209 = vmul.u32 %v4202, %v4193
        %v4210 = vadd.s32 %v4205, %v4207
        %vm4211 = vc.u32 %v4205, %v4207
        %v4212 = vadd.s32 %v4208, 1
        %v4213 = vsel %vm4211, %v4212, %v4208
        %v4214 = vadd.s32 %v4209, %v4213
        %v4215 = vadd.s32 %v4214, 536870912
        %v4216 = vshrl.u32 %v4215, 30
        %v4217 = vshll.u32 %v4216, 30
        %v4218 = vsub.s32 %v4214, %v4217
        %vm4219 = vcmp.lt.s32.totalorder %v4218, 0
        %v4220 = vsub.s32 0, %v4218
        %v4221 = vsel %vm4219, %v4220, %v4218
        %v4222 = vclz %v4221
        %v4223 = vsub.s32 %v4222, 2
        %vm4224 = vcmp.gt.s32.totalorder 0, %v4223
        %v4225 = vsel %vm4224, 0, %v4223
        %v4226 = vsub.s32 32, %v4225
        %v4227 = vshll.u32 %v4218, %v4225
        %v4228 = vshrl.u32 %v4210, %v4226
        %v4229 = vor.u32 %v4227, %v4228
        %v4230 = vsub.s32 4294967266, %v4225
        %v4231 = vadd.s32 %v4230, 127
        %v4232 = vshll.u32 %v4231, 23
        %v4233 = vor.u32 4788187, %v4232
        %v4234 = vand.u32 2147483647, %v4233
        %v4236 = vcvt.s32.f32 %v4229
        %v4237 = vmul.f32 %v4236, %v4234
        %v4238 = vxor.u32 %v4237, 2147483648
        %v4239 = vsel %vm4156, %v4238, %v4237
        %v4240 = vsub.s32 4, %v4216
        %v4241 = vsel %vm4156, %v4240, %v4216
        %v4242 = vsel %vm4155, %v3813, %v4239
        %v4243 = vsel %vm4155, 0, %v4241
        %v4244 = vcosq.f32.pop %v4242
        %v4245 = vsinq.f32.pop %v4242
        %vm4246 = vweird.f32 %v3813
        %v4247 = vadd.s32 %v4243, 3
        %v4248 = vand.u32 %v4247, 3
        %vm4249 = vcmp.lt.s32.totalorder %v4248, 2
        %vm4250 = vcmp.eq.s32.totalorder %v4248, 0
        %v4251 = vxor.u32 %v4245, 2147483648
        %v4252 = vsel %vm4250, %v4244, %v4251
        %vm4253 = vcmp.eq.s32.totalorder %v4248, 2
        %v4254 = vxor.u32 %v4244, 2147483648
        %v4255 = vsel %vm4253, %v4254, %v4245
        %v4256 = vsel %vm4249, %v4252, %v4255
        %v4257 = vsel %vm4246, nan, %v4256
        %v4258 = vand.u32 2147483647, %v3814
        %vm4259 = vcmp.le.f32.partialorder %v4258, 0.7853982
        %vm4260 = vcmp.lt.s32.totalorder %v3814, 0
        %v4261 = vand.u32 %v3814, 2139095040
        %v4262 = vshrl.u32 %v4261, 23
        %v4263 = vsub.s32 %v4262, 127
        %v4264 = vand.u32 2147483647, %v3814
        %v4265 = vand.u32 %v4264, 8388607
        %v4266 = vor.u32 %v4265, 8388608
        %v4267 = vsub.s32 0, %v4266
        %v4268 = vadd.s32 %v4263, 1
        %vm4269 = vcmp.gt.s32.totalorder %v4268, 0
        %v4270 = vsel %vm4269, %v4268, 0
        %v4271 = vshrl.u32 %v4270, 5
        %v4272 = vand.u32 %v4270, 31
        %v4273 = vsub.s32 32, %v4272
        %v4274 = vshrl.u32 683565275, %v4273
        %v4275 = vshll.u32 683565275, %v4272
        %v4276 = vshrl.u32 2475754826, %v4273
        %v4277 = vor.u32 %v4275, %v4276
        %v4278 = vshll.u32 2475754826, %v4272
        %v4279 = vshrl.u32 2131351028, %v4273
        %v4280 = vor.u32 %v4278, %v4279
        %v4281 = vshll.u32 2131351028, %v4272
        %v4282 = vshrl.u32 2102212464, %v4273
        %v4283 = vor.u32 %v4281, %v4282
        %v4284 = vshll.u32 2102212464, %v4272
        %v4285 = vshrl.u32 920167782, %v4273
        %v4286 = vor.u32 %v4284, %v4285
        %v4287 = vshll.u32 920167782, %v4272
        %v4288 = vshrl.u32 1326507024, %v4273
        %v4289 = vor.u32 %v4287, %v4288
        %vm4290 = vcmp.lt.s32.totalorder %v4271, 1
        %vm4291 = vcmp.lt.s32.totalorder %v4271, 2
        %vm4292 = vcmp.lt.s32.totalorder %v4271, 3
        %vm4293 = vcmp.lt.s32.totalorder %v4271, 4
        %v4294 = vsel %vm4290, %v4274, %v4277
        %v4295 = vsel %vm4293, %v4283, 2102212464
        %v4296 = vsel %vm4292, %v4280, %v4295
        %v4297 = vsel %vm4291, %v4294, %v4296
        %v4298 = vsel %vm4290, %v4277, %v4280
        %v4299 = vsel %vm4293, %v4286, 920167782
        %v4300 = vsel %vm4292, %v4283, %v4299
        %v4301 = vsel %vm4291, %v4298, %v4300
        %v4302 = vsel %vm4290, %v4280, %v4283
        %v4303 = vsel %vm4293, %v4289, 1326507024
        %v4304 = vsel %vm4292, %v4286, %v4303
        %v4305 = vsel %vm4291, %v4302, %v4304
        %v4306 = vshll.u32 %v4266, 8
        %v4307 = vmul.u32.u64.compose %v4306, %v4305
        %v4308 = vextract.low.u32 %v4307
        %v4309 = vextract.high.u32 %v4307
        %v4310 = vmul.u32.u64.compose %v4306, %v4301
        %v4311 = vextract.low.u32 %v4310
        %v4312 = vextract.high.u32 %v4310
        %v4313 = vmul.u32 %v4306, %v4297
        %v4314 = vadd.s32 %v4309, %v4311
        %vm4315 = vc.u32 %v4309, %v4311
        %v4316 = vadd.s32 %v4312, 1
        %v4317 = vsel %vm4315, %v4316, %v4312
        %v4318 = vadd.s32 %v4313, %v4317
        %v4319 = vadd.s32 %v4318, 536870912
        %v4320 = vshrl.u32 %v4319, 30
        %v4321 = vshll.u32 %v4320, 30
        %v4322 = vsub.s32 %v4318, %v4321
        %vm4323 = vcmp.lt.s32.totalorder %v4322, 0
        %v4324 = vsub.s32 0, %v4322
        %v4325 = vsel %vm4323, %v4324, %v4322
        %v4326 = vclz %v4325
        %v4327 = vsub.s32 %v4326, 2
        %vm4328 = vcmp.gt.s32.totalorder 0, %v4327
        %v4329 = vsel %vm4328, 0, %v4327
        %v4330 = vsub.s32 32, %v4329
        %v4331 = vshll.u32 %v4322, %v4329
        %v4332 = vshrl.u32 %v4314, %v4330
        %v4333 = vor.u32 %v4331, %v4332
        %v4334 = vsub.s32 4294967266, %v4329
        %v4335 = vadd.s32 %v4334, 127
        %v4336 = vshll.u32 %v4335, 23
        %v4337 = vor.u32 4788187, %v4336
        %v4338 = vand.u32 2147483647, %v4337
        %v4340 = vcvt.s32.f32 %v4333
        %v4341 = vmul.f32 %v4340, %v4338
        %v4342 = vxor.u32 %v4341, 2147483648
        %v4343 = vsel %vm4260, %v4342, %v4341
        %v4344 = vsub.s32 4, %v4320
        %v4345 = vsel %vm4260, %v4344, %v4320
        %v4346 = vsel %vm4259, %v3814, %v4343
        %v4347 = vsel %vm4259, 0, %v4345
        %v4348 = vcosq.f32.pop %v4346
        %v4349 = vsinq.f32.pop %v4346
        %vm4350 = vweird.f32 %v3814
        %v4351 = vadd.s32 %v4347, 3
        %v4352 = vand.u32 %v4351, 3
        %vm4353 = vcmp.lt.s32.totalorder %v4352, 2
        %vm4354 = vcmp.eq.s32.totalorder %v4352, 0
        %v4355 = vxor.u32 %v4349, 2147483648
        %v4356 = vsel %vm4354, %v4348, %v4355
        %vm4357 = vcmp.eq.s32.totalorder %v4352, 2
        %v4358 = vxor.u32 %v4348, 2147483648
        %v4359 = vsel %vm4357, %v4358, %v4349
        %v4360 = vsel %vm4353, %v4356, %v4359
        %v4361 = vsel %vm4350, nan, %v4360
        %v4362 = vand.u32 2147483647, %v3815
        %vm4363 = vcmp.le.f32.partialorder %v4362, 0.7853982
        %vm4364 = vcmp.lt.s32.totalorder %v3815, 0
        %v4365 = vand.u32 %v3815, 2139095040
        %v4366 = vshrl.u32 %v4365, 23
        %v4367 = vsub.s32 %v4366, 127
        %v4368 = vand.u32 2147483647, %v3815
        %v4369 = vand.u32 %v4368, 8388607
        %v4370 = vor.u32 %v4369, 8388608
        %v4371 = vsub.s32 0, %v4370
        %v4372 = vadd.s32 %v4367, 1
        %vm4373 = vcmp.gt.s32.totalorder %v4372, 0
        %v4374 = vsel %vm4373, %v4372, 0
        %v4375 = vshrl.u32 %v4374, 5
        %v4376 = vand.u32 %v4374, 31
        %v4377 = vsub.s32 32, %v4376
        %v4378 = vshrl.u32 683565275, %v4377
        %v4379 = vshll.u32 683565275, %v4376
        %v4380 = vshrl.u32 2475754826, %v4377
        %v4381 = vor.u32 %v4379, %v4380
        %v4382 = vshll.u32 2475754826, %v4376
        %v4383 = vshrl.u32 2131351028, %v4377
        %v4384 = vor.u32 %v4382, %v4383
        %v4385 = vshll.u32 2131351028, %v4376
        %v4386 = vshrl.u32 2102212464, %v4377
        %v4387 = vor.u32 %v4385, %v4386
        %v4388 = vshll.u32 2102212464, %v4376
        %v4389 = vshrl.u32 920167782, %v4377
        %v4390 = vor.u32 %v4388, %v4389
        %v4391 = vshll.u32 920167782, %v4376
        %v4392 = vshrl.u32 1326507024, %v4377
        %v4393 = vor.u32 %v4391, %v4392
        %vm4394 = vcmp.lt.s32.totalorder %v4375, 1
        %vm4395 = vcmp.lt.s32.totalorder %v4375, 2
        %vm4396 = vcmp.lt.s32.totalorder %v4375, 3
        %vm4397 = vcmp.lt.s32.totalorder %v4375, 4
        %v4398 = vsel %vm4394, %v4378, %v4381
        %v4399 = vsel %vm4397, %v4387, 2102212464
        %v4400 = vsel %vm4396, %v4384, %v4399
        %v4401 = vsel %vm4395, %v4398, %v4400
        %v4402 = vsel %vm4394, %v4381, %v4384
        %v4403 = vsel %vm4397, %v4390, 920167782
        %v4404 = vsel %vm4396, %v4387, %v4403
        %v4405 = vsel %vm4395, %v4402, %v4404
        %v4406 = vsel %vm4394, %v4384, %v4387
        %v4407 = vsel %vm4397, %v4393, 1326507024
        %v4408 = vsel %vm4396, %v4390, %v4407
        %v4409 = vsel %vm4395, %v4406, %v4408
        %v4410 = vshll.u32 %v4370, 8
        %v4411 = vmul.u32.u64.compose %v4410, %v4409
        %v4412 = vextract.low.u32 %v4411
        %v4413 = vextract.high.u32 %v4411
        %v4414 = vmul.u32.u64.compose %v4410, %v4405
        %v4415 = vextract.low.u32 %v4414
        %v4416 = vextract.high.u32 %v4414
        %v4417 = vmul.u32 %v4410, %v4401
        %v4418 = vadd.s32 %v4413, %v4415
        %vm4419 = vc.u32 %v4413, %v4415
        %v4420 = vadd.s32 %v4416, 1
        %v4421 = vsel %vm4419, %v4420, %v4416
        %v4422 = vadd.s32 %v4417, %v4421
        %v4423 = vadd.s32 %v4422, 536870912
        %v4424 = vshrl.u32 %v4423, 30
        %v4425 = vshll.u32 %v4424, 30
        %v4426 = vsub.s32 %v4422, %v4425
        %vm4427 = vcmp.lt.s32.totalorder %v4426, 0
        %v4428 = vsub.s32 0, %v4426
        %v4429 = vsel %vm4427, %v4428, %v4426
        %v4430 = vclz %v4429
        %v4431 = vsub.s32 %v4430, 2
        %vm4432 = vcmp.gt.s32.totalorder 0, %v4431
        %v4433 = vsel %vm4432, 0, %v4431
        %v4434 = vsub.s32 32, %v4433
        %v4435 = vshll.u32 %v4426, %v4433
        %v4436 = vshrl.u32 %v4418, %v4434
        %v4437 = vor.u32 %v4435, %v4436
        %v4438 = vsub.s32 4294967266, %v4433
        %v4439 = vadd.s32 %v4438, 127
        %v4440 = vshll.u32 %v4439, 23
        %v4441 = vor.u32 4788187, %v4440
        %v4442 = vand.u32 2147483647, %v4441
        %v4444 = vcvt.s32.f32 %v4437
        %v4445 = vmul.f32 %v4444, %v4442
        %v4446 = vxor.u32 %v4445, 2147483648
        %v4447 = vsel %vm4364, %v4446, %v4445
        %v4448 = vsub.s32 4, %v4424
        %v4449 = vsel %vm4364, %v4448, %v4424
        %v4450 = vsel %vm4363, %v3815, %v4447
        %v4451 = vsel %vm4363, 0, %v4449
        %v4452 = vcosq.f32.pop %v4450
        %v4453 = vsinq.f32.pop %v4450
        %vm4454 = vweird.f32 %v3815
        %v4455 = vadd.s32 %v4451, 3
        %v4456 = vand.u32 %v4455, 3
        %vm4457 = vcmp.lt.s32.totalorder %v4456, 2
        %vm4458 = vcmp.eq.s32.totalorder %v4456, 0
        %v4459 = vxor.u32 %v4453, 2147483648
        %v4460 = vsel %vm4458, %v4452, %v4459
        %vm4461 = vcmp.eq.s32.totalorder %v4456, 2
        %v4462 = vxor.u32 %v4452, 2147483648
        %v4463 = vsel %vm4461, %v4462, %v4453
        %v4464 = vsel %vm4457, %v4460, %v4463
        %v4465 = vsel %vm4454, nan, %v4464
        %v4466 = vand.u32 2147483647, %v3816
        %vm4467 = vcmp.le.f32.partialorder %v4466, 0.7853982
        %vm4468 = vcmp.lt.s32.totalorder %v3816, 0
        %v4469 = vand.u32 %v3816, 2139095040
        %v4470 = vshrl.u32 %v4469, 23
        %v4471 = vsub.s32 %v4470, 127
        %v4472 = vand.u32 2147483647, %v3816
        %v4473 = vand.u32 %v4472, 8388607
        %v4474 = vor.u32 %v4473, 8388608
        %v4475 = vsub.s32 0, %v4474
        %v4476 = vadd.s32 %v4471, 1
        %vm4477 = vcmp.gt.s32.totalorder %v4476, 0
        %v4478 = vsel %vm4477, %v4476, 0
        %v4479 = vshrl.u32 %v4478, 5
        %v4480 = vand.u32 %v4478, 31
        %v4481 = vsub.s32 32, %v4480
        %v4482 = vshrl.u32 683565275, %v4481
        %v4483 = vshll.u32 683565275, %v4480
        %v4484 = vshrl.u32 2475754826, %v4481
        %v4485 = vor.u32 %v4483, %v4484
        %v4486 = vshll.u32 2475754826, %v4480
        %v4487 = vshrl.u32 2131351028, %v4481
        %v4488 = vor.u32 %v4486, %v4487
        %v4489 = vshll.u32 2131351028, %v4480
        %v4490 = vshrl.u32 2102212464, %v4481
        %v4491 = vor.u32 %v4489, %v4490
        %v4492 = vshll.u32 2102212464, %v4480
        %v4493 = vshrl.u32 920167782, %v4481
        %v4494 = vor.u32 %v4492, %v4493
        %v4495 = vshll.u32 920167782, %v4480
        %v4496 = vshrl.u32 1326507024, %v4481
        %v4497 = vor.u32 %v4495, %v4496
        %vm4498 = vcmp.lt.s32.totalorder %v4479, 1
        %vm4499 = vcmp.lt.s32.totalorder %v4479, 2
        %vm4500 = vcmp.lt.s32.totalorder %v4479, 3
        %vm4501 = vcmp.lt.s32.totalorder %v4479, 4
        %v4502 = vsel %vm4498, %v4482, %v4485
        %v4503 = vsel %vm4501, %v4491, 2102212464
        %v4504 = vsel %vm4500, %v4488, %v4503
        %v4505 = vsel %vm4499, %v4502, %v4504
        %v4506 = vsel %vm4498, %v4485, %v4488
        %v4507 = vsel %vm4501, %v4494, 920167782
        %v4508 = vsel %vm4500, %v4491, %v4507
        %v4509 = vsel %vm4499, %v4506, %v4508
        %v4510 = vsel %vm4498, %v4488, %v4491
        %v4511 = vsel %vm4501, %v4497, 1326507024
        %v4512 = vsel %vm4500, %v4494, %v4511
        %v4513 = vsel %vm4499, %v4510, %v4512
        %v4514 = vshll.u32 %v4474, 8
        %v4515 = vmul.u32.u64.compose %v4514, %v4513
        %v4516 = vextract.low.u32 %v4515
        %v4517 = vextract.high.u32 %v4515
        %v4518 = vmul.u32.u64.compose %v4514, %v4509
        %v4519 = vextract.low.u32 %v4518
        %v4520 = vextract.high.u32 %v4518
        %v4521 = vmul.u32 %v4514, %v4505
        %v4522 = vadd.s32 %v4517, %v4519
        %vm4523 = vc.u32 %v4517, %v4519
        %v4524 = vadd.s32 %v4520, 1
        %v4525 = vsel %vm4523, %v4524, %v4520
        %v4526 = vadd.s32 %v4521, %v4525
        %v4527 = vadd.s32 %v4526, 536870912
        %v4528 = vshrl.u32 %v4527, 30
        %v4529 = vshll.u32 %v4528, 30
        %v4530 = vsub.s32 %v4526, %v4529
        %vm4531 = vcmp.lt.s32.totalorder %v4530, 0
        %v4532 = vsub.s32 0, %v4530
        %v4533 = vsel %vm4531, %v4532, %v4530
        %v4534 = vclz %v4533
        %v4535 = vsub.s32 %v4534, 2
        %vm4536 = vcmp.gt.s32.totalorder 0, %v4535
        %v4537 = vsel %vm4536, 0, %v4535
        %v4538 = vsub.s32 32, %v4537
        %v4539 = vshll.u32 %v4530, %v4537
        %v4540 = vshrl.u32 %v4522, %v4538
        %v4541 = vor.u32 %v4539, %v4540
        %v4542 = vsub.s32 4294967266, %v4537
        %v4543 = vadd.s32 %v4542, 127
        %v4544 = vshll.u32 %v4543, 23
        %v4545 = vor.u32 4788187, %v4544
        %v4546 = vand.u32 2147483647, %v4545
        %v4548 = vcvt.s32.f32 %v4541
        %v4549 = vmul.f32 %v4548, %v4546
        %v4550 = vxor.u32 %v4549, 2147483648
        %v4551 = vsel %vm4468, %v4550, %v4549
        %v4552 = vsub.s32 4, %v4528
        %v4553 = vsel %vm4468, %v4552, %v4528
        %v4554 = vsel %vm4467, %v3816, %v4551
        %v4555 = vsel %vm4467, 0, %v4553
        %v4556 = vcosq.f32.pop %v4554
        %v4557 = vsinq.f32.pop %v4554
        %vm4558 = vweird.f32 %v3816
        %v4559 = vadd.s32 %v4555, 3
        %v4560 = vand.u32 %v4559, 3
        %vm4561 = vcmp.lt.s32.totalorder %v4560, 2
        %vm4562 = vcmp.eq.s32.totalorder %v4560, 0
        %v4563 = vxor.u32 %v4557, 2147483648
        %v4564 = vsel %vm4562, %v4556, %v4563
        %vm4565 = vcmp.eq.s32.totalorder %v4560, 2
        %v4566 = vxor.u32 %v4556, 2147483648
        %v4567 = vsel %vm4565, %v4566, %v4557
        %v4568 = vsel %vm4561, %v4564, %v4567
        %v4569 = vsel %vm4558, nan, %v4568
        %v4570 = vand.u32 2147483647, %v3817
        %vm4571 = vcmp.le.f32.partialorder %v4570, 0.7853982
        %vm4572 = vcmp.lt.s32.totalorder %v3817, 0
        %v4573 = vand.u32 %v3817, 2139095040
        %v4574 = vshrl.u32 %v4573, 23
        %v4575 = vsub.s32 %v4574, 127
        %v4576 = vand.u32 2147483647, %v3817
        %v4577 = vand.u32 %v4576, 8388607
        %v4578 = vor.u32 %v4577, 8388608
        %v4579 = vsub.s32 0, %v4578
        %v4580 = vadd.s32 %v4575, 1
        %vm4581 = vcmp.gt.s32.totalorder %v4580, 0
        %v4582 = vsel %vm4581, %v4580, 0
        %v4583 = vshrl.u32 %v4582, 5
        %v4584 = vand.u32 %v4582, 31
        %v4585 = vsub.s32 32, %v4584
        %v4586 = vshrl.u32 683565275, %v4585
        %v4587 = vshll.u32 683565275, %v4584
        %v4588 = vshrl.u32 2475754826, %v4585
        %v4589 = vor.u32 %v4587, %v4588
        %v4590 = vshll.u32 2475754826, %v4584
        %v4591 = vshrl.u32 2131351028, %v4585
        %v4592 = vor.u32 %v4590, %v4591
        %v4593 = vshll.u32 2131351028, %v4584
        %v4594 = vshrl.u32 2102212464, %v4585
        %v4595 = vor.u32 %v4593, %v4594
        %v4596 = vshll.u32 2102212464, %v4584
        %v4597 = vshrl.u32 920167782, %v4585
        %v4598 = vor.u32 %v4596, %v4597
        %v4599 = vshll.u32 920167782, %v4584
        %v4600 = vshrl.u32 1326507024, %v4585
        %v4601 = vor.u32 %v4599, %v4600
        %vm4602 = vcmp.lt.s32.totalorder %v4583, 1
        %vm4603 = vcmp.lt.s32.totalorder %v4583, 2
        %vm4604 = vcmp.lt.s32.totalorder %v4583, 3
        %vm4605 = vcmp.lt.s32.totalorder %v4583, 4
        %v4606 = vsel %vm4602, %v4586, %v4589
        %v4607 = vsel %vm4605, %v4595, 2102212464
        %v4608 = vsel %vm4604, %v4592, %v4607
        %v4609 = vsel %vm4603, %v4606, %v4608
        %v4610 = vsel %vm4602, %v4589, %v4592
        %v4611 = vsel %vm4605, %v4598, 920167782
        %v4612 = vsel %vm4604, %v4595, %v4611
        %v4613 = vsel %vm4603, %v4610, %v4612
        %v4614 = vsel %vm4602, %v4592, %v4595
        %v4615 = vsel %vm4605, %v4601, 1326507024
        %v4616 = vsel %vm4604, %v4598, %v4615
        %v4617 = vsel %vm4603, %v4614, %v4616
        %v4618 = vshll.u32 %v4578, 8
        %v4619 = vmul.u32.u64.compose %v4618, %v4617
        %v4620 = vextract.low.u32 %v4619
        %v4621 = vextract.high.u32 %v4619
        %v4622 = vmul.u32.u64.compose %v4618, %v4613
        %v4623 = vextract.low.u32 %v4622
        %v4624 = vextract.high.u32 %v4622
        %v4625 = vmul.u32 %v4618, %v4609
        %v4626 = vadd.s32 %v4621, %v4623
        %vm4627 = vc.u32 %v4621, %v4623
        %v4628 = vadd.s32 %v4624, 1
        %v4629 = vsel %vm4627, %v4628, %v4624
        %v4630 = vadd.s32 %v4625, %v4629
        %v4631 = vadd.s32 %v4630, 536870912
        %v4632 = vshrl.u32 %v4631, 30
        %v4633 = vshll.u32 %v4632, 30
        %v4634 = vsub.s32 %v4630, %v4633
        %vm4635 = vcmp.lt.s32.totalorder %v4634, 0
        %v4636 = vsub.s32 0, %v4634
        %v4637 = vsel %vm4635, %v4636, %v4634
        %v4638 = vclz %v4637
        %v4639 = vsub.s32 %v4638, 2
        %vm4640 = vcmp.gt.s32.totalorder 0, %v4639
        %v4641 = vsel %vm4640, 0, %v4639
        %v4642 = vsub.s32 32, %v4641
        %v4643 = vshll.u32 %v4634, %v4641
        %v4644 = vshrl.u32 %v4626, %v4642
        %v4645 = vor.u32 %v4643, %v4644
        %v4646 = vsub.s32 4294967266, %v4641
        %v4647 = vadd.s32 %v4646, 127
        %v4648 = vshll.u32 %v4647, 23
        %v4649 = vor.u32 4788187, %v4648
        %v4650 = vand.u32 2147483647, %v4649
        %v4652 = vcvt.s32.f32 %v4645
        %v4653 = vmul.f32 %v4652, %v4650
        %v4654 = vxor.u32 %v4653, 2147483648
        %v4655 = vsel %vm4572, %v4654, %v4653
        %v4656 = vsub.s32 4, %v4632
        %v4657 = vsel %vm4572, %v4656, %v4632
        %v4658 = vsel %vm4571, %v3817, %v4655
        %v4659 = vsel %vm4571, 0, %v4657
        %v4660 = vcosq.f32.pop %v4658
        %v4661 = vsinq.f32.pop %v4658
        %vm4662 = vweird.f32 %v3817
        %v4663 = vadd.s32 %v4659, 3
        %v4664 = vand.u32 %v4663, 3
        %vm4665 = vcmp.lt.s32.totalorder %v4664, 2
        %vm4666 = vcmp.eq.s32.totalorder %v4664, 0
        %v4667 = vxor.u32 %v4661, 2147483648
        %v4668 = vsel %vm4666, %v4660, %v4667
        %vm4669 = vcmp.eq.s32.totalorder %v4664, 2
        %v4670 = vxor.u32 %v4660, 2147483648
        %v4671 = vsel %vm4669, %v4670, %v4661
        %v4672 = vsel %vm4665, %v4668, %v4671
        %v4673 = vsel %vm4662, nan, %v4672
        %v4674 = vand.u32 2147483647, %v3818
        %vm4675 = vcmp.le.f32.partialorder %v4674, 0.7853982
        %vm4676 = vcmp.lt.s32.totalorder %v3818, 0
        %v4677 = vand.u32 %v3818, 2139095040
        %v4678 = vshrl.u32 %v4677, 23
        %v4679 = vsub.s32 %v4678, 127
        %v4680 = vand.u32 2147483647, %v3818
        %v4681 = vand.u32 %v4680, 8388607
        %v4682 = vor.u32 %v4681, 8388608
        %v4683 = vsub.s32 0, %v4682
        %v4684 = vadd.s32 %v4679, 1
        %vm4685 = vcmp.gt.s32.totalorder %v4684, 0
        %v4686 = vsel %vm4685, %v4684, 0
        %v4687 = vshrl.u32 %v4686, 5
        %v4688 = vand.u32 %v4686, 31
        %v4689 = vsub.s32 32, %v4688
        %v4690 = vshrl.u32 683565275, %v4689
        %v4691 = vshll.u32 683565275, %v4688
        %v4692 = vshrl.u32 2475754826, %v4689
        %v4693 = vor.u32 %v4691, %v4692
        %v4694 = vshll.u32 2475754826, %v4688
        %v4695 = vshrl.u32 2131351028, %v4689
        %v4696 = vor.u32 %v4694, %v4695
        %v4697 = vshll.u32 2131351028, %v4688
        %v4698 = vshrl.u32 2102212464, %v4689
        %v4699 = vor.u32 %v4697, %v4698
        %v4700 = vshll.u32 2102212464, %v4688
        %v4701 = vshrl.u32 920167782, %v4689
        %v4702 = vor.u32 %v4700, %v4701
        %v4703 = vshll.u32 920167782, %v4688
        %v4704 = vshrl.u32 1326507024, %v4689
        %v4705 = vor.u32 %v4703, %v4704
        %vm4706 = vcmp.lt.s32.totalorder %v4687, 1
        %vm4707 = vcmp.lt.s32.totalorder %v4687, 2
        %vm4708 = vcmp.lt.s32.totalorder %v4687, 3
        %vm4709 = vcmp.lt.s32.totalorder %v4687, 4
        %v4710 = vsel %vm4706, %v4690, %v4693
        %v4711 = vsel %vm4709, %v4699, 2102212464
        %v4712 = vsel %vm4708, %v4696, %v4711
        %v4713 = vsel %vm4707, %v4710, %v4712
        %v4714 = vsel %vm4706, %v4693, %v4696
        %v4715 = vsel %vm4709, %v4702, 920167782
        %v4716 = vsel %vm4708, %v4699, %v4715
        %v4717 = vsel %vm4707, %v4714, %v4716
        %v4718 = vsel %vm4706, %v4696, %v4699
        %v4719 = vsel %vm4709, %v4705, 1326507024
        %v4720 = vsel %vm4708, %v4702, %v4719
        %v4721 = vsel %vm4707, %v4718, %v4720
        %v4722 = vshll.u32 %v4682, 8
        %v4723 = vmul.u32.u64.compose %v4722, %v4721
        %v4724 = vextract.low.u32 %v4723
        %v4725 = vextract.high.u32 %v4723
        %v4726 = vmul.u32.u64.compose %v4722, %v4717
        %v4727 = vextract.low.u32 %v4726
        %v4728 = vextract.high.u32 %v4726
        %v4729 = vmul.u32 %v4722, %v4713
        %v4730 = vadd.s32 %v4725, %v4727
        %vm4731 = vc.u32 %v4725, %v4727
        %v4732 = vadd.s32 %v4728, 1
        %v4733 = vsel %vm4731, %v4732, %v4728
        %v4734 = vadd.s32 %v4729, %v4733
        %v4735 = vadd.s32 %v4734, 536870912
        %v4736 = vshrl.u32 %v4735, 30
        %v4737 = vshll.u32 %v4736, 30
        %v4738 = vsub.s32 %v4734, %v4737
        %vm4739 = vcmp.lt.s32.totalorder %v4738, 0
        %v4740 = vsub.s32 0, %v4738
        %v4741 = vsel %vm4739, %v4740, %v4738
        %v4742 = vclz %v4741
        %v4743 = vsub.s32 %v4742, 2
        %vm4744 = vcmp.gt.s32.totalorder 0, %v4743
        %v4745 = vsel %vm4744, 0, %v4743
        %v4746 = vsub.s32 32, %v4745
        %v4747 = vshll.u32 %v4738, %v4745
        %v4748 = vshrl.u32 %v4730, %v4746
        %v4749 = vor.u32 %v4747, %v4748
        %v4750 = vsub.s32 4294967266, %v4745
        %v4751 = vadd.s32 %v4750, 127
        %v4752 = vshll.u32 %v4751, 23
        %v4753 = vor.u32 4788187, %v4752
        %v4754 = vand.u32 2147483647, %v4753
        %v4756 = vcvt.s32.f32 %v4749
        %v4757 = vmul.f32 %v4756, %v4754
        %v4758 = vxor.u32 %v4757, 2147483648
        %v4759 = vsel %vm4676, %v4758, %v4757
        %v4760 = vsub.s32 4, %v4736
        %v4761 = vsel %vm4676, %v4760, %v4736
        %v4762 = vsel %vm4675, %v3818, %v4759
        %v4763 = vsel %vm4675, 0, %v4761
        %v4764 = vcosq.f32.pop %v4762
        %v4765 = vsinq.f32.pop %v4762
        %vm4766 = vweird.f32 %v3818
        %v4767 = vadd.s32 %v4763, 3
        %v4768 = vand.u32 %v4767, 3
        %vm4769 = vcmp.lt.s32.totalorder %v4768, 2
        %vm4770 = vcmp.eq.s32.totalorder %v4768, 0
        %v4771 = vxor.u32 %v4765, 2147483648
        %v4772 = vsel %vm4770, %v4764, %v4771
        %vm4773 = vcmp.eq.s32.totalorder %v4768, 2
        %v4774 = vxor.u32 %v4764, 2147483648
        %v4775 = vsel %vm4773, %v4774, %v4765
        %v4776 = vsel %vm4769, %v4772, %v4775
        %v4777 = vsel %vm4766, nan, %v4776
        %v4778 = vand.u32 2147483647, %v3819
        %vm4779 = vcmp.le.f32.partialorder %v4778, 0.7853982
        %vm4780 = vcmp.lt.s32.totalorder %v3819, 0
        %v4781 = vand.u32 %v3819, 2139095040
        %v4782 = vshrl.u32 %v4781, 23
        %v4783 = vsub.s32 %v4782, 127
        %v4784 = vand.u32 2147483647, %v3819
        %v4785 = vand.u32 %v4784, 8388607
        %v4786 = vor.u32 %v4785, 8388608
        %v4787 = vsub.s32 0, %v4786
        %v4788 = vadd.s32 %v4783, 1
        %vm4789 = vcmp.gt.s32.totalorder %v4788, 0
        %v4790 = vsel %vm4789, %v4788, 0
        %v4791 = vshrl.u32 %v4790, 5
        %v4792 = vand.u32 %v4790, 31
        %v4793 = vsub.s32 32, %v4792
        %v4794 = vshrl.u32 683565275, %v4793
        %v4795 = vshll.u32 683565275, %v4792
        %v4796 = vshrl.u32 2475754826, %v4793
        %v4797 = vor.u32 %v4795, %v4796
        %v4798 = vshll.u32 2475754826, %v4792
        %v4799 = vshrl.u32 2131351028, %v4793
        %v4800 = vor.u32 %v4798, %v4799
        %v4801 = vshll.u32 2131351028, %v4792
        %v4802 = vshrl.u32 2102212464, %v4793
        %v4803 = vor.u32 %v4801, %v4802
        %v4804 = vshll.u32 2102212464, %v4792
        %v4805 = vshrl.u32 920167782, %v4793
        %v4806 = vor.u32 %v4804, %v4805
        %v4807 = vshll.u32 920167782, %v4792
        %v4808 = vshrl.u32 1326507024, %v4793
        %v4809 = vor.u32 %v4807, %v4808
        %vm4810 = vcmp.lt.s32.totalorder %v4791, 1
        %vm4811 = vcmp.lt.s32.totalorder %v4791, 2
        %vm4812 = vcmp.lt.s32.totalorder %v4791, 3
        %vm4813 = vcmp.lt.s32.totalorder %v4791, 4
        %v4814 = vsel %vm4810, %v4794, %v4797
        %v4815 = vsel %vm4813, %v4803, 2102212464
        %v4816 = vsel %vm4812, %v4800, %v4815
        %v4817 = vsel %vm4811, %v4814, %v4816
        %v4818 = vsel %vm4810, %v4797, %v4800
        %v4819 = vsel %vm4813, %v4806, 920167782
        %v4820 = vsel %vm4812, %v4803, %v4819
        %v4821 = vsel %vm4811, %v4818, %v4820
        %v4822 = vsel %vm4810, %v4800, %v4803
        %v4823 = vsel %vm4813, %v4809, 1326507024
        %v4824 = vsel %vm4812, %v4806, %v4823
        %v4825 = vsel %vm4811, %v4822, %v4824
        %v4826 = vshll.u32 %v4786, 8
        %v4827 = vmul.u32.u64.compose %v4826, %v4825
        %v4828 = vextract.low.u32 %v4827
        %v4829 = vextract.high.u32 %v4827
        %v4830 = vmul.u32.u64.compose %v4826, %v4821
        %v4831 = vextract.low.u32 %v4830
        %v4832 = vextract.high.u32 %v4830
        %v4833 = vmul.u32 %v4826, %v4817
        %v4834 = vadd.s32 %v4829, %v4831
        %vm4835 = vc.u32 %v4829, %v4831
        %v4836 = vadd.s32 %v4832, 1
        %v4837 = vsel %vm4835, %v4836, %v4832
        %v4838 = vadd.s32 %v4833, %v4837
        %v4839 = vadd.s32 %v4838, 536870912
        %v4840 = vshrl.u32 %v4839, 30
        %v4841 = vshll.u32 %v4840, 30
        %v4842 = vsub.s32 %v4838, %v4841
        %vm4843 = vcmp.lt.s32.totalorder %v4842, 0
        %v4844 = vsub.s32 0, %v4842
        %v4845 = vsel %vm4843, %v4844, %v4842
        %v4846 = vclz %v4845
        %v4847 = vsub.s32 %v4846, 2
        %vm4848 = vcmp.gt.s32.totalorder 0, %v4847
        %v4849 = vsel %vm4848, 0, %v4847
        %v4850 = vsub.s32 32, %v4849
        %v4851 = vshll.u32 %v4842, %v4849
        %v4852 = vshrl.u32 %v4834, %v4850
        %v4853 = vor.u32 %v4851, %v4852
        %v4854 = vsub.s32 4294967266, %v4849
        %v4855 = vadd.s32 %v4854, 127
        %v4856 = vshll.u32 %v4855, 23
        %v4857 = vor.u32 4788187, %v4856
        %v4858 = vand.u32 2147483647, %v4857
        %v4860 = vcvt.s32.f32 %v4853
        %v4861 = vmul.f32 %v4860, %v4858
        %v4862 = vxor.u32 %v4861, 2147483648
        %v4863 = vsel %vm4780, %v4862, %v4861
        %v4864 = vsub.s32 4, %v4840
        %v4865 = vsel %vm4780, %v4864, %v4840
        %v4866 = vsel %vm4779, %v3819, %v4863
        %v4867 = vsel %vm4779, 0, %v4865
        %v4868 = vcosq.f32.pop %v4866
        %v4869 = vsinq.f32.pop %v4866
        %vm4870 = vweird.f32 %v3819
        %v4871 = vadd.s32 %v4867, 3
        %v4872 = vand.u32 %v4871, 3
        %vm4873 = vcmp.lt.s32.totalorder %v4872, 2
        %vm4874 = vcmp.eq.s32.totalorder %v4872, 0
        %v4875 = vxor.u32 %v4869, 2147483648
        %v4876 = vsel %vm4874, %v4868, %v4875
        %vm4877 = vcmp.eq.s32.totalorder %v4872, 2
        %v4878 = vxor.u32 %v4868, 2147483648
        %v4879 = vsel %vm4877, %v4878, %v4869
        %v4880 = vsel %vm4873, %v4876, %v4879
        %v4881 = vsel %vm4870, nan, %v4880
        %v4882 = vand.u32 2147483647, %v3820
        %vm4883 = vcmp.le.f32.partialorder %v4882, 0.7853982
        %vm4884 = vcmp.lt.s32.totalorder %v3820, 0
        %v4885 = vand.u32 %v3820, 2139095040
        %v4886 = vshrl.u32 %v4885, 23
        %v4887 = vsub.s32 %v4886, 127
        %v4888 = vand.u32 2147483647, %v3820
        %v4889 = vand.u32 %v4888, 8388607
        %v4890 = vor.u32 %v4889, 8388608
        %v4891 = vsub.s32 0, %v4890
        %v4892 = vadd.s32 %v4887, 1
        %vm4893 = vcmp.gt.s32.totalorder %v4892, 0
        %v4894 = vsel %vm4893, %v4892, 0
        %v4895 = vshrl.u32 %v4894, 5
        %v4896 = vand.u32 %v4894, 31
        %v4897 = vsub.s32 32, %v4896
        %v4898 = vshrl.u32 683565275, %v4897
        %v4899 = vshll.u32 683565275, %v4896
        %v4900 = vshrl.u32 2475754826, %v4897
        %v4901 = vor.u32 %v4899, %v4900
        %v4902 = vshll.u32 2475754826, %v4896
        %v4903 = vshrl.u32 2131351028, %v4897
        %v4904 = vor.u32 %v4902, %v4903
        %v4905 = vshll.u32 2131351028, %v4896
        %v4906 = vshrl.u32 2102212464, %v4897
        %v4907 = vor.u32 %v4905, %v4906
        %v4908 = vshll.u32 2102212464, %v4896
        %v4909 = vshrl.u32 920167782, %v4897
        %v4910 = vor.u32 %v4908, %v4909
        %v4911 = vshll.u32 920167782, %v4896
        %v4912 = vshrl.u32 1326507024, %v4897
        %v4913 = vor.u32 %v4911, %v4912
        %vm4914 = vcmp.lt.s32.totalorder %v4895, 1
        %vm4915 = vcmp.lt.s32.totalorder %v4895, 2
        %vm4916 = vcmp.lt.s32.totalorder %v4895, 3
        %vm4917 = vcmp.lt.s32.totalorder %v4895, 4
        %v4918 = vsel %vm4914, %v4898, %v4901
        %v4919 = vsel %vm4917, %v4907, 2102212464
        %v4920 = vsel %vm4916, %v4904, %v4919
        %v4921 = vsel %vm4915, %v4918, %v4920
        %v4922 = vsel %vm4914, %v4901, %v4904
        %v4923 = vsel %vm4917, %v4910, 920167782
        %v4924 = vsel %vm4916, %v4907, %v4923
        %v4925 = vsel %vm4915, %v4922, %v4924
        %v4926 = vsel %vm4914, %v4904, %v4907
        %v4927 = vsel %vm4917, %v4913, 1326507024
        %v4928 = vsel %vm4916, %v4910, %v4927
        %v4929 = vsel %vm4915, %v4926, %v4928
        %v4930 = vshll.u32 %v4890, 8
        %v4931 = vmul.u32.u64.compose %v4930, %v4929
        %v4932 = vextract.low.u32 %v4931
        %v4933 = vextract.high.u32 %v4931
        %v4934 = vmul.u32.u64.compose %v4930, %v4925
        %v4935 = vextract.low.u32 %v4934
        %v4936 = vextract.high.u32 %v4934
        %v4937 = vmul.u32 %v4930, %v4921
        %v4938 = vadd.s32 %v4933, %v4935
        %vm4939 = vc.u32 %v4933, %v4935
        %v4940 = vadd.s32 %v4936, 1
        %v4941 = vsel %vm4939, %v4940, %v4936
        %v4942 = vadd.s32 %v4937, %v4941
        %v4943 = vadd.s32 %v4942, 536870912
        %v4944 = vshrl.u32 %v4943, 30
        %v4945 = vshll.u32 %v4944, 30
        %v4946 = vsub.s32 %v4942, %v4945
        %vm4947 = vcmp.lt.s32.totalorder %v4946, 0
        %v4948 = vsub.s32 0, %v4946
        %v4949 = vsel %vm4947, %v4948, %v4946
        %v4950 = vclz %v4949
        %v4951 = vsub.s32 %v4950, 2
        %vm4952 = vcmp.gt.s32.totalorder 0, %v4951
        %v4953 = vsel %vm4952, 0, %v4951
        %v4954 = vsub.s32 32, %v4953
        %v4955 = vshll.u32 %v4946, %v4953
        %v4956 = vshrl.u32 %v4938, %v4954
        %v4957 = vor.u32 %v4955, %v4956
        %v4958 = vsub.s32 4294967266, %v4953
        %v4959 = vadd.s32 %v4958, 127
        %v4960 = vshll.u32 %v4959, 23
        %v4961 = vor.u32 4788187, %v4960
        %v4962 = vand.u32 2147483647, %v4961
        %v4964 = vcvt.s32.f32 %v4957
        %v4965 = vmul.f32 %v4964, %v4962
        %v4966 = vxor.u32 %v4965, 2147483648
        %v4967 = vsel %vm4884, %v4966, %v4965
        %v4968 = vsub.s32 4, %v4944
        %v4969 = vsel %vm4884, %v4968, %v4944
        %v4970 = vsel %vm4883, %v3820, %v4967
        %v4971 = vsel %vm4883, 0, %v4969
        %v4972 = vcosq.f32.pop %v4970
        %v4973 = vsinq.f32.pop %v4970
        %vm4974 = vweird.f32 %v3820
        %v4975 = vadd.s32 %v4971, 3
        %v4976 = vand.u32 %v4975, 3
        %vm4977 = vcmp.lt.s32.totalorder %v4976, 2
        %vm4978 = vcmp.eq.s32.totalorder %v4976, 0
        %v4979 = vxor.u32 %v4973, 2147483648
        %v4980 = vsel %vm4978, %v4972, %v4979
        %vm4981 = vcmp.eq.s32.totalorder %v4976, 2
        %v4982 = vxor.u32 %v4972, 2147483648
        %v4983 = vsel %vm4981, %v4982, %v4973
        %v4984 = vsel %vm4977, %v4980, %v4983
        %v4985 = vsel %vm4974, nan, %v4984
        %v4986 = vand.u32 2147483647, %v3821
        %vm4987 = vcmp.le.f32.partialorder %v4986, 0.7853982
        %vm4988 = vcmp.lt.s32.totalorder %v3821, 0
        %v4989 = vand.u32 %v3821, 2139095040
        %v4990 = vshrl.u32 %v4989, 23
        %v4991 = vsub.s32 %v4990, 127
        %v4992 = vand.u32 2147483647, %v3821
        %v4993 = vand.u32 %v4992, 8388607
        %v4994 = vor.u32 %v4993, 8388608
        %v4995 = vsub.s32 0, %v4994
        %v4996 = vadd.s32 %v4991, 1
        %vm4997 = vcmp.gt.s32.totalorder %v4996, 0
        %v4998 = vsel %vm4997, %v4996, 0
        %v4999 = vshrl.u32 %v4998, 5
        %v5000 = vand.u32 %v4998, 31
        %v5001 = vsub.s32 32, %v5000
        %v5002 = vshrl.u32 683565275, %v5001
        %v5003 = vshll.u32 683565275, %v5000
        %v5004 = vshrl.u32 2475754826, %v5001
        %v5005 = vor.u32 %v5003, %v5004
        %v5006 = vshll.u32 2475754826, %v5000
        %v5007 = vshrl.u32 2131351028, %v5001
        %v5008 = vor.u32 %v5006, %v5007
        %v5009 = vshll.u32 2131351028, %v5000
        %v5010 = vshrl.u32 2102212464, %v5001
        %v5011 = vor.u32 %v5009, %v5010
        %v5012 = vshll.u32 2102212464, %v5000
        %v5013 = vshrl.u32 920167782, %v5001
        %v5014 = vor.u32 %v5012, %v5013
        %v5015 = vshll.u32 920167782, %v5000
        %v5016 = vshrl.u32 1326507024, %v5001
        %v5017 = vor.u32 %v5015, %v5016
        %vm5018 = vcmp.lt.s32.totalorder %v4999, 1
        %vm5019 = vcmp.lt.s32.totalorder %v4999, 2
        %vm5020 = vcmp.lt.s32.totalorder %v4999, 3
        %vm5021 = vcmp.lt.s32.totalorder %v4999, 4
        %v5022 = vsel %vm5018, %v5002, %v5005
        %v5023 = vsel %vm5021, %v5011, 2102212464
        %v5024 = vsel %vm5020, %v5008, %v5023
        %v5025 = vsel %vm5019, %v5022, %v5024
        %v5026 = vsel %vm5018, %v5005, %v5008
        %v5027 = vsel %vm5021, %v5014, 920167782
        %v5028 = vsel %vm5020, %v5011, %v5027
        %v5029 = vsel %vm5019, %v5026, %v5028
        %v5030 = vsel %vm5018, %v5008, %v5011
        %v5031 = vsel %vm5021, %v5017, 1326507024
        %v5032 = vsel %vm5020, %v5014, %v5031
        %v5033 = vsel %vm5019, %v5030, %v5032
        %v5034 = vshll.u32 %v4994, 8
        %v5035 = vmul.u32.u64.compose %v5034, %v5033
        %v5036 = vextract.low.u32 %v5035
        %v5037 = vextract.high.u32 %v5035
        %v5038 = vmul.u32.u64.compose %v5034, %v5029
        %v5039 = vextract.low.u32 %v5038
        %v5040 = vextract.high.u32 %v5038
        %v5041 = vmul.u32 %v5034, %v5025
        %v5042 = vadd.s32 %v5037, %v5039
        %vm5043 = vc.u32 %v5037, %v5039
        %v5044 = vadd.s32 %v5040, 1
        %v5045 = vsel %vm5043, %v5044, %v5040
        %v5046 = vadd.s32 %v5041, %v5045
        %v5047 = vadd.s32 %v5046, 536870912
        %v5048 = vshrl.u32 %v5047, 30
        %v5049 = vshll.u32 %v5048, 30
        %v5050 = vsub.s32 %v5046, %v5049
        %vm5051 = vcmp.lt.s32.totalorder %v5050, 0
        %v5052 = vsub.s32 0, %v5050
        %v5053 = vsel %vm5051, %v5052, %v5050
        %v5054 = vclz %v5053
        %v5055 = vsub.s32 %v5054, 2
        %vm5056 = vcmp.gt.s32.totalorder 0, %v5055
        %v5057 = vsel %vm5056, 0, %v5055
        %v5058 = vsub.s32 32, %v5057
        %v5059 = vshll.u32 %v5050, %v5057
        %v5060 = vshrl.u32 %v5042, %v5058
        %v5061 = vor.u32 %v5059, %v5060
        %v5062 = vsub.s32 4294967266, %v5057
        %v5063 = vadd.s32 %v5062, 127
        %v5064 = vshll.u32 %v5063, 23
        %v5065 = vor.u32 4788187, %v5064
        %v5066 = vand.u32 2147483647, %v5065
        %v5068 = vcvt.s32.f32 %v5061
        %v5069 = vmul.f32 %v5068, %v5066
        %v5070 = vxor.u32 %v5069, 2147483648
        %v5071 = vsel %vm4988, %v5070, %v5069
        %v5072 = vsub.s32 4, %v5048
        %v5073 = vsel %vm4988, %v5072, %v5048
        %v5074 = vsel %vm4987, %v3821, %v5071
        %v5075 = vsel %vm4987, 0, %v5073
        %v5076 = vcosq.f32.pop %v5074
        %v5077 = vsinq.f32.pop %v5074
        %vm5078 = vweird.f32 %v3821
        %v5079 = vadd.s32 %v5075, 3
        %v5080 = vand.u32 %v5079, 3
        %vm5081 = vcmp.lt.s32.totalorder %v5080, 2
        %vm5082 = vcmp.eq.s32.totalorder %v5080, 0
        %v5083 = vxor.u32 %v5077, 2147483648
        %v5084 = vsel %vm5082, %v5076, %v5083
        %vm5085 = vcmp.eq.s32.totalorder %v5080, 2
        %v5086 = vxor.u32 %v5076, 2147483648
        %v5087 = vsel %vm5085, %v5086, %v5077
        %v5088 = vsel %vm5081, %v5084, %v5087
        %v5089 = vsel %vm5078, nan, %v5088
        %v5090 = vand.u32 2147483647, %v3822
        %vm5091 = vcmp.le.f32.partialorder %v5090, 0.7853982
        %vm5092 = vcmp.lt.s32.totalorder %v3822, 0
        %v5093 = vand.u32 %v3822, 2139095040
        %v5094 = vshrl.u32 %v5093, 23
        %v5095 = vsub.s32 %v5094, 127
        %v5096 = vand.u32 2147483647, %v3822
        %v5097 = vand.u32 %v5096, 8388607
        %v5098 = vor.u32 %v5097, 8388608
        %v5099 = vsub.s32 0, %v5098
        %v5100 = vadd.s32 %v5095, 1
        %vm5101 = vcmp.gt.s32.totalorder %v5100, 0
        %v5102 = vsel %vm5101, %v5100, 0
        %v5103 = vshrl.u32 %v5102, 5
        %v5104 = vand.u32 %v5102, 31
        %v5105 = vsub.s32 32, %v5104
        %v5106 = vshrl.u32 683565275, %v5105
        %v5107 = vshll.u32 683565275, %v5104
        %v5108 = vshrl.u32 2475754826, %v5105
        %v5109 = vor.u32 %v5107, %v5108
        %v5110 = vshll.u32 2475754826, %v5104
        %v5111 = vshrl.u32 2131351028, %v5105
        %v5112 = vor.u32 %v5110, %v5111
        %v5113 = vshll.u32 2131351028, %v5104
        %v5114 = vshrl.u32 2102212464, %v5105
        %v5115 = vor.u32 %v5113, %v5114
        %v5116 = vshll.u32 2102212464, %v5104
        %v5117 = vshrl.u32 920167782, %v5105
        %v5118 = vor.u32 %v5116, %v5117
        %v5119 = vshll.u32 920167782, %v5104
        %v5120 = vshrl.u32 1326507024, %v5105
        %v5121 = vor.u32 %v5119, %v5120
        %vm5122 = vcmp.lt.s32.totalorder %v5103, 1
        %vm5123 = vcmp.lt.s32.totalorder %v5103, 2
        %vm5124 = vcmp.lt.s32.totalorder %v5103, 3
        %vm5125 = vcmp.lt.s32.totalorder %v5103, 4
        %v5126 = vsel %vm5122, %v5106, %v5109
        %v5127 = vsel %vm5125, %v5115, 2102212464
        %v5128 = vsel %vm5124, %v5112, %v5127
        %v5129 = vsel %vm5123, %v5126, %v5128
        %v5130 = vsel %vm5122, %v5109, %v5112
        %v5131 = vsel %vm5125, %v5118, 920167782
        %v5132 = vsel %vm5124, %v5115, %v5131
        %v5133 = vsel %vm5123, %v5130, %v5132
        %v5134 = vsel %vm5122, %v5112, %v5115
        %v5135 = vsel %vm5125, %v5121, 1326507024
        %v5136 = vsel %vm5124, %v5118, %v5135
        %v5137 = vsel %vm5123, %v5134, %v5136
        %v5138 = vshll.u32 %v5098, 8
        %v5139 = vmul.u32.u64.compose %v5138, %v5137
        %v5140 = vextract.low.u32 %v5139
        %v5141 = vextract.high.u32 %v5139
        %v5142 = vmul.u32.u64.compose %v5138, %v5133
        %v5143 = vextract.low.u32 %v5142
        %v5144 = vextract.high.u32 %v5142
        %v5145 = vmul.u32 %v5138, %v5129
        %v5146 = vadd.s32 %v5141, %v5143
        %vm5147 = vc.u32 %v5141, %v5143
        %v5148 = vadd.s32 %v5144, 1
        %v5149 = vsel %vm5147, %v5148, %v5144
        %v5150 = vadd.s32 %v5145, %v5149
        %v5151 = vadd.s32 %v5150, 536870912
        %v5152 = vshrl.u32 %v5151, 30
        %v5153 = vshll.u32 %v5152, 30
        %v5154 = vsub.s32 %v5150, %v5153
        %vm5155 = vcmp.lt.s32.totalorder %v5154, 0
        %v5156 = vsub.s32 0, %v5154
        %v5157 = vsel %vm5155, %v5156, %v5154
        %v5158 = vclz %v5157
        %v5159 = vsub.s32 %v5158, 2
        %vm5160 = vcmp.gt.s32.totalorder 0, %v5159
        %v5161 = vsel %vm5160, 0, %v5159
        %v5162 = vsub.s32 32, %v5161
        %v5163 = vshll.u32 %v5154, %v5161
        %v5164 = vshrl.u32 %v5146, %v5162
        %v5165 = vor.u32 %v5163, %v5164
        %v5166 = vsub.s32 4294967266, %v5161
        %v5167 = vadd.s32 %v5166, 127
        %v5168 = vshll.u32 %v5167, 23
        %v5169 = vor.u32 4788187, %v5168
        %v5170 = vand.u32 2147483647, %v5169
        %v5172 = vcvt.s32.f32 %v5165
        %v5173 = vmul.f32 %v5172, %v5170
        %v5174 = vxor.u32 %v5173, 2147483648
        %v5175 = vsel %vm5092, %v5174, %v5173
        %v5176 = vsub.s32 4, %v5152
        %v5177 = vsel %vm5092, %v5176, %v5152
        %v5178 = vsel %vm5091, %v3822, %v5175
        %v5179 = vsel %vm5091, 0, %v5177
        %v5180 = vcosq.f32.pop %v5178
        %v5181 = vsinq.f32.pop %v5178
        %vm5182 = vweird.f32 %v3822
        %v5183 = vadd.s32 %v5179, 3
        %v5184 = vand.u32 %v5183, 3
        %vm5185 = vcmp.lt.s32.totalorder %v5184, 2
        %vm5186 = vcmp.eq.s32.totalorder %v5184, 0
        %v5187 = vxor.u32 %v5181, 2147483648
        %v5188 = vsel %vm5186, %v5180, %v5187
        %vm5189 = vcmp.eq.s32.totalorder %v5184, 2
        %v5190 = vxor.u32 %v5180, 2147483648
        %v5191 = vsel %vm5189, %v5190, %v5181
        %v5192 = vsel %vm5185, %v5188, %v5191
        %v5193 = vsel %vm5182, nan, %v5192
        %v5194 = vand.u32 2147483647, %v3823
        %vm5195 = vcmp.le.f32.partialorder %v5194, 0.7853982
        %vm5196 = vcmp.lt.s32.totalorder %v3823, 0
        %v5197 = vand.u32 %v3823, 2139095040
        %v5198 = vshrl.u32 %v5197, 23
        %v5199 = vsub.s32 %v5198, 127
        %v5200 = vand.u32 2147483647, %v3823
        %v5201 = vand.u32 %v5200, 8388607
        %v5202 = vor.u32 %v5201, 8388608
        %v5203 = vsub.s32 0, %v5202
        %v5204 = vadd.s32 %v5199, 1
        %vm5205 = vcmp.gt.s32.totalorder %v5204, 0
        %v5206 = vsel %vm5205, %v5204, 0
        %v5207 = vshrl.u32 %v5206, 5
        %v5208 = vand.u32 %v5206, 31
        %v5209 = vsub.s32 32, %v5208
        %v5210 = vshrl.u32 683565275, %v5209
        %v5211 = vshll.u32 683565275, %v5208
        %v5212 = vshrl.u32 2475754826, %v5209
        %v5213 = vor.u32 %v5211, %v5212
        %v5214 = vshll.u32 2475754826, %v5208
        %v5215 = vshrl.u32 2131351028, %v5209
        %v5216 = vor.u32 %v5214, %v5215
        %v5217 = vshll.u32 2131351028, %v5208
        %v5218 = vshrl.u32 2102212464, %v5209
        %v5219 = vor.u32 %v5217, %v5218
        %v5220 = vshll.u32 2102212464, %v5208
        %v5221 = vshrl.u32 920167782, %v5209
        %v5222 = vor.u32 %v5220, %v5221
        %v5223 = vshll.u32 920167782, %v5208
        %v5224 = vshrl.u32 1326507024, %v5209
        %v5225 = vor.u32 %v5223, %v5224
        %vm5226 = vcmp.lt.s32.totalorder %v5207, 1
        %vm5227 = vcmp.lt.s32.totalorder %v5207, 2
        %vm5228 = vcmp.lt.s32.totalorder %v5207, 3
        %vm5229 = vcmp.lt.s32.totalorder %v5207, 4
        %v5230 = vsel %vm5226, %v5210, %v5213
        %v5231 = vsel %vm5229, %v5219, 2102212464
        %v5232 = vsel %vm5228, %v5216, %v5231
        %v5233 = vsel %vm5227, %v5230, %v5232
        %v5234 = vsel %vm5226, %v5213, %v5216
        %v5235 = vsel %vm5229, %v5222, 920167782
        %v5236 = vsel %vm5228, %v5219, %v5235
        %v5237 = vsel %vm5227, %v5234, %v5236
        %v5238 = vsel %vm5226, %v5216, %v5219
        %v5239 = vsel %vm5229, %v5225, 1326507024
        %v5240 = vsel %vm5228, %v5222, %v5239
        %v5241 = vsel %vm5227, %v5238, %v5240
        %v5242 = vshll.u32 %v5202, 8
        %v5243 = vmul.u32.u64.compose %v5242, %v5241
        %v5244 = vextract.low.u32 %v5243
        %v5245 = vextract.high.u32 %v5243
        %v5246 = vmul.u32.u64.compose %v5242, %v5237
        %v5247 = vextract.low.u32 %v5246
        %v5248 = vextract.high.u32 %v5246
        %v5249 = vmul.u32 %v5242, %v5233
        %v5250 = vadd.s32 %v5245, %v5247
        %vm5251 = vc.u32 %v5245, %v5247
        %v5252 = vadd.s32 %v5248, 1
        %v5253 = vsel %vm5251, %v5252, %v5248
        %v5254 = vadd.s32 %v5249, %v5253
        %v5255 = vadd.s32 %v5254, 536870912
        %v5256 = vshrl.u32 %v5255, 30
        %v5257 = vshll.u32 %v5256, 30
        %v5258 = vsub.s32 %v5254, %v5257
        %vm5259 = vcmp.lt.s32.totalorder %v5258, 0
        %v5260 = vsub.s32 0, %v5258
        %v5261 = vsel %vm5259, %v5260, %v5258
        %v5262 = vclz %v5261
        %v5263 = vsub.s32 %v5262, 2
        %vm5264 = vcmp.gt.s32.totalorder 0, %v5263
        %v5265 = vsel %vm5264, 0, %v5263
        %v5266 = vsub.s32 32, %v5265
        %v5267 = vshll.u32 %v5258, %v5265
        %v5268 = vshrl.u32 %v5250, %v5266
        %v5269 = vor.u32 %v5267, %v5268
        %v5270 = vsub.s32 4294967266, %v5265
        %v5271 = vadd.s32 %v5270, 127
        %v5272 = vshll.u32 %v5271, 23
        %v5273 = vor.u32 4788187, %v5272
        %v5274 = vand.u32 2147483647, %v5273
        %v5276 = vcvt.s32.f32 %v5269
        %v5277 = vmul.f32 %v5276, %v5274
        %v5278 = vxor.u32 %v5277, 2147483648
        %v5279 = vsel %vm5196, %v5278, %v5277
        %v5280 = vsub.s32 4, %v5256
        %v5281 = vsel %vm5196, %v5280, %v5256
        %v5282 = vsel %vm5195, %v3823, %v5279
        %v5283 = vsel %vm5195, 0, %v5281
        %v5284 = vcosq.f32.pop %v5282
        %v5285 = vsinq.f32.pop %v5282
        %vm5286 = vweird.f32 %v3823
        %v5287 = vadd.s32 %v5283, 3
        %v5288 = vand.u32 %v5287, 3
        %vm5289 = vcmp.lt.s32.totalorder %v5288, 2
        %vm5290 = vcmp.eq.s32.totalorder %v5288, 0
        %v5291 = vxor.u32 %v5285, 2147483648
        %v5292 = vsel %vm5290, %v5284, %v5291
        %vm5293 = vcmp.eq.s32.totalorder %v5288, 2
        %v5294 = vxor.u32 %v5284, 2147483648
        %v5295 = vsel %vm5293, %v5294, %v5285
        %v5296 = vsel %vm5289, %v5292, %v5295
        %v5297 = vsel %vm5286, nan, %v5296
        %v5298 = vand.u32 2147483647, %v3824
        %vm5299 = vcmp.le.f32.partialorder %v5298, 0.7853982
        %vm5300 = vcmp.lt.s32.totalorder %v3824, 0
        %v5301 = vand.u32 %v3824, 2139095040
        %v5302 = vshrl.u32 %v5301, 23
        %v5303 = vsub.s32 %v5302, 127
        %v5304 = vand.u32 2147483647, %v3824
        %v5305 = vand.u32 %v5304, 8388607
        %v5306 = vor.u32 %v5305, 8388608
        %v5307 = vsub.s32 0, %v5306
        %v5308 = vadd.s32 %v5303, 1
        %vm5309 = vcmp.gt.s32.totalorder %v5308, 0
        %v5310 = vsel %vm5309, %v5308, 0
        %v5311 = vshrl.u32 %v5310, 5
        %v5312 = vand.u32 %v5310, 31
        %v5313 = vsub.s32 32, %v5312
        %v5314 = vshrl.u32 683565275, %v5313
        %v5315 = vshll.u32 683565275, %v5312
        %v5316 = vshrl.u32 2475754826, %v5313
        %v5317 = vor.u32 %v5315, %v5316
        %v5318 = vshll.u32 2475754826, %v5312
        %v5319 = vshrl.u32 2131351028, %v5313
        %v5320 = vor.u32 %v5318, %v5319
        %v5321 = vshll.u32 2131351028, %v5312
        %v5322 = vshrl.u32 2102212464, %v5313
        %v5323 = vor.u32 %v5321, %v5322
        %v5324 = vshll.u32 2102212464, %v5312
        %v5325 = vshrl.u32 920167782, %v5313
        %v5326 = vor.u32 %v5324, %v5325
        %v5327 = vshll.u32 920167782, %v5312
        %v5328 = vshrl.u32 1326507024, %v5313
        %v5329 = vor.u32 %v5327, %v5328
        %vm5330 = vcmp.lt.s32.totalorder %v5311, 1
        %vm5331 = vcmp.lt.s32.totalorder %v5311, 2
        %vm5332 = vcmp.lt.s32.totalorder %v5311, 3
        %vm5333 = vcmp.lt.s32.totalorder %v5311, 4
        %v5334 = vsel %vm5330, %v5314, %v5317
        %v5335 = vsel %vm5333, %v5323, 2102212464
        %v5336 = vsel %vm5332, %v5320, %v5335
        %v5337 = vsel %vm5331, %v5334, %v5336
        %v5338 = vsel %vm5330, %v5317, %v5320
        %v5339 = vsel %vm5333, %v5326, 920167782
        %v5340 = vsel %vm5332, %v5323, %v5339
        %v5341 = vsel %vm5331, %v5338, %v5340
        %v5342 = vsel %vm5330, %v5320, %v5323
        %v5343 = vsel %vm5333, %v5329, 1326507024
        %v5344 = vsel %vm5332, %v5326, %v5343
        %v5345 = vsel %vm5331, %v5342, %v5344
        %v5346 = vshll.u32 %v5306, 8
        %v5347 = vmul.u32.u64.compose %v5346, %v5345
        %v5348 = vextract.low.u32 %v5347
        %v5349 = vextract.high.u32 %v5347
        %v5350 = vmul.u32.u64.compose %v5346, %v5341
        %v5351 = vextract.low.u32 %v5350
        %v5352 = vextract.high.u32 %v5350
        %v5353 = vmul.u32 %v5346, %v5337
        %v5354 = vadd.s32 %v5349, %v5351
        %vm5355 = vc.u32 %v5349, %v5351
        %v5356 = vadd.s32 %v5352, 1
        %v5357 = vsel %vm5355, %v5356, %v5352
        %v5358 = vadd.s32 %v5353, %v5357
        %v5359 = vadd.s32 %v5358, 536870912
        %v5360 = vshrl.u32 %v5359, 30
        %v5361 = vshll.u32 %v5360, 30
        %v5362 = vsub.s32 %v5358, %v5361
        %vm5363 = vcmp.lt.s32.totalorder %v5362, 0
        %v5364 = vsub.s32 0, %v5362
        %v5365 = vsel %vm5363, %v5364, %v5362
        %v5366 = vclz %v5365
        %v5367 = vsub.s32 %v5366, 2
        %vm5368 = vcmp.gt.s32.totalorder 0, %v5367
        %v5369 = vsel %vm5368, 0, %v5367
        %v5370 = vsub.s32 32, %v5369
        %v5371 = vshll.u32 %v5362, %v5369
        %v5372 = vshrl.u32 %v5354, %v5370
        %v5373 = vor.u32 %v5371, %v5372
        %v5374 = vsub.s32 4294967266, %v5369
        %v5375 = vadd.s32 %v5374, 127
        %v5376 = vshll.u32 %v5375, 23
        %v5377 = vor.u32 4788187, %v5376
        %v5378 = vand.u32 2147483647, %v5377
        %v5380 = vcvt.s32.f32 %v5373
        %v5381 = vmul.f32 %v5380, %v5378
        %v5382 = vxor.u32 %v5381, 2147483648
        %v5383 = vsel %vm5300, %v5382, %v5381
        %v5384 = vsub.s32 4, %v5360
        %v5385 = vsel %vm5300, %v5384, %v5360
        %v5386 = vsel %vm5299, %v3824, %v5383
        %v5387 = vsel %vm5299, 0, %v5385
        %v5388 = vcosq.f32.pop %v5386
        %v5389 = vsinq.f32.pop %v5386
        %vm5390 = vweird.f32 %v3824
        %v5391 = vadd.s32 %v5387, 3
        %v5392 = vand.u32 %v5391, 3
        %vm5393 = vcmp.lt.s32.totalorder %v5392, 2
        %vm5394 = vcmp.eq.s32.totalorder %v5392, 0
        %v5395 = vxor.u32 %v5389, 2147483648
        %v5396 = vsel %vm5394, %v5388, %v5395
        %vm5397 = vcmp.eq.s32.totalorder %v5392, 2
        %v5398 = vxor.u32 %v5388, 2147483648
        %v5399 = vsel %vm5397, %v5398, %v5389
        %v5400 = vsel %vm5393, %v5396, %v5399
        %v5401 = vsel %vm5390, nan, %v5400
        %v5402 = vand.u32 2147483647, %v3825
        %vm5403 = vcmp.le.f32.partialorder %v5402, 0.7853982
        %vm5404 = vcmp.lt.s32.totalorder %v3825, 0
        %v5405 = vand.u32 %v3825, 2139095040
        %v5406 = vshrl.u32 %v5405, 23
        %v5407 = vsub.s32 %v5406, 127
        %v5408 = vand.u32 2147483647, %v3825
        %v5409 = vand.u32 %v5408, 8388607
        %v5410 = vor.u32 %v5409, 8388608
        %v5411 = vsub.s32 0, %v5410
        %v5412 = vadd.s32 %v5407, 1
        %vm5413 = vcmp.gt.s32.totalorder %v5412, 0
        %v5414 = vsel %vm5413, %v5412, 0
        %v5415 = vshrl.u32 %v5414, 5
        %v5416 = vand.u32 %v5414, 31
        %v5417 = vsub.s32 32, %v5416
        %v5418 = vshrl.u32 683565275, %v5417
        %v5419 = vshll.u32 683565275, %v5416
        %v5420 = vshrl.u32 2475754826, %v5417
        %v5421 = vor.u32 %v5419, %v5420
        %v5422 = vshll.u32 2475754826, %v5416
        %v5423 = vshrl.u32 2131351028, %v5417
        %v5424 = vor.u32 %v5422, %v5423
        %v5425 = vshll.u32 2131351028, %v5416
        %v5426 = vshrl.u32 2102212464, %v5417
        %v5427 = vor.u32 %v5425, %v5426
        %v5428 = vshll.u32 2102212464, %v5416
        %v5429 = vshrl.u32 920167782, %v5417
        %v5430 = vor.u32 %v5428, %v5429
        %v5431 = vshll.u32 920167782, %v5416
        %v5432 = vshrl.u32 1326507024, %v5417
        %v5433 = vor.u32 %v5431, %v5432
        %vm5434 = vcmp.lt.s32.totalorder %v5415, 1
        %vm5435 = vcmp.lt.s32.totalorder %v5415, 2
        %vm5436 = vcmp.lt.s32.totalorder %v5415, 3
        %vm5437 = vcmp.lt.s32.totalorder %v5415, 4
        %v5438 = vsel %vm5434, %v5418, %v5421
        %v5439 = vsel %vm5437, %v5427, 2102212464
        %v5440 = vsel %vm5436, %v5424, %v5439
        %v5441 = vsel %vm5435, %v5438, %v5440
        %v5442 = vsel %vm5434, %v5421, %v5424
        %v5443 = vsel %vm5437, %v5430, 920167782
        %v5444 = vsel %vm5436, %v5427, %v5443
        %v5445 = vsel %vm5435, %v5442, %v5444
        %v5446 = vsel %vm5434, %v5424, %v5427
        %v5447 = vsel %vm5437, %v5433, 1326507024
        %v5448 = vsel %vm5436, %v5430, %v5447
        %v5449 = vsel %vm5435, %v5446, %v5448
        %v5450 = vshll.u32 %v5410, 8
        %v5451 = vmul.u32.u64.compose %v5450, %v5449
        %v5452 = vextract.low.u32 %v5451
        %v5453 = vextract.high.u32 %v5451
        %v5454 = vmul.u32.u64.compose %v5450, %v5445
        %v5455 = vextract.low.u32 %v5454
        %v5456 = vextract.high.u32 %v5454
        %v5457 = vmul.u32 %v5450, %v5441
        %v5458 = vadd.s32 %v5453, %v5455
        %vm5459 = vc.u32 %v5453, %v5455
        %v5460 = vadd.s32 %v5456, 1
        %v5461 = vsel %vm5459, %v5460, %v5456
        %v5462 = vadd.s32 %v5457, %v5461
        %v5463 = vadd.s32 %v5462, 536870912
        %v5464 = vshrl.u32 %v5463, 30
        %v5465 = vshll.u32 %v5464, 30
        %v5466 = vsub.s32 %v5462, %v5465
        %vm5467 = vcmp.lt.s32.totalorder %v5466, 0
        %v5468 = vsub.s32 0, %v5466
        %v5469 = vsel %vm5467, %v5468, %v5466
        %v5470 = vclz %v5469
        %v5471 = vsub.s32 %v5470, 2
        %vm5472 = vcmp.gt.s32.totalorder 0, %v5471
        %v5473 = vsel %vm5472, 0, %v5471
        %v5474 = vsub.s32 32, %v5473
        %v5475 = vshll.u32 %v5466, %v5473
        %v5476 = vshrl.u32 %v5458, %v5474
        %v5477 = vor.u32 %v5475, %v5476
        %v5478 = vsub.s32 4294967266, %v5473
        %v5479 = vadd.s32 %v5478, 127
        %v5480 = vshll.u32 %v5479, 23
        %v5481 = vor.u32 4788187, %v5480
        %v5482 = vand.u32 2147483647, %v5481
        %v5484 = vcvt.s32.f32 %v5477
        %v5485 = vmul.f32 %v5484, %v5482
        %v5486 = vxor.u32 %v5485, 2147483648
        %v5487 = vsel %vm5404, %v5486, %v5485
        %v5488 = vsub.s32 4, %v5464
        %v5489 = vsel %vm5404, %v5488, %v5464
        %v5490 = vsel %vm5403, %v3825, %v5487
        %v5491 = vsel %vm5403, 0, %v5489
        %v5492 = vcosq.f32.pop %v5490
        %v5493 = vsinq.f32.pop %v5490
        %vm5494 = vweird.f32 %v3825
        %v5495 = vadd.s32 %v5491, 3
        %v5496 = vand.u32 %v5495, 3
        %vm5497 = vcmp.lt.s32.totalorder %v5496, 2
        %vm5498 = vcmp.eq.s32.totalorder %v5496, 0
        %v5499 = vxor.u32 %v5493, 2147483648
        %v5500 = vsel %vm5498, %v5492, %v5499
        %vm5501 = vcmp.eq.s32.totalorder %v5496, 2
        %v5502 = vxor.u32 %v5492, 2147483648
        %v5503 = vsel %vm5501, %v5502, %v5493
        %v5504 = vsel %vm5497, %v5500, %v5503
        %v5505 = vsel %vm5494, nan, %v5504
        %v5506 = vand.u32 2147483647, %v3826
        %vm5507 = vcmp.le.f32.partialorder %v5506, 0.7853982
        %vm5508 = vcmp.lt.s32.totalorder %v3826, 0
        %v5509 = vand.u32 %v3826, 2139095040
        %v5510 = vshrl.u32 %v5509, 23
        %v5511 = vsub.s32 %v5510, 127
        %v5512 = vand.u32 2147483647, %v3826
        %v5513 = vand.u32 %v5512, 8388607
        %v5514 = vor.u32 %v5513, 8388608
        %v5515 = vsub.s32 0, %v5514
        %v5516 = vadd.s32 %v5511, 1
        %vm5517 = vcmp.gt.s32.totalorder %v5516, 0
        %v5518 = vsel %vm5517, %v5516, 0
        %v5519 = vshrl.u32 %v5518, 5
        %v5520 = vand.u32 %v5518, 31
        %v5521 = vsub.s32 32, %v5520
        %v5522 = vshrl.u32 683565275, %v5521
        %v5523 = vshll.u32 683565275, %v5520
        %v5524 = vshrl.u32 2475754826, %v5521
        %v5525 = vor.u32 %v5523, %v5524
        %v5526 = vshll.u32 2475754826, %v5520
        %v5527 = vshrl.u32 2131351028, %v5521
        %v5528 = vor.u32 %v5526, %v5527
        %v5529 = vshll.u32 2131351028, %v5520
        %v5530 = vshrl.u32 2102212464, %v5521
        %v5531 = vor.u32 %v5529, %v5530
        %v5532 = vshll.u32 2102212464, %v5520
        %v5533 = vshrl.u32 920167782, %v5521
        %v5534 = vor.u32 %v5532, %v5533
        %v5535 = vshll.u32 920167782, %v5520
        %v5536 = vshrl.u32 1326507024, %v5521
        %v5537 = vor.u32 %v5535, %v5536
        %vm5538 = vcmp.lt.s32.totalorder %v5519, 1
        %vm5539 = vcmp.lt.s32.totalorder %v5519, 2
        %vm5540 = vcmp.lt.s32.totalorder %v5519, 3
        %vm5541 = vcmp.lt.s32.totalorder %v5519, 4
        %v5542 = vsel %vm5538, %v5522, %v5525
        %v5543 = vsel %vm5541, %v5531, 2102212464
        %v5544 = vsel %vm5540, %v5528, %v5543
        %v5545 = vsel %vm5539, %v5542, %v5544
        %v5546 = vsel %vm5538, %v5525, %v5528
        %v5547 = vsel %vm5541, %v5534, 920167782
        %v5548 = vsel %vm5540, %v5531, %v5547
        %v5549 = vsel %vm5539, %v5546, %v5548
        %v5550 = vsel %vm5538, %v5528, %v5531
        %v5551 = vsel %vm5541, %v5537, 1326507024
        %v5552 = vsel %vm5540, %v5534, %v5551
        %v5553 = vsel %vm5539, %v5550, %v5552
        %v5554 = vshll.u32 %v5514, 8
        %v5555 = vmul.u32.u64.compose %v5554, %v5553
        %v5556 = vextract.low.u32 %v5555
        %v5557 = vextract.high.u32 %v5555
        %v5558 = vmul.u32.u64.compose %v5554, %v5549
        %v5559 = vextract.low.u32 %v5558
        %v5560 = vextract.high.u32 %v5558
        %v5561 = vmul.u32 %v5554, %v5545
        %v5562 = vadd.s32 %v5557, %v5559
        %vm5563 = vc.u32 %v5557, %v5559
        %v5564 = vadd.s32 %v5560, 1
        %v5565 = vsel %vm5563, %v5564, %v5560
        %v5566 = vadd.s32 %v5561, %v5565
        %v5567 = vadd.s32 %v5566, 536870912
        %v5568 = vshrl.u32 %v5567, 30
        %v5569 = vshll.u32 %v5568, 30
        %v5570 = vsub.s32 %v5566, %v5569
        %vm5571 = vcmp.lt.s32.totalorder %v5570, 0
        %v5572 = vsub.s32 0, %v5570
        %v5573 = vsel %vm5571, %v5572, %v5570
        %v5574 = vclz %v5573
        %v5575 = vsub.s32 %v5574, 2
        %vm5576 = vcmp.gt.s32.totalorder 0, %v5575
        %v5577 = vsel %vm5576, 0, %v5575
        %v5578 = vsub.s32 32, %v5577
        %v5579 = vshll.u32 %v5570, %v5577
        %v5580 = vshrl.u32 %v5562, %v5578
        %v5581 = vor.u32 %v5579, %v5580
        %v5582 = vsub.s32 4294967266, %v5577
        %v5583 = vadd.s32 %v5582, 127
        %v5584 = vshll.u32 %v5583, 23
        %v5585 = vor.u32 4788187, %v5584
        %v5586 = vand.u32 2147483647, %v5585
        %v5588 = vcvt.s32.f32 %v5581
        %v5589 = vmul.f32 %v5588, %v5586
        %v5590 = vxor.u32 %v5589, 2147483648
        %v5591 = vsel %vm5508, %v5590, %v5589
        %v5592 = vsub.s32 4, %v5568
        %v5593 = vsel %vm5508, %v5592, %v5568
        %v5594 = vsel %vm5507, %v3826, %v5591
        %v5595 = vsel %vm5507, 0, %v5593
        %v5596 = vcosq.f32.pop %v5594
        %v5597 = vsinq.f32.pop %v5594
        %vm5598 = vweird.f32 %v3826
        %v5599 = vadd.s32 %v5595, 3
        %v5600 = vand.u32 %v5599, 3
        %vm5601 = vcmp.lt.s32.totalorder %v5600, 2
        %vm5602 = vcmp.eq.s32.totalorder %v5600, 0
        %v5603 = vxor.u32 %v5597, 2147483648
        %v5604 = vsel %vm5602, %v5596, %v5603
        %vm5605 = vcmp.eq.s32.totalorder %v5600, 2
        %v5606 = vxor.u32 %v5596, 2147483648
        %v5607 = vsel %vm5605, %v5606, %v5597
        %v5608 = vsel %vm5601, %v5604, %v5607
        %v5609 = vsel %vm5598, nan, %v5608
        %v5610 = vand.u32 2147483647, %v3827
        %vm5611 = vcmp.le.f32.partialorder %v5610, 0.7853982
        %vm5612 = vcmp.lt.s32.totalorder %v3827, 0
        %v5613 = vand.u32 %v3827, 2139095040
        %v5614 = vshrl.u32 %v5613, 23
        %v5615 = vsub.s32 %v5614, 127
        %v5616 = vand.u32 2147483647, %v3827
        %v5617 = vand.u32 %v5616, 8388607
        %v5618 = vor.u32 %v5617, 8388608
        %v5619 = vsub.s32 0, %v5618
        %v5620 = vadd.s32 %v5615, 1
        %vm5621 = vcmp.gt.s32.totalorder %v5620, 0
        %v5622 = vsel %vm5621, %v5620, 0
        %v5623 = vshrl.u32 %v5622, 5
        %v5624 = vand.u32 %v5622, 31
        %v5625 = vsub.s32 32, %v5624
        %v5626 = vshrl.u32 683565275, %v5625
        %v5627 = vshll.u32 683565275, %v5624
        %v5628 = vshrl.u32 2475754826, %v5625
        %v5629 = vor.u32 %v5627, %v5628
        %v5630 = vshll.u32 2475754826, %v5624
        %v5631 = vshrl.u32 2131351028, %v5625
        %v5632 = vor.u32 %v5630, %v5631
        %v5633 = vshll.u32 2131351028, %v5624
        %v5634 = vshrl.u32 2102212464, %v5625
        %v5635 = vor.u32 %v5633, %v5634
        %v5636 = vshll.u32 2102212464, %v5624
        %v5637 = vshrl.u32 920167782, %v5625
        %v5638 = vor.u32 %v5636, %v5637
        %v5639 = vshll.u32 920167782, %v5624
        %v5640 = vshrl.u32 1326507024, %v5625
        %v5641 = vor.u32 %v5639, %v5640
        %vm5642 = vcmp.lt.s32.totalorder %v5623, 1
        %vm5643 = vcmp.lt.s32.totalorder %v5623, 2
        %vm5644 = vcmp.lt.s32.totalorder %v5623, 3
        %vm5645 = vcmp.lt.s32.totalorder %v5623, 4
        %v5646 = vsel %vm5642, %v5626, %v5629
        %v5647 = vsel %vm5645, %v5635, 2102212464
        %v5648 = vsel %vm5644, %v5632, %v5647
        %v5649 = vsel %vm5643, %v5646, %v5648
        %v5650 = vsel %vm5642, %v5629, %v5632
        %v5651 = vsel %vm5645, %v5638, 920167782
        %v5652 = vsel %vm5644, %v5635, %v5651
        %v5653 = vsel %vm5643, %v5650, %v5652
        %v5654 = vsel %vm5642, %v5632, %v5635
        %v5655 = vsel %vm5645, %v5641, 1326507024
        %v5656 = vsel %vm5644, %v5638, %v5655
        %v5657 = vsel %vm5643, %v5654, %v5656
        %v5658 = vshll.u32 %v5618, 8
        %v5659 = vmul.u32.u64.compose %v5658, %v5657
        %v5660 = vextract.low.u32 %v5659
        %v5661 = vextract.high.u32 %v5659
        %v5662 = vmul.u32.u64.compose %v5658, %v5653
        %v5663 = vextract.low.u32 %v5662
        %v5664 = vextract.high.u32 %v5662
        %v5665 = vmul.u32 %v5658, %v5649
        %v5666 = vadd.s32 %v5661, %v5663
        %vm5667 = vc.u32 %v5661, %v5663
        %v5668 = vadd.s32 %v5664, 1
        %v5669 = vsel %vm5667, %v5668, %v5664
        %v5670 = vadd.s32 %v5665, %v5669
        %v5671 = vadd.s32 %v5670, 536870912
        %v5672 = vshrl.u32 %v5671, 30
        %v5673 = vshll.u32 %v5672, 30
        %v5674 = vsub.s32 %v5670, %v5673
        %vm5675 = vcmp.lt.s32.totalorder %v5674, 0
        %v5676 = vsub.s32 0, %v5674
        %v5677 = vsel %vm5675, %v5676, %v5674
        %v5678 = vclz %v5677
        %v5679 = vsub.s32 %v5678, 2
        %vm5680 = vcmp.gt.s32.totalorder 0, %v5679
        %v5681 = vsel %vm5680, 0, %v5679
        %v5682 = vsub.s32 32, %v5681
        %v5683 = vshll.u32 %v5674, %v5681
        %v5684 = vshrl.u32 %v5666, %v5682
        %v5685 = vor.u32 %v5683, %v5684
        %v5686 = vsub.s32 4294967266, %v5681
        %v5687 = vadd.s32 %v5686, 127
        %v5688 = vshll.u32 %v5687, 23
        %v5689 = vor.u32 4788187, %v5688
        %v5690 = vand.u32 2147483647, %v5689
        %v5692 = vcvt.s32.f32 %v5685
        %v5693 = vmul.f32 %v5692, %v5690
        %v5694 = vxor.u32 %v5693, 2147483648
        %v5695 = vsel %vm5612, %v5694, %v5693
        %v5696 = vsub.s32 4, %v5672
        %v5697 = vsel %vm5612, %v5696, %v5672
        %v5698 = vsel %vm5611, %v3827, %v5695
        %v5699 = vsel %vm5611, 0, %v5697
        %v5700 = vcosq.f32.pop %v5698
        %v5701 = vsinq.f32.pop %v5698
        %vm5702 = vweird.f32 %v3827
        %v5703 = vadd.s32 %v5699, 3
        %v5704 = vand.u32 %v5703, 3
        %vm5705 = vcmp.lt.s32.totalorder %v5704, 2
        %vm5706 = vcmp.eq.s32.totalorder %v5704, 0
        %v5707 = vxor.u32 %v5701, 2147483648
        %v5708 = vsel %vm5706, %v5700, %v5707
        %vm5709 = vcmp.eq.s32.totalorder %v5704, 2
        %v5710 = vxor.u32 %v5700, 2147483648
        %v5711 = vsel %vm5709, %v5710, %v5701
        %v5712 = vsel %vm5705, %v5708, %v5711
        %v5713 = vsel %vm5702, nan, %v5712
        %v5714 = vand.u32 2147483647, %v3828
        %vm5715 = vcmp.le.f32.partialorder %v5714, 0.7853982
        %vm5716 = vcmp.lt.s32.totalorder %v3828, 0
        %v5717 = vand.u32 %v3828, 2139095040
        %v5718 = vshrl.u32 %v5717, 23
        %v5719 = vsub.s32 %v5718, 127
        %v5720 = vand.u32 2147483647, %v3828
        %v5721 = vand.u32 %v5720, 8388607
        %v5722 = vor.u32 %v5721, 8388608
        %v5723 = vsub.s32 0, %v5722
        %v5724 = vadd.s32 %v5719, 1
        %vm5725 = vcmp.gt.s32.totalorder %v5724, 0
        %v5726 = vsel %vm5725, %v5724, 0
        %v5727 = vshrl.u32 %v5726, 5
        %v5728 = vand.u32 %v5726, 31
        %v5729 = vsub.s32 32, %v5728
        %v5730 = vshrl.u32 683565275, %v5729
        %v5731 = vshll.u32 683565275, %v5728
        %v5732 = vshrl.u32 2475754826, %v5729
        %v5733 = vor.u32 %v5731, %v5732
        %v5734 = vshll.u32 2475754826, %v5728
        %v5735 = vshrl.u32 2131351028, %v5729
        %v5736 = vor.u32 %v5734, %v5735
        %v5737 = vshll.u32 2131351028, %v5728
        %v5738 = vshrl.u32 2102212464, %v5729
        %v5739 = vor.u32 %v5737, %v5738
        %v5740 = vshll.u32 2102212464, %v5728
        %v5741 = vshrl.u32 920167782, %v5729
        %v5742 = vor.u32 %v5740, %v5741
        %v5743 = vshll.u32 920167782, %v5728
        %v5744 = vshrl.u32 1326507024, %v5729
        %v5745 = vor.u32 %v5743, %v5744
        %vm5746 = vcmp.lt.s32.totalorder %v5727, 1
        %vm5747 = vcmp.lt.s32.totalorder %v5727, 2
        %vm5748 = vcmp.lt.s32.totalorder %v5727, 3
        %vm5749 = vcmp.lt.s32.totalorder %v5727, 4
        %v5750 = vsel %vm5746, %v5730, %v5733
        %v5751 = vsel %vm5749, %v5739, 2102212464
        %v5752 = vsel %vm5748, %v5736, %v5751
        %v5753 = vsel %vm5747, %v5750, %v5752
        %v5754 = vsel %vm5746, %v5733, %v5736
        %v5755 = vsel %vm5749, %v5742, 920167782
        %v5756 = vsel %vm5748, %v5739, %v5755
        %v5757 = vsel %vm5747, %v5754, %v5756
        %v5758 = vsel %vm5746, %v5736, %v5739
        %v5759 = vsel %vm5749, %v5745, 1326507024
        %v5760 = vsel %vm5748, %v5742, %v5759
        %v5761 = vsel %vm5747, %v5758, %v5760
        %v5762 = vshll.u32 %v5722, 8
        %v5763 = vmul.u32.u64.compose %v5762, %v5761
        %v5764 = vextract.low.u32 %v5763
        %v5765 = vextract.high.u32 %v5763
        %v5766 = vmul.u32.u64.compose %v5762, %v5757
        %v5767 = vextract.low.u32 %v5766
        %v5768 = vextract.high.u32 %v5766
        %v5769 = vmul.u32 %v5762, %v5753
        %v5770 = vadd.s32 %v5765, %v5767
        %vm5771 = vc.u32 %v5765, %v5767
        %v5772 = vadd.s32 %v5768, 1
        %v5773 = vsel %vm5771, %v5772, %v5768
        %v5774 = vadd.s32 %v5769, %v5773
        %v5775 = vadd.s32 %v5774, 536870912
        %v5776 = vshrl.u32 %v5775, 30
        %v5777 = vshll.u32 %v5776, 30
        %v5778 = vsub.s32 %v5774, %v5777
        %vm5779 = vcmp.lt.s32.totalorder %v5778, 0
        %v5780 = vsub.s32 0, %v5778
        %v5781 = vsel %vm5779, %v5780, %v5778
        %v5782 = vclz %v5781
        %v5783 = vsub.s32 %v5782, 2
        %vm5784 = vcmp.gt.s32.totalorder 0, %v5783
        %v5785 = vsel %vm5784, 0, %v5783
        %v5786 = vsub.s32 32, %v5785
        %v5787 = vshll.u32 %v5778, %v5785
        %v5788 = vshrl.u32 %v5770, %v5786
        %v5789 = vor.u32 %v5787, %v5788
        %v5790 = vsub.s32 4294967266, %v5785
        %v5791 = vadd.s32 %v5790, 127
        %v5792 = vshll.u32 %v5791, 23
        %v5793 = vor.u32 4788187, %v5792
        %v5794 = vand.u32 2147483647, %v5793
        %v5796 = vcvt.s32.f32 %v5789
        %v5797 = vmul.f32 %v5796, %v5794
        %v5798 = vxor.u32 %v5797, 2147483648
        %v5799 = vsel %vm5716, %v5798, %v5797
        %v5800 = vsub.s32 4, %v5776
        %v5801 = vsel %vm5716, %v5800, %v5776
        %v5802 = vsel %vm5715, %v3828, %v5799
        %v5803 = vsel %vm5715, 0, %v5801
        %v5804 = vcosq.f32.pop %v5802
        %v5805 = vsinq.f32.pop %v5802
        %vm5806 = vweird.f32 %v3828
        %v5807 = vadd.s32 %v5803, 3
        %v5808 = vand.u32 %v5807, 3
        %vm5809 = vcmp.lt.s32.totalorder %v5808, 2
        %vm5810 = vcmp.eq.s32.totalorder %v5808, 0
        %v5811 = vxor.u32 %v5805, 2147483648
        %v5812 = vsel %vm5810, %v5804, %v5811
        %vm5813 = vcmp.eq.s32.totalorder %v5808, 2
        %v5814 = vxor.u32 %v5804, 2147483648
        %v5815 = vsel %vm5813, %v5814, %v5805
        %v5816 = vsel %vm5809, %v5812, %v5815
        %v5817 = vsel %vm5806, nan, %v5816
        %v5818 = vand.u32 2147483647, %v3829
        %vm5819 = vcmp.le.f32.partialorder %v5818, 0.7853982
        %vm5820 = vcmp.lt.s32.totalorder %v3829, 0
        %v5821 = vand.u32 %v3829, 2139095040
        %v5822 = vshrl.u32 %v5821, 23
        %v5823 = vsub.s32 %v5822, 127
        %v5824 = vand.u32 2147483647, %v3829
        %v5825 = vand.u32 %v5824, 8388607
        %v5826 = vor.u32 %v5825, 8388608
        %v5827 = vsub.s32 0, %v5826
        %v5828 = vadd.s32 %v5823, 1
        %vm5829 = vcmp.gt.s32.totalorder %v5828, 0
        %v5830 = vsel %vm5829, %v5828, 0
        %v5831 = vshrl.u32 %v5830, 5
        %v5832 = vand.u32 %v5830, 31
        %v5833 = vsub.s32 32, %v5832
        %v5834 = vshrl.u32 683565275, %v5833
        %v5835 = vshll.u32 683565275, %v5832
        %v5836 = vshrl.u32 2475754826, %v5833
        %v5837 = vor.u32 %v5835, %v5836
        %v5838 = vshll.u32 2475754826, %v5832
        %v5839 = vshrl.u32 2131351028, %v5833
        %v5840 = vor.u32 %v5838, %v5839
        %v5841 = vshll.u32 2131351028, %v5832
        %v5842 = vshrl.u32 2102212464, %v5833
        %v5843 = vor.u32 %v5841, %v5842
        %v5844 = vshll.u32 2102212464, %v5832
        %v5845 = vshrl.u32 920167782, %v5833
        %v5846 = vor.u32 %v5844, %v5845
        %v5847 = vshll.u32 920167782, %v5832
        %v5848 = vshrl.u32 1326507024, %v5833
        %v5849 = vor.u32 %v5847, %v5848
        %vm5850 = vcmp.lt.s32.totalorder %v5831, 1
        %vm5851 = vcmp.lt.s32.totalorder %v5831, 2
        %vm5852 = vcmp.lt.s32.totalorder %v5831, 3
        %vm5853 = vcmp.lt.s32.totalorder %v5831, 4
        %v5854 = vsel %vm5850, %v5834, %v5837
        %v5855 = vsel %vm5853, %v5843, 2102212464
        %v5856 = vsel %vm5852, %v5840, %v5855
        %v5857 = vsel %vm5851, %v5854, %v5856
        %v5858 = vsel %vm5850, %v5837, %v5840
        %v5859 = vsel %vm5853, %v5846, 920167782
        %v5860 = vsel %vm5852, %v5843, %v5859
        %v5861 = vsel %vm5851, %v5858, %v5860
        %v5862 = vsel %vm5850, %v5840, %v5843
        %v5863 = vsel %vm5853, %v5849, 1326507024
        %v5864 = vsel %vm5852, %v5846, %v5863
        %v5865 = vsel %vm5851, %v5862, %v5864
        %v5866 = vshll.u32 %v5826, 8
        %v5867 = vmul.u32.u64.compose %v5866, %v5865
        %v5868 = vextract.low.u32 %v5867
        %v5869 = vextract.high.u32 %v5867
        %v5870 = vmul.u32.u64.compose %v5866, %v5861
        %v5871 = vextract.low.u32 %v5870
        %v5872 = vextract.high.u32 %v5870
        %v5873 = vmul.u32 %v5866, %v5857
        %v5874 = vadd.s32 %v5869, %v5871
        %vm5875 = vc.u32 %v5869, %v5871
        %v5876 = vadd.s32 %v5872, 1
        %v5877 = vsel %vm5875, %v5876, %v5872
        %v5878 = vadd.s32 %v5873, %v5877
        %v5879 = vadd.s32 %v5878, 536870912
        %v5880 = vshrl.u32 %v5879, 30
        %v5881 = vshll.u32 %v5880, 30
        %v5882 = vsub.s32 %v5878, %v5881
        %vm5883 = vcmp.lt.s32.totalorder %v5882, 0
        %v5884 = vsub.s32 0, %v5882
        %v5885 = vsel %vm5883, %v5884, %v5882
        %v5886 = vclz %v5885
        %v5887 = vsub.s32 %v5886, 2
        %vm5888 = vcmp.gt.s32.totalorder 0, %v5887
        %v5889 = vsel %vm5888, 0, %v5887
        %v5890 = vsub.s32 32, %v5889
        %v5891 = vshll.u32 %v5882, %v5889
        %v5892 = vshrl.u32 %v5874, %v5890
        %v5893 = vor.u32 %v5891, %v5892
        %v5894 = vsub.s32 4294967266, %v5889
        %v5895 = vadd.s32 %v5894, 127
        %v5896 = vshll.u32 %v5895, 23
        %v5897 = vor.u32 4788187, %v5896
        %v5898 = vand.u32 2147483647, %v5897
        %v5900 = vcvt.s32.f32 %v5893
        %v5901 = vmul.f32 %v5900, %v5898
        %v5902 = vxor.u32 %v5901, 2147483648
        %v5903 = vsel %vm5820, %v5902, %v5901
        %v5904 = vsub.s32 4, %v5880
        %v5905 = vsel %vm5820, %v5904, %v5880
        %v5906 = vsel %vm5819, %v3829, %v5903
        %v5907 = vsel %vm5819, 0, %v5905
        %v5908 = vcosq.f32.pop %v5906
        %v5909 = vsinq.f32.pop %v5906
        %vm5910 = vweird.f32 %v3829
        %v5911 = vadd.s32 %v5907, 3
        %v5912 = vand.u32 %v5911, 3
        %vm5913 = vcmp.lt.s32.totalorder %v5912, 2
        %vm5914 = vcmp.eq.s32.totalorder %v5912, 0
        %v5915 = vxor.u32 %v5909, 2147483648
        %v5916 = vsel %vm5914, %v5908, %v5915
        %vm5917 = vcmp.eq.s32.totalorder %v5912, 2
        %v5918 = vxor.u32 %v5908, 2147483648
        %v5919 = vsel %vm5917, %v5918, %v5909
        %v5920 = vsel %vm5913, %v5916, %v5919
        %v5921 = vsel %vm5910, nan, %v5920
        %v5922 = vand.u32 2147483647, %v3830
        %vm5923 = vcmp.le.f32.partialorder %v5922, 0.7853982
        %vm5924 = vcmp.lt.s32.totalorder %v3830, 0
        %v5925 = vand.u32 %v3830, 2139095040
        %v5926 = vshrl.u32 %v5925, 23
        %v5927 = vsub.s32 %v5926, 127
        %v5928 = vand.u32 2147483647, %v3830
        %v5929 = vand.u32 %v5928, 8388607
        %v5930 = vor.u32 %v5929, 8388608
        %v5931 = vsub.s32 0, %v5930
        %v5932 = vadd.s32 %v5927, 1
        %vm5933 = vcmp.gt.s32.totalorder %v5932, 0
        %v5934 = vsel %vm5933, %v5932, 0
        %v5935 = vshrl.u32 %v5934, 5
        %v5936 = vand.u32 %v5934, 31
        %v5937 = vsub.s32 32, %v5936
        %v5938 = vshrl.u32 683565275, %v5937
        %v5939 = vshll.u32 683565275, %v5936
        %v5940 = vshrl.u32 2475754826, %v5937
        %v5941 = vor.u32 %v5939, %v5940
        %v5942 = vshll.u32 2475754826, %v5936
        %v5943 = vshrl.u32 2131351028, %v5937
        %v5944 = vor.u32 %v5942, %v5943
        %v5945 = vshll.u32 2131351028, %v5936
        %v5946 = vshrl.u32 2102212464, %v5937
        %v5947 = vor.u32 %v5945, %v5946
        %v5948 = vshll.u32 2102212464, %v5936
        %v5949 = vshrl.u32 920167782, %v5937
        %v5950 = vor.u32 %v5948, %v5949
        %v5951 = vshll.u32 920167782, %v5936
        %v5952 = vshrl.u32 1326507024, %v5937
        %v5953 = vor.u32 %v5951, %v5952
        %vm5954 = vcmp.lt.s32.totalorder %v5935, 1
        %vm5955 = vcmp.lt.s32.totalorder %v5935, 2
        %vm5956 = vcmp.lt.s32.totalorder %v5935, 3
        %vm5957 = vcmp.lt.s32.totalorder %v5935, 4
        %v5958 = vsel %vm5954, %v5938, %v5941
        %v5959 = vsel %vm5957, %v5947, 2102212464
        %v5960 = vsel %vm5956, %v5944, %v5959
        %v5961 = vsel %vm5955, %v5958, %v5960
        %v5962 = vsel %vm5954, %v5941, %v5944
        %v5963 = vsel %vm5957, %v5950, 920167782
        %v5964 = vsel %vm5956, %v5947, %v5963
        %v5965 = vsel %vm5955, %v5962, %v5964
        %v5966 = vsel %vm5954, %v5944, %v5947
        %v5967 = vsel %vm5957, %v5953, 1326507024
        %v5968 = vsel %vm5956, %v5950, %v5967
        %v5969 = vsel %vm5955, %v5966, %v5968
        %v5970 = vshll.u32 %v5930, 8
        %v5971 = vmul.u32.u64.compose %v5970, %v5969
        %v5972 = vextract.low.u32 %v5971
        %v5973 = vextract.high.u32 %v5971
        %v5974 = vmul.u32.u64.compose %v5970, %v5965
        %v5975 = vextract.low.u32 %v5974
        %v5976 = vextract.high.u32 %v5974
        %v5977 = vmul.u32 %v5970, %v5961
        %v5978 = vadd.s32 %v5973, %v5975
        %vm5979 = vc.u32 %v5973, %v5975
        %v5980 = vadd.s32 %v5976, 1
        %v5981 = vsel %vm5979, %v5980, %v5976
        %v5982 = vadd.s32 %v5977, %v5981
        %v5983 = vadd.s32 %v5982, 536870912
        %v5984 = vshrl.u32 %v5983, 30
        %v5985 = vshll.u32 %v5984, 30
        %v5986 = vsub.s32 %v5982, %v5985
        %vm5987 = vcmp.lt.s32.totalorder %v5986, 0
        %v5988 = vsub.s32 0, %v5986
        %v5989 = vsel %vm5987, %v5988, %v5986
        %v5990 = vclz %v5989
        %v5991 = vsub.s32 %v5990, 2
        %vm5992 = vcmp.gt.s32.totalorder 0, %v5991
        %v5993 = vsel %vm5992, 0, %v5991
        %v5994 = vsub.s32 32, %v5993
        %v5995 = vshll.u32 %v5986, %v5993
        %v5996 = vshrl.u32 %v5978, %v5994
        %v5997 = vor.u32 %v5995, %v5996
        %v5998 = vsub.s32 4294967266, %v5993
        %v5999 = vadd.s32 %v5998, 127
        %v6000 = vshll.u32 %v5999, 23
        %v6001 = vor.u32 4788187, %v6000
        %v6002 = vand.u32 2147483647, %v6001
        %v6004 = vcvt.s32.f32 %v5997
        %v6005 = vmul.f32 %v6004, %v6002
        %v6006 = vxor.u32 %v6005, 2147483648
        %v6007 = vsel %vm5924, %v6006, %v6005
        %v6008 = vsub.s32 4, %v5984
        %v6009 = vsel %vm5924, %v6008, %v5984
        %v6010 = vsel %vm5923, %v3830, %v6007
        %v6011 = vsel %vm5923, 0, %v6009
        %v6012 = vcosq.f32.pop %v6010
        %v6013 = vsinq.f32.pop %v6010
        %vm6014 = vweird.f32 %v3830
        %v6015 = vadd.s32 %v6011, 3
        %v6016 = vand.u32 %v6015, 3
        %vm6017 = vcmp.lt.s32.totalorder %v6016, 2
        %vm6018 = vcmp.eq.s32.totalorder %v6016, 0
        %v6019 = vxor.u32 %v6013, 2147483648
        %v6020 = vsel %vm6018, %v6012, %v6019
        %vm6021 = vcmp.eq.s32.totalorder %v6016, 2
        %v6022 = vxor.u32 %v6012, 2147483648
        %v6023 = vsel %vm6021, %v6022, %v6013
        %v6024 = vsel %vm6017, %v6020, %v6023
        %v6025 = vsel %vm6014, nan, %v6024
        %v6026 = vand.u32 2147483647, %v3831
        %vm6027 = vcmp.le.f32.partialorder %v6026, 0.7853982
        %vm6028 = vcmp.lt.s32.totalorder %v3831, 0
        %v6029 = vand.u32 %v3831, 2139095040
        %v6030 = vshrl.u32 %v6029, 23
        %v6031 = vsub.s32 %v6030, 127
        %v6032 = vand.u32 2147483647, %v3831
        %v6033 = vand.u32 %v6032, 8388607
        %v6034 = vor.u32 %v6033, 8388608
        %v6035 = vsub.s32 0, %v6034
        %v6036 = vadd.s32 %v6031, 1
        %vm6037 = vcmp.gt.s32.totalorder %v6036, 0
        %v6038 = vsel %vm6037, %v6036, 0
        %v6039 = vshrl.u32 %v6038, 5
        %v6040 = vand.u32 %v6038, 31
        %v6041 = vsub.s32 32, %v6040
        %v6042 = vshrl.u32 683565275, %v6041
        %v6043 = vshll.u32 683565275, %v6040
        %v6044 = vshrl.u32 2475754826, %v6041
        %v6045 = vor.u32 %v6043, %v6044
        %v6046 = vshll.u32 2475754826, %v6040
        %v6047 = vshrl.u32 2131351028, %v6041
        %v6048 = vor.u32 %v6046, %v6047
        %v6049 = vshll.u32 2131351028, %v6040
        %v6050 = vshrl.u32 2102212464, %v6041
        %v6051 = vor.u32 %v6049, %v6050
        %v6052 = vshll.u32 2102212464, %v6040
        %v6053 = vshrl.u32 920167782, %v6041
        %v6054 = vor.u32 %v6052, %v6053
        %v6055 = vshll.u32 920167782, %v6040
        %v6056 = vshrl.u32 1326507024, %v6041
        %v6057 = vor.u32 %v6055, %v6056
        %vm6058 = vcmp.lt.s32.totalorder %v6039, 1
        %vm6059 = vcmp.lt.s32.totalorder %v6039, 2
        %vm6060 = vcmp.lt.s32.totalorder %v6039, 3
        %vm6061 = vcmp.lt.s32.totalorder %v6039, 4
        %v6062 = vsel %vm6058, %v6042, %v6045
        %v6063 = vsel %vm6061, %v6051, 2102212464
        %v6064 = vsel %vm6060, %v6048, %v6063
        %v6065 = vsel %vm6059, %v6062, %v6064
        %v6066 = vsel %vm6058, %v6045, %v6048
        %v6067 = vsel %vm6061, %v6054, 920167782
        %v6068 = vsel %vm6060, %v6051, %v6067
        %v6069 = vsel %vm6059, %v6066, %v6068
        %v6070 = vsel %vm6058, %v6048, %v6051
        %v6071 = vsel %vm6061, %v6057, 1326507024
        %v6072 = vsel %vm6060, %v6054, %v6071
        %v6073 = vsel %vm6059, %v6070, %v6072
        %v6074 = vshll.u32 %v6034, 8
        %v6075 = vmul.u32.u64.compose %v6074, %v6073
        %v6076 = vextract.low.u32 %v6075
        %v6077 = vextract.high.u32 %v6075
        %v6078 = vmul.u32.u64.compose %v6074, %v6069
        %v6079 = vextract.low.u32 %v6078
        %v6080 = vextract.high.u32 %v6078
        %v6081 = vmul.u32 %v6074, %v6065
        %v6082 = vadd.s32 %v6077, %v6079
        %vm6083 = vc.u32 %v6077, %v6079
        %v6084 = vadd.s32 %v6080, 1
        %v6085 = vsel %vm6083, %v6084, %v6080
        %v6086 = vadd.s32 %v6081, %v6085
        %v6087 = vadd.s32 %v6086, 536870912
        %v6088 = vshrl.u32 %v6087, 30
        %v6089 = vshll.u32 %v6088, 30
        %v6090 = vsub.s32 %v6086, %v6089
        %vm6091 = vcmp.lt.s32.totalorder %v6090, 0
        %v6092 = vsub.s32 0, %v6090
        %v6093 = vsel %vm6091, %v6092, %v6090
        %v6094 = vclz %v6093
        %v6095 = vsub.s32 %v6094, 2
        %vm6096 = vcmp.gt.s32.totalorder 0, %v6095
        %v6097 = vsel %vm6096, 0, %v6095
        %v6098 = vsub.s32 32, %v6097
        %v6099 = vshll.u32 %v6090, %v6097
        %v6100 = vshrl.u32 %v6082, %v6098
        %v6101 = vor.u32 %v6099, %v6100
        %v6102 = vsub.s32 4294967266, %v6097
        %v6103 = vadd.s32 %v6102, 127
        %v6104 = vshll.u32 %v6103, 23
        %v6105 = vor.u32 4788187, %v6104
        %v6106 = vand.u32 2147483647, %v6105
        %v6108 = vcvt.s32.f32 %v6101
        %v6109 = vmul.f32 %v6108, %v6106
        %v6110 = vxor.u32 %v6109, 2147483648
        %v6111 = vsel %vm6028, %v6110, %v6109
        %v6112 = vsub.s32 4, %v6088
        %v6113 = vsel %vm6028, %v6112, %v6088
        %v6114 = vsel %vm6027, %v3831, %v6111
        %v6115 = vsel %vm6027, 0, %v6113
        %v6116 = vcosq.f32.pop %v6114
        %v6117 = vsinq.f32.pop %v6114
        %vm6118 = vweird.f32 %v3831
        %v6119 = vadd.s32 %v6115, 3
        %v6120 = vand.u32 %v6119, 3
        %vm6121 = vcmp.lt.s32.totalorder %v6120, 2
        %vm6122 = vcmp.eq.s32.totalorder %v6120, 0
        %v6123 = vxor.u32 %v6117, 2147483648
        %v6124 = vsel %vm6122, %v6116, %v6123
        %vm6125 = vcmp.eq.s32.totalorder %v6120, 2
        %v6126 = vxor.u32 %v6116, 2147483648
        %v6127 = vsel %vm6125, %v6126, %v6117
        %v6128 = vsel %vm6121, %v6124, %v6127
        %v6129 = vsel %vm6118, nan, %v6128
        %v6130 = vand.u32 2147483647, %v3832
        %vm6131 = vcmp.le.f32.partialorder %v6130, 0.7853982
        %vm6132 = vcmp.lt.s32.totalorder %v3832, 0
        %v6133 = vand.u32 %v3832, 2139095040
        %v6134 = vshrl.u32 %v6133, 23
        %v6135 = vsub.s32 %v6134, 127
        %v6136 = vand.u32 2147483647, %v3832
        %v6137 = vand.u32 %v6136, 8388607
        %v6138 = vor.u32 %v6137, 8388608
        %v6139 = vsub.s32 0, %v6138
        %v6140 = vadd.s32 %v6135, 1
        %vm6141 = vcmp.gt.s32.totalorder %v6140, 0
        %v6142 = vsel %vm6141, %v6140, 0
        %v6143 = vshrl.u32 %v6142, 5
        %v6144 = vand.u32 %v6142, 31
        %v6145 = vsub.s32 32, %v6144
        %v6146 = vshrl.u32 683565275, %v6145
        %v6147 = vshll.u32 683565275, %v6144
        %v6148 = vshrl.u32 2475754826, %v6145
        %v6149 = vor.u32 %v6147, %v6148
        %v6150 = vshll.u32 2475754826, %v6144
        %v6151 = vshrl.u32 2131351028, %v6145
        %v6152 = vor.u32 %v6150, %v6151
        %v6153 = vshll.u32 2131351028, %v6144
        %v6154 = vshrl.u32 2102212464, %v6145
        %v6155 = vor.u32 %v6153, %v6154
        %v6156 = vshll.u32 2102212464, %v6144
        %v6157 = vshrl.u32 920167782, %v6145
        %v6158 = vor.u32 %v6156, %v6157
        %v6159 = vshll.u32 920167782, %v6144
        %v6160 = vshrl.u32 1326507024, %v6145
        %v6161 = vor.u32 %v6159, %v6160
        %vm6162 = vcmp.lt.s32.totalorder %v6143, 1
        %vm6163 = vcmp.lt.s32.totalorder %v6143, 2
        %vm6164 = vcmp.lt.s32.totalorder %v6143, 3
        %vm6165 = vcmp.lt.s32.totalorder %v6143, 4
        %v6166 = vsel %vm6162, %v6146, %v6149
        %v6167 = vsel %vm6165, %v6155, 2102212464
        %v6168 = vsel %vm6164, %v6152, %v6167
        %v6169 = vsel %vm6163, %v6166, %v6168
        %v6170 = vsel %vm6162, %v6149, %v6152
        %v6171 = vsel %vm6165, %v6158, 920167782
        %v6172 = vsel %vm6164, %v6155, %v6171
        %v6173 = vsel %vm6163, %v6170, %v6172
        %v6174 = vsel %vm6162, %v6152, %v6155
        %v6175 = vsel %vm6165, %v6161, 1326507024
        %v6176 = vsel %vm6164, %v6158, %v6175
        %v6177 = vsel %vm6163, %v6174, %v6176
        %v6178 = vshll.u32 %v6138, 8
        %v6179 = vmul.u32.u64.compose %v6178, %v6177
        %v6180 = vextract.low.u32 %v6179
        %v6181 = vextract.high.u32 %v6179
        %v6182 = vmul.u32.u64.compose %v6178, %v6173
        %v6183 = vextract.low.u32 %v6182
        %v6184 = vextract.high.u32 %v6182
        %v6185 = vmul.u32 %v6178, %v6169
        %v6186 = vadd.s32 %v6181, %v6183
        %vm6187 = vc.u32 %v6181, %v6183
        %v6188 = vadd.s32 %v6184, 1
        %v6189 = vsel %vm6187, %v6188, %v6184
        %v6190 = vadd.s32 %v6185, %v6189
        %v6191 = vadd.s32 %v6190, 536870912
        %v6192 = vshrl.u32 %v6191, 30
        %v6193 = vshll.u32 %v6192, 30
        %v6194 = vsub.s32 %v6190, %v6193
        %vm6195 = vcmp.lt.s32.totalorder %v6194, 0
        %v6196 = vsub.s32 0, %v6194
        %v6197 = vsel %vm6195, %v6196, %v6194
        %v6198 = vclz %v6197
        %v6199 = vsub.s32 %v6198, 2
        %vm6200 = vcmp.gt.s32.totalorder 0, %v6199
        %v6201 = vsel %vm6200, 0, %v6199
        %v6202 = vsub.s32 32, %v6201
        %v6203 = vshll.u32 %v6194, %v6201
        %v6204 = vshrl.u32 %v6186, %v6202
        %v6205 = vor.u32 %v6203, %v6204
        %v6206 = vsub.s32 4294967266, %v6201
        %v6207 = vadd.s32 %v6206, 127
        %v6208 = vshll.u32 %v6207, 23
        %v6209 = vor.u32 4788187, %v6208
        %v6210 = vand.u32 2147483647, %v6209
        %v6212 = vcvt.s32.f32 %v6205
        %v6213 = vmul.f32 %v6212, %v6210
        %v6214 = vxor.u32 %v6213, 2147483648
        %v6215 = vsel %vm6132, %v6214, %v6213
        %v6216 = vsub.s32 4, %v6192
        %v6217 = vsel %vm6132, %v6216, %v6192
        %v6218 = vsel %vm6131, %v3832, %v6215
        %v6219 = vsel %vm6131, 0, %v6217
        %v6220 = vcosq.f32.pop %v6218
        %v6221 = vsinq.f32.pop %v6218
        %vm6222 = vweird.f32 %v3832
        %v6223 = vadd.s32 %v6219, 3
        %v6224 = vand.u32 %v6223, 3
        %vm6225 = vcmp.lt.s32.totalorder %v6224, 2
        %vm6226 = vcmp.eq.s32.totalorder %v6224, 0
        %v6227 = vxor.u32 %v6221, 2147483648
        %v6228 = vsel %vm6226, %v6220, %v6227
        %vm6229 = vcmp.eq.s32.totalorder %v6224, 2
        %v6230 = vxor.u32 %v6220, 2147483648
        %v6231 = vsel %vm6229, %v6230, %v6221
        %v6232 = vsel %vm6225, %v6228, %v6231
        %v6233 = vsel %vm6222, nan, %v6232
        %v6234 = vand.u32 2147483647, %v3833
        %vm6235 = vcmp.le.f32.partialorder %v6234, 0.7853982
        %vm6236 = vcmp.lt.s32.totalorder %v3833, 0
        %v6237 = vand.u32 %v3833, 2139095040
        %v6238 = vshrl.u32 %v6237, 23
        %v6239 = vsub.s32 %v6238, 127
        %v6240 = vand.u32 2147483647, %v3833
        %v6241 = vand.u32 %v6240, 8388607
        %v6242 = vor.u32 %v6241, 8388608
        %v6243 = vsub.s32 0, %v6242
        %v6244 = vadd.s32 %v6239, 1
        %vm6245 = vcmp.gt.s32.totalorder %v6244, 0
        %v6246 = vsel %vm6245, %v6244, 0
        %v6247 = vshrl.u32 %v6246, 5
        %v6248 = vand.u32 %v6246, 31
        %v6249 = vsub.s32 32, %v6248
        %v6250 = vshrl.u32 683565275, %v6249
        %v6251 = vshll.u32 683565275, %v6248
        %v6252 = vshrl.u32 2475754826, %v6249
        %v6253 = vor.u32 %v6251, %v6252
        %v6254 = vshll.u32 2475754826, %v6248
        %v6255 = vshrl.u32 2131351028, %v6249
        %v6256 = vor.u32 %v6254, %v6255
        %v6257 = vshll.u32 2131351028, %v6248
        %v6258 = vshrl.u32 2102212464, %v6249
        %v6259 = vor.u32 %v6257, %v6258
        %v6260 = vshll.u32 2102212464, %v6248
        %v6261 = vshrl.u32 920167782, %v6249
        %v6262 = vor.u32 %v6260, %v6261
        %v6263 = vshll.u32 920167782, %v6248
        %v6264 = vshrl.u32 1326507024, %v6249
        %v6265 = vor.u32 %v6263, %v6264
        %vm6266 = vcmp.lt.s32.totalorder %v6247, 1
        %vm6267 = vcmp.lt.s32.totalorder %v6247, 2
        %vm6268 = vcmp.lt.s32.totalorder %v6247, 3
        %vm6269 = vcmp.lt.s32.totalorder %v6247, 4
        %v6270 = vsel %vm6266, %v6250, %v6253
        %v6271 = vsel %vm6269, %v6259, 2102212464
        %v6272 = vsel %vm6268, %v6256, %v6271
        %v6273 = vsel %vm6267, %v6270, %v6272
        %v6274 = vsel %vm6266, %v6253, %v6256
        %v6275 = vsel %vm6269, %v6262, 920167782
        %v6276 = vsel %vm6268, %v6259, %v6275
        %v6277 = vsel %vm6267, %v6274, %v6276
        %v6278 = vsel %vm6266, %v6256, %v6259
        %v6279 = vsel %vm6269, %v6265, 1326507024
        %v6280 = vsel %vm6268, %v6262, %v6279
        %v6281 = vsel %vm6267, %v6278, %v6280
        %v6282 = vshll.u32 %v6242, 8
        %v6283 = vmul.u32.u64.compose %v6282, %v6281
        %v6284 = vextract.low.u32 %v6283
        %v6285 = vextract.high.u32 %v6283
        %v6286 = vmul.u32.u64.compose %v6282, %v6277
        %v6287 = vextract.low.u32 %v6286
        %v6288 = vextract.high.u32 %v6286
        %v6289 = vmul.u32 %v6282, %v6273
        %v6290 = vadd.s32 %v6285, %v6287
        %vm6291 = vc.u32 %v6285, %v6287
        %v6292 = vadd.s32 %v6288, 1
        %v6293 = vsel %vm6291, %v6292, %v6288
        %v6294 = vadd.s32 %v6289, %v6293
        %v6295 = vadd.s32 %v6294, 536870912
        %v6296 = vshrl.u32 %v6295, 30
        %v6297 = vshll.u32 %v6296, 30
        %v6298 = vsub.s32 %v6294, %v6297
        %vm6299 = vcmp.lt.s32.totalorder %v6298, 0
        %v6300 = vsub.s32 0, %v6298
        %v6301 = vsel %vm6299, %v6300, %v6298
        %v6302 = vclz %v6301
        %v6303 = vsub.s32 %v6302, 2
        %vm6304 = vcmp.gt.s32.totalorder 0, %v6303
        %v6305 = vsel %vm6304, 0, %v6303
        %v6306 = vsub.s32 32, %v6305
        %v6307 = vshll.u32 %v6298, %v6305
        %v6308 = vshrl.u32 %v6290, %v6306
        %v6309 = vor.u32 %v6307, %v6308
        %v6310 = vsub.s32 4294967266, %v6305
        %v6311 = vadd.s32 %v6310, 127
        %v6312 = vshll.u32 %v6311, 23
        %v6313 = vor.u32 4788187, %v6312
        %v6314 = vand.u32 2147483647, %v6313
        %v6316 = vcvt.s32.f32 %v6309
        %v6317 = vmul.f32 %v6316, %v6314
        %v6318 = vxor.u32 %v6317, 2147483648
        %v6319 = vsel %vm6236, %v6318, %v6317
        %v6320 = vsub.s32 4, %v6296
        %v6321 = vsel %vm6236, %v6320, %v6296
        %v6322 = vsel %vm6235, %v3833, %v6319
        %v6323 = vsel %vm6235, 0, %v6321
        %v6324 = vcosq.f32.pop %v6322
        %v6325 = vsinq.f32.pop %v6322
        %vm6326 = vweird.f32 %v3833
        %v6327 = vadd.s32 %v6323, 3
        %v6328 = vand.u32 %v6327, 3
        %vm6329 = vcmp.lt.s32.totalorder %v6328, 2
        %vm6330 = vcmp.eq.s32.totalorder %v6328, 0
        %v6331 = vxor.u32 %v6325, 2147483648
        %v6332 = vsel %vm6330, %v6324, %v6331
        %vm6333 = vcmp.eq.s32.totalorder %v6328, 2
        %v6334 = vxor.u32 %v6324, 2147483648
        %v6335 = vsel %vm6333, %v6334, %v6325
        %v6336 = vsel %vm6329, %v6332, %v6335
        %v6337 = vsel %vm6326, nan, %v6336
        %v6338 = vand.u32 2147483647, %v3834
        %vm6339 = vcmp.le.f32.partialorder %v6338, 0.7853982
        %vm6340 = vcmp.lt.s32.totalorder %v3834, 0
        %v6341 = vand.u32 %v3834, 2139095040
        %v6342 = vshrl.u32 %v6341, 23
        %v6343 = vsub.s32 %v6342, 127
        %v6344 = vand.u32 2147483647, %v3834
        %v6345 = vand.u32 %v6344, 8388607
        %v6346 = vor.u32 %v6345, 8388608
        %v6347 = vsub.s32 0, %v6346
        %v6348 = vadd.s32 %v6343, 1
        %vm6349 = vcmp.gt.s32.totalorder %v6348, 0
        %v6350 = vsel %vm6349, %v6348, 0
        %v6351 = vshrl.u32 %v6350, 5
        %v6352 = vand.u32 %v6350, 31
        %v6353 = vsub.s32 32, %v6352
        %v6354 = vshrl.u32 683565275, %v6353
        %v6355 = vshll.u32 683565275, %v6352
        %v6356 = vshrl.u32 2475754826, %v6353
        %v6357 = vor.u32 %v6355, %v6356
        %v6358 = vshll.u32 2475754826, %v6352
        %v6359 = vshrl.u32 2131351028, %v6353
        %v6360 = vor.u32 %v6358, %v6359
        %v6361 = vshll.u32 2131351028, %v6352
        %v6362 = vshrl.u32 2102212464, %v6353
        %v6363 = vor.u32 %v6361, %v6362
        %v6364 = vshll.u32 2102212464, %v6352
        %v6365 = vshrl.u32 920167782, %v6353
        %v6366 = vor.u32 %v6364, %v6365
        %v6367 = vshll.u32 920167782, %v6352
        %v6368 = vshrl.u32 1326507024, %v6353
        %v6369 = vor.u32 %v6367, %v6368
        %vm6370 = vcmp.lt.s32.totalorder %v6351, 1
        %vm6371 = vcmp.lt.s32.totalorder %v6351, 2
        %vm6372 = vcmp.lt.s32.totalorder %v6351, 3
        %vm6373 = vcmp.lt.s32.totalorder %v6351, 4
        %v6374 = vsel %vm6370, %v6354, %v6357
        %v6375 = vsel %vm6373, %v6363, 2102212464
        %v6376 = vsel %vm6372, %v6360, %v6375
        %v6377 = vsel %vm6371, %v6374, %v6376
        %v6378 = vsel %vm6370, %v6357, %v6360
        %v6379 = vsel %vm6373, %v6366, 920167782
        %v6380 = vsel %vm6372, %v6363, %v6379
        %v6381 = vsel %vm6371, %v6378, %v6380
        %v6382 = vsel %vm6370, %v6360, %v6363
        %v6383 = vsel %vm6373, %v6369, 1326507024
        %v6384 = vsel %vm6372, %v6366, %v6383
        %v6385 = vsel %vm6371, %v6382, %v6384
        %v6386 = vshll.u32 %v6346, 8
        %v6387 = vmul.u32.u64.compose %v6386, %v6385
        %v6388 = vextract.low.u32 %v6387
        %v6389 = vextract.high.u32 %v6387
        %v6390 = vmul.u32.u64.compose %v6386, %v6381
        %v6391 = vextract.low.u32 %v6390
        %v6392 = vextract.high.u32 %v6390
        %v6393 = vmul.u32 %v6386, %v6377
        %v6394 = vadd.s32 %v6389, %v6391
        %vm6395 = vc.u32 %v6389, %v6391
        %v6396 = vadd.s32 %v6392, 1
        %v6397 = vsel %vm6395, %v6396, %v6392
        %v6398 = vadd.s32 %v6393, %v6397
        %v6399 = vadd.s32 %v6398, 536870912
        %v6400 = vshrl.u32 %v6399, 30
        %v6401 = vshll.u32 %v6400, 30
        %v6402 = vsub.s32 %v6398, %v6401
        %vm6403 = vcmp.lt.s32.totalorder %v6402, 0
        %v6404 = vsub.s32 0, %v6402
        %v6405 = vsel %vm6403, %v6404, %v6402
        %v6406 = vclz %v6405
        %v6407 = vsub.s32 %v6406, 2
        %vm6408 = vcmp.gt.s32.totalorder 0, %v6407
        %v6409 = vsel %vm6408, 0, %v6407
        %v6410 = vsub.s32 32, %v6409
        %v6411 = vshll.u32 %v6402, %v6409
        %v6412 = vshrl.u32 %v6394, %v6410
        %v6413 = vor.u32 %v6411, %v6412
        %v6414 = vsub.s32 4294967266, %v6409
        %v6415 = vadd.s32 %v6414, 127
        %v6416 = vshll.u32 %v6415, 23
        %v6417 = vor.u32 4788187, %v6416
        %v6418 = vand.u32 2147483647, %v6417
        %v6420 = vcvt.s32.f32 %v6413
        %v6421 = vmul.f32 %v6420, %v6418
        %v6422 = vxor.u32 %v6421, 2147483648
        %v6423 = vsel %vm6340, %v6422, %v6421
        %v6424 = vsub.s32 4, %v6400
        %v6425 = vsel %vm6340, %v6424, %v6400
        %v6426 = vsel %vm6339, %v3834, %v6423
        %v6427 = vsel %vm6339, 0, %v6425
        %v6428 = vcosq.f32.pop %v6426
        %v6429 = vsinq.f32.pop %v6426
        %vm6430 = vweird.f32 %v3834
        %v6431 = vadd.s32 %v6427, 3
        %v6432 = vand.u32 %v6431, 3
        %vm6433 = vcmp.lt.s32.totalorder %v6432, 2
        %vm6434 = vcmp.eq.s32.totalorder %v6432, 0
        %v6435 = vxor.u32 %v6429, 2147483648
        %v6436 = vsel %vm6434, %v6428, %v6435
        %vm6437 = vcmp.eq.s32.totalorder %v6432, 2
        %v6438 = vxor.u32 %v6428, 2147483648
        %v6439 = vsel %vm6437, %v6438, %v6429
        %v6440 = vsel %vm6433, %v6436, %v6439
        %v6441 = vsel %vm6430, nan, %v6440
        %v6442 = vand.u32 2147483647, %v3835
        %vm6443 = vcmp.le.f32.partialorder %v6442, 0.7853982
        %vm6444 = vcmp.lt.s32.totalorder %v3835, 0
        %v6445 = vand.u32 %v3835, 2139095040
        %v6446 = vshrl.u32 %v6445, 23
        %v6447 = vsub.s32 %v6446, 127
        %v6448 = vand.u32 2147483647, %v3835
        %v6449 = vand.u32 %v6448, 8388607
        %v6450 = vor.u32 %v6449, 8388608
        %v6451 = vsub.s32 0, %v6450
        %v6452 = vadd.s32 %v6447, 1
        %vm6453 = vcmp.gt.s32.totalorder %v6452, 0
        %v6454 = vsel %vm6453, %v6452, 0
        %v6455 = vshrl.u32 %v6454, 5
        %v6456 = vand.u32 %v6454, 31
        %v6457 = vsub.s32 32, %v6456
        %v6458 = vshrl.u32 683565275, %v6457
        %v6459 = vshll.u32 683565275, %v6456
        %v6460 = vshrl.u32 2475754826, %v6457
        %v6461 = vor.u32 %v6459, %v6460
        %v6462 = vshll.u32 2475754826, %v6456
        %v6463 = vshrl.u32 2131351028, %v6457
        %v6464 = vor.u32 %v6462, %v6463
        %v6465 = vshll.u32 2131351028, %v6456
        %v6466 = vshrl.u32 2102212464, %v6457
        %v6467 = vor.u32 %v6465, %v6466
        %v6468 = vshll.u32 2102212464, %v6456
        %v6469 = vshrl.u32 920167782, %v6457
        %v6470 = vor.u32 %v6468, %v6469
        %v6471 = vshll.u32 920167782, %v6456
        %v6472 = vshrl.u32 1326507024, %v6457
        %v6473 = vor.u32 %v6471, %v6472
        %vm6474 = vcmp.lt.s32.totalorder %v6455, 1
        %vm6475 = vcmp.lt.s32.totalorder %v6455, 2
        %vm6476 = vcmp.lt.s32.totalorder %v6455, 3
        %vm6477 = vcmp.lt.s32.totalorder %v6455, 4
        %v6478 = vsel %vm6474, %v6458, %v6461
        %v6479 = vsel %vm6477, %v6467, 2102212464
        %v6480 = vsel %vm6476, %v6464, %v6479
        %v6481 = vsel %vm6475, %v6478, %v6480
        %v6482 = vsel %vm6474, %v6461, %v6464
        %v6483 = vsel %vm6477, %v6470, 920167782
        %v6484 = vsel %vm6476, %v6467, %v6483
        %v6485 = vsel %vm6475, %v6482, %v6484
        %v6486 = vsel %vm6474, %v6464, %v6467
        %v6487 = vsel %vm6477, %v6473, 1326507024
        %v6488 = vsel %vm6476, %v6470, %v6487
        %v6489 = vsel %vm6475, %v6486, %v6488
        %v6490 = vshll.u32 %v6450, 8
        %v6491 = vmul.u32.u64.compose %v6490, %v6489
        %v6492 = vextract.low.u32 %v6491
        %v6493 = vextract.high.u32 %v6491
        %v6494 = vmul.u32.u64.compose %v6490, %v6485
        %v6495 = vextract.low.u32 %v6494
        %v6496 = vextract.high.u32 %v6494
        %v6497 = vmul.u32 %v6490, %v6481
        %v6498 = vadd.s32 %v6493, %v6495
        %vm6499 = vc.u32 %v6493, %v6495
        %v6500 = vadd.s32 %v6496, 1
        %v6501 = vsel %vm6499, %v6500, %v6496
        %v6502 = vadd.s32 %v6497, %v6501
        %v6503 = vadd.s32 %v6502, 536870912
        %v6504 = vshrl.u32 %v6503, 30
        %v6505 = vshll.u32 %v6504, 30
        %v6506 = vsub.s32 %v6502, %v6505
        %vm6507 = vcmp.lt.s32.totalorder %v6506, 0
        %v6508 = vsub.s32 0, %v6506
        %v6509 = vsel %vm6507, %v6508, %v6506
        %v6510 = vclz %v6509
        %v6511 = vsub.s32 %v6510, 2
        %vm6512 = vcmp.gt.s32.totalorder 0, %v6511
        %v6513 = vsel %vm6512, 0, %v6511
        %v6514 = vsub.s32 32, %v6513
        %v6515 = vshll.u32 %v6506, %v6513
        %v6516 = vshrl.u32 %v6498, %v6514
        %v6517 = vor.u32 %v6515, %v6516
        %v6518 = vsub.s32 4294967266, %v6513
        %v6519 = vadd.s32 %v6518, 127
        %v6520 = vshll.u32 %v6519, 23
        %v6521 = vor.u32 4788187, %v6520
        %v6522 = vand.u32 2147483647, %v6521
        %v6524 = vcvt.s32.f32 %v6517
        %v6525 = vmul.f32 %v6524, %v6522
        %v6526 = vxor.u32 %v6525, 2147483648
        %v6527 = vsel %vm6444, %v6526, %v6525
        %v6528 = vsub.s32 4, %v6504
        %v6529 = vsel %vm6444, %v6528, %v6504
        %v6530 = vsel %vm6443, %v3835, %v6527
        %v6531 = vsel %vm6443, 0, %v6529
        %v6532 = vcosq.f32.pop %v6530
        %v6533 = vsinq.f32.pop %v6530
        %vm6534 = vweird.f32 %v3835
        %v6535 = vadd.s32 %v6531, 3
        %v6536 = vand.u32 %v6535, 3
        %vm6537 = vcmp.lt.s32.totalorder %v6536, 2
        %vm6538 = vcmp.eq.s32.totalorder %v6536, 0
        %v6539 = vxor.u32 %v6533, 2147483648
        %v6540 = vsel %vm6538, %v6532, %v6539
        %vm6541 = vcmp.eq.s32.totalorder %v6536, 2
        %v6542 = vxor.u32 %v6532, 2147483648
        %v6543 = vsel %vm6541, %v6542, %v6533
        %v6544 = vsel %vm6537, %v6540, %v6543
        %v6545 = vsel %vm6534, nan, %v6544
        %v6546 = vand.u32 2147483647, %v3836
        %vm6547 = vcmp.le.f32.partialorder %v6546, 0.7853982
        %vm6548 = vcmp.lt.s32.totalorder %v3836, 0
        %v6549 = vand.u32 %v3836, 2139095040
        %v6550 = vshrl.u32 %v6549, 23
        %v6551 = vsub.s32 %v6550, 127
        %v6552 = vand.u32 2147483647, %v3836
        %v6553 = vand.u32 %v6552, 8388607
        %v6554 = vor.u32 %v6553, 8388608
        %v6555 = vsub.s32 0, %v6554
        %v6556 = vadd.s32 %v6551, 1
        %vm6557 = vcmp.gt.s32.totalorder %v6556, 0
        %v6558 = vsel %vm6557, %v6556, 0
        %v6559 = vshrl.u32 %v6558, 5
        %v6560 = vand.u32 %v6558, 31
        %v6561 = vsub.s32 32, %v6560
        %v6562 = vshrl.u32 683565275, %v6561
        %v6563 = vshll.u32 683565275, %v6560
        %v6564 = vshrl.u32 2475754826, %v6561
        %v6565 = vor.u32 %v6563, %v6564
        %v6566 = vshll.u32 2475754826, %v6560
        %v6567 = vshrl.u32 2131351028, %v6561
        %v6568 = vor.u32 %v6566, %v6567
        %v6569 = vshll.u32 2131351028, %v6560
        %v6570 = vshrl.u32 2102212464, %v6561
        %v6571 = vor.u32 %v6569, %v6570
        %v6572 = vshll.u32 2102212464, %v6560
        %v6573 = vshrl.u32 920167782, %v6561
        %v6574 = vor.u32 %v6572, %v6573
        %v6575 = vshll.u32 920167782, %v6560
        %v6576 = vshrl.u32 1326507024, %v6561
        %v6577 = vor.u32 %v6575, %v6576
        %vm6578 = vcmp.lt.s32.totalorder %v6559, 1
        %vm6579 = vcmp.lt.s32.totalorder %v6559, 2
        %vm6580 = vcmp.lt.s32.totalorder %v6559, 3
        %vm6581 = vcmp.lt.s32.totalorder %v6559, 4
        %v6582 = vsel %vm6578, %v6562, %v6565
        %v6583 = vsel %vm6581, %v6571, 2102212464
        %v6584 = vsel %vm6580, %v6568, %v6583
        %v6585 = vsel %vm6579, %v6582, %v6584
        %v6586 = vsel %vm6578, %v6565, %v6568
        %v6587 = vsel %vm6581, %v6574, 920167782
        %v6588 = vsel %vm6580, %v6571, %v6587
        %v6589 = vsel %vm6579, %v6586, %v6588
        %v6590 = vsel %vm6578, %v6568, %v6571
        %v6591 = vsel %vm6581, %v6577, 1326507024
        %v6592 = vsel %vm6580, %v6574, %v6591
        %v6593 = vsel %vm6579, %v6590, %v6592
        %v6594 = vshll.u32 %v6554, 8
        %v6595 = vmul.u32.u64.compose %v6594, %v6593
        %v6596 = vextract.low.u32 %v6595
        %v6597 = vextract.high.u32 %v6595
        %v6598 = vmul.u32.u64.compose %v6594, %v6589
        %v6599 = vextract.low.u32 %v6598
        %v6600 = vextract.high.u32 %v6598
        %v6601 = vmul.u32 %v6594, %v6585
        %v6602 = vadd.s32 %v6597, %v6599
        %vm6603 = vc.u32 %v6597, %v6599
        %v6604 = vadd.s32 %v6600, 1
        %v6605 = vsel %vm6603, %v6604, %v6600
        %v6606 = vadd.s32 %v6601, %v6605
        %v6607 = vadd.s32 %v6606, 536870912
        %v6608 = vshrl.u32 %v6607, 30
        %v6609 = vshll.u32 %v6608, 30
        %v6610 = vsub.s32 %v6606, %v6609
        %vm6611 = vcmp.lt.s32.totalorder %v6610, 0
        %v6612 = vsub.s32 0, %v6610
        %v6613 = vsel %vm6611, %v6612, %v6610
        %v6614 = vclz %v6613
        %v6615 = vsub.s32 %v6614, 2
        %vm6616 = vcmp.gt.s32.totalorder 0, %v6615
        %v6617 = vsel %vm6616, 0, %v6615
        %v6618 = vsub.s32 32, %v6617
        %v6619 = vshll.u32 %v6610, %v6617
        %v6620 = vshrl.u32 %v6602, %v6618
        %v6621 = vor.u32 %v6619, %v6620
        %v6622 = vsub.s32 4294967266, %v6617
        %v6623 = vadd.s32 %v6622, 127
        %v6624 = vshll.u32 %v6623, 23
        %v6625 = vor.u32 4788187, %v6624
        %v6626 = vand.u32 2147483647, %v6625
        %v6628 = vcvt.s32.f32 %v6621
        %v6629 = vmul.f32 %v6628, %v6626
        %v6630 = vxor.u32 %v6629, 2147483648
        %v6631 = vsel %vm6548, %v6630, %v6629
        %v6632 = vsub.s32 4, %v6608
        %v6633 = vsel %vm6548, %v6632, %v6608
        %v6634 = vsel %vm6547, %v3836, %v6631
        %v6635 = vsel %vm6547, 0, %v6633
        %v6636 = vcosq.f32.pop %v6634
        %v6637 = vsinq.f32.pop %v6634
        %vm6638 = vweird.f32 %v3836
        %v6639 = vadd.s32 %v6635, 3
        %v6640 = vand.u32 %v6639, 3
        %vm6641 = vcmp.lt.s32.totalorder %v6640, 2
        %vm6642 = vcmp.eq.s32.totalorder %v6640, 0
        %v6643 = vxor.u32 %v6637, 2147483648
        %v6644 = vsel %vm6642, %v6636, %v6643
        %vm6645 = vcmp.eq.s32.totalorder %v6640, 2
        %v6646 = vxor.u32 %v6636, 2147483648
        %v6647 = vsel %vm6645, %v6646, %v6637
        %v6648 = vsel %vm6641, %v6644, %v6647
        %v6649 = vsel %vm6638, nan, %v6648
        %v6650 = vand.u32 2147483647, %v3837
        %vm6651 = vcmp.le.f32.partialorder %v6650, 0.7853982
        %vm6652 = vcmp.lt.s32.totalorder %v3837, 0
        %v6653 = vand.u32 %v3837, 2139095040
        %v6654 = vshrl.u32 %v6653, 23
        %v6655 = vsub.s32 %v6654, 127
        %v6656 = vand.u32 2147483647, %v3837
        %v6657 = vand.u32 %v6656, 8388607
        %v6658 = vor.u32 %v6657, 8388608
        %v6659 = vsub.s32 0, %v6658
        %v6660 = vadd.s32 %v6655, 1
        %vm6661 = vcmp.gt.s32.totalorder %v6660, 0
        %v6662 = vsel %vm6661, %v6660, 0
        %v6663 = vshrl.u32 %v6662, 5
        %v6664 = vand.u32 %v6662, 31
        %v6665 = vsub.s32 32, %v6664
        %v6666 = vshrl.u32 683565275, %v6665
        %v6667 = vshll.u32 683565275, %v6664
        %v6668 = vshrl.u32 2475754826, %v6665
        %v6669 = vor.u32 %v6667, %v6668
        %v6670 = vshll.u32 2475754826, %v6664
        %v6671 = vshrl.u32 2131351028, %v6665
        %v6672 = vor.u32 %v6670, %v6671
        %v6673 = vshll.u32 2131351028, %v6664
        %v6674 = vshrl.u32 2102212464, %v6665
        %v6675 = vor.u32 %v6673, %v6674
        %v6676 = vshll.u32 2102212464, %v6664
        %v6677 = vshrl.u32 920167782, %v6665
        %v6678 = vor.u32 %v6676, %v6677
        %v6679 = vshll.u32 920167782, %v6664
        %v6680 = vshrl.u32 1326507024, %v6665
        %v6681 = vor.u32 %v6679, %v6680
        %vm6682 = vcmp.lt.s32.totalorder %v6663, 1
        %vm6683 = vcmp.lt.s32.totalorder %v6663, 2
        %vm6684 = vcmp.lt.s32.totalorder %v6663, 3
        %vm6685 = vcmp.lt.s32.totalorder %v6663, 4
        %v6686 = vsel %vm6682, %v6666, %v6669
        %v6687 = vsel %vm6685, %v6675, 2102212464
        %v6688 = vsel %vm6684, %v6672, %v6687
        %v6689 = vsel %vm6683, %v6686, %v6688
        %v6690 = vsel %vm6682, %v6669, %v6672
        %v6691 = vsel %vm6685, %v6678, 920167782
        %v6692 = vsel %vm6684, %v6675, %v6691
        %v6693 = vsel %vm6683, %v6690, %v6692
        %v6694 = vsel %vm6682, %v6672, %v6675
        %v6695 = vsel %vm6685, %v6681, 1326507024
        %v6696 = vsel %vm6684, %v6678, %v6695
        %v6697 = vsel %vm6683, %v6694, %v6696
        %v6698 = vshll.u32 %v6658, 8
        %v6699 = vmul.u32.u64.compose %v6698, %v6697
        %v6700 = vextract.low.u32 %v6699
        %v6701 = vextract.high.u32 %v6699
        %v6702 = vmul.u32.u64.compose %v6698, %v6693
        %v6703 = vextract.low.u32 %v6702
        %v6704 = vextract.high.u32 %v6702
        %v6705 = vmul.u32 %v6698, %v6689
        %v6706 = vadd.s32 %v6701, %v6703
        %vm6707 = vc.u32 %v6701, %v6703
        %v6708 = vadd.s32 %v6704, 1
        %v6709 = vsel %vm6707, %v6708, %v6704
        %v6710 = vadd.s32 %v6705, %v6709
        %v6711 = vadd.s32 %v6710, 536870912
        %v6712 = vshrl.u32 %v6711, 30
        %v6713 = vshll.u32 %v6712, 30
        %v6714 = vsub.s32 %v6710, %v6713
        %vm6715 = vcmp.lt.s32.totalorder %v6714, 0
        %v6716 = vsub.s32 0, %v6714
        %v6717 = vsel %vm6715, %v6716, %v6714
        %v6718 = vclz %v6717
        %v6719 = vsub.s32 %v6718, 2
        %vm6720 = vcmp.gt.s32.totalorder 0, %v6719
        %v6721 = vsel %vm6720, 0, %v6719
        %v6722 = vsub.s32 32, %v6721
        %v6723 = vshll.u32 %v6714, %v6721
        %v6724 = vshrl.u32 %v6706, %v6722
        %v6725 = vor.u32 %v6723, %v6724
        %v6726 = vsub.s32 4294967266, %v6721
        %v6727 = vadd.s32 %v6726, 127
        %v6728 = vshll.u32 %v6727, 23
        %v6729 = vor.u32 4788187, %v6728
        %v6730 = vand.u32 2147483647, %v6729
        %v6732 = vcvt.s32.f32 %v6725
        %v6733 = vmul.f32 %v6732, %v6730
        %v6734 = vxor.u32 %v6733, 2147483648
        %v6735 = vsel %vm6652, %v6734, %v6733
        %v6736 = vsub.s32 4, %v6712
        %v6737 = vsel %vm6652, %v6736, %v6712
        %v6738 = vsel %vm6651, %v3837, %v6735
        %v6739 = vsel %vm6651, 0, %v6737
        %v6740 = vcosq.f32.pop %v6738
        %v6741 = vsinq.f32.pop %v6738
        %vm6742 = vweird.f32 %v3837
        %v6743 = vadd.s32 %v6739, 3
        %v6744 = vand.u32 %v6743, 3
        %vm6745 = vcmp.lt.s32.totalorder %v6744, 2
        %vm6746 = vcmp.eq.s32.totalorder %v6744, 0
        %v6747 = vxor.u32 %v6741, 2147483648
        %v6748 = vsel %vm6746, %v6740, %v6747
        %vm6749 = vcmp.eq.s32.totalorder %v6744, 2
        %v6750 = vxor.u32 %v6740, 2147483648
        %v6751 = vsel %vm6749, %v6750, %v6741
        %v6752 = vsel %vm6745, %v6748, %v6751
        %v6753 = vsel %vm6742, nan, %v6752
        %v6754 = vand.u32 2147483647, %v3838
        %vm6755 = vcmp.le.f32.partialorder %v6754, 0.7853982
        %vm6756 = vcmp.lt.s32.totalorder %v3838, 0
        %v6757 = vand.u32 %v3838, 2139095040
        %v6758 = vshrl.u32 %v6757, 23
        %v6759 = vsub.s32 %v6758, 127
        %v6760 = vand.u32 2147483647, %v3838
        %v6761 = vand.u32 %v6760, 8388607
        %v6762 = vor.u32 %v6761, 8388608
        %v6763 = vsub.s32 0, %v6762
        %v6764 = vadd.s32 %v6759, 1
        %vm6765 = vcmp.gt.s32.totalorder %v6764, 0
        %v6766 = vsel %vm6765, %v6764, 0
        %v6767 = vshrl.u32 %v6766, 5
        %v6768 = vand.u32 %v6766, 31
        %v6769 = vsub.s32 32, %v6768
        %v6770 = vshrl.u32 683565275, %v6769
        %v6771 = vshll.u32 683565275, %v6768
        %v6772 = vshrl.u32 2475754826, %v6769
        %v6773 = vor.u32 %v6771, %v6772
        %v6774 = vshll.u32 2475754826, %v6768
        %v6775 = vshrl.u32 2131351028, %v6769
        %v6776 = vor.u32 %v6774, %v6775
        %v6777 = vshll.u32 2131351028, %v6768
        %v6778 = vshrl.u32 2102212464, %v6769
        %v6779 = vor.u32 %v6777, %v6778
        %v6780 = vshll.u32 2102212464, %v6768
        %v6781 = vshrl.u32 920167782, %v6769
        %v6782 = vor.u32 %v6780, %v6781
        %v6783 = vshll.u32 920167782, %v6768
        %v6784 = vshrl.u32 1326507024, %v6769
        %v6785 = vor.u32 %v6783, %v6784
        %vm6786 = vcmp.lt.s32.totalorder %v6767, 1
        %vm6787 = vcmp.lt.s32.totalorder %v6767, 2
        %vm6788 = vcmp.lt.s32.totalorder %v6767, 3
        %vm6789 = vcmp.lt.s32.totalorder %v6767, 4
        %v6790 = vsel %vm6786, %v6770, %v6773
        %v6791 = vsel %vm6789, %v6779, 2102212464
        %v6792 = vsel %vm6788, %v6776, %v6791
        %v6793 = vsel %vm6787, %v6790, %v6792
        %v6794 = vsel %vm6786, %v6773, %v6776
        %v6795 = vsel %vm6789, %v6782, 920167782
        %v6796 = vsel %vm6788, %v6779, %v6795
        %v6797 = vsel %vm6787, %v6794, %v6796
        %v6798 = vsel %vm6786, %v6776, %v6779
        %v6799 = vsel %vm6789, %v6785, 1326507024
        %v6800 = vsel %vm6788, %v6782, %v6799
        %v6801 = vsel %vm6787, %v6798, %v6800
        %v6802 = vshll.u32 %v6762, 8
        %v6803 = vmul.u32.u64.compose %v6802, %v6801
        %v6804 = vextract.low.u32 %v6803
        %v6805 = vextract.high.u32 %v6803
        %v6806 = vmul.u32.u64.compose %v6802, %v6797
        %v6807 = vextract.low.u32 %v6806
        %v6808 = vextract.high.u32 %v6806
        %v6809 = vmul.u32 %v6802, %v6793
        %v6810 = vadd.s32 %v6805, %v6807
        %vm6811 = vc.u32 %v6805, %v6807
        %v6812 = vadd.s32 %v6808, 1
        %v6813 = vsel %vm6811, %v6812, %v6808
        %v6814 = vadd.s32 %v6809, %v6813
        %v6815 = vadd.s32 %v6814, 536870912
        %v6816 = vshrl.u32 %v6815, 30
        %v6817 = vshll.u32 %v6816, 30
        %v6818 = vsub.s32 %v6814, %v6817
        %vm6819 = vcmp.lt.s32.totalorder %v6818, 0
        %v6820 = vsub.s32 0, %v6818
        %v6821 = vsel %vm6819, %v6820, %v6818
        %v6822 = vclz %v6821
        %v6823 = vsub.s32 %v6822, 2
        %vm6824 = vcmp.gt.s32.totalorder 0, %v6823
        %v6825 = vsel %vm6824, 0, %v6823
        %v6826 = vsub.s32 32, %v6825
        %v6827 = vshll.u32 %v6818, %v6825
        %v6828 = vshrl.u32 %v6810, %v6826
        %v6829 = vor.u32 %v6827, %v6828
        %v6830 = vsub.s32 4294967266, %v6825
        %v6831 = vadd.s32 %v6830, 127
        %v6832 = vshll.u32 %v6831, 23
        %v6833 = vor.u32 4788187, %v6832
        %v6834 = vand.u32 2147483647, %v6833
        %v6836 = vcvt.s32.f32 %v6829
        %v6837 = vmul.f32 %v6836, %v6834
        %v6838 = vxor.u32 %v6837, 2147483648
        %v6839 = vsel %vm6756, %v6838, %v6837
        %v6840 = vsub.s32 4, %v6816
        %v6841 = vsel %vm6756, %v6840, %v6816
        %v6842 = vsel %vm6755, %v3838, %v6839
        %v6843 = vsel %vm6755, 0, %v6841
        %v6844 = vcosq.f32.pop %v6842
        %v6845 = vsinq.f32.pop %v6842
        %vm6846 = vweird.f32 %v3838
        %v6847 = vadd.s32 %v6843, 3
        %v6848 = vand.u32 %v6847, 3
        %vm6849 = vcmp.lt.s32.totalorder %v6848, 2
        %vm6850 = vcmp.eq.s32.totalorder %v6848, 0
        %v6851 = vxor.u32 %v6845, 2147483648
        %v6852 = vsel %vm6850, %v6844, %v6851
        %vm6853 = vcmp.eq.s32.totalorder %v6848, 2
        %v6854 = vxor.u32 %v6844, 2147483648
        %v6855 = vsel %vm6853, %v6854, %v6845
        %v6856 = vsel %vm6849, %v6852, %v6855
        %v6857 = vsel %vm6846, nan, %v6856
        %v6858 = vand.u32 2147483647, %v3839
        %vm6859 = vcmp.le.f32.partialorder %v6858, 0.7853982
        %vm6860 = vcmp.lt.s32.totalorder %v3839, 0
        %v6861 = vand.u32 %v3839, 2139095040
        %v6862 = vshrl.u32 %v6861, 23
        %v6863 = vsub.s32 %v6862, 127
        %v6864 = vand.u32 2147483647, %v3839
        %v6865 = vand.u32 %v6864, 8388607
        %v6866 = vor.u32 %v6865, 8388608
        %v6867 = vsub.s32 0, %v6866
        %v6868 = vadd.s32 %v6863, 1
        %vm6869 = vcmp.gt.s32.totalorder %v6868, 0
        %v6870 = vsel %vm6869, %v6868, 0
        %v6871 = vshrl.u32 %v6870, 5
        %v6872 = vand.u32 %v6870, 31
        %v6873 = vsub.s32 32, %v6872
        %v6874 = vshrl.u32 683565275, %v6873
        %v6875 = vshll.u32 683565275, %v6872
        %v6876 = vshrl.u32 2475754826, %v6873
        %v6877 = vor.u32 %v6875, %v6876
        %v6878 = vshll.u32 2475754826, %v6872
        %v6879 = vshrl.u32 2131351028, %v6873
        %v6880 = vor.u32 %v6878, %v6879
        %v6881 = vshll.u32 2131351028, %v6872
        %v6882 = vshrl.u32 2102212464, %v6873
        %v6883 = vor.u32 %v6881, %v6882
        %v6884 = vshll.u32 2102212464, %v6872
        %v6885 = vshrl.u32 920167782, %v6873
        %v6886 = vor.u32 %v6884, %v6885
        %v6887 = vshll.u32 920167782, %v6872
        %v6888 = vshrl.u32 1326507024, %v6873
        %v6889 = vor.u32 %v6887, %v6888
        %vm6890 = vcmp.lt.s32.totalorder %v6871, 1
        %vm6891 = vcmp.lt.s32.totalorder %v6871, 2
        %vm6892 = vcmp.lt.s32.totalorder %v6871, 3
        %vm6893 = vcmp.lt.s32.totalorder %v6871, 4
        %v6894 = vsel %vm6890, %v6874, %v6877
        %v6895 = vsel %vm6893, %v6883, 2102212464
        %v6896 = vsel %vm6892, %v6880, %v6895
        %v6897 = vsel %vm6891, %v6894, %v6896
        %v6898 = vsel %vm6890, %v6877, %v6880
        %v6899 = vsel %vm6893, %v6886, 920167782
        %v6900 = vsel %vm6892, %v6883, %v6899
        %v6901 = vsel %vm6891, %v6898, %v6900
        %v6902 = vsel %vm6890, %v6880, %v6883
        %v6903 = vsel %vm6893, %v6889, 1326507024
        %v6904 = vsel %vm6892, %v6886, %v6903
        %v6905 = vsel %vm6891, %v6902, %v6904
        %v6906 = vshll.u32 %v6866, 8
        %v6907 = vmul.u32.u64.compose %v6906, %v6905
        %v6908 = vextract.low.u32 %v6907
        %v6909 = vextract.high.u32 %v6907
        %v6910 = vmul.u32.u64.compose %v6906, %v6901
        %v6911 = vextract.low.u32 %v6910
        %v6912 = vextract.high.u32 %v6910
        %v6913 = vmul.u32 %v6906, %v6897
        %v6914 = vadd.s32 %v6909, %v6911
        %vm6915 = vc.u32 %v6909, %v6911
        %v6916 = vadd.s32 %v6912, 1
        %v6917 = vsel %vm6915, %v6916, %v6912
        %v6918 = vadd.s32 %v6913, %v6917
        %v6919 = vadd.s32 %v6918, 536870912
        %v6920 = vshrl.u32 %v6919, 30
        %v6921 = vshll.u32 %v6920, 30
        %v6922 = vsub.s32 %v6918, %v6921
        %vm6923 = vcmp.lt.s32.totalorder %v6922, 0
        %v6924 = vsub.s32 0, %v6922
        %v6925 = vsel %vm6923, %v6924, %v6922
        %v6926 = vclz %v6925
        %v6927 = vsub.s32 %v6926, 2
        %vm6928 = vcmp.gt.s32.totalorder 0, %v6927
        %v6929 = vsel %vm6928, 0, %v6927
        %v6930 = vsub.s32 32, %v6929
        %v6931 = vshll.u32 %v6922, %v6929
        %v6932 = vshrl.u32 %v6914, %v6930
        %v6933 = vor.u32 %v6931, %v6932
        %v6934 = vsub.s32 4294967266, %v6929
        %v6935 = vadd.s32 %v6934, 127
        %v6936 = vshll.u32 %v6935, 23
        %v6937 = vor.u32 4788187, %v6936
        %v6938 = vand.u32 2147483647, %v6937
        %v6940 = vcvt.s32.f32 %v6933
        %v6941 = vmul.f32 %v6940, %v6938
        %v6942 = vxor.u32 %v6941, 2147483648
        %v6943 = vsel %vm6860, %v6942, %v6941
        %v6944 = vsub.s32 4, %v6920
        %v6945 = vsel %vm6860, %v6944, %v6920
        %v6946 = vsel %vm6859, %v3839, %v6943
        %v6947 = vsel %vm6859, 0, %v6945
        %v6948 = vcosq.f32.pop %v6946
        %v6949 = vsinq.f32.pop %v6946
        %vm6950 = vweird.f32 %v3839
        %v6951 = vadd.s32 %v6947, 3
        %v6952 = vand.u32 %v6951, 3
        %vm6953 = vcmp.lt.s32.totalorder %v6952, 2
        %vm6954 = vcmp.eq.s32.totalorder %v6952, 0
        %v6955 = vxor.u32 %v6949, 2147483648
        %v6956 = vsel %vm6954, %v6948, %v6955
        %vm6957 = vcmp.eq.s32.totalorder %v6952, 2
        %v6958 = vxor.u32 %v6948, 2147483648
        %v6959 = vsel %vm6957, %v6958, %v6949
        %v6960 = vsel %vm6953, %v6956, %v6959
        %v6961 = vsel %vm6950, nan, %v6960
        %v6962 = vand.u32 2147483647, %v3840
        %vm6963 = vcmp.le.f32.partialorder %v6962, 0.7853982
        %vm6964 = vcmp.lt.s32.totalorder %v3840, 0
        %v6965 = vand.u32 %v3840, 2139095040
        %v6966 = vshrl.u32 %v6965, 23
        %v6967 = vsub.s32 %v6966, 127
        %v6968 = vand.u32 2147483647, %v3840
        %v6969 = vand.u32 %v6968, 8388607
        %v6970 = vor.u32 %v6969, 8388608
        %v6971 = vsub.s32 0, %v6970
        %v6972 = vadd.s32 %v6967, 1
        %vm6973 = vcmp.gt.s32.totalorder %v6972, 0
        %v6974 = vsel %vm6973, %v6972, 0
        %v6975 = vshrl.u32 %v6974, 5
        %v6976 = vand.u32 %v6974, 31
        %v6977 = vsub.s32 32, %v6976
        %v6978 = vshrl.u32 683565275, %v6977
        %v6979 = vshll.u32 683565275, %v6976
        %v6980 = vshrl.u32 2475754826, %v6977
        %v6981 = vor.u32 %v6979, %v6980
        %v6982 = vshll.u32 2475754826, %v6976
        %v6983 = vshrl.u32 2131351028, %v6977
        %v6984 = vor.u32 %v6982, %v6983
        %v6985 = vshll.u32 2131351028, %v6976
        %v6986 = vshrl.u32 2102212464, %v6977
        %v6987 = vor.u32 %v6985, %v6986
        %v6988 = vshll.u32 2102212464, %v6976
        %v6989 = vshrl.u32 920167782, %v6977
        %v6990 = vor.u32 %v6988, %v6989
        %v6991 = vshll.u32 920167782, %v6976
        %v6992 = vshrl.u32 1326507024, %v6977
        %v6993 = vor.u32 %v6991, %v6992
        %vm6994 = vcmp.lt.s32.totalorder %v6975, 1
        %vm6995 = vcmp.lt.s32.totalorder %v6975, 2
        %vm6996 = vcmp.lt.s32.totalorder %v6975, 3
        %vm6997 = vcmp.lt.s32.totalorder %v6975, 4
        %v6998 = vsel %vm6994, %v6978, %v6981
        %v6999 = vsel %vm6997, %v6987, 2102212464
        %v7000 = vsel %vm6996, %v6984, %v6999
        %v7001 = vsel %vm6995, %v6998, %v7000
        %v7002 = vsel %vm6994, %v6981, %v6984
        %v7003 = vsel %vm6997, %v6990, 920167782
        %v7004 = vsel %vm6996, %v6987, %v7003
        %v7005 = vsel %vm6995, %v7002, %v7004
        %v7006 = vsel %vm6994, %v6984, %v6987
        %v7007 = vsel %vm6997, %v6993, 1326507024
        %v7008 = vsel %vm6996, %v6990, %v7007
        %v7009 = vsel %vm6995, %v7006, %v7008
        %v7010 = vshll.u32 %v6970, 8
        %v7011 = vmul.u32.u64.compose %v7010, %v7009
        %v7012 = vextract.low.u32 %v7011
        %v7013 = vextract.high.u32 %v7011
        %v7014 = vmul.u32.u64.compose %v7010, %v7005
        %v7015 = vextract.low.u32 %v7014
        %v7016 = vextract.high.u32 %v7014
        %v7017 = vmul.u32 %v7010, %v7001
        %v7018 = vadd.s32 %v7013, %v7015
        %vm7019 = vc.u32 %v7013, %v7015
        %v7020 = vadd.s32 %v7016, 1
        %v7021 = vsel %vm7019, %v7020, %v7016
        %v7022 = vadd.s32 %v7017, %v7021
        %v7023 = vadd.s32 %v7022, 536870912
        %v7024 = vshrl.u32 %v7023, 30
        %v7025 = vshll.u32 %v7024, 30
        %v7026 = vsub.s32 %v7022, %v7025
        %vm7027 = vcmp.lt.s32.totalorder %v7026, 0
        %v7028 = vsub.s32 0, %v7026
        %v7029 = vsel %vm7027, %v7028, %v7026
        %v7030 = vclz %v7029
        %v7031 = vsub.s32 %v7030, 2
        %vm7032 = vcmp.gt.s32.totalorder 0, %v7031
        %v7033 = vsel %vm7032, 0, %v7031
        %v7034 = vsub.s32 32, %v7033
        %v7035 = vshll.u32 %v7026, %v7033
        %v7036 = vshrl.u32 %v7018, %v7034
        %v7037 = vor.u32 %v7035, %v7036
        %v7038 = vsub.s32 4294967266, %v7033
        %v7039 = vadd.s32 %v7038, 127
        %v7040 = vshll.u32 %v7039, 23
        %v7041 = vor.u32 4788187, %v7040
        %v7042 = vand.u32 2147483647, %v7041
        %v7044 = vcvt.s32.f32 %v7037
        %v7045 = vmul.f32 %v7044, %v7042
        %v7046 = vxor.u32 %v7045, 2147483648
        %v7047 = vsel %vm6964, %v7046, %v7045
        %v7048 = vsub.s32 4, %v7024
        %v7049 = vsel %vm6964, %v7048, %v7024
        %v7050 = vsel %vm6963, %v3840, %v7047
        %v7051 = vsel %vm6963, 0, %v7049
        %v7052 = vcosq.f32.pop %v7050
        %v7053 = vsinq.f32.pop %v7050
        %vm7054 = vweird.f32 %v3840
        %v7055 = vadd.s32 %v7051, 3
        %v7056 = vand.u32 %v7055, 3
        %vm7057 = vcmp.lt.s32.totalorder %v7056, 2
        %vm7058 = vcmp.eq.s32.totalorder %v7056, 0
        %v7059 = vxor.u32 %v7053, 2147483648
        %v7060 = vsel %vm7058, %v7052, %v7059
        %vm7061 = vcmp.eq.s32.totalorder %v7056, 2
        %v7062 = vxor.u32 %v7052, 2147483648
        %v7063 = vsel %vm7061, %v7062, %v7053
        %v7064 = vsel %vm7057, %v7060, %v7063
        %v7065 = vsel %vm7054, nan, %v7064
        %v7066 = vand.u32 2147483647, %v3841
        %vm7067 = vcmp.le.f32.partialorder %v7066, 0.7853982
        %vm7068 = vcmp.lt.s32.totalorder %v3841, 0
        %v7069 = vand.u32 %v3841, 2139095040
        %v7070 = vshrl.u32 %v7069, 23
        %v7071 = vsub.s32 %v7070, 127
        %v7072 = vand.u32 2147483647, %v3841
        %v7073 = vand.u32 %v7072, 8388607
        %v7074 = vor.u32 %v7073, 8388608
        %v7075 = vsub.s32 0, %v7074
        %v7076 = vadd.s32 %v7071, 1
        %vm7077 = vcmp.gt.s32.totalorder %v7076, 0
        %v7078 = vsel %vm7077, %v7076, 0
        %v7079 = vshrl.u32 %v7078, 5
        %v7080 = vand.u32 %v7078, 31
        %v7081 = vsub.s32 32, %v7080
        %v7082 = vshrl.u32 683565275, %v7081
        %v7083 = vshll.u32 683565275, %v7080
        %v7084 = vshrl.u32 2475754826, %v7081
        %v7085 = vor.u32 %v7083, %v7084
        %v7086 = vshll.u32 2475754826, %v7080
        %v7087 = vshrl.u32 2131351028, %v7081
        %v7088 = vor.u32 %v7086, %v7087
        %v7089 = vshll.u32 2131351028, %v7080
        %v7090 = vshrl.u32 2102212464, %v7081
        %v7091 = vor.u32 %v7089, %v7090
        %v7092 = vshll.u32 2102212464, %v7080
        %v7093 = vshrl.u32 920167782, %v7081
        %v7094 = vor.u32 %v7092, %v7093
        %v7095 = vshll.u32 920167782, %v7080
        %v7096 = vshrl.u32 1326507024, %v7081
        %v7097 = vor.u32 %v7095, %v7096
        %vm7098 = vcmp.lt.s32.totalorder %v7079, 1
        %vm7099 = vcmp.lt.s32.totalorder %v7079, 2
        %vm7100 = vcmp.lt.s32.totalorder %v7079, 3
        %vm7101 = vcmp.lt.s32.totalorder %v7079, 4
        %v7102 = vsel %vm7098, %v7082, %v7085
        %v7103 = vsel %vm7101, %v7091, 2102212464
        %v7104 = vsel %vm7100, %v7088, %v7103
        %v7105 = vsel %vm7099, %v7102, %v7104
        %v7106 = vsel %vm7098, %v7085, %v7088
        %v7107 = vsel %vm7101, %v7094, 920167782
        %v7108 = vsel %vm7100, %v7091, %v7107
        %v7109 = vsel %vm7099, %v7106, %v7108
        %v7110 = vsel %vm7098, %v7088, %v7091
        %v7111 = vsel %vm7101, %v7097, 1326507024
        %v7112 = vsel %vm7100, %v7094, %v7111
        %v7113 = vsel %vm7099, %v7110, %v7112
        %v7114 = vshll.u32 %v7074, 8
        %v7115 = vmul.u32.u64.compose %v7114, %v7113
        %v7116 = vextract.low.u32 %v7115
        %v7117 = vextract.high.u32 %v7115
        %v7118 = vmul.u32.u64.compose %v7114, %v7109
        %v7119 = vextract.low.u32 %v7118
        %v7120 = vextract.high.u32 %v7118
        %v7121 = vmul.u32 %v7114, %v7105
        %v7122 = vadd.s32 %v7117, %v7119
        %vm7123 = vc.u32 %v7117, %v7119
        %v7124 = vadd.s32 %v7120, 1
        %v7125 = vsel %vm7123, %v7124, %v7120
        %v7126 = vadd.s32 %v7121, %v7125
        %v7127 = vadd.s32 %v7126, 536870912
        %v7128 = vshrl.u32 %v7127, 30
        %v7129 = vshll.u32 %v7128, 30
        %v7130 = vsub.s32 %v7126, %v7129
        %vm7131 = vcmp.lt.s32.totalorder %v7130, 0
        %v7132 = vsub.s32 0, %v7130
        %v7133 = vsel %vm7131, %v7132, %v7130
        %v7134 = vclz %v7133
        %v7135 = vsub.s32 %v7134, 2
        %vm7136 = vcmp.gt.s32.totalorder 0, %v7135
        %v7137 = vsel %vm7136, 0, %v7135
        %v7138 = vsub.s32 32, %v7137
        %v7139 = vshll.u32 %v7130, %v7137
        %v7140 = vshrl.u32 %v7122, %v7138
        %v7141 = vor.u32 %v7139, %v7140
        %v7142 = vsub.s32 4294967266, %v7137
        %v7143 = vadd.s32 %v7142, 127
        %v7144 = vshll.u32 %v7143, 23
        %v7145 = vor.u32 4788187, %v7144
        %v7146 = vand.u32 2147483647, %v7145
        %v7148 = vcvt.s32.f32 %v7141
        %v7149 = vmul.f32 %v7148, %v7146
        %v7150 = vxor.u32 %v7149, 2147483648
        %v7151 = vsel %vm7068, %v7150, %v7149
        %v7152 = vsub.s32 4, %v7128
        %v7153 = vsel %vm7068, %v7152, %v7128
        %v7154 = vsel %vm7067, %v3841, %v7151
        %v7155 = vsel %vm7067, 0, %v7153
        %v7156 = vcosq.f32.pop %v7154
        %v7157 = vsinq.f32.pop %v7154
        %vm7158 = vweird.f32 %v3841
        %v7159 = vadd.s32 %v7155, 3
        %v7160 = vand.u32 %v7159, 3
        %vm7161 = vcmp.lt.s32.totalorder %v7160, 2
        %vm7162 = vcmp.eq.s32.totalorder %v7160, 0
        %v7163 = vxor.u32 %v7157, 2147483648
        %v7164 = vsel %vm7162, %v7156, %v7163
        %vm7165 = vcmp.eq.s32.totalorder %v7160, 2
        %v7166 = vxor.u32 %v7156, 2147483648
        %v7167 = vsel %vm7165, %v7166, %v7157
        %v7168 = vsel %vm7161, %v7164, %v7167
        %v7169 = vsel %vm7158, nan, %v7168
        %7170 = vst [vmem:[%s159 + $0x100] sm:$0xff] %v3945
        %7171 = vst [vmem:[%s159 + $0x108] sm:$0xff] %v4049
        %7172 = vst [vmem:[%s159 + $0x110] sm:$0xff] %v4153
        %7173 = vst [vmem:[%s159 + $0x118] sm:$0xff] %v4257
        %7174 = vst [vmem:[%s159 + $0x120] sm:$0xff] %v4361
        %7175 = vst [vmem:[%s159 + $0x128] sm:$0xff] %v4465
        %7176 = vst [vmem:[%s159 + $0x130] sm:$0xff] %v4569
        %7177 = vst [vmem:[%s159 + $0x138] sm:$0xff] %v4673
        %7178 = vst [vmem:[%s159 + $0x140] sm:$0xff] %v4777
        %7179 = vst [vmem:[%s159 + $0x148] sm:$0xff] %v4881
        %7180 = vst [vmem:[%s159 + $0x150] sm:$0xff] %v4985
        %7181 = vst [vmem:[%s159 + $0x158] sm:$0xff] %v5089
        %7182 = vst [vmem:[%s159 + $0x160] sm:$0xff] %v5193
        %7183 = vst [vmem:[%s159 + $0x168] sm:$0xff] %v5297
        %7184 = vst [vmem:[%s159 + $0x170] sm:$0xff] %v5401
        %7185 = vst [vmem:[%s159 + $0x178] sm:$0xff] %v5505
        %7186 = vst [vmem:[%s159 + $0x180] sm:$0xff] %v5609
        %7187 = vst [vmem:[%s159 + $0x188] sm:$0xff] %v5713
        %7188 = vst [vmem:[%s159 + $0x190] sm:$0xff] %v5817
        %7189 = vst [vmem:[%s159 + $0x198] sm:$0xff] %v5921
        %7190 = vst [vmem:[%s159 + $0x1a0] sm:$0xff] %v6025
        %7191 = vst [vmem:[%s159 + $0x1a8] sm:$0xff] %v6129
        %7192 = vst [vmem:[%s159 + $0x1b0] sm:$0xff] %v6233
        %7193 = vst [vmem:[%s159 + $0x1b8] sm:$0xff] %v6337
        %7194 = vst [vmem:[%s159 + $0x1c0] sm:$0xff] %v6441
        %7195 = vst [vmem:[%s159 + $0x1c8] sm:$0xff] %v6545
        %7196 = vst [vmem:[%s159 + $0x1d0] sm:$0xff] %v6649
        %7197 = vst [vmem:[%s159 + $0x1d8] sm:$0xff] %v6753
        %7198 = vst [vmem:[%s159 + $0x1e0] sm:$0xff] %v6857
        %7199 = vst [vmem:[%s159 + $0x1e8] sm:$0xff] %v6961
        %7200 = vst [vmem:[%s159 + $0x1f0] sm:$0xff] %v7065
        %7201 = vst [vmem:[%s159 + $0x1f8] sm:$0xff] %v7169
        %s7202 = scalar_lea.vmem %s139, 2 [#allocation2]
        %v7203 = vld [vmem:[%s7202] ss:$4 sm:$0xff]
        %s7204 = scalar_lea.vmem %s139, 34 [#allocation2]
        %v7205 = vld [vmem:[%s7204] ss:$4 sm:$0xff]
        %v7208 = vlaneseq
        %v7209 = vshrl.u32 %v7208, 7
        %v7210 = vsub.s32 0, %v7209
        %v7211 = vrot.slane %v7203, %v7210
        %v7212 = vlaneseq
        %v7213 = vshrl.u32 %v7212, 7
        %v7214 = vsub.s32 1, %v7213
        %v7215 = vrot.slane %v7203, %v7214
        %v7216 = vlaneseq
        %v7217 = vshrl.u32 %v7216, 7
        %v7218 = vsub.s32 2, %v7217
        %v7219 = vrot.slane %v7203, %v7218
        %v7220 = vlaneseq
        %v7221 = vshrl.u32 %v7220, 7
        %v7222 = vsub.s32 3, %v7221
        %v7223 = vrot.slane %v7203, %v7222
        %v7224 = vlaneseq
        %v7225 = vshrl.u32 %v7224, 7
        %v7226 = vsub.s32 4, %v7225
        %v7227 = vrot.slane %v7203, %v7226
        %v7228 = vlaneseq
        %v7229 = vshrl.u32 %v7228, 7
        %v7230 = vsub.s32 5, %v7229
        %v7231 = vrot.slane %v7203, %v7230
        %v7232 = vlaneseq
        %v7233 = vshrl.u32 %v7232, 7
        %v7234 = vsub.s32 6, %v7233
        %v7235 = vrot.slane %v7203, %v7234
        %v7236 = vlaneseq
        %v7237 = vshrl.u32 %v7236, 7
        %v7238 = vsub.s32 7, %v7237
        %v7239 = vrot.slane %v7203, %v7238
        %v7240 = vlaneseq
        %v7241 = vshrl.u32 %v7240, 7
        %v7242 = vsub.s32 0, %v7241
        %v7243 = vrot.slane %v7205, %v7242
        %v7244 = vlaneseq
        %v7245 = vshrl.u32 %v7244, 7
        %v7246 = vsub.s32 1, %v7245
        %v7247 = vrot.slane %v7205, %v7246
        %v7248 = vlaneseq
        %v7249 = vshrl.u32 %v7248, 7
        %v7250 = vsub.s32 2, %v7249
        %v7251 = vrot.slane %v7205, %v7250
        %v7252 = vlaneseq
        %v7253 = vshrl.u32 %v7252, 7
        %v7254 = vsub.s32 3, %v7253
        %v7255 = vrot.slane %v7205, %v7254
        %v7256 = vlaneseq
        %v7257 = vshrl.u32 %v7256, 7
        %v7258 = vsub.s32 4, %v7257
        %v7259 = vrot.slane %v7205, %v7258
        %v7260 = vlaneseq
        %v7261 = vshrl.u32 %v7260, 7
        %v7262 = vsub.s32 5, %v7261
        %v7263 = vrot.slane %v7205, %v7262
        %v7264 = vlaneseq
        %v7265 = vshrl.u32 %v7264, 7
        %v7266 = vsub.s32 6, %v7265
        %v7267 = vrot.slane %v7205, %v7266
        %v7268 = vlaneseq
        %v7269 = vshrl.u32 %v7268, 7
        %v7270 = vsub.s32 7, %v7269
        %v7271 = vrot.slane %v7205, %v7270
        %v7288 = vmul.f32 %v7211, %v261
        %v7289 = vmul.f32 %v7215, %v261
        %v7290 = vmul.f32 %v7219, %v261
        %v7291 = vmul.f32 %v7223, %v261
        %v7292 = vmul.f32 %v7227, %v261
        %v7293 = vmul.f32 %v7231, %v261
        %v7294 = vmul.f32 %v7235, %v261
        %v7295 = vmul.f32 %v7239, %v261
        %v7296 = vmul.f32 %v7243, %v261
        %v7297 = vmul.f32 %v7247, %v261
        %v7298 = vmul.f32 %v7251, %v261
        %v7299 = vmul.f32 %v7255, %v261
        %v7300 = vmul.f32 %v7259, %v261
        %v7301 = vmul.f32 %v7263, %v261
        %v7302 = vmul.f32 %v7267, %v261
        %v7303 = vmul.f32 %v7271, %v261
        %v7304 = vmul.f32 %v7211, %v266
        %v7305 = vmul.f32 %v7215, %v266
        %v7306 = vmul.f32 %v7219, %v266
        %v7307 = vmul.f32 %v7223, %v266
        %v7308 = vmul.f32 %v7227, %v266
        %v7309 = vmul.f32 %v7231, %v266
        %v7310 = vmul.f32 %v7235, %v266
        %v7311 = vmul.f32 %v7239, %v266
        %v7312 = vmul.f32 %v7243, %v266
        %v7313 = vmul.f32 %v7247, %v266
        %v7314 = vmul.f32 %v7251, %v266
        %v7315 = vmul.f32 %v7255, %v266
        %v7316 = vmul.f32 %v7259, %v266
        %v7317 = vmul.f32 %v7263, %v266
        %v7318 = vmul.f32 %v7267, %v266
        %v7319 = vmul.f32 %v7271, %v266
        %v7320 = vadd.f32 %v7288, %v171
        %v7321 = vadd.f32 %v7289, %v171
        %v7322 = vadd.f32 %v7290, %v171
        %v7323 = vadd.f32 %v7291, %v171
        %v7324 = vadd.f32 %v7292, %v171
        %v7325 = vadd.f32 %v7293, %v171
        %v7326 = vadd.f32 %v7294, %v171
        %v7327 = vadd.f32 %v7295, %v171
        %v7328 = vadd.f32 %v7296, %v171
        %v7329 = vadd.f32 %v7297, %v171
        %v7330 = vadd.f32 %v7298, %v171
        %v7331 = vadd.f32 %v7299, %v171
        %v7332 = vadd.f32 %v7300, %v171
        %v7333 = vadd.f32 %v7301, %v171
        %v7334 = vadd.f32 %v7302, %v171
        %v7335 = vadd.f32 %v7303, %v171
        %v7336 = vadd.f32 %v7304, %v172
        %v7337 = vadd.f32 %v7305, %v172
        %v7338 = vadd.f32 %v7306, %v172
        %v7339 = vadd.f32 %v7307, %v172
        %v7340 = vadd.f32 %v7308, %v172
        %v7341 = vadd.f32 %v7309, %v172
        %v7342 = vadd.f32 %v7310, %v172
        %v7343 = vadd.f32 %v7311, %v172
        %v7344 = vadd.f32 %v7312, %v172
        %v7345 = vadd.f32 %v7313, %v172
        %v7346 = vadd.f32 %v7314, %v172
        %v7347 = vadd.f32 %v7315, %v172
        %v7348 = vadd.f32 %v7316, %v172
        %v7349 = vadd.f32 %v7317, %v172
        %v7350 = vadd.f32 %v7318, %v172
        %v7351 = vadd.f32 %v7319, %v172
        %v7352 = vand.u32 2147483647, %v7320
        %vm7353 = vcmp.le.f32.partialorder %v7352, 0.7853982
        %vm7354 = vcmp.lt.s32.totalorder %v7320, 0
        %v7355 = vand.u32 %v7320, 2139095040
        %v7356 = vshrl.u32 %v7355, 23
        %v7357 = vsub.s32 %v7356, 127
        %v7358 = vand.u32 2147483647, %v7320
        %v7359 = vand.u32 %v7358, 8388607
        %v7360 = vor.u32 %v7359, 8388608
        %v7361 = vsub.s32 0, %v7360
        %v7362 = vadd.s32 %v7357, 1
        %vm7363 = vcmp.gt.s32.totalorder %v7362, 0
        %v7364 = vsel %vm7363, %v7362, 0
        %v7365 = vshrl.u32 %v7364, 5
        %v7366 = vand.u32 %v7364, 31
        %v7367 = vsub.s32 32, %v7366
        %v7368 = vshrl.u32 683565275, %v7367
        %v7369 = vshll.u32 683565275, %v7366
        %v7370 = vshrl.u32 2475754826, %v7367
        %v7371 = vor.u32 %v7369, %v7370
        %v7372 = vshll.u32 2475754826, %v7366
        %v7373 = vshrl.u32 2131351028, %v7367
        %v7374 = vor.u32 %v7372, %v7373
        %v7375 = vshll.u32 2131351028, %v7366
        %v7376 = vshrl.u32 2102212464, %v7367
        %v7377 = vor.u32 %v7375, %v7376
        %v7378 = vshll.u32 2102212464, %v7366
        %v7379 = vshrl.u32 920167782, %v7367
        %v7380 = vor.u32 %v7378, %v7379
        %v7381 = vshll.u32 920167782, %v7366
        %v7382 = vshrl.u32 1326507024, %v7367
        %v7383 = vor.u32 %v7381, %v7382
        %vm7384 = vcmp.lt.s32.totalorder %v7365, 1
        %vm7385 = vcmp.lt.s32.totalorder %v7365, 2
        %vm7386 = vcmp.lt.s32.totalorder %v7365, 3
        %vm7387 = vcmp.lt.s32.totalorder %v7365, 4
        %v7388 = vsel %vm7384, %v7368, %v7371
        %v7389 = vsel %vm7387, %v7377, 2102212464
        %v7390 = vsel %vm7386, %v7374, %v7389
        %v7391 = vsel %vm7385, %v7388, %v7390
        %v7392 = vsel %vm7384, %v7371, %v7374
        %v7393 = vsel %vm7387, %v7380, 920167782
        %v7394 = vsel %vm7386, %v7377, %v7393
        %v7395 = vsel %vm7385, %v7392, %v7394
        %v7396 = vsel %vm7384, %v7374, %v7377
        %v7397 = vsel %vm7387, %v7383, 1326507024
        %v7398 = vsel %vm7386, %v7380, %v7397
        %v7399 = vsel %vm7385, %v7396, %v7398
        %v7400 = vshll.u32 %v7360, 8
        %v7401 = vmul.u32.u64.compose %v7400, %v7399
        %v7402 = vextract.low.u32 %v7401
        %v7403 = vextract.high.u32 %v7401
        %v7404 = vmul.u32.u64.compose %v7400, %v7395
        %v7405 = vextract.low.u32 %v7404
        %v7406 = vextract.high.u32 %v7404
        %v7407 = vmul.u32 %v7400, %v7391
        %v7408 = vadd.s32 %v7403, %v7405
        %vm7409 = vc.u32 %v7403, %v7405
        %v7410 = vadd.s32 %v7406, 1
        %v7411 = vsel %vm7409, %v7410, %v7406
        %v7412 = vadd.s32 %v7407, %v7411
        %v7413 = vadd.s32 %v7412, 536870912
        %v7414 = vshrl.u32 %v7413, 30
        %v7415 = vshll.u32 %v7414, 30
        %v7416 = vsub.s32 %v7412, %v7415
        %vm7417 = vcmp.lt.s32.totalorder %v7416, 0
        %v7418 = vsub.s32 0, %v7416
        %v7419 = vsel %vm7417, %v7418, %v7416
        %v7420 = vclz %v7419
        %v7421 = vsub.s32 %v7420, 2
        %vm7422 = vcmp.gt.s32.totalorder 0, %v7421
        %v7423 = vsel %vm7422, 0, %v7421
        %v7424 = vsub.s32 32, %v7423
        %v7425 = vshll.u32 %v7416, %v7423
        %v7426 = vshrl.u32 %v7408, %v7424
        %v7427 = vor.u32 %v7425, %v7426
        %v7428 = vsub.s32 4294967266, %v7423
        %v7429 = vadd.s32 %v7428, 127
        %v7430 = vshll.u32 %v7429, 23
        %v7431 = vor.u32 4788187, %v7430
        %v7432 = vand.u32 2147483647, %v7431
        %v7434 = vcvt.s32.f32 %v7427
        %v7435 = vmul.f32 %v7434, %v7432
        %v7436 = vxor.u32 %v7435, 2147483648
        %v7437 = vsel %vm7354, %v7436, %v7435
        %v7438 = vsub.s32 4, %v7414
        %v7439 = vsel %vm7354, %v7438, %v7414
        %v7440 = vsel %vm7353, %v7320, %v7437
        %v7441 = vsel %vm7353, 0, %v7439
        %v7442 = vcosq.f32.pop %v7440
        %v7443 = vsinq.f32.pop %v7440
        %vm7444 = vweird.f32 %v7320
        %v7445 = vadd.s32 %v7441, 3
        %v7446 = vand.u32 %v7445, 3
        %vm7447 = vcmp.lt.s32.totalorder %v7446, 2
        %vm7448 = vcmp.eq.s32.totalorder %v7446, 0
        %v7449 = vxor.u32 %v7443, 2147483648
        %v7450 = vsel %vm7448, %v7442, %v7449
        %vm7451 = vcmp.eq.s32.totalorder %v7446, 2
        %v7452 = vxor.u32 %v7442, 2147483648
        %v7453 = vsel %vm7451, %v7452, %v7443
        %v7454 = vsel %vm7447, %v7450, %v7453
        %v7455 = vsel %vm7444, nan, %v7454
        %v7456 = vand.u32 2147483647, %v7321
        %vm7457 = vcmp.le.f32.partialorder %v7456, 0.7853982
        %vm7458 = vcmp.lt.s32.totalorder %v7321, 0
        %v7459 = vand.u32 %v7321, 2139095040
        %v7460 = vshrl.u32 %v7459, 23
        %v7461 = vsub.s32 %v7460, 127
        %v7462 = vand.u32 2147483647, %v7321
        %v7463 = vand.u32 %v7462, 8388607
        %v7464 = vor.u32 %v7463, 8388608
        %v7465 = vsub.s32 0, %v7464
        %v7466 = vadd.s32 %v7461, 1
        %vm7467 = vcmp.gt.s32.totalorder %v7466, 0
        %v7468 = vsel %vm7467, %v7466, 0
        %v7469 = vshrl.u32 %v7468, 5
        %v7470 = vand.u32 %v7468, 31
        %v7471 = vsub.s32 32, %v7470
        %v7472 = vshrl.u32 683565275, %v7471
        %v7473 = vshll.u32 683565275, %v7470
        %v7474 = vshrl.u32 2475754826, %v7471
        %v7475 = vor.u32 %v7473, %v7474
        %v7476 = vshll.u32 2475754826, %v7470
        %v7477 = vshrl.u32 2131351028, %v7471
        %v7478 = vor.u32 %v7476, %v7477
        %v7479 = vshll.u32 2131351028, %v7470
        %v7480 = vshrl.u32 2102212464, %v7471
        %v7481 = vor.u32 %v7479, %v7480
        %v7482 = vshll.u32 2102212464, %v7470
        %v7483 = vshrl.u32 920167782, %v7471
        %v7484 = vor.u32 %v7482, %v7483
        %v7485 = vshll.u32 920167782, %v7470
        %v7486 = vshrl.u32 1326507024, %v7471
        %v7487 = vor.u32 %v7485, %v7486
        %vm7488 = vcmp.lt.s32.totalorder %v7469, 1
        %vm7489 = vcmp.lt.s32.totalorder %v7469, 2
        %vm7490 = vcmp.lt.s32.totalorder %v7469, 3
        %vm7491 = vcmp.lt.s32.totalorder %v7469, 4
        %v7492 = vsel %vm7488, %v7472, %v7475
        %v7493 = vsel %vm7491, %v7481, 2102212464
        %v7494 = vsel %vm7490, %v7478, %v7493
        %v7495 = vsel %vm7489, %v7492, %v7494
        %v7496 = vsel %vm7488, %v7475, %v7478
        %v7497 = vsel %vm7491, %v7484, 920167782
        %v7498 = vsel %vm7490, %v7481, %v7497
        %v7499 = vsel %vm7489, %v7496, %v7498
        %v7500 = vsel %vm7488, %v7478, %v7481
        %v7501 = vsel %vm7491, %v7487, 1326507024
        %v7502 = vsel %vm7490, %v7484, %v7501
        %v7503 = vsel %vm7489, %v7500, %v7502
        %v7504 = vshll.u32 %v7464, 8
        %v7505 = vmul.u32.u64.compose %v7504, %v7503
        %v7506 = vextract.low.u32 %v7505
        %v7507 = vextract.high.u32 %v7505
        %v7508 = vmul.u32.u64.compose %v7504, %v7499
        %v7509 = vextract.low.u32 %v7508
        %v7510 = vextract.high.u32 %v7508
        %v7511 = vmul.u32 %v7504, %v7495
        %v7512 = vadd.s32 %v7507, %v7509
        %vm7513 = vc.u32 %v7507, %v7509
        %v7514 = vadd.s32 %v7510, 1
        %v7515 = vsel %vm7513, %v7514, %v7510
        %v7516 = vadd.s32 %v7511, %v7515
        %v7517 = vadd.s32 %v7516, 536870912
        %v7518 = vshrl.u32 %v7517, 30
        %v7519 = vshll.u32 %v7518, 30
        %v7520 = vsub.s32 %v7516, %v7519
        %vm7521 = vcmp.lt.s32.totalorder %v7520, 0
        %v7522 = vsub.s32 0, %v7520
        %v7523 = vsel %vm7521, %v7522, %v7520
        %v7524 = vclz %v7523
        %v7525 = vsub.s32 %v7524, 2
        %vm7526 = vcmp.gt.s32.totalorder 0, %v7525
        %v7527 = vsel %vm7526, 0, %v7525
        %v7528 = vsub.s32 32, %v7527
        %v7529 = vshll.u32 %v7520, %v7527
        %v7530 = vshrl.u32 %v7512, %v7528
        %v7531 = vor.u32 %v7529, %v7530
        %v7532 = vsub.s32 4294967266, %v7527
        %v7533 = vadd.s32 %v7532, 127
        %v7534 = vshll.u32 %v7533, 23
        %v7535 = vor.u32 4788187, %v7534
        %v7536 = vand.u32 2147483647, %v7535
        %v7538 = vcvt.s32.f32 %v7531
        %v7539 = vmul.f32 %v7538, %v7536
        %v7540 = vxor.u32 %v7539, 2147483648
        %v7541 = vsel %vm7458, %v7540, %v7539
        %v7542 = vsub.s32 4, %v7518
        %v7543 = vsel %vm7458, %v7542, %v7518
        %v7544 = vsel %vm7457, %v7321, %v7541
        %v7545 = vsel %vm7457, 0, %v7543
        %v7546 = vcosq.f32.pop %v7544
        %v7547 = vsinq.f32.pop %v7544
        %vm7548 = vweird.f32 %v7321
        %v7549 = vadd.s32 %v7545, 3
        %v7550 = vand.u32 %v7549, 3
        %vm7551 = vcmp.lt.s32.totalorder %v7550, 2
        %vm7552 = vcmp.eq.s32.totalorder %v7550, 0
        %v7553 = vxor.u32 %v7547, 2147483648
        %v7554 = vsel %vm7552, %v7546, %v7553
        %vm7555 = vcmp.eq.s32.totalorder %v7550, 2
        %v7556 = vxor.u32 %v7546, 2147483648
        %v7557 = vsel %vm7555, %v7556, %v7547
        %v7558 = vsel %vm7551, %v7554, %v7557
        %v7559 = vsel %vm7548, nan, %v7558
        %v7560 = vand.u32 2147483647, %v7322
        %vm7561 = vcmp.le.f32.partialorder %v7560, 0.7853982
        %vm7562 = vcmp.lt.s32.totalorder %v7322, 0
        %v7563 = vand.u32 %v7322, 2139095040
        %v7564 = vshrl.u32 %v7563, 23
        %v7565 = vsub.s32 %v7564, 127
        %v7566 = vand.u32 2147483647, %v7322
        %v7567 = vand.u32 %v7566, 8388607
        %v7568 = vor.u32 %v7567, 8388608
        %v7569 = vsub.s32 0, %v7568
        %v7570 = vadd.s32 %v7565, 1
        %vm7571 = vcmp.gt.s32.totalorder %v7570, 0
        %v7572 = vsel %vm7571, %v7570, 0
        %v7573 = vshrl.u32 %v7572, 5
        %v7574 = vand.u32 %v7572, 31
        %v7575 = vsub.s32 32, %v7574
        %v7576 = vshrl.u32 683565275, %v7575
        %v7577 = vshll.u32 683565275, %v7574
        %v7578 = vshrl.u32 2475754826, %v7575
        %v7579 = vor.u32 %v7577, %v7578
        %v7580 = vshll.u32 2475754826, %v7574
        %v7581 = vshrl.u32 2131351028, %v7575
        %v7582 = vor.u32 %v7580, %v7581
        %v7583 = vshll.u32 2131351028, %v7574
        %v7584 = vshrl.u32 2102212464, %v7575
        %v7585 = vor.u32 %v7583, %v7584
        %v7586 = vshll.u32 2102212464, %v7574
        %v7587 = vshrl.u32 920167782, %v7575
        %v7588 = vor.u32 %v7586, %v7587
        %v7589 = vshll.u32 920167782, %v7574
        %v7590 = vshrl.u32 1326507024, %v7575
        %v7591 = vor.u32 %v7589, %v7590
        %vm7592 = vcmp.lt.s32.totalorder %v7573, 1
        %vm7593 = vcmp.lt.s32.totalorder %v7573, 2
        %vm7594 = vcmp.lt.s32.totalorder %v7573, 3
        %vm7595 = vcmp.lt.s32.totalorder %v7573, 4
        %v7596 = vsel %vm7592, %v7576, %v7579
        %v7597 = vsel %vm7595, %v7585, 2102212464
        %v7598 = vsel %vm7594, %v7582, %v7597
        %v7599 = vsel %vm7593, %v7596, %v7598
        %v7600 = vsel %vm7592, %v7579, %v7582
        %v7601 = vsel %vm7595, %v7588, 920167782
        %v7602 = vsel %vm7594, %v7585, %v7601
        %v7603 = vsel %vm7593, %v7600, %v7602
        %v7604 = vsel %vm7592, %v7582, %v7585
        %v7605 = vsel %vm7595, %v7591, 1326507024
        %v7606 = vsel %vm7594, %v7588, %v7605
        %v7607 = vsel %vm7593, %v7604, %v7606
        %v7608 = vshll.u32 %v7568, 8
        %v7609 = vmul.u32.u64.compose %v7608, %v7607
        %v7610 = vextract.low.u32 %v7609
        %v7611 = vextract.high.u32 %v7609
        %v7612 = vmul.u32.u64.compose %v7608, %v7603
        %v7613 = vextract.low.u32 %v7612
        %v7614 = vextract.high.u32 %v7612
        %v7615 = vmul.u32 %v7608, %v7599
        %v7616 = vadd.s32 %v7611, %v7613
        %vm7617 = vc.u32 %v7611, %v7613
        %v7618 = vadd.s32 %v7614, 1
        %v7619 = vsel %vm7617, %v7618, %v7614
        %v7620 = vadd.s32 %v7615, %v7619
        %v7621 = vadd.s32 %v7620, 536870912
        %v7622 = vshrl.u32 %v7621, 30
        %v7623 = vshll.u32 %v7622, 30
        %v7624 = vsub.s32 %v7620, %v7623
        %vm7625 = vcmp.lt.s32.totalorder %v7624, 0
        %v7626 = vsub.s32 0, %v7624
        %v7627 = vsel %vm7625, %v7626, %v7624
        %v7628 = vclz %v7627
        %v7629 = vsub.s32 %v7628, 2
        %vm7630 = vcmp.gt.s32.totalorder 0, %v7629
        %v7631 = vsel %vm7630, 0, %v7629
        %v7632 = vsub.s32 32, %v7631
        %v7633 = vshll.u32 %v7624, %v7631
        %v7634 = vshrl.u32 %v7616, %v7632
        %v7635 = vor.u32 %v7633, %v7634
        %v7636 = vsub.s32 4294967266, %v7631
        %v7637 = vadd.s32 %v7636, 127
        %v7638 = vshll.u32 %v7637, 23
        %v7639 = vor.u32 4788187, %v7638
        %v7640 = vand.u32 2147483647, %v7639
        %v7642 = vcvt.s32.f32 %v7635
        %v7643 = vmul.f32 %v7642, %v7640
        %v7644 = vxor.u32 %v7643, 2147483648
        %v7645 = vsel %vm7562, %v7644, %v7643
        %v7646 = vsub.s32 4, %v7622
        %v7647 = vsel %vm7562, %v7646, %v7622
        %v7648 = vsel %vm7561, %v7322, %v7645
        %v7649 = vsel %vm7561, 0, %v7647
        %v7650 = vcosq.f32.pop %v7648
        %v7651 = vsinq.f32.pop %v7648
        %vm7652 = vweird.f32 %v7322
        %v7653 = vadd.s32 %v7649, 3
        %v7654 = vand.u32 %v7653, 3
        %vm7655 = vcmp.lt.s32.totalorder %v7654, 2
        %vm7656 = vcmp.eq.s32.totalorder %v7654, 0
        %v7657 = vxor.u32 %v7651, 2147483648
        %v7658 = vsel %vm7656, %v7650, %v7657
        %vm7659 = vcmp.eq.s32.totalorder %v7654, 2
        %v7660 = vxor.u32 %v7650, 2147483648
        %v7661 = vsel %vm7659, %v7660, %v7651
        %v7662 = vsel %vm7655, %v7658, %v7661
        %v7663 = vsel %vm7652, nan, %v7662
        %v7664 = vand.u32 2147483647, %v7323
        %vm7665 = vcmp.le.f32.partialorder %v7664, 0.7853982
        %vm7666 = vcmp.lt.s32.totalorder %v7323, 0
        %v7667 = vand.u32 %v7323, 2139095040
        %v7668 = vshrl.u32 %v7667, 23
        %v7669 = vsub.s32 %v7668, 127
        %v7670 = vand.u32 2147483647, %v7323
        %v7671 = vand.u32 %v7670, 8388607
        %v7672 = vor.u32 %v7671, 8388608
        %v7673 = vsub.s32 0, %v7672
        %v7674 = vadd.s32 %v7669, 1
        %vm7675 = vcmp.gt.s32.totalorder %v7674, 0
        %v7676 = vsel %vm7675, %v7674, 0
        %v7677 = vshrl.u32 %v7676, 5
        %v7678 = vand.u32 %v7676, 31
        %v7679 = vsub.s32 32, %v7678
        %v7680 = vshrl.u32 683565275, %v7679
        %v7681 = vshll.u32 683565275, %v7678
        %v7682 = vshrl.u32 2475754826, %v7679
        %v7683 = vor.u32 %v7681, %v7682
        %v7684 = vshll.u32 2475754826, %v7678
        %v7685 = vshrl.u32 2131351028, %v7679
        %v7686 = vor.u32 %v7684, %v7685
        %v7687 = vshll.u32 2131351028, %v7678
        %v7688 = vshrl.u32 2102212464, %v7679
        %v7689 = vor.u32 %v7687, %v7688
        %v7690 = vshll.u32 2102212464, %v7678
        %v7691 = vshrl.u32 920167782, %v7679
        %v7692 = vor.u32 %v7690, %v7691
        %v7693 = vshll.u32 920167782, %v7678
        %v7694 = vshrl.u32 1326507024, %v7679
        %v7695 = vor.u32 %v7693, %v7694
        %vm7696 = vcmp.lt.s32.totalorder %v7677, 1
        %vm7697 = vcmp.lt.s32.totalorder %v7677, 2
        %vm7698 = vcmp.lt.s32.totalorder %v7677, 3
        %vm7699 = vcmp.lt.s32.totalorder %v7677, 4
        %v7700 = vsel %vm7696, %v7680, %v7683
        %v7701 = vsel %vm7699, %v7689, 2102212464
        %v7702 = vsel %vm7698, %v7686, %v7701
        %v7703 = vsel %vm7697, %v7700, %v7702
        %v7704 = vsel %vm7696, %v7683, %v7686
        %v7705 = vsel %vm7699, %v7692, 920167782
        %v7706 = vsel %vm7698, %v7689, %v7705
        %v7707 = vsel %vm7697, %v7704, %v7706
        %v7708 = vsel %vm7696, %v7686, %v7689
        %v7709 = vsel %vm7699, %v7695, 1326507024
        %v7710 = vsel %vm7698, %v7692, %v7709
        %v7711 = vsel %vm7697, %v7708, %v7710
        %v7712 = vshll.u32 %v7672, 8
        %v7713 = vmul.u32.u64.compose %v7712, %v7711
        %v7714 = vextract.low.u32 %v7713
        %v7715 = vextract.high.u32 %v7713
        %v7716 = vmul.u32.u64.compose %v7712, %v7707
        %v7717 = vextract.low.u32 %v7716
        %v7718 = vextract.high.u32 %v7716
        %v7719 = vmul.u32 %v7712, %v7703
        %v7720 = vadd.s32 %v7715, %v7717
        %vm7721 = vc.u32 %v7715, %v7717
        %v7722 = vadd.s32 %v7718, 1
        %v7723 = vsel %vm7721, %v7722, %v7718
        %v7724 = vadd.s32 %v7719, %v7723
        %v7725 = vadd.s32 %v7724, 536870912
        %v7726 = vshrl.u32 %v7725, 30
        %v7727 = vshll.u32 %v7726, 30
        %v7728 = vsub.s32 %v7724, %v7727
        %vm7729 = vcmp.lt.s32.totalorder %v7728, 0
        %v7730 = vsub.s32 0, %v7728
        %v7731 = vsel %vm7729, %v7730, %v7728
        %v7732 = vclz %v7731
        %v7733 = vsub.s32 %v7732, 2
        %vm7734 = vcmp.gt.s32.totalorder 0, %v7733
        %v7735 = vsel %vm7734, 0, %v7733
        %v7736 = vsub.s32 32, %v7735
        %v7737 = vshll.u32 %v7728, %v7735
        %v7738 = vshrl.u32 %v7720, %v7736
        %v7739 = vor.u32 %v7737, %v7738
        %v7740 = vsub.s32 4294967266, %v7735
        %v7741 = vadd.s32 %v7740, 127
        %v7742 = vshll.u32 %v7741, 23
        %v7743 = vor.u32 4788187, %v7742
        %v7744 = vand.u32 2147483647, %v7743
        %v7746 = vcvt.s32.f32 %v7739
        %v7747 = vmul.f32 %v7746, %v7744
        %v7748 = vxor.u32 %v7747, 2147483648
        %v7749 = vsel %vm7666, %v7748, %v7747
        %v7750 = vsub.s32 4, %v7726
        %v7751 = vsel %vm7666, %v7750, %v7726
        %v7752 = vsel %vm7665, %v7323, %v7749
        %v7753 = vsel %vm7665, 0, %v7751
        %v7754 = vcosq.f32.pop %v7752
        %v7755 = vsinq.f32.pop %v7752
        %vm7756 = vweird.f32 %v7323
        %v7757 = vadd.s32 %v7753, 3
        %v7758 = vand.u32 %v7757, 3
        %vm7759 = vcmp.lt.s32.totalorder %v7758, 2
        %vm7760 = vcmp.eq.s32.totalorder %v7758, 0
        %v7761 = vxor.u32 %v7755, 2147483648
        %v7762 = vsel %vm7760, %v7754, %v7761
        %vm7763 = vcmp.eq.s32.totalorder %v7758, 2
        %v7764 = vxor.u32 %v7754, 2147483648
        %v7765 = vsel %vm7763, %v7764, %v7755
        %v7766 = vsel %vm7759, %v7762, %v7765
        %v7767 = vsel %vm7756, nan, %v7766
        %v7768 = vand.u32 2147483647, %v7324
        %vm7769 = vcmp.le.f32.partialorder %v7768, 0.7853982
        %vm7770 = vcmp.lt.s32.totalorder %v7324, 0
        %v7771 = vand.u32 %v7324, 2139095040
        %v7772 = vshrl.u32 %v7771, 23
        %v7773 = vsub.s32 %v7772, 127
        %v7774 = vand.u32 2147483647, %v7324
        %v7775 = vand.u32 %v7774, 8388607
        %v7776 = vor.u32 %v7775, 8388608
        %v7777 = vsub.s32 0, %v7776
        %v7778 = vadd.s32 %v7773, 1
        %vm7779 = vcmp.gt.s32.totalorder %v7778, 0
        %v7780 = vsel %vm7779, %v7778, 0
        %v7781 = vshrl.u32 %v7780, 5
        %v7782 = vand.u32 %v7780, 31
        %v7783 = vsub.s32 32, %v7782
        %v7784 = vshrl.u32 683565275, %v7783
        %v7785 = vshll.u32 683565275, %v7782
        %v7786 = vshrl.u32 2475754826, %v7783
        %v7787 = vor.u32 %v7785, %v7786
        %v7788 = vshll.u32 2475754826, %v7782
        %v7789 = vshrl.u32 2131351028, %v7783
        %v7790 = vor.u32 %v7788, %v7789
        %v7791 = vshll.u32 2131351028, %v7782
        %v7792 = vshrl.u32 2102212464, %v7783
        %v7793 = vor.u32 %v7791, %v7792
        %v7794 = vshll.u32 2102212464, %v7782
        %v7795 = vshrl.u32 920167782, %v7783
        %v7796 = vor.u32 %v7794, %v7795
        %v7797 = vshll.u32 920167782, %v7782
        %v7798 = vshrl.u32 1326507024, %v7783
        %v7799 = vor.u32 %v7797, %v7798
        %vm7800 = vcmp.lt.s32.totalorder %v7781, 1
        %vm7801 = vcmp.lt.s32.totalorder %v7781, 2
        %vm7802 = vcmp.lt.s32.totalorder %v7781, 3
        %vm7803 = vcmp.lt.s32.totalorder %v7781, 4
        %v7804 = vsel %vm7800, %v7784, %v7787
        %v7805 = vsel %vm7803, %v7793, 2102212464
        %v7806 = vsel %vm7802, %v7790, %v7805
        %v7807 = vsel %vm7801, %v7804, %v7806
        %v7808 = vsel %vm7800, %v7787, %v7790
        %v7809 = vsel %vm7803, %v7796, 920167782
        %v7810 = vsel %vm7802, %v7793, %v7809
        %v7811 = vsel %vm7801, %v7808, %v7810
        %v7812 = vsel %vm7800, %v7790, %v7793
        %v7813 = vsel %vm7803, %v7799, 1326507024
        %v7814 = vsel %vm7802, %v7796, %v7813
        %v7815 = vsel %vm7801, %v7812, %v7814
        %v7816 = vshll.u32 %v7776, 8
        %v7817 = vmul.u32.u64.compose %v7816, %v7815
        %v7818 = vextract.low.u32 %v7817
        %v7819 = vextract.high.u32 %v7817
        %v7820 = vmul.u32.u64.compose %v7816, %v7811
        %v7821 = vextract.low.u32 %v7820
        %v7822 = vextract.high.u32 %v7820
        %v7823 = vmul.u32 %v7816, %v7807
        %v7824 = vadd.s32 %v7819, %v7821
        %vm7825 = vc.u32 %v7819, %v7821
        %v7826 = vadd.s32 %v7822, 1
        %v7827 = vsel %vm7825, %v7826, %v7822
        %v7828 = vadd.s32 %v7823, %v7827
        %v7829 = vadd.s32 %v7828, 536870912
        %v7830 = vshrl.u32 %v7829, 30
        %v7831 = vshll.u32 %v7830, 30
        %v7832 = vsub.s32 %v7828, %v7831
        %vm7833 = vcmp.lt.s32.totalorder %v7832, 0
        %v7834 = vsub.s32 0, %v7832
        %v7835 = vsel %vm7833, %v7834, %v7832
        %v7836 = vclz %v7835
        %v7837 = vsub.s32 %v7836, 2
        %vm7838 = vcmp.gt.s32.totalorder 0, %v7837
        %v7839 = vsel %vm7838, 0, %v7837
        %v7840 = vsub.s32 32, %v7839
        %v7841 = vshll.u32 %v7832, %v7839
        %v7842 = vshrl.u32 %v7824, %v7840
        %v7843 = vor.u32 %v7841, %v7842
        %v7844 = vsub.s32 4294967266, %v7839
        %v7845 = vadd.s32 %v7844, 127
        %v7846 = vshll.u32 %v7845, 23
        %v7847 = vor.u32 4788187, %v7846
        %v7848 = vand.u32 2147483647, %v7847
        %v7850 = vcvt.s32.f32 %v7843
        %v7851 = vmul.f32 %v7850, %v7848
        %v7852 = vxor.u32 %v7851, 2147483648
        %v7853 = vsel %vm7770, %v7852, %v7851
        %v7854 = vsub.s32 4, %v7830
        %v7855 = vsel %vm7770, %v7854, %v7830
        %v7856 = vsel %vm7769, %v7324, %v7853
        %v7857 = vsel %vm7769, 0, %v7855
        %v7858 = vcosq.f32.pop %v7856
        %v7859 = vsinq.f32.pop %v7856
        %vm7860 = vweird.f32 %v7324
        %v7861 = vadd.s32 %v7857, 3
        %v7862 = vand.u32 %v7861, 3
        %vm7863 = vcmp.lt.s32.totalorder %v7862, 2
        %vm7864 = vcmp.eq.s32.totalorder %v7862, 0
        %v7865 = vxor.u32 %v7859, 2147483648
        %v7866 = vsel %vm7864, %v7858, %v7865
        %vm7867 = vcmp.eq.s32.totalorder %v7862, 2
        %v7868 = vxor.u32 %v7858, 2147483648
        %v7869 = vsel %vm7867, %v7868, %v7859
        %v7870 = vsel %vm7863, %v7866, %v7869
        %v7871 = vsel %vm7860, nan, %v7870
        %v7872 = vand.u32 2147483647, %v7325
        %vm7873 = vcmp.le.f32.partialorder %v7872, 0.7853982
        %vm7874 = vcmp.lt.s32.totalorder %v7325, 0
        %v7875 = vand.u32 %v7325, 2139095040
        %v7876 = vshrl.u32 %v7875, 23
        %v7877 = vsub.s32 %v7876, 127
        %v7878 = vand.u32 2147483647, %v7325
        %v7879 = vand.u32 %v7878, 8388607
        %v7880 = vor.u32 %v7879, 8388608
        %v7881 = vsub.s32 0, %v7880
        %v7882 = vadd.s32 %v7877, 1
        %vm7883 = vcmp.gt.s32.totalorder %v7882, 0
        %v7884 = vsel %vm7883, %v7882, 0
        %v7885 = vshrl.u32 %v7884, 5
        %v7886 = vand.u32 %v7884, 31
        %v7887 = vsub.s32 32, %v7886
        %v7888 = vshrl.u32 683565275, %v7887
        %v7889 = vshll.u32 683565275, %v7886
        %v7890 = vshrl.u32 2475754826, %v7887
        %v7891 = vor.u32 %v7889, %v7890
        %v7892 = vshll.u32 2475754826, %v7886
        %v7893 = vshrl.u32 2131351028, %v7887
        %v7894 = vor.u32 %v7892, %v7893
        %v7895 = vshll.u32 2131351028, %v7886
        %v7896 = vshrl.u32 2102212464, %v7887
        %v7897 = vor.u32 %v7895, %v7896
        %v7898 = vshll.u32 2102212464, %v7886
        %v7899 = vshrl.u32 920167782, %v7887
        %v7900 = vor.u32 %v7898, %v7899
        %v7901 = vshll.u32 920167782, %v7886
        %v7902 = vshrl.u32 1326507024, %v7887
        %v7903 = vor.u32 %v7901, %v7902
        %vm7904 = vcmp.lt.s32.totalorder %v7885, 1
        %vm7905 = vcmp.lt.s32.totalorder %v7885, 2
        %vm7906 = vcmp.lt.s32.totalorder %v7885, 3
        %vm7907 = vcmp.lt.s32.totalorder %v7885, 4
        %v7908 = vsel %vm7904, %v7888, %v7891
        %v7909 = vsel %vm7907, %v7897, 2102212464
        %v7910 = vsel %vm7906, %v7894, %v7909
        %v7911 = vsel %vm7905, %v7908, %v7910
        %v7912 = vsel %vm7904, %v7891, %v7894
        %v7913 = vsel %vm7907, %v7900, 920167782
        %v7914 = vsel %vm7906, %v7897, %v7913
        %v7915 = vsel %vm7905, %v7912, %v7914
        %v7916 = vsel %vm7904, %v7894, %v7897
        %v7917 = vsel %vm7907, %v7903, 1326507024
        %v7918 = vsel %vm7906, %v7900, %v7917
        %v7919 = vsel %vm7905, %v7916, %v7918
        %v7920 = vshll.u32 %v7880, 8
        %v7921 = vmul.u32.u64.compose %v7920, %v7919
        %v7922 = vextract.low.u32 %v7921
        %v7923 = vextract.high.u32 %v7921
        %v7924 = vmul.u32.u64.compose %v7920, %v7915
        %v7925 = vextract.low.u32 %v7924
        %v7926 = vextract.high.u32 %v7924
        %v7927 = vmul.u32 %v7920, %v7911
        %v7928 = vadd.s32 %v7923, %v7925
        %vm7929 = vc.u32 %v7923, %v7925
        %v7930 = vadd.s32 %v7926, 1
        %v7931 = vsel %vm7929, %v7930, %v7926
        %v7932 = vadd.s32 %v7927, %v7931
        %v7933 = vadd.s32 %v7932, 536870912
        %v7934 = vshrl.u32 %v7933, 30
        %v7935 = vshll.u32 %v7934, 30
        %v7936 = vsub.s32 %v7932, %v7935
        %vm7937 = vcmp.lt.s32.totalorder %v7936, 0
        %v7938 = vsub.s32 0, %v7936
        %v7939 = vsel %vm7937, %v7938, %v7936
        %v7940 = vclz %v7939
        %v7941 = vsub.s32 %v7940, 2
        %vm7942 = vcmp.gt.s32.totalorder 0, %v7941
        %v7943 = vsel %vm7942, 0, %v7941
        %v7944 = vsub.s32 32, %v7943
        %v7945 = vshll.u32 %v7936, %v7943
        %v7946 = vshrl.u32 %v7928, %v7944
        %v7947 = vor.u32 %v7945, %v7946
        %v7948 = vsub.s32 4294967266, %v7943
        %v7949 = vadd.s32 %v7948, 127
        %v7950 = vshll.u32 %v7949, 23
        %v7951 = vor.u32 4788187, %v7950
        %v7952 = vand.u32 2147483647, %v7951
        %v7954 = vcvt.s32.f32 %v7947
        %v7955 = vmul.f32 %v7954, %v7952
        %v7956 = vxor.u32 %v7955, 2147483648
        %v7957 = vsel %vm7874, %v7956, %v7955
        %v7958 = vsub.s32 4, %v7934
        %v7959 = vsel %vm7874, %v7958, %v7934
        %v7960 = vsel %vm7873, %v7325, %v7957
        %v7961 = vsel %vm7873, 0, %v7959
        %v7962 = vcosq.f32.pop %v7960
        %v7963 = vsinq.f32.pop %v7960
        %vm7964 = vweird.f32 %v7325
        %v7965 = vadd.s32 %v7961, 3
        %v7966 = vand.u32 %v7965, 3
        %vm7967 = vcmp.lt.s32.totalorder %v7966, 2
        %vm7968 = vcmp.eq.s32.totalorder %v7966, 0
        %v7969 = vxor.u32 %v7963, 2147483648
        %v7970 = vsel %vm7968, %v7962, %v7969
        %vm7971 = vcmp.eq.s32.totalorder %v7966, 2
        %v7972 = vxor.u32 %v7962, 2147483648
        %v7973 = vsel %vm7971, %v7972, %v7963
        %v7974 = vsel %vm7967, %v7970, %v7973
        %v7975 = vsel %vm7964, nan, %v7974
        %v7976 = vand.u32 2147483647, %v7326
        %vm7977 = vcmp.le.f32.partialorder %v7976, 0.7853982
        %vm7978 = vcmp.lt.s32.totalorder %v7326, 0
        %v7979 = vand.u32 %v7326, 2139095040
        %v7980 = vshrl.u32 %v7979, 23
        %v7981 = vsub.s32 %v7980, 127
        %v7982 = vand.u32 2147483647, %v7326
        %v7983 = vand.u32 %v7982, 8388607
        %v7984 = vor.u32 %v7983, 8388608
        %v7985 = vsub.s32 0, %v7984
        %v7986 = vadd.s32 %v7981, 1
        %vm7987 = vcmp.gt.s32.totalorder %v7986, 0
        %v7988 = vsel %vm7987, %v7986, 0
        %v7989 = vshrl.u32 %v7988, 5
        %v7990 = vand.u32 %v7988, 31
        %v7991 = vsub.s32 32, %v7990
        %v7992 = vshrl.u32 683565275, %v7991
        %v7993 = vshll.u32 683565275, %v7990
        %v7994 = vshrl.u32 2475754826, %v7991
        %v7995 = vor.u32 %v7993, %v7994
        %v7996 = vshll.u32 2475754826, %v7990
        %v7997 = vshrl.u32 2131351028, %v7991
        %v7998 = vor.u32 %v7996, %v7997
        %v7999 = vshll.u32 2131351028, %v7990
        %v8000 = vshrl.u32 2102212464, %v7991
        %v8001 = vor.u32 %v7999, %v8000
        %v8002 = vshll.u32 2102212464, %v7990
        %v8003 = vshrl.u32 920167782, %v7991
        %v8004 = vor.u32 %v8002, %v8003
        %v8005 = vshll.u32 920167782, %v7990
        %v8006 = vshrl.u32 1326507024, %v7991
        %v8007 = vor.u32 %v8005, %v8006
        %vm8008 = vcmp.lt.s32.totalorder %v7989, 1
        %vm8009 = vcmp.lt.s32.totalorder %v7989, 2
        %vm8010 = vcmp.lt.s32.totalorder %v7989, 3
        %vm8011 = vcmp.lt.s32.totalorder %v7989, 4
        %v8012 = vsel %vm8008, %v7992, %v7995
        %v8013 = vsel %vm8011, %v8001, 2102212464
        %v8014 = vsel %vm8010, %v7998, %v8013
        %v8015 = vsel %vm8009, %v8012, %v8014
        %v8016 = vsel %vm8008, %v7995, %v7998
        %v8017 = vsel %vm8011, %v8004, 920167782
        %v8018 = vsel %vm8010, %v8001, %v8017
        %v8019 = vsel %vm8009, %v8016, %v8018
        %v8020 = vsel %vm8008, %v7998, %v8001
        %v8021 = vsel %vm8011, %v8007, 1326507024
        %v8022 = vsel %vm8010, %v8004, %v8021
        %v8023 = vsel %vm8009, %v8020, %v8022
        %v8024 = vshll.u32 %v7984, 8
        %v8025 = vmul.u32.u64.compose %v8024, %v8023
        %v8026 = vextract.low.u32 %v8025
        %v8027 = vextract.high.u32 %v8025
        %v8028 = vmul.u32.u64.compose %v8024, %v8019
        %v8029 = vextract.low.u32 %v8028
        %v8030 = vextract.high.u32 %v8028
        %v8031 = vmul.u32 %v8024, %v8015
        %v8032 = vadd.s32 %v8027, %v8029
        %vm8033 = vc.u32 %v8027, %v8029
        %v8034 = vadd.s32 %v8030, 1
        %v8035 = vsel %vm8033, %v8034, %v8030
        %v8036 = vadd.s32 %v8031, %v8035
        %v8037 = vadd.s32 %v8036, 536870912
        %v8038 = vshrl.u32 %v8037, 30
        %v8039 = vshll.u32 %v8038, 30
        %v8040 = vsub.s32 %v8036, %v8039
        %vm8041 = vcmp.lt.s32.totalorder %v8040, 0
        %v8042 = vsub.s32 0, %v8040
        %v8043 = vsel %vm8041, %v8042, %v8040
        %v8044 = vclz %v8043
        %v8045 = vsub.s32 %v8044, 2
        %vm8046 = vcmp.gt.s32.totalorder 0, %v8045
        %v8047 = vsel %vm8046, 0, %v8045
        %v8048 = vsub.s32 32, %v8047
        %v8049 = vshll.u32 %v8040, %v8047
        %v8050 = vshrl.u32 %v8032, %v8048
        %v8051 = vor.u32 %v8049, %v8050
        %v8052 = vsub.s32 4294967266, %v8047
        %v8053 = vadd.s32 %v8052, 127
        %v8054 = vshll.u32 %v8053, 23
        %v8055 = vor.u32 4788187, %v8054
        %v8056 = vand.u32 2147483647, %v8055
        %v8058 = vcvt.s32.f32 %v8051
        %v8059 = vmul.f32 %v8058, %v8056
        %v8060 = vxor.u32 %v8059, 2147483648
        %v8061 = vsel %vm7978, %v8060, %v8059
        %v8062 = vsub.s32 4, %v8038
        %v8063 = vsel %vm7978, %v8062, %v8038
        %v8064 = vsel %vm7977, %v7326, %v8061
        %v8065 = vsel %vm7977, 0, %v8063
        %v8066 = vcosq.f32.pop %v8064
        %v8067 = vsinq.f32.pop %v8064
        %vm8068 = vweird.f32 %v7326
        %v8069 = vadd.s32 %v8065, 3
        %v8070 = vand.u32 %v8069, 3
        %vm8071 = vcmp.lt.s32.totalorder %v8070, 2
        %vm8072 = vcmp.eq.s32.totalorder %v8070, 0
        %v8073 = vxor.u32 %v8067, 2147483648
        %v8074 = vsel %vm8072, %v8066, %v8073
        %vm8075 = vcmp.eq.s32.totalorder %v8070, 2
        %v8076 = vxor.u32 %v8066, 2147483648
        %v8077 = vsel %vm8075, %v8076, %v8067
        %v8078 = vsel %vm8071, %v8074, %v8077
        %v8079 = vsel %vm8068, nan, %v8078
        %v8080 = vand.u32 2147483647, %v7327
        %vm8081 = vcmp.le.f32.partialorder %v8080, 0.7853982
        %vm8082 = vcmp.lt.s32.totalorder %v7327, 0
        %v8083 = vand.u32 %v7327, 2139095040
        %v8084 = vshrl.u32 %v8083, 23
        %v8085 = vsub.s32 %v8084, 127
        %v8086 = vand.u32 2147483647, %v7327
        %v8087 = vand.u32 %v8086, 8388607
        %v8088 = vor.u32 %v8087, 8388608
        %v8089 = vsub.s32 0, %v8088
        %v8090 = vadd.s32 %v8085, 1
        %vm8091 = vcmp.gt.s32.totalorder %v8090, 0
        %v8092 = vsel %vm8091, %v8090, 0
        %v8093 = vshrl.u32 %v8092, 5
        %v8094 = vand.u32 %v8092, 31
        %v8095 = vsub.s32 32, %v8094
        %v8096 = vshrl.u32 683565275, %v8095
        %v8097 = vshll.u32 683565275, %v8094
        %v8098 = vshrl.u32 2475754826, %v8095
        %v8099 = vor.u32 %v8097, %v8098
        %v8100 = vshll.u32 2475754826, %v8094
        %v8101 = vshrl.u32 2131351028, %v8095
        %v8102 = vor.u32 %v8100, %v8101
        %v8103 = vshll.u32 2131351028, %v8094
        %v8104 = vshrl.u32 2102212464, %v8095
        %v8105 = vor.u32 %v8103, %v8104
        %v8106 = vshll.u32 2102212464, %v8094
        %v8107 = vshrl.u32 920167782, %v8095
        %v8108 = vor.u32 %v8106, %v8107
        %v8109 = vshll.u32 920167782, %v8094
        %v8110 = vshrl.u32 1326507024, %v8095
        %v8111 = vor.u32 %v8109, %v8110
        %vm8112 = vcmp.lt.s32.totalorder %v8093, 1
        %vm8113 = vcmp.lt.s32.totalorder %v8093, 2
        %vm8114 = vcmp.lt.s32.totalorder %v8093, 3
        %vm8115 = vcmp.lt.s32.totalorder %v8093, 4
        %v8116 = vsel %vm8112, %v8096, %v8099
        %v8117 = vsel %vm8115, %v8105, 2102212464
        %v8118 = vsel %vm8114, %v8102, %v8117
        %v8119 = vsel %vm8113, %v8116, %v8118
        %v8120 = vsel %vm8112, %v8099, %v8102
        %v8121 = vsel %vm8115, %v8108, 920167782
        %v8122 = vsel %vm8114, %v8105, %v8121
        %v8123 = vsel %vm8113, %v8120, %v8122
        %v8124 = vsel %vm8112, %v8102, %v8105
        %v8125 = vsel %vm8115, %v8111, 1326507024
        %v8126 = vsel %vm8114, %v8108, %v8125
        %v8127 = vsel %vm8113, %v8124, %v8126
        %v8128 = vshll.u32 %v8088, 8
        %v8129 = vmul.u32.u64.compose %v8128, %v8127
        %v8130 = vextract.low.u32 %v8129
        %v8131 = vextract.high.u32 %v8129
        %v8132 = vmul.u32.u64.compose %v8128, %v8123
        %v8133 = vextract.low.u32 %v8132
        %v8134 = vextract.high.u32 %v8132
        %v8135 = vmul.u32 %v8128, %v8119
        %v8136 = vadd.s32 %v8131, %v8133
        %vm8137 = vc.u32 %v8131, %v8133
        %v8138 = vadd.s32 %v8134, 1
        %v8139 = vsel %vm8137, %v8138, %v8134
        %v8140 = vadd.s32 %v8135, %v8139
        %v8141 = vadd.s32 %v8140, 536870912
        %v8142 = vshrl.u32 %v8141, 30
        %v8143 = vshll.u32 %v8142, 30
        %v8144 = vsub.s32 %v8140, %v8143
        %vm8145 = vcmp.lt.s32.totalorder %v8144, 0
        %v8146 = vsub.s32 0, %v8144
        %v8147 = vsel %vm8145, %v8146, %v8144
        %v8148 = vclz %v8147
        %v8149 = vsub.s32 %v8148, 2
        %vm8150 = vcmp.gt.s32.totalorder 0, %v8149
        %v8151 = vsel %vm8150, 0, %v8149
        %v8152 = vsub.s32 32, %v8151
        %v8153 = vshll.u32 %v8144, %v8151
        %v8154 = vshrl.u32 %v8136, %v8152
        %v8155 = vor.u32 %v8153, %v8154
        %v8156 = vsub.s32 4294967266, %v8151
        %v8157 = vadd.s32 %v8156, 127
        %v8158 = vshll.u32 %v8157, 23
        %v8159 = vor.u32 4788187, %v8158
        %v8160 = vand.u32 2147483647, %v8159
        %v8162 = vcvt.s32.f32 %v8155
        %v8163 = vmul.f32 %v8162, %v8160
        %v8164 = vxor.u32 %v8163, 2147483648
        %v8165 = vsel %vm8082, %v8164, %v8163
        %v8166 = vsub.s32 4, %v8142
        %v8167 = vsel %vm8082, %v8166, %v8142
        %v8168 = vsel %vm8081, %v7327, %v8165
        %v8169 = vsel %vm8081, 0, %v8167
        %v8170 = vcosq.f32.pop %v8168
        %v8171 = vsinq.f32.pop %v8168
        %vm8172 = vweird.f32 %v7327
        %v8173 = vadd.s32 %v8169, 3
        %v8174 = vand.u32 %v8173, 3
        %vm8175 = vcmp.lt.s32.totalorder %v8174, 2
        %vm8176 = vcmp.eq.s32.totalorder %v8174, 0
        %v8177 = vxor.u32 %v8171, 2147483648
        %v8178 = vsel %vm8176, %v8170, %v8177
        %vm8179 = vcmp.eq.s32.totalorder %v8174, 2
        %v8180 = vxor.u32 %v8170, 2147483648
        %v8181 = vsel %vm8179, %v8180, %v8171
        %v8182 = vsel %vm8175, %v8178, %v8181
        %v8183 = vsel %vm8172, nan, %v8182
        %v8184 = vand.u32 2147483647, %v7328
        %vm8185 = vcmp.le.f32.partialorder %v8184, 0.7853982
        %vm8186 = vcmp.lt.s32.totalorder %v7328, 0
        %v8187 = vand.u32 %v7328, 2139095040
        %v8188 = vshrl.u32 %v8187, 23
        %v8189 = vsub.s32 %v8188, 127
        %v8190 = vand.u32 2147483647, %v7328
        %v8191 = vand.u32 %v8190, 8388607
        %v8192 = vor.u32 %v8191, 8388608
        %v8193 = vsub.s32 0, %v8192
        %v8194 = vadd.s32 %v8189, 1
        %vm8195 = vcmp.gt.s32.totalorder %v8194, 0
        %v8196 = vsel %vm8195, %v8194, 0
        %v8197 = vshrl.u32 %v8196, 5
        %v8198 = vand.u32 %v8196, 31
        %v8199 = vsub.s32 32, %v8198
        %v8200 = vshrl.u32 683565275, %v8199
        %v8201 = vshll.u32 683565275, %v8198
        %v8202 = vshrl.u32 2475754826, %v8199
        %v8203 = vor.u32 %v8201, %v8202
        %v8204 = vshll.u32 2475754826, %v8198
        %v8205 = vshrl.u32 2131351028, %v8199
        %v8206 = vor.u32 %v8204, %v8205
        %v8207 = vshll.u32 2131351028, %v8198
        %v8208 = vshrl.u32 2102212464, %v8199
        %v8209 = vor.u32 %v8207, %v8208
        %v8210 = vshll.u32 2102212464, %v8198
        %v8211 = vshrl.u32 920167782, %v8199
        %v8212 = vor.u32 %v8210, %v8211
        %v8213 = vshll.u32 920167782, %v8198
        %v8214 = vshrl.u32 1326507024, %v8199
        %v8215 = vor.u32 %v8213, %v8214
        %vm8216 = vcmp.lt.s32.totalorder %v8197, 1
        %vm8217 = vcmp.lt.s32.totalorder %v8197, 2
        %vm8218 = vcmp.lt.s32.totalorder %v8197, 3
        %vm8219 = vcmp.lt.s32.totalorder %v8197, 4
        %v8220 = vsel %vm8216, %v8200, %v8203
        %v8221 = vsel %vm8219, %v8209, 2102212464
        %v8222 = vsel %vm8218, %v8206, %v8221
        %v8223 = vsel %vm8217, %v8220, %v8222
        %v8224 = vsel %vm8216, %v8203, %v8206
        %v8225 = vsel %vm8219, %v8212, 920167782
        %v8226 = vsel %vm8218, %v8209, %v8225
        %v8227 = vsel %vm8217, %v8224, %v8226
        %v8228 = vsel %vm8216, %v8206, %v8209
        %v8229 = vsel %vm8219, %v8215, 1326507024
        %v8230 = vsel %vm8218, %v8212, %v8229
        %v8231 = vsel %vm8217, %v8228, %v8230
        %v8232 = vshll.u32 %v8192, 8
        %v8233 = vmul.u32.u64.compose %v8232, %v8231
        %v8234 = vextract.low.u32 %v8233
        %v8235 = vextract.high.u32 %v8233
        %v8236 = vmul.u32.u64.compose %v8232, %v8227
        %v8237 = vextract.low.u32 %v8236
        %v8238 = vextract.high.u32 %v8236
        %v8239 = vmul.u32 %v8232, %v8223
        %v8240 = vadd.s32 %v8235, %v8237
        %vm8241 = vc.u32 %v8235, %v8237
        %v8242 = vadd.s32 %v8238, 1
        %v8243 = vsel %vm8241, %v8242, %v8238
        %v8244 = vadd.s32 %v8239, %v8243
        %v8245 = vadd.s32 %v8244, 536870912
        %v8246 = vshrl.u32 %v8245, 30
        %v8247 = vshll.u32 %v8246, 30
        %v8248 = vsub.s32 %v8244, %v8247
        %vm8249 = vcmp.lt.s32.totalorder %v8248, 0
        %v8250 = vsub.s32 0, %v8248
        %v8251 = vsel %vm8249, %v8250, %v8248
        %v8252 = vclz %v8251
        %v8253 = vsub.s32 %v8252, 2
        %vm8254 = vcmp.gt.s32.totalorder 0, %v8253
        %v8255 = vsel %vm8254, 0, %v8253
        %v8256 = vsub.s32 32, %v8255
        %v8257 = vshll.u32 %v8248, %v8255
        %v8258 = vshrl.u32 %v8240, %v8256
        %v8259 = vor.u32 %v8257, %v8258
        %v8260 = vsub.s32 4294967266, %v8255
        %v8261 = vadd.s32 %v8260, 127
        %v8262 = vshll.u32 %v8261, 23
        %v8263 = vor.u32 4788187, %v8262
        %v8264 = vand.u32 2147483647, %v8263
        %v8266 = vcvt.s32.f32 %v8259
        %v8267 = vmul.f32 %v8266, %v8264
        %v8268 = vxor.u32 %v8267, 2147483648
        %v8269 = vsel %vm8186, %v8268, %v8267
        %v8270 = vsub.s32 4, %v8246
        %v8271 = vsel %vm8186, %v8270, %v8246
        %v8272 = vsel %vm8185, %v7328, %v8269
        %v8273 = vsel %vm8185, 0, %v8271
        %v8274 = vcosq.f32.pop %v8272
        %v8275 = vsinq.f32.pop %v8272
        %vm8276 = vweird.f32 %v7328
        %v8277 = vadd.s32 %v8273, 3
        %v8278 = vand.u32 %v8277, 3
        %vm8279 = vcmp.lt.s32.totalorder %v8278, 2
        %vm8280 = vcmp.eq.s32.totalorder %v8278, 0
        %v8281 = vxor.u32 %v8275, 2147483648
        %v8282 = vsel %vm8280, %v8274, %v8281
        %vm8283 = vcmp.eq.s32.totalorder %v8278, 2
        %v8284 = vxor.u32 %v8274, 2147483648
        %v8285 = vsel %vm8283, %v8284, %v8275
        %v8286 = vsel %vm8279, %v8282, %v8285
        %v8287 = vsel %vm8276, nan, %v8286
        %v8288 = vand.u32 2147483647, %v7329
        %vm8289 = vcmp.le.f32.partialorder %v8288, 0.7853982
        %vm8290 = vcmp.lt.s32.totalorder %v7329, 0
        %v8291 = vand.u32 %v7329, 2139095040
        %v8292 = vshrl.u32 %v8291, 23
        %v8293 = vsub.s32 %v8292, 127
        %v8294 = vand.u32 2147483647, %v7329
        %v8295 = vand.u32 %v8294, 8388607
        %v8296 = vor.u32 %v8295, 8388608
        %v8297 = vsub.s32 0, %v8296
        %v8298 = vadd.s32 %v8293, 1
        %vm8299 = vcmp.gt.s32.totalorder %v8298, 0
        %v8300 = vsel %vm8299, %v8298, 0
        %v8301 = vshrl.u32 %v8300, 5
        %v8302 = vand.u32 %v8300, 31
        %v8303 = vsub.s32 32, %v8302
        %v8304 = vshrl.u32 683565275, %v8303
        %v8305 = vshll.u32 683565275, %v8302
        %v8306 = vshrl.u32 2475754826, %v8303
        %v8307 = vor.u32 %v8305, %v8306
        %v8308 = vshll.u32 2475754826, %v8302
        %v8309 = vshrl.u32 2131351028, %v8303
        %v8310 = vor.u32 %v8308, %v8309
        %v8311 = vshll.u32 2131351028, %v8302
        %v8312 = vshrl.u32 2102212464, %v8303
        %v8313 = vor.u32 %v8311, %v8312
        %v8314 = vshll.u32 2102212464, %v8302
        %v8315 = vshrl.u32 920167782, %v8303
        %v8316 = vor.u32 %v8314, %v8315
        %v8317 = vshll.u32 920167782, %v8302
        %v8318 = vshrl.u32 1326507024, %v8303
        %v8319 = vor.u32 %v8317, %v8318
        %vm8320 = vcmp.lt.s32.totalorder %v8301, 1
        %vm8321 = vcmp.lt.s32.totalorder %v8301, 2
        %vm8322 = vcmp.lt.s32.totalorder %v8301, 3
        %vm8323 = vcmp.lt.s32.totalorder %v8301, 4
        %v8324 = vsel %vm8320, %v8304, %v8307
        %v8325 = vsel %vm8323, %v8313, 2102212464
        %v8326 = vsel %vm8322, %v8310, %v8325
        %v8327 = vsel %vm8321, %v8324, %v8326
        %v8328 = vsel %vm8320, %v8307, %v8310
        %v8329 = vsel %vm8323, %v8316, 920167782
        %v8330 = vsel %vm8322, %v8313, %v8329
        %v8331 = vsel %vm8321, %v8328, %v8330
        %v8332 = vsel %vm8320, %v8310, %v8313
        %v8333 = vsel %vm8323, %v8319, 1326507024
        %v8334 = vsel %vm8322, %v8316, %v8333
        %v8335 = vsel %vm8321, %v8332, %v8334
        %v8336 = vshll.u32 %v8296, 8
        %v8337 = vmul.u32.u64.compose %v8336, %v8335
        %v8338 = vextract.low.u32 %v8337
        %v8339 = vextract.high.u32 %v8337
        %v8340 = vmul.u32.u64.compose %v8336, %v8331
        %v8341 = vextract.low.u32 %v8340
        %v8342 = vextract.high.u32 %v8340
        %v8343 = vmul.u32 %v8336, %v8327
        %v8344 = vadd.s32 %v8339, %v8341
        %vm8345 = vc.u32 %v8339, %v8341
        %v8346 = vadd.s32 %v8342, 1
        %v8347 = vsel %vm8345, %v8346, %v8342
        %v8348 = vadd.s32 %v8343, %v8347
        %v8349 = vadd.s32 %v8348, 536870912
        %v8350 = vshrl.u32 %v8349, 30
        %v8351 = vshll.u32 %v8350, 30
        %v8352 = vsub.s32 %v8348, %v8351
        %vm8353 = vcmp.lt.s32.totalorder %v8352, 0
        %v8354 = vsub.s32 0, %v8352
        %v8355 = vsel %vm8353, %v8354, %v8352
        %v8356 = vclz %v8355
        %v8357 = vsub.s32 %v8356, 2
        %vm8358 = vcmp.gt.s32.totalorder 0, %v8357
        %v8359 = vsel %vm8358, 0, %v8357
        %v8360 = vsub.s32 32, %v8359
        %v8361 = vshll.u32 %v8352, %v8359
        %v8362 = vshrl.u32 %v8344, %v8360
        %v8363 = vor.u32 %v8361, %v8362
        %v8364 = vsub.s32 4294967266, %v8359
        %v8365 = vadd.s32 %v8364, 127
        %v8366 = vshll.u32 %v8365, 23
        %v8367 = vor.u32 4788187, %v8366
        %v8368 = vand.u32 2147483647, %v8367
        %v8370 = vcvt.s32.f32 %v8363
        %v8371 = vmul.f32 %v8370, %v8368
        %v8372 = vxor.u32 %v8371, 2147483648
        %v8373 = vsel %vm8290, %v8372, %v8371
        %v8374 = vsub.s32 4, %v8350
        %v8375 = vsel %vm8290, %v8374, %v8350
        %v8376 = vsel %vm8289, %v7329, %v8373
        %v8377 = vsel %vm8289, 0, %v8375
        %v8378 = vcosq.f32.pop %v8376
        %v8379 = vsinq.f32.pop %v8376
        %vm8380 = vweird.f32 %v7329
        %v8381 = vadd.s32 %v8377, 3
        %v8382 = vand.u32 %v8381, 3
        %vm8383 = vcmp.lt.s32.totalorder %v8382, 2
        %vm8384 = vcmp.eq.s32.totalorder %v8382, 0
        %v8385 = vxor.u32 %v8379, 2147483648
        %v8386 = vsel %vm8384, %v8378, %v8385
        %vm8387 = vcmp.eq.s32.totalorder %v8382, 2
        %v8388 = vxor.u32 %v8378, 2147483648
        %v8389 = vsel %vm8387, %v8388, %v8379
        %v8390 = vsel %vm8383, %v8386, %v8389
        %v8391 = vsel %vm8380, nan, %v8390
        %v8392 = vand.u32 2147483647, %v7330
        %vm8393 = vcmp.le.f32.partialorder %v8392, 0.7853982
        %vm8394 = vcmp.lt.s32.totalorder %v7330, 0
        %v8395 = vand.u32 %v7330, 2139095040
        %v8396 = vshrl.u32 %v8395, 23
        %v8397 = vsub.s32 %v8396, 127
        %v8398 = vand.u32 2147483647, %v7330
        %v8399 = vand.u32 %v8398, 8388607
        %v8400 = vor.u32 %v8399, 8388608
        %v8401 = vsub.s32 0, %v8400
        %v8402 = vadd.s32 %v8397, 1
        %vm8403 = vcmp.gt.s32.totalorder %v8402, 0
        %v8404 = vsel %vm8403, %v8402, 0
        %v8405 = vshrl.u32 %v8404, 5
        %v8406 = vand.u32 %v8404, 31
        %v8407 = vsub.s32 32, %v8406
        %v8408 = vshrl.u32 683565275, %v8407
        %v8409 = vshll.u32 683565275, %v8406
        %v8410 = vshrl.u32 2475754826, %v8407
        %v8411 = vor.u32 %v8409, %v8410
        %v8412 = vshll.u32 2475754826, %v8406
        %v8413 = vshrl.u32 2131351028, %v8407
        %v8414 = vor.u32 %v8412, %v8413
        %v8415 = vshll.u32 2131351028, %v8406
        %v8416 = vshrl.u32 2102212464, %v8407
        %v8417 = vor.u32 %v8415, %v8416
        %v8418 = vshll.u32 2102212464, %v8406
        %v8419 = vshrl.u32 920167782, %v8407
        %v8420 = vor.u32 %v8418, %v8419
        %v8421 = vshll.u32 920167782, %v8406
        %v8422 = vshrl.u32 1326507024, %v8407
        %v8423 = vor.u32 %v8421, %v8422
        %vm8424 = vcmp.lt.s32.totalorder %v8405, 1
        %vm8425 = vcmp.lt.s32.totalorder %v8405, 2
        %vm8426 = vcmp.lt.s32.totalorder %v8405, 3
        %vm8427 = vcmp.lt.s32.totalorder %v8405, 4
        %v8428 = vsel %vm8424, %v8408, %v8411
        %v8429 = vsel %vm8427, %v8417, 2102212464
        %v8430 = vsel %vm8426, %v8414, %v8429
        %v8431 = vsel %vm8425, %v8428, %v8430
        %v8432 = vsel %vm8424, %v8411, %v8414
        %v8433 = vsel %vm8427, %v8420, 920167782
        %v8434 = vsel %vm8426, %v8417, %v8433
        %v8435 = vsel %vm8425, %v8432, %v8434
        %v8436 = vsel %vm8424, %v8414, %v8417
        %v8437 = vsel %vm8427, %v8423, 1326507024
        %v8438 = vsel %vm8426, %v8420, %v8437
        %v8439 = vsel %vm8425, %v8436, %v8438
        %v8440 = vshll.u32 %v8400, 8
        %v8441 = vmul.u32.u64.compose %v8440, %v8439
        %v8442 = vextract.low.u32 %v8441
        %v8443 = vextract.high.u32 %v8441
        %v8444 = vmul.u32.u64.compose %v8440, %v8435
        %v8445 = vextract.low.u32 %v8444
        %v8446 = vextract.high.u32 %v8444
        %v8447 = vmul.u32 %v8440, %v8431
        %v8448 = vadd.s32 %v8443, %v8445
        %vm8449 = vc.u32 %v8443, %v8445
        %v8450 = vadd.s32 %v8446, 1
        %v8451 = vsel %vm8449, %v8450, %v8446
        %v8452 = vadd.s32 %v8447, %v8451
        %v8453 = vadd.s32 %v8452, 536870912
        %v8454 = vshrl.u32 %v8453, 30
        %v8455 = vshll.u32 %v8454, 30
        %v8456 = vsub.s32 %v8452, %v8455
        %vm8457 = vcmp.lt.s32.totalorder %v8456, 0
        %v8458 = vsub.s32 0, %v8456
        %v8459 = vsel %vm8457, %v8458, %v8456
        %v8460 = vclz %v8459
        %v8461 = vsub.s32 %v8460, 2
        %vm8462 = vcmp.gt.s32.totalorder 0, %v8461
        %v8463 = vsel %vm8462, 0, %v8461
        %v8464 = vsub.s32 32, %v8463
        %v8465 = vshll.u32 %v8456, %v8463
        %v8466 = vshrl.u32 %v8448, %v8464
        %v8467 = vor.u32 %v8465, %v8466
        %v8468 = vsub.s32 4294967266, %v8463
        %v8469 = vadd.s32 %v8468, 127
        %v8470 = vshll.u32 %v8469, 23
        %v8471 = vor.u32 4788187, %v8470
        %v8472 = vand.u32 2147483647, %v8471
        %v8474 = vcvt.s32.f32 %v8467
        %v8475 = vmul.f32 %v8474, %v8472
        %v8476 = vxor.u32 %v8475, 2147483648
        %v8477 = vsel %vm8394, %v8476, %v8475
        %v8478 = vsub.s32 4, %v8454
        %v8479 = vsel %vm8394, %v8478, %v8454
        %v8480 = vsel %vm8393, %v7330, %v8477
        %v8481 = vsel %vm8393, 0, %v8479
        %v8482 = vcosq.f32.pop %v8480
        %v8483 = vsinq.f32.pop %v8480
        %vm8484 = vweird.f32 %v7330
        %v8485 = vadd.s32 %v8481, 3
        %v8486 = vand.u32 %v8485, 3
        %vm8487 = vcmp.lt.s32.totalorder %v8486, 2
        %vm8488 = vcmp.eq.s32.totalorder %v8486, 0
        %v8489 = vxor.u32 %v8483, 2147483648
        %v8490 = vsel %vm8488, %v8482, %v8489
        %vm8491 = vcmp.eq.s32.totalorder %v8486, 2
        %v8492 = vxor.u32 %v8482, 2147483648
        %v8493 = vsel %vm8491, %v8492, %v8483
        %v8494 = vsel %vm8487, %v8490, %v8493
        %v8495 = vsel %vm8484, nan, %v8494
        %v8496 = vand.u32 2147483647, %v7331
        %vm8497 = vcmp.le.f32.partialorder %v8496, 0.7853982
        %vm8498 = vcmp.lt.s32.totalorder %v7331, 0
        %v8499 = vand.u32 %v7331, 2139095040
        %v8500 = vshrl.u32 %v8499, 23
        %v8501 = vsub.s32 %v8500, 127
        %v8502 = vand.u32 2147483647, %v7331
        %v8503 = vand.u32 %v8502, 8388607
        %v8504 = vor.u32 %v8503, 8388608
        %v8505 = vsub.s32 0, %v8504
        %v8506 = vadd.s32 %v8501, 1
        %vm8507 = vcmp.gt.s32.totalorder %v8506, 0
        %v8508 = vsel %vm8507, %v8506, 0
        %v8509 = vshrl.u32 %v8508, 5
        %v8510 = vand.u32 %v8508, 31
        %v8511 = vsub.s32 32, %v8510
        %v8512 = vshrl.u32 683565275, %v8511
        %v8513 = vshll.u32 683565275, %v8510
        %v8514 = vshrl.u32 2475754826, %v8511
        %v8515 = vor.u32 %v8513, %v8514
        %v8516 = vshll.u32 2475754826, %v8510
        %v8517 = vshrl.u32 2131351028, %v8511
        %v8518 = vor.u32 %v8516, %v8517
        %v8519 = vshll.u32 2131351028, %v8510
        %v8520 = vshrl.u32 2102212464, %v8511
        %v8521 = vor.u32 %v8519, %v8520
        %v8522 = vshll.u32 2102212464, %v8510
        %v8523 = vshrl.u32 920167782, %v8511
        %v8524 = vor.u32 %v8522, %v8523
        %v8525 = vshll.u32 920167782, %v8510
        %v8526 = vshrl.u32 1326507024, %v8511
        %v8527 = vor.u32 %v8525, %v8526
        %vm8528 = vcmp.lt.s32.totalorder %v8509, 1
        %vm8529 = vcmp.lt.s32.totalorder %v8509, 2
        %vm8530 = vcmp.lt.s32.totalorder %v8509, 3
        %vm8531 = vcmp.lt.s32.totalorder %v8509, 4
        %v8532 = vsel %vm8528, %v8512, %v8515
        %v8533 = vsel %vm8531, %v8521, 2102212464
        %v8534 = vsel %vm8530, %v8518, %v8533
        %v8535 = vsel %vm8529, %v8532, %v8534
        %v8536 = vsel %vm8528, %v8515, %v8518
        %v8537 = vsel %vm8531, %v8524, 920167782
        %v8538 = vsel %vm8530, %v8521, %v8537
        %v8539 = vsel %vm8529, %v8536, %v8538
        %v8540 = vsel %vm8528, %v8518, %v8521
        %v8541 = vsel %vm8531, %v8527, 1326507024
        %v8542 = vsel %vm8530, %v8524, %v8541
        %v8543 = vsel %vm8529, %v8540, %v8542
        %v8544 = vshll.u32 %v8504, 8
        %v8545 = vmul.u32.u64.compose %v8544, %v8543
        %v8546 = vextract.low.u32 %v8545
        %v8547 = vextract.high.u32 %v8545
        %v8548 = vmul.u32.u64.compose %v8544, %v8539
        %v8549 = vextract.low.u32 %v8548
        %v8550 = vextract.high.u32 %v8548
        %v8551 = vmul.u32 %v8544, %v8535
        %v8552 = vadd.s32 %v8547, %v8549
        %vm8553 = vc.u32 %v8547, %v8549
        %v8554 = vadd.s32 %v8550, 1
        %v8555 = vsel %vm8553, %v8554, %v8550
        %v8556 = vadd.s32 %v8551, %v8555
        %v8557 = vadd.s32 %v8556, 536870912
        %v8558 = vshrl.u32 %v8557, 30
        %v8559 = vshll.u32 %v8558, 30
        %v8560 = vsub.s32 %v8556, %v8559
        %vm8561 = vcmp.lt.s32.totalorder %v8560, 0
        %v8562 = vsub.s32 0, %v8560
        %v8563 = vsel %vm8561, %v8562, %v8560
        %v8564 = vclz %v8563
        %v8565 = vsub.s32 %v8564, 2
        %vm8566 = vcmp.gt.s32.totalorder 0, %v8565
        %v8567 = vsel %vm8566, 0, %v8565
        %v8568 = vsub.s32 32, %v8567
        %v8569 = vshll.u32 %v8560, %v8567
        %v8570 = vshrl.u32 %v8552, %v8568
        %v8571 = vor.u32 %v8569, %v8570
        %v8572 = vsub.s32 4294967266, %v8567
        %v8573 = vadd.s32 %v8572, 127
        %v8574 = vshll.u32 %v8573, 23
        %v8575 = vor.u32 4788187, %v8574
        %v8576 = vand.u32 2147483647, %v8575
        %v8578 = vcvt.s32.f32 %v8571
        %v8579 = vmul.f32 %v8578, %v8576
        %v8580 = vxor.u32 %v8579, 2147483648
        %v8581 = vsel %vm8498, %v8580, %v8579
        %v8582 = vsub.s32 4, %v8558
        %v8583 = vsel %vm8498, %v8582, %v8558
        %v8584 = vsel %vm8497, %v7331, %v8581
        %v8585 = vsel %vm8497, 0, %v8583
        %v8586 = vcosq.f32.pop %v8584
        %v8587 = vsinq.f32.pop %v8584
        %vm8588 = vweird.f32 %v7331
        %v8589 = vadd.s32 %v8585, 3
        %v8590 = vand.u32 %v8589, 3
        %vm8591 = vcmp.lt.s32.totalorder %v8590, 2
        %vm8592 = vcmp.eq.s32.totalorder %v8590, 0
        %v8593 = vxor.u32 %v8587, 2147483648
        %v8594 = vsel %vm8592, %v8586, %v8593
        %vm8595 = vcmp.eq.s32.totalorder %v8590, 2
        %v8596 = vxor.u32 %v8586, 2147483648
        %v8597 = vsel %vm8595, %v8596, %v8587
        %v8598 = vsel %vm8591, %v8594, %v8597
        %v8599 = vsel %vm8588, nan, %v8598
        %v8600 = vand.u32 2147483647, %v7332
        %vm8601 = vcmp.le.f32.partialorder %v8600, 0.7853982
        %vm8602 = vcmp.lt.s32.totalorder %v7332, 0
        %v8603 = vand.u32 %v7332, 2139095040
        %v8604 = vshrl.u32 %v8603, 23
        %v8605 = vsub.s32 %v8604, 127
        %v8606 = vand.u32 2147483647, %v7332
        %v8607 = vand.u32 %v8606, 8388607
        %v8608 = vor.u32 %v8607, 8388608
        %v8609 = vsub.s32 0, %v8608
        %v8610 = vadd.s32 %v8605, 1
        %vm8611 = vcmp.gt.s32.totalorder %v8610, 0
        %v8612 = vsel %vm8611, %v8610, 0
        %v8613 = vshrl.u32 %v8612, 5
        %v8614 = vand.u32 %v8612, 31
        %v8615 = vsub.s32 32, %v8614
        %v8616 = vshrl.u32 683565275, %v8615
        %v8617 = vshll.u32 683565275, %v8614
        %v8618 = vshrl.u32 2475754826, %v8615
        %v8619 = vor.u32 %v8617, %v8618
        %v8620 = vshll.u32 2475754826, %v8614
        %v8621 = vshrl.u32 2131351028, %v8615
        %v8622 = vor.u32 %v8620, %v8621
        %v8623 = vshll.u32 2131351028, %v8614
        %v8624 = vshrl.u32 2102212464, %v8615
        %v8625 = vor.u32 %v8623, %v8624
        %v8626 = vshll.u32 2102212464, %v8614
        %v8627 = vshrl.u32 920167782, %v8615
        %v8628 = vor.u32 %v8626, %v8627
        %v8629 = vshll.u32 920167782, %v8614
        %v8630 = vshrl.u32 1326507024, %v8615
        %v8631 = vor.u32 %v8629, %v8630
        %vm8632 = vcmp.lt.s32.totalorder %v8613, 1
        %vm8633 = vcmp.lt.s32.totalorder %v8613, 2
        %vm8634 = vcmp.lt.s32.totalorder %v8613, 3
        %vm8635 = vcmp.lt.s32.totalorder %v8613, 4
        %v8636 = vsel %vm8632, %v8616, %v8619
        %v8637 = vsel %vm8635, %v8625, 2102212464
        %v8638 = vsel %vm8634, %v8622, %v8637
        %v8639 = vsel %vm8633, %v8636, %v8638
        %v8640 = vsel %vm8632, %v8619, %v8622
        %v8641 = vsel %vm8635, %v8628, 920167782
        %v8642 = vsel %vm8634, %v8625, %v8641
        %v8643 = vsel %vm8633, %v8640, %v8642
        %v8644 = vsel %vm8632, %v8622, %v8625
        %v8645 = vsel %vm8635, %v8631, 1326507024
        %v8646 = vsel %vm8634, %v8628, %v8645
        %v8647 = vsel %vm8633, %v8644, %v8646
        %v8648 = vshll.u32 %v8608, 8
        %v8649 = vmul.u32.u64.compose %v8648, %v8647
        %v8650 = vextract.low.u32 %v8649
        %v8651 = vextract.high.u32 %v8649
        %v8652 = vmul.u32.u64.compose %v8648, %v8643
        %v8653 = vextract.low.u32 %v8652
        %v8654 = vextract.high.u32 %v8652
        %v8655 = vmul.u32 %v8648, %v8639
        %v8656 = vadd.s32 %v8651, %v8653
        %vm8657 = vc.u32 %v8651, %v8653
        %v8658 = vadd.s32 %v8654, 1
        %v8659 = vsel %vm8657, %v8658, %v8654
        %v8660 = vadd.s32 %v8655, %v8659
        %v8661 = vadd.s32 %v8660, 536870912
        %v8662 = vshrl.u32 %v8661, 30
        %v8663 = vshll.u32 %v8662, 30
        %v8664 = vsub.s32 %v8660, %v8663
        %vm8665 = vcmp.lt.s32.totalorder %v8664, 0
        %v8666 = vsub.s32 0, %v8664
        %v8667 = vsel %vm8665, %v8666, %v8664
        %v8668 = vclz %v8667
        %v8669 = vsub.s32 %v8668, 2
        %vm8670 = vcmp.gt.s32.totalorder 0, %v8669
        %v8671 = vsel %vm8670, 0, %v8669
        %v8672 = vsub.s32 32, %v8671
        %v8673 = vshll.u32 %v8664, %v8671
        %v8674 = vshrl.u32 %v8656, %v8672
        %v8675 = vor.u32 %v8673, %v8674
        %v8676 = vsub.s32 4294967266, %v8671
        %v8677 = vadd.s32 %v8676, 127
        %v8678 = vshll.u32 %v8677, 23
        %v8679 = vor.u32 4788187, %v8678
        %v8680 = vand.u32 2147483647, %v8679
        %v8682 = vcvt.s32.f32 %v8675
        %v8683 = vmul.f32 %v8682, %v8680
        %v8684 = vxor.u32 %v8683, 2147483648
        %v8685 = vsel %vm8602, %v8684, %v8683
        %v8686 = vsub.s32 4, %v8662
        %v8687 = vsel %vm8602, %v8686, %v8662
        %v8688 = vsel %vm8601, %v7332, %v8685
        %v8689 = vsel %vm8601, 0, %v8687
        %v8690 = vcosq.f32.pop %v8688
        %v8691 = vsinq.f32.pop %v8688
        %vm8692 = vweird.f32 %v7332
        %v8693 = vadd.s32 %v8689, 3
        %v8694 = vand.u32 %v8693, 3
        %vm8695 = vcmp.lt.s32.totalorder %v8694, 2
        %vm8696 = vcmp.eq.s32.totalorder %v8694, 0
        %v8697 = vxor.u32 %v8691, 2147483648
        %v8698 = vsel %vm8696, %v8690, %v8697
        %vm8699 = vcmp.eq.s32.totalorder %v8694, 2
        %v8700 = vxor.u32 %v8690, 2147483648
        %v8701 = vsel %vm8699, %v8700, %v8691
        %v8702 = vsel %vm8695, %v8698, %v8701
        %v8703 = vsel %vm8692, nan, %v8702
        %v8704 = vand.u32 2147483647, %v7333
        %vm8705 = vcmp.le.f32.partialorder %v8704, 0.7853982
        %vm8706 = vcmp.lt.s32.totalorder %v7333, 0
        %v8707 = vand.u32 %v7333, 2139095040
        %v8708 = vshrl.u32 %v8707, 23
        %v8709 = vsub.s32 %v8708, 127
        %v8710 = vand.u32 2147483647, %v7333
        %v8711 = vand.u32 %v8710, 8388607
        %v8712 = vor.u32 %v8711, 8388608
        %v8713 = vsub.s32 0, %v8712
        %v8714 = vadd.s32 %v8709, 1
        %vm8715 = vcmp.gt.s32.totalorder %v8714, 0
        %v8716 = vsel %vm8715, %v8714, 0
        %v8717 = vshrl.u32 %v8716, 5
        %v8718 = vand.u32 %v8716, 31
        %v8719 = vsub.s32 32, %v8718
        %v8720 = vshrl.u32 683565275, %v8719
        %v8721 = vshll.u32 683565275, %v8718
        %v8722 = vshrl.u32 2475754826, %v8719
        %v8723 = vor.u32 %v8721, %v8722
        %v8724 = vshll.u32 2475754826, %v8718
        %v8725 = vshrl.u32 2131351028, %v8719
        %v8726 = vor.u32 %v8724, %v8725
        %v8727 = vshll.u32 2131351028, %v8718
        %v8728 = vshrl.u32 2102212464, %v8719
        %v8729 = vor.u32 %v8727, %v8728
        %v8730 = vshll.u32 2102212464, %v8718
        %v8731 = vshrl.u32 920167782, %v8719
        %v8732 = vor.u32 %v8730, %v8731
        %v8733 = vshll.u32 920167782, %v8718
        %v8734 = vshrl.u32 1326507024, %v8719
        %v8735 = vor.u32 %v8733, %v8734
        %vm8736 = vcmp.lt.s32.totalorder %v8717, 1
        %vm8737 = vcmp.lt.s32.totalorder %v8717, 2
        %vm8738 = vcmp.lt.s32.totalorder %v8717, 3
        %vm8739 = vcmp.lt.s32.totalorder %v8717, 4
        %v8740 = vsel %vm8736, %v8720, %v8723
        %v8741 = vsel %vm8739, %v8729, 2102212464
        %v8742 = vsel %vm8738, %v8726, %v8741
        %v8743 = vsel %vm8737, %v8740, %v8742
        %v8744 = vsel %vm8736, %v8723, %v8726
        %v8745 = vsel %vm8739, %v8732, 920167782
        %v8746 = vsel %vm8738, %v8729, %v8745
        %v8747 = vsel %vm8737, %v8744, %v8746
        %v8748 = vsel %vm8736, %v8726, %v8729
        %v8749 = vsel %vm8739, %v8735, 1326507024
        %v8750 = vsel %vm8738, %v8732, %v8749
        %v8751 = vsel %vm8737, %v8748, %v8750
        %v8752 = vshll.u32 %v8712, 8
        %v8753 = vmul.u32.u64.compose %v8752, %v8751
        %v8754 = vextract.low.u32 %v8753
        %v8755 = vextract.high.u32 %v8753
        %v8756 = vmul.u32.u64.compose %v8752, %v8747
        %v8757 = vextract.low.u32 %v8756
        %v8758 = vextract.high.u32 %v8756
        %v8759 = vmul.u32 %v8752, %v8743
        %v8760 = vadd.s32 %v8755, %v8757
        %vm8761 = vc.u32 %v8755, %v8757
        %v8762 = vadd.s32 %v8758, 1
        %v8763 = vsel %vm8761, %v8762, %v8758
        %v8764 = vadd.s32 %v8759, %v8763
        %v8765 = vadd.s32 %v8764, 536870912
        %v8766 = vshrl.u32 %v8765, 30
        %v8767 = vshll.u32 %v8766, 30
        %v8768 = vsub.s32 %v8764, %v8767
        %vm8769 = vcmp.lt.s32.totalorder %v8768, 0
        %v8770 = vsub.s32 0, %v8768
        %v8771 = vsel %vm8769, %v8770, %v8768
        %v8772 = vclz %v8771
        %v8773 = vsub.s32 %v8772, 2
        %vm8774 = vcmp.gt.s32.totalorder 0, %v8773
        %v8775 = vsel %vm8774, 0, %v8773
        %v8776 = vsub.s32 32, %v8775
        %v8777 = vshll.u32 %v8768, %v8775
        %v8778 = vshrl.u32 %v8760, %v8776
        %v8779 = vor.u32 %v8777, %v8778
        %v8780 = vsub.s32 4294967266, %v8775
        %v8781 = vadd.s32 %v8780, 127
        %v8782 = vshll.u32 %v8781, 23
        %v8783 = vor.u32 4788187, %v8782
        %v8784 = vand.u32 2147483647, %v8783
        %v8786 = vcvt.s32.f32 %v8779
        %v8787 = vmul.f32 %v8786, %v8784
        %v8788 = vxor.u32 %v8787, 2147483648
        %v8789 = vsel %vm8706, %v8788, %v8787
        %v8790 = vsub.s32 4, %v8766
        %v8791 = vsel %vm8706, %v8790, %v8766
        %v8792 = vsel %vm8705, %v7333, %v8789
        %v8793 = vsel %vm8705, 0, %v8791
        %v8794 = vcosq.f32.pop %v8792
        %v8795 = vsinq.f32.pop %v8792
        %vm8796 = vweird.f32 %v7333
        %v8797 = vadd.s32 %v8793, 3
        %v8798 = vand.u32 %v8797, 3
        %vm8799 = vcmp.lt.s32.totalorder %v8798, 2
        %vm8800 = vcmp.eq.s32.totalorder %v8798, 0
        %v8801 = vxor.u32 %v8795, 2147483648
        %v8802 = vsel %vm8800, %v8794, %v8801
        %vm8803 = vcmp.eq.s32.totalorder %v8798, 2
        %v8804 = vxor.u32 %v8794, 2147483648
        %v8805 = vsel %vm8803, %v8804, %v8795
        %v8806 = vsel %vm8799, %v8802, %v8805
        %v8807 = vsel %vm8796, nan, %v8806
        %v8808 = vand.u32 2147483647, %v7334
        %vm8809 = vcmp.le.f32.partialorder %v8808, 0.7853982
        %vm8810 = vcmp.lt.s32.totalorder %v7334, 0
        %v8811 = vand.u32 %v7334, 2139095040
        %v8812 = vshrl.u32 %v8811, 23
        %v8813 = vsub.s32 %v8812, 127
        %v8814 = vand.u32 2147483647, %v7334
        %v8815 = vand.u32 %v8814, 8388607
        %v8816 = vor.u32 %v8815, 8388608
        %v8817 = vsub.s32 0, %v8816
        %v8818 = vadd.s32 %v8813, 1
        %vm8819 = vcmp.gt.s32.totalorder %v8818, 0
        %v8820 = vsel %vm8819, %v8818, 0
        %v8821 = vshrl.u32 %v8820, 5
        %v8822 = vand.u32 %v8820, 31
        %v8823 = vsub.s32 32, %v8822
        %v8824 = vshrl.u32 683565275, %v8823
        %v8825 = vshll.u32 683565275, %v8822
        %v8826 = vshrl.u32 2475754826, %v8823
        %v8827 = vor.u32 %v8825, %v8826
        %v8828 = vshll.u32 2475754826, %v8822
        %v8829 = vshrl.u32 2131351028, %v8823
        %v8830 = vor.u32 %v8828, %v8829
        %v8831 = vshll.u32 2131351028, %v8822
        %v8832 = vshrl.u32 2102212464, %v8823
        %v8833 = vor.u32 %v8831, %v8832
        %v8834 = vshll.u32 2102212464, %v8822
        %v8835 = vshrl.u32 920167782, %v8823
        %v8836 = vor.u32 %v8834, %v8835
        %v8837 = vshll.u32 920167782, %v8822
        %v8838 = vshrl.u32 1326507024, %v8823
        %v8839 = vor.u32 %v8837, %v8838
        %vm8840 = vcmp.lt.s32.totalorder %v8821, 1
        %vm8841 = vcmp.lt.s32.totalorder %v8821, 2
        %vm8842 = vcmp.lt.s32.totalorder %v8821, 3
        %vm8843 = vcmp.lt.s32.totalorder %v8821, 4
        %v8844 = vsel %vm8840, %v8824, %v8827
        %v8845 = vsel %vm8843, %v8833, 2102212464
        %v8846 = vsel %vm8842, %v8830, %v8845
        %v8847 = vsel %vm8841, %v8844, %v8846
        %v8848 = vsel %vm8840, %v8827, %v8830
        %v8849 = vsel %vm8843, %v8836, 920167782
        %v8850 = vsel %vm8842, %v8833, %v8849
        %v8851 = vsel %vm8841, %v8848, %v8850
        %v8852 = vsel %vm8840, %v8830, %v8833
        %v8853 = vsel %vm8843, %v8839, 1326507024
        %v8854 = vsel %vm8842, %v8836, %v8853
        %v8855 = vsel %vm8841, %v8852, %v8854
        %v8856 = vshll.u32 %v8816, 8
        %v8857 = vmul.u32.u64.compose %v8856, %v8855
        %v8858 = vextract.low.u32 %v8857
        %v8859 = vextract.high.u32 %v8857
        %v8860 = vmul.u32.u64.compose %v8856, %v8851
        %v8861 = vextract.low.u32 %v8860
        %v8862 = vextract.high.u32 %v8860
        %v8863 = vmul.u32 %v8856, %v8847
        %v8864 = vadd.s32 %v8859, %v8861
        %vm8865 = vc.u32 %v8859, %v8861
        %v8866 = vadd.s32 %v8862, 1
        %v8867 = vsel %vm8865, %v8866, %v8862
        %v8868 = vadd.s32 %v8863, %v8867
        %v8869 = vadd.s32 %v8868, 536870912
        %v8870 = vshrl.u32 %v8869, 30
        %v8871 = vshll.u32 %v8870, 30
        %v8872 = vsub.s32 %v8868, %v8871
        %vm8873 = vcmp.lt.s32.totalorder %v8872, 0
        %v8874 = vsub.s32 0, %v8872
        %v8875 = vsel %vm8873, %v8874, %v8872
        %v8876 = vclz %v8875
        %v8877 = vsub.s32 %v8876, 2
        %vm8878 = vcmp.gt.s32.totalorder 0, %v8877
        %v8879 = vsel %vm8878, 0, %v8877
        %v8880 = vsub.s32 32, %v8879
        %v8881 = vshll.u32 %v8872, %v8879
        %v8882 = vshrl.u32 %v8864, %v8880
        %v8883 = vor.u32 %v8881, %v8882
        %v8884 = vsub.s32 4294967266, %v8879
        %v8885 = vadd.s32 %v8884, 127
        %v8886 = vshll.u32 %v8885, 23
        %v8887 = vor.u32 4788187, %v8886
        %v8888 = vand.u32 2147483647, %v8887
        %v8890 = vcvt.s32.f32 %v8883
        %v8891 = vmul.f32 %v8890, %v8888
        %v8892 = vxor.u32 %v8891, 2147483648
        %v8893 = vsel %vm8810, %v8892, %v8891
        %v8894 = vsub.s32 4, %v8870
        %v8895 = vsel %vm8810, %v8894, %v8870
        %v8896 = vsel %vm8809, %v7334, %v8893
        %v8897 = vsel %vm8809, 0, %v8895
        %v8898 = vcosq.f32.pop %v8896
        %v8899 = vsinq.f32.pop %v8896
        %vm8900 = vweird.f32 %v7334
        %v8901 = vadd.s32 %v8897, 3
        %v8902 = vand.u32 %v8901, 3
        %vm8903 = vcmp.lt.s32.totalorder %v8902, 2
        %vm8904 = vcmp.eq.s32.totalorder %v8902, 0
        %v8905 = vxor.u32 %v8899, 2147483648
        %v8906 = vsel %vm8904, %v8898, %v8905
        %vm8907 = vcmp.eq.s32.totalorder %v8902, 2
        %v8908 = vxor.u32 %v8898, 2147483648
        %v8909 = vsel %vm8907, %v8908, %v8899
        %v8910 = vsel %vm8903, %v8906, %v8909
        %v8911 = vsel %vm8900, nan, %v8910
        %v8912 = vand.u32 2147483647, %v7335
        %vm8913 = vcmp.le.f32.partialorder %v8912, 0.7853982
        %vm8914 = vcmp.lt.s32.totalorder %v7335, 0
        %v8915 = vand.u32 %v7335, 2139095040
        %v8916 = vshrl.u32 %v8915, 23
        %v8917 = vsub.s32 %v8916, 127
        %v8918 = vand.u32 2147483647, %v7335
        %v8919 = vand.u32 %v8918, 8388607
        %v8920 = vor.u32 %v8919, 8388608
        %v8921 = vsub.s32 0, %v8920
        %v8922 = vadd.s32 %v8917, 1
        %vm8923 = vcmp.gt.s32.totalorder %v8922, 0
        %v8924 = vsel %vm8923, %v8922, 0
        %v8925 = vshrl.u32 %v8924, 5
        %v8926 = vand.u32 %v8924, 31
        %v8927 = vsub.s32 32, %v8926
        %v8928 = vshrl.u32 683565275, %v8927
        %v8929 = vshll.u32 683565275, %v8926
        %v8930 = vshrl.u32 2475754826, %v8927
        %v8931 = vor.u32 %v8929, %v8930
        %v8932 = vshll.u32 2475754826, %v8926
        %v8933 = vshrl.u32 2131351028, %v8927
        %v8934 = vor.u32 %v8932, %v8933
        %v8935 = vshll.u32 2131351028, %v8926
        %v8936 = vshrl.u32 2102212464, %v8927
        %v8937 = vor.u32 %v8935, %v8936
        %v8938 = vshll.u32 2102212464, %v8926
        %v8939 = vshrl.u32 920167782, %v8927
        %v8940 = vor.u32 %v8938, %v8939
        %v8941 = vshll.u32 920167782, %v8926
        %v8942 = vshrl.u32 1326507024, %v8927
        %v8943 = vor.u32 %v8941, %v8942
        %vm8944 = vcmp.lt.s32.totalorder %v8925, 1
        %vm8945 = vcmp.lt.s32.totalorder %v8925, 2
        %vm8946 = vcmp.lt.s32.totalorder %v8925, 3
        %vm8947 = vcmp.lt.s32.totalorder %v8925, 4
        %v8948 = vsel %vm8944, %v8928, %v8931
        %v8949 = vsel %vm8947, %v8937, 2102212464
        %v8950 = vsel %vm8946, %v8934, %v8949
        %v8951 = vsel %vm8945, %v8948, %v8950
        %v8952 = vsel %vm8944, %v8931, %v8934
        %v8953 = vsel %vm8947, %v8940, 920167782
        %v8954 = vsel %vm8946, %v8937, %v8953
        %v8955 = vsel %vm8945, %v8952, %v8954
        %v8956 = vsel %vm8944, %v8934, %v8937
        %v8957 = vsel %vm8947, %v8943, 1326507024
        %v8958 = vsel %vm8946, %v8940, %v8957
        %v8959 = vsel %vm8945, %v8956, %v8958
        %v8960 = vshll.u32 %v8920, 8
        %v8961 = vmul.u32.u64.compose %v8960, %v8959
        %v8962 = vextract.low.u32 %v8961
        %v8963 = vextract.high.u32 %v8961
        %v8964 = vmul.u32.u64.compose %v8960, %v8955
        %v8965 = vextract.low.u32 %v8964
        %v8966 = vextract.high.u32 %v8964
        %v8967 = vmul.u32 %v8960, %v8951
        %v8968 = vadd.s32 %v8963, %v8965
        %vm8969 = vc.u32 %v8963, %v8965
        %v8970 = vadd.s32 %v8966, 1
        %v8971 = vsel %vm8969, %v8970, %v8966
        %v8972 = vadd.s32 %v8967, %v8971
        %v8973 = vadd.s32 %v8972, 536870912
        %v8974 = vshrl.u32 %v8973, 30
        %v8975 = vshll.u32 %v8974, 30
        %v8976 = vsub.s32 %v8972, %v8975
        %vm8977 = vcmp.lt.s32.totalorder %v8976, 0
        %v8978 = vsub.s32 0, %v8976
        %v8979 = vsel %vm8977, %v8978, %v8976
        %v8980 = vclz %v8979
        %v8981 = vsub.s32 %v8980, 2
        %vm8982 = vcmp.gt.s32.totalorder 0, %v8981
        %v8983 = vsel %vm8982, 0, %v8981
        %v8984 = vsub.s32 32, %v8983
        %v8985 = vshll.u32 %v8976, %v8983
        %v8986 = vshrl.u32 %v8968, %v8984
        %v8987 = vor.u32 %v8985, %v8986
        %v8988 = vsub.s32 4294967266, %v8983
        %v8989 = vadd.s32 %v8988, 127
        %v8990 = vshll.u32 %v8989, 23
        %v8991 = vor.u32 4788187, %v8990
        %v8992 = vand.u32 2147483647, %v8991
        %v8994 = vcvt.s32.f32 %v8987
        %v8995 = vmul.f32 %v8994, %v8992
        %v8996 = vxor.u32 %v8995, 2147483648
        %v8997 = vsel %vm8914, %v8996, %v8995
        %v8998 = vsub.s32 4, %v8974
        %v8999 = vsel %vm8914, %v8998, %v8974
        %v9000 = vsel %vm8913, %v7335, %v8997
        %v9001 = vsel %vm8913, 0, %v8999
        %v9002 = vcosq.f32.pop %v9000
        %v9003 = vsinq.f32.pop %v9000
        %vm9004 = vweird.f32 %v7335
        %v9005 = vadd.s32 %v9001, 3
        %v9006 = vand.u32 %v9005, 3
        %vm9007 = vcmp.lt.s32.totalorder %v9006, 2
        %vm9008 = vcmp.eq.s32.totalorder %v9006, 0
        %v9009 = vxor.u32 %v9003, 2147483648
        %v9010 = vsel %vm9008, %v9002, %v9009
        %vm9011 = vcmp.eq.s32.totalorder %v9006, 2
        %v9012 = vxor.u32 %v9002, 2147483648
        %v9013 = vsel %vm9011, %v9012, %v9003
        %v9014 = vsel %vm9007, %v9010, %v9013
        %v9015 = vsel %vm9004, nan, %v9014
        %v9016 = vand.u32 2147483647, %v7336
        %vm9017 = vcmp.le.f32.partialorder %v9016, 0.7853982
        %vm9018 = vcmp.lt.s32.totalorder %v7336, 0
        %v9019 = vand.u32 %v7336, 2139095040
        %v9020 = vshrl.u32 %v9019, 23
        %v9021 = vsub.s32 %v9020, 127
        %v9022 = vand.u32 2147483647, %v7336
        %v9023 = vand.u32 %v9022, 8388607
        %v9024 = vor.u32 %v9023, 8388608
        %v9025 = vsub.s32 0, %v9024
        %v9026 = vadd.s32 %v9021, 1
        %vm9027 = vcmp.gt.s32.totalorder %v9026, 0
        %v9028 = vsel %vm9027, %v9026, 0
        %v9029 = vshrl.u32 %v9028, 5
        %v9030 = vand.u32 %v9028, 31
        %v9031 = vsub.s32 32, %v9030
        %v9032 = vshrl.u32 683565275, %v9031
        %v9033 = vshll.u32 683565275, %v9030
        %v9034 = vshrl.u32 2475754826, %v9031
        %v9035 = vor.u32 %v9033, %v9034
        %v9036 = vshll.u32 2475754826, %v9030
        %v9037 = vshrl.u32 2131351028, %v9031
        %v9038 = vor.u32 %v9036, %v9037
        %v9039 = vshll.u32 2131351028, %v9030
        %v9040 = vshrl.u32 2102212464, %v9031
        %v9041 = vor.u32 %v9039, %v9040
        %v9042 = vshll.u32 2102212464, %v9030
        %v9043 = vshrl.u32 920167782, %v9031
        %v9044 = vor.u32 %v9042, %v9043
        %v9045 = vshll.u32 920167782, %v9030
        %v9046 = vshrl.u32 1326507024, %v9031
        %v9047 = vor.u32 %v9045, %v9046
        %vm9048 = vcmp.lt.s32.totalorder %v9029, 1
        %vm9049 = vcmp.lt.s32.totalorder %v9029, 2
        %vm9050 = vcmp.lt.s32.totalorder %v9029, 3
        %vm9051 = vcmp.lt.s32.totalorder %v9029, 4
        %v9052 = vsel %vm9048, %v9032, %v9035
        %v9053 = vsel %vm9051, %v9041, 2102212464
        %v9054 = vsel %vm9050, %v9038, %v9053
        %v9055 = vsel %vm9049, %v9052, %v9054
        %v9056 = vsel %vm9048, %v9035, %v9038
        %v9057 = vsel %vm9051, %v9044, 920167782
        %v9058 = vsel %vm9050, %v9041, %v9057
        %v9059 = vsel %vm9049, %v9056, %v9058
        %v9060 = vsel %vm9048, %v9038, %v9041
        %v9061 = vsel %vm9051, %v9047, 1326507024
        %v9062 = vsel %vm9050, %v9044, %v9061
        %v9063 = vsel %vm9049, %v9060, %v9062
        %v9064 = vshll.u32 %v9024, 8
        %v9065 = vmul.u32.u64.compose %v9064, %v9063
        %v9066 = vextract.low.u32 %v9065
        %v9067 = vextract.high.u32 %v9065
        %v9068 = vmul.u32.u64.compose %v9064, %v9059
        %v9069 = vextract.low.u32 %v9068
        %v9070 = vextract.high.u32 %v9068
        %v9071 = vmul.u32 %v9064, %v9055
        %v9072 = vadd.s32 %v9067, %v9069
        %vm9073 = vc.u32 %v9067, %v9069
        %v9074 = vadd.s32 %v9070, 1
        %v9075 = vsel %vm9073, %v9074, %v9070
        %v9076 = vadd.s32 %v9071, %v9075
        %v9077 = vadd.s32 %v9076, 536870912
        %v9078 = vshrl.u32 %v9077, 30
        %v9079 = vshll.u32 %v9078, 30
        %v9080 = vsub.s32 %v9076, %v9079
        %vm9081 = vcmp.lt.s32.totalorder %v9080, 0
        %v9082 = vsub.s32 0, %v9080
        %v9083 = vsel %vm9081, %v9082, %v9080
        %v9084 = vclz %v9083
        %v9085 = vsub.s32 %v9084, 2
        %vm9086 = vcmp.gt.s32.totalorder 0, %v9085
        %v9087 = vsel %vm9086, 0, %v9085
        %v9088 = vsub.s32 32, %v9087
        %v9089 = vshll.u32 %v9080, %v9087
        %v9090 = vshrl.u32 %v9072, %v9088
        %v9091 = vor.u32 %v9089, %v9090
        %v9092 = vsub.s32 4294967266, %v9087
        %v9093 = vadd.s32 %v9092, 127
        %v9094 = vshll.u32 %v9093, 23
        %v9095 = vor.u32 4788187, %v9094
        %v9096 = vand.u32 2147483647, %v9095
        %v9098 = vcvt.s32.f32 %v9091
        %v9099 = vmul.f32 %v9098, %v9096
        %v9100 = vxor.u32 %v9099, 2147483648
        %v9101 = vsel %vm9018, %v9100, %v9099
        %v9102 = vsub.s32 4, %v9078
        %v9103 = vsel %vm9018, %v9102, %v9078
        %v9104 = vsel %vm9017, %v7336, %v9101
        %v9105 = vsel %vm9017, 0, %v9103
        %v9106 = vcosq.f32.pop %v9104
        %v9107 = vsinq.f32.pop %v9104
        %vm9108 = vweird.f32 %v7336
        %v9109 = vadd.s32 %v9105, 3
        %v9110 = vand.u32 %v9109, 3
        %vm9111 = vcmp.lt.s32.totalorder %v9110, 2
        %vm9112 = vcmp.eq.s32.totalorder %v9110, 0
        %v9113 = vxor.u32 %v9107, 2147483648
        %v9114 = vsel %vm9112, %v9106, %v9113
        %vm9115 = vcmp.eq.s32.totalorder %v9110, 2
        %v9116 = vxor.u32 %v9106, 2147483648
        %v9117 = vsel %vm9115, %v9116, %v9107
        %v9118 = vsel %vm9111, %v9114, %v9117
        %v9119 = vsel %vm9108, nan, %v9118
        %v9120 = vand.u32 2147483647, %v7337
        %vm9121 = vcmp.le.f32.partialorder %v9120, 0.7853982
        %vm9122 = vcmp.lt.s32.totalorder %v7337, 0
        %v9123 = vand.u32 %v7337, 2139095040
        %v9124 = vshrl.u32 %v9123, 23
        %v9125 = vsub.s32 %v9124, 127
        %v9126 = vand.u32 2147483647, %v7337
        %v9127 = vand.u32 %v9126, 8388607
        %v9128 = vor.u32 %v9127, 8388608
        %v9129 = vsub.s32 0, %v9128
        %v9130 = vadd.s32 %v9125, 1
        %vm9131 = vcmp.gt.s32.totalorder %v9130, 0
        %v9132 = vsel %vm9131, %v9130, 0
        %v9133 = vshrl.u32 %v9132, 5
        %v9134 = vand.u32 %v9132, 31
        %v9135 = vsub.s32 32, %v9134
        %v9136 = vshrl.u32 683565275, %v9135
        %v9137 = vshll.u32 683565275, %v9134
        %v9138 = vshrl.u32 2475754826, %v9135
        %v9139 = vor.u32 %v9137, %v9138
        %v9140 = vshll.u32 2475754826, %v9134
        %v9141 = vshrl.u32 2131351028, %v9135
        %v9142 = vor.u32 %v9140, %v9141
        %v9143 = vshll.u32 2131351028, %v9134
        %v9144 = vshrl.u32 2102212464, %v9135
        %v9145 = vor.u32 %v9143, %v9144
        %v9146 = vshll.u32 2102212464, %v9134
        %v9147 = vshrl.u32 920167782, %v9135
        %v9148 = vor.u32 %v9146, %v9147
        %v9149 = vshll.u32 920167782, %v9134
        %v9150 = vshrl.u32 1326507024, %v9135
        %v9151 = vor.u32 %v9149, %v9150
        %vm9152 = vcmp.lt.s32.totalorder %v9133, 1
        %vm9153 = vcmp.lt.s32.totalorder %v9133, 2
        %vm9154 = vcmp.lt.s32.totalorder %v9133, 3
        %vm9155 = vcmp.lt.s32.totalorder %v9133, 4
        %v9156 = vsel %vm9152, %v9136, %v9139
        %v9157 = vsel %vm9155, %v9145, 2102212464
        %v9158 = vsel %vm9154, %v9142, %v9157
        %v9159 = vsel %vm9153, %v9156, %v9158
        %v9160 = vsel %vm9152, %v9139, %v9142
        %v9161 = vsel %vm9155, %v9148, 920167782
        %v9162 = vsel %vm9154, %v9145, %v9161
        %v9163 = vsel %vm9153, %v9160, %v9162
        %v9164 = vsel %vm9152, %v9142, %v9145
        %v9165 = vsel %vm9155, %v9151, 1326507024
        %v9166 = vsel %vm9154, %v9148, %v9165
        %v9167 = vsel %vm9153, %v9164, %v9166
        %v9168 = vshll.u32 %v9128, 8
        %v9169 = vmul.u32.u64.compose %v9168, %v9167
        %v9170 = vextract.low.u32 %v9169
        %v9171 = vextract.high.u32 %v9169
        %v9172 = vmul.u32.u64.compose %v9168, %v9163
        %v9173 = vextract.low.u32 %v9172
        %v9174 = vextract.high.u32 %v9172
        %v9175 = vmul.u32 %v9168, %v9159
        %v9176 = vadd.s32 %v9171, %v9173
        %vm9177 = vc.u32 %v9171, %v9173
        %v9178 = vadd.s32 %v9174, 1
        %v9179 = vsel %vm9177, %v9178, %v9174
        %v9180 = vadd.s32 %v9175, %v9179
        %v9181 = vadd.s32 %v9180, 536870912
        %v9182 = vshrl.u32 %v9181, 30
        %v9183 = vshll.u32 %v9182, 30
        %v9184 = vsub.s32 %v9180, %v9183
        %vm9185 = vcmp.lt.s32.totalorder %v9184, 0
        %v9186 = vsub.s32 0, %v9184
        %v9187 = vsel %vm9185, %v9186, %v9184
        %v9188 = vclz %v9187
        %v9189 = vsub.s32 %v9188, 2
        %vm9190 = vcmp.gt.s32.totalorder 0, %v9189
        %v9191 = vsel %vm9190, 0, %v9189
        %v9192 = vsub.s32 32, %v9191
        %v9193 = vshll.u32 %v9184, %v9191
        %v9194 = vshrl.u32 %v9176, %v9192
        %v9195 = vor.u32 %v9193, %v9194
        %v9196 = vsub.s32 4294967266, %v9191
        %v9197 = vadd.s32 %v9196, 127
        %v9198 = vshll.u32 %v9197, 23
        %v9199 = vor.u32 4788187, %v9198
        %v9200 = vand.u32 2147483647, %v9199
        %v9202 = vcvt.s32.f32 %v9195
        %v9203 = vmul.f32 %v9202, %v9200
        %v9204 = vxor.u32 %v9203, 2147483648
        %v9205 = vsel %vm9122, %v9204, %v9203
        %v9206 = vsub.s32 4, %v9182
        %v9207 = vsel %vm9122, %v9206, %v9182
        %v9208 = vsel %vm9121, %v7337, %v9205
        %v9209 = vsel %vm9121, 0, %v9207
        %v9210 = vcosq.f32.pop %v9208
        %v9211 = vsinq.f32.pop %v9208
        %vm9212 = vweird.f32 %v7337
        %v9213 = vadd.s32 %v9209, 3
        %v9214 = vand.u32 %v9213, 3
        %vm9215 = vcmp.lt.s32.totalorder %v9214, 2
        %vm9216 = vcmp.eq.s32.totalorder %v9214, 0
        %v9217 = vxor.u32 %v9211, 2147483648
        %v9218 = vsel %vm9216, %v9210, %v9217
        %vm9219 = vcmp.eq.s32.totalorder %v9214, 2
        %v9220 = vxor.u32 %v9210, 2147483648
        %v9221 = vsel %vm9219, %v9220, %v9211
        %v9222 = vsel %vm9215, %v9218, %v9221
        %v9223 = vsel %vm9212, nan, %v9222
        %v9224 = vand.u32 2147483647, %v7338
        %vm9225 = vcmp.le.f32.partialorder %v9224, 0.7853982
        %vm9226 = vcmp.lt.s32.totalorder %v7338, 0
        %v9227 = vand.u32 %v7338, 2139095040
        %v9228 = vshrl.u32 %v9227, 23
        %v9229 = vsub.s32 %v9228, 127
        %v9230 = vand.u32 2147483647, %v7338
        %v9231 = vand.u32 %v9230, 8388607
        %v9232 = vor.u32 %v9231, 8388608
        %v9233 = vsub.s32 0, %v9232
        %v9234 = vadd.s32 %v9229, 1
        %vm9235 = vcmp.gt.s32.totalorder %v9234, 0
        %v9236 = vsel %vm9235, %v9234, 0
        %v9237 = vshrl.u32 %v9236, 5
        %v9238 = vand.u32 %v9236, 31
        %v9239 = vsub.s32 32, %v9238
        %v9240 = vshrl.u32 683565275, %v9239
        %v9241 = vshll.u32 683565275, %v9238
        %v9242 = vshrl.u32 2475754826, %v9239
        %v9243 = vor.u32 %v9241, %v9242
        %v9244 = vshll.u32 2475754826, %v9238
        %v9245 = vshrl.u32 2131351028, %v9239
        %v9246 = vor.u32 %v9244, %v9245
        %v9247 = vshll.u32 2131351028, %v9238
        %v9248 = vshrl.u32 2102212464, %v9239
        %v9249 = vor.u32 %v9247, %v9248
        %v9250 = vshll.u32 2102212464, %v9238
        %v9251 = vshrl.u32 920167782, %v9239
        %v9252 = vor.u32 %v9250, %v9251
        %v9253 = vshll.u32 920167782, %v9238
        %v9254 = vshrl.u32 1326507024, %v9239
        %v9255 = vor.u32 %v9253, %v9254
        %vm9256 = vcmp.lt.s32.totalorder %v9237, 1
        %vm9257 = vcmp.lt.s32.totalorder %v9237, 2
        %vm9258 = vcmp.lt.s32.totalorder %v9237, 3
        %vm9259 = vcmp.lt.s32.totalorder %v9237, 4
        %v9260 = vsel %vm9256, %v9240, %v9243
        %v9261 = vsel %vm9259, %v9249, 2102212464
        %v9262 = vsel %vm9258, %v9246, %v9261
        %v9263 = vsel %vm9257, %v9260, %v9262
        %v9264 = vsel %vm9256, %v9243, %v9246
        %v9265 = vsel %vm9259, %v9252, 920167782
        %v9266 = vsel %vm9258, %v9249, %v9265
        %v9267 = vsel %vm9257, %v9264, %v9266
        %v9268 = vsel %vm9256, %v9246, %v9249
        %v9269 = vsel %vm9259, %v9255, 1326507024
        %v9270 = vsel %vm9258, %v9252, %v9269
        %v9271 = vsel %vm9257, %v9268, %v9270
        %v9272 = vshll.u32 %v9232, 8
        %v9273 = vmul.u32.u64.compose %v9272, %v9271
        %v9274 = vextract.low.u32 %v9273
        %v9275 = vextract.high.u32 %v9273
        %v9276 = vmul.u32.u64.compose %v9272, %v9267
        %v9277 = vextract.low.u32 %v9276
        %v9278 = vextract.high.u32 %v9276
        %v9279 = vmul.u32 %v9272, %v9263
        %v9280 = vadd.s32 %v9275, %v9277
        %vm9281 = vc.u32 %v9275, %v9277
        %v9282 = vadd.s32 %v9278, 1
        %v9283 = vsel %vm9281, %v9282, %v9278
        %v9284 = vadd.s32 %v9279, %v9283
        %v9285 = vadd.s32 %v9284, 536870912
        %v9286 = vshrl.u32 %v9285, 30
        %v9287 = vshll.u32 %v9286, 30
        %v9288 = vsub.s32 %v9284, %v9287
        %vm9289 = vcmp.lt.s32.totalorder %v9288, 0
        %v9290 = vsub.s32 0, %v9288
        %v9291 = vsel %vm9289, %v9290, %v9288
        %v9292 = vclz %v9291
        %v9293 = vsub.s32 %v9292, 2
        %vm9294 = vcmp.gt.s32.totalorder 0, %v9293
        %v9295 = vsel %vm9294, 0, %v9293
        %v9296 = vsub.s32 32, %v9295
        %v9297 = vshll.u32 %v9288, %v9295
        %v9298 = vshrl.u32 %v9280, %v9296
        %v9299 = vor.u32 %v9297, %v9298
        %v9300 = vsub.s32 4294967266, %v9295
        %v9301 = vadd.s32 %v9300, 127
        %v9302 = vshll.u32 %v9301, 23
        %v9303 = vor.u32 4788187, %v9302
        %v9304 = vand.u32 2147483647, %v9303
        %v9306 = vcvt.s32.f32 %v9299
        %v9307 = vmul.f32 %v9306, %v9304
        %v9308 = vxor.u32 %v9307, 2147483648
        %v9309 = vsel %vm9226, %v9308, %v9307
        %v9310 = vsub.s32 4, %v9286
        %v9311 = vsel %vm9226, %v9310, %v9286
        %v9312 = vsel %vm9225, %v7338, %v9309
        %v9313 = vsel %vm9225, 0, %v9311
        %v9314 = vcosq.f32.pop %v9312
        %v9315 = vsinq.f32.pop %v9312
        %vm9316 = vweird.f32 %v7338
        %v9317 = vadd.s32 %v9313, 3
        %v9318 = vand.u32 %v9317, 3
        %vm9319 = vcmp.lt.s32.totalorder %v9318, 2
        %vm9320 = vcmp.eq.s32.totalorder %v9318, 0
        %v9321 = vxor.u32 %v9315, 2147483648
        %v9322 = vsel %vm9320, %v9314, %v9321
        %vm9323 = vcmp.eq.s32.totalorder %v9318, 2
        %v9324 = vxor.u32 %v9314, 2147483648
        %v9325 = vsel %vm9323, %v9324, %v9315
        %v9326 = vsel %vm9319, %v9322, %v9325
        %v9327 = vsel %vm9316, nan, %v9326
        %v9328 = vand.u32 2147483647, %v7339
        %vm9329 = vcmp.le.f32.partialorder %v9328, 0.7853982
        %vm9330 = vcmp.lt.s32.totalorder %v7339, 0
        %v9331 = vand.u32 %v7339, 2139095040
        %v9332 = vshrl.u32 %v9331, 23
        %v9333 = vsub.s32 %v9332, 127
        %v9334 = vand.u32 2147483647, %v7339
        %v9335 = vand.u32 %v9334, 8388607
        %v9336 = vor.u32 %v9335, 8388608
        %v9337 = vsub.s32 0, %v9336
        %v9338 = vadd.s32 %v9333, 1
        %vm9339 = vcmp.gt.s32.totalorder %v9338, 0
        %v9340 = vsel %vm9339, %v9338, 0
        %v9341 = vshrl.u32 %v9340, 5
        %v9342 = vand.u32 %v9340, 31
        %v9343 = vsub.s32 32, %v9342
        %v9344 = vshrl.u32 683565275, %v9343
        %v9345 = vshll.u32 683565275, %v9342
        %v9346 = vshrl.u32 2475754826, %v9343
        %v9347 = vor.u32 %v9345, %v9346
        %v9348 = vshll.u32 2475754826, %v9342
        %v9349 = vshrl.u32 2131351028, %v9343
        %v9350 = vor.u32 %v9348, %v9349
        %v9351 = vshll.u32 2131351028, %v9342
        %v9352 = vshrl.u32 2102212464, %v9343
        %v9353 = vor.u32 %v9351, %v9352
        %v9354 = vshll.u32 2102212464, %v9342
        %v9355 = vshrl.u32 920167782, %v9343
        %v9356 = vor.u32 %v9354, %v9355
        %v9357 = vshll.u32 920167782, %v9342
        %v9358 = vshrl.u32 1326507024, %v9343
        %v9359 = vor.u32 %v9357, %v9358
        %vm9360 = vcmp.lt.s32.totalorder %v9341, 1
        %vm9361 = vcmp.lt.s32.totalorder %v9341, 2
        %vm9362 = vcmp.lt.s32.totalorder %v9341, 3
        %vm9363 = vcmp.lt.s32.totalorder %v9341, 4
        %v9364 = vsel %vm9360, %v9344, %v9347
        %v9365 = vsel %vm9363, %v9353, 2102212464
        %v9366 = vsel %vm9362, %v9350, %v9365
        %v9367 = vsel %vm9361, %v9364, %v9366
        %v9368 = vsel %vm9360, %v9347, %v9350
        %v9369 = vsel %vm9363, %v9356, 920167782
        %v9370 = vsel %vm9362, %v9353, %v9369
        %v9371 = vsel %vm9361, %v9368, %v9370
        %v9372 = vsel %vm9360, %v9350, %v9353
        %v9373 = vsel %vm9363, %v9359, 1326507024
        %v9374 = vsel %vm9362, %v9356, %v9373
        %v9375 = vsel %vm9361, %v9372, %v9374
        %v9376 = vshll.u32 %v9336, 8
        %v9377 = vmul.u32.u64.compose %v9376, %v9375
        %v9378 = vextract.low.u32 %v9377
        %v9379 = vextract.high.u32 %v9377
        %v9380 = vmul.u32.u64.compose %v9376, %v9371
        %v9381 = vextract.low.u32 %v9380
        %v9382 = vextract.high.u32 %v9380
        %v9383 = vmul.u32 %v9376, %v9367
        %v9384 = vadd.s32 %v9379, %v9381
        %vm9385 = vc.u32 %v9379, %v9381
        %v9386 = vadd.s32 %v9382, 1
        %v9387 = vsel %vm9385, %v9386, %v9382
        %v9388 = vadd.s32 %v9383, %v9387
        %v9389 = vadd.s32 %v9388, 536870912
        %v9390 = vshrl.u32 %v9389, 30
        %v9391 = vshll.u32 %v9390, 30
        %v9392 = vsub.s32 %v9388, %v9391
        %vm9393 = vcmp.lt.s32.totalorder %v9392, 0
        %v9394 = vsub.s32 0, %v9392
        %v9395 = vsel %vm9393, %v9394, %v9392
        %v9396 = vclz %v9395
        %v9397 = vsub.s32 %v9396, 2
        %vm9398 = vcmp.gt.s32.totalorder 0, %v9397
        %v9399 = vsel %vm9398, 0, %v9397
        %v9400 = vsub.s32 32, %v9399
        %v9401 = vshll.u32 %v9392, %v9399
        %v9402 = vshrl.u32 %v9384, %v9400
        %v9403 = vor.u32 %v9401, %v9402
        %v9404 = vsub.s32 4294967266, %v9399
        %v9405 = vadd.s32 %v9404, 127
        %v9406 = vshll.u32 %v9405, 23
        %v9407 = vor.u32 4788187, %v9406
        %v9408 = vand.u32 2147483647, %v9407
        %v9410 = vcvt.s32.f32 %v9403
        %v9411 = vmul.f32 %v9410, %v9408
        %v9412 = vxor.u32 %v9411, 2147483648
        %v9413 = vsel %vm9330, %v9412, %v9411
        %v9414 = vsub.s32 4, %v9390
        %v9415 = vsel %vm9330, %v9414, %v9390
        %v9416 = vsel %vm9329, %v7339, %v9413
        %v9417 = vsel %vm9329, 0, %v9415
        %v9418 = vcosq.f32.pop %v9416
        %v9419 = vsinq.f32.pop %v9416
        %vm9420 = vweird.f32 %v7339
        %v9421 = vadd.s32 %v9417, 3
        %v9422 = vand.u32 %v9421, 3
        %vm9423 = vcmp.lt.s32.totalorder %v9422, 2
        %vm9424 = vcmp.eq.s32.totalorder %v9422, 0
        %v9425 = vxor.u32 %v9419, 2147483648
        %v9426 = vsel %vm9424, %v9418, %v9425
        %vm9427 = vcmp.eq.s32.totalorder %v9422, 2
        %v9428 = vxor.u32 %v9418, 2147483648
        %v9429 = vsel %vm9427, %v9428, %v9419
        %v9430 = vsel %vm9423, %v9426, %v9429
        %v9431 = vsel %vm9420, nan, %v9430
        %v9432 = vand.u32 2147483647, %v7340
        %vm9433 = vcmp.le.f32.partialorder %v9432, 0.7853982
        %vm9434 = vcmp.lt.s32.totalorder %v7340, 0
        %v9435 = vand.u32 %v7340, 2139095040
        %v9436 = vshrl.u32 %v9435, 23
        %v9437 = vsub.s32 %v9436, 127
        %v9438 = vand.u32 2147483647, %v7340
        %v9439 = vand.u32 %v9438, 8388607
        %v9440 = vor.u32 %v9439, 8388608
        %v9441 = vsub.s32 0, %v9440
        %v9442 = vadd.s32 %v9437, 1
        %vm9443 = vcmp.gt.s32.totalorder %v9442, 0
        %v9444 = vsel %vm9443, %v9442, 0
        %v9445 = vshrl.u32 %v9444, 5
        %v9446 = vand.u32 %v9444, 31
        %v9447 = vsub.s32 32, %v9446
        %v9448 = vshrl.u32 683565275, %v9447
        %v9449 = vshll.u32 683565275, %v9446
        %v9450 = vshrl.u32 2475754826, %v9447
        %v9451 = vor.u32 %v9449, %v9450
        %v9452 = vshll.u32 2475754826, %v9446
        %v9453 = vshrl.u32 2131351028, %v9447
        %v9454 = vor.u32 %v9452, %v9453
        %v9455 = vshll.u32 2131351028, %v9446
        %v9456 = vshrl.u32 2102212464, %v9447
        %v9457 = vor.u32 %v9455, %v9456
        %v9458 = vshll.u32 2102212464, %v9446
        %v9459 = vshrl.u32 920167782, %v9447
        %v9460 = vor.u32 %v9458, %v9459
        %v9461 = vshll.u32 920167782, %v9446
        %v9462 = vshrl.u32 1326507024, %v9447
        %v9463 = vor.u32 %v9461, %v9462
        %vm9464 = vcmp.lt.s32.totalorder %v9445, 1
        %vm9465 = vcmp.lt.s32.totalorder %v9445, 2
        %vm9466 = vcmp.lt.s32.totalorder %v9445, 3
        %vm9467 = vcmp.lt.s32.totalorder %v9445, 4
        %v9468 = vsel %vm9464, %v9448, %v9451
        %v9469 = vsel %vm9467, %v9457, 2102212464
        %v9470 = vsel %vm9466, %v9454, %v9469
        %v9471 = vsel %vm9465, %v9468, %v9470
        %v9472 = vsel %vm9464, %v9451, %v9454
        %v9473 = vsel %vm9467, %v9460, 920167782
        %v9474 = vsel %vm9466, %v9457, %v9473
        %v9475 = vsel %vm9465, %v9472, %v9474
        %v9476 = vsel %vm9464, %v9454, %v9457
        %v9477 = vsel %vm9467, %v9463, 1326507024
        %v9478 = vsel %vm9466, %v9460, %v9477
        %v9479 = vsel %vm9465, %v9476, %v9478
        %v9480 = vshll.u32 %v9440, 8
        %v9481 = vmul.u32.u64.compose %v9480, %v9479
        %v9482 = vextract.low.u32 %v9481
        %v9483 = vextract.high.u32 %v9481
        %v9484 = vmul.u32.u64.compose %v9480, %v9475
        %v9485 = vextract.low.u32 %v9484
        %v9486 = vextract.high.u32 %v9484
        %v9487 = vmul.u32 %v9480, %v9471
        %v9488 = vadd.s32 %v9483, %v9485
        %vm9489 = vc.u32 %v9483, %v9485
        %v9490 = vadd.s32 %v9486, 1
        %v9491 = vsel %vm9489, %v9490, %v9486
        %v9492 = vadd.s32 %v9487, %v9491
        %v9493 = vadd.s32 %v9492, 536870912
        %v9494 = vshrl.u32 %v9493, 30
        %v9495 = vshll.u32 %v9494, 30
        %v9496 = vsub.s32 %v9492, %v9495
        %vm9497 = vcmp.lt.s32.totalorder %v9496, 0
        %v9498 = vsub.s32 0, %v9496
        %v9499 = vsel %vm9497, %v9498, %v9496
        %v9500 = vclz %v9499
        %v9501 = vsub.s32 %v9500, 2
        %vm9502 = vcmp.gt.s32.totalorder 0, %v9501
        %v9503 = vsel %vm9502, 0, %v9501
        %v9504 = vsub.s32 32, %v9503
        %v9505 = vshll.u32 %v9496, %v9503
        %v9506 = vshrl.u32 %v9488, %v9504
        %v9507 = vor.u32 %v9505, %v9506
        %v9508 = vsub.s32 4294967266, %v9503
        %v9509 = vadd.s32 %v9508, 127
        %v9510 = vshll.u32 %v9509, 23
        %v9511 = vor.u32 4788187, %v9510
        %v9512 = vand.u32 2147483647, %v9511
        %v9514 = vcvt.s32.f32 %v9507
        %v9515 = vmul.f32 %v9514, %v9512
        %v9516 = vxor.u32 %v9515, 2147483648
        %v9517 = vsel %vm9434, %v9516, %v9515
        %v9518 = vsub.s32 4, %v9494
        %v9519 = vsel %vm9434, %v9518, %v9494
        %v9520 = vsel %vm9433, %v7340, %v9517
        %v9521 = vsel %vm9433, 0, %v9519
        %v9522 = vcosq.f32.pop %v9520
        %v9523 = vsinq.f32.pop %v9520
        %vm9524 = vweird.f32 %v7340
        %v9525 = vadd.s32 %v9521, 3
        %v9526 = vand.u32 %v9525, 3
        %vm9527 = vcmp.lt.s32.totalorder %v9526, 2
        %vm9528 = vcmp.eq.s32.totalorder %v9526, 0
        %v9529 = vxor.u32 %v9523, 2147483648
        %v9530 = vsel %vm9528, %v9522, %v9529
        %vm9531 = vcmp.eq.s32.totalorder %v9526, 2
        %v9532 = vxor.u32 %v9522, 2147483648
        %v9533 = vsel %vm9531, %v9532, %v9523
        %v9534 = vsel %vm9527, %v9530, %v9533
        %v9535 = vsel %vm9524, nan, %v9534
        %v9536 = vand.u32 2147483647, %v7341
        %vm9537 = vcmp.le.f32.partialorder %v9536, 0.7853982
        %vm9538 = vcmp.lt.s32.totalorder %v7341, 0
        %v9539 = vand.u32 %v7341, 2139095040
        %v9540 = vshrl.u32 %v9539, 23
        %v9541 = vsub.s32 %v9540, 127
        %v9542 = vand.u32 2147483647, %v7341
        %v9543 = vand.u32 %v9542, 8388607
        %v9544 = vor.u32 %v9543, 8388608
        %v9545 = vsub.s32 0, %v9544
        %v9546 = vadd.s32 %v9541, 1
        %vm9547 = vcmp.gt.s32.totalorder %v9546, 0
        %v9548 = vsel %vm9547, %v9546, 0
        %v9549 = vshrl.u32 %v9548, 5
        %v9550 = vand.u32 %v9548, 31
        %v9551 = vsub.s32 32, %v9550
        %v9552 = vshrl.u32 683565275, %v9551
        %v9553 = vshll.u32 683565275, %v9550
        %v9554 = vshrl.u32 2475754826, %v9551
        %v9555 = vor.u32 %v9553, %v9554
        %v9556 = vshll.u32 2475754826, %v9550
        %v9557 = vshrl.u32 2131351028, %v9551
        %v9558 = vor.u32 %v9556, %v9557
        %v9559 = vshll.u32 2131351028, %v9550
        %v9560 = vshrl.u32 2102212464, %v9551
        %v9561 = vor.u32 %v9559, %v9560
        %v9562 = vshll.u32 2102212464, %v9550
        %v9563 = vshrl.u32 920167782, %v9551
        %v9564 = vor.u32 %v9562, %v9563
        %v9565 = vshll.u32 920167782, %v9550
        %v9566 = vshrl.u32 1326507024, %v9551
        %v9567 = vor.u32 %v9565, %v9566
        %vm9568 = vcmp.lt.s32.totalorder %v9549, 1
        %vm9569 = vcmp.lt.s32.totalorder %v9549, 2
        %vm9570 = vcmp.lt.s32.totalorder %v9549, 3
        %vm9571 = vcmp.lt.s32.totalorder %v9549, 4
        %v9572 = vsel %vm9568, %v9552, %v9555
        %v9573 = vsel %vm9571, %v9561, 2102212464
        %v9574 = vsel %vm9570, %v9558, %v9573
        %v9575 = vsel %vm9569, %v9572, %v9574
        %v9576 = vsel %vm9568, %v9555, %v9558
        %v9577 = vsel %vm9571, %v9564, 920167782
        %v9578 = vsel %vm9570, %v9561, %v9577
        %v9579 = vsel %vm9569, %v9576, %v9578
        %v9580 = vsel %vm9568, %v9558, %v9561
        %v9581 = vsel %vm9571, %v9567, 1326507024
        %v9582 = vsel %vm9570, %v9564, %v9581
        %v9583 = vsel %vm9569, %v9580, %v9582
        %v9584 = vshll.u32 %v9544, 8
        %v9585 = vmul.u32.u64.compose %v9584, %v9583
        %v9586 = vextract.low.u32 %v9585
        %v9587 = vextract.high.u32 %v9585
        %v9588 = vmul.u32.u64.compose %v9584, %v9579
        %v9589 = vextract.low.u32 %v9588
        %v9590 = vextract.high.u32 %v9588
        %v9591 = vmul.u32 %v9584, %v9575
        %v9592 = vadd.s32 %v9587, %v9589
        %vm9593 = vc.u32 %v9587, %v9589
        %v9594 = vadd.s32 %v9590, 1
        %v9595 = vsel %vm9593, %v9594, %v9590
        %v9596 = vadd.s32 %v9591, %v9595
        %v9597 = vadd.s32 %v9596, 536870912
        %v9598 = vshrl.u32 %v9597, 30
        %v9599 = vshll.u32 %v9598, 30
        %v9600 = vsub.s32 %v9596, %v9599
        %vm9601 = vcmp.lt.s32.totalorder %v9600, 0
        %v9602 = vsub.s32 0, %v9600
        %v9603 = vsel %vm9601, %v9602, %v9600
        %v9604 = vclz %v9603
        %v9605 = vsub.s32 %v9604, 2
        %vm9606 = vcmp.gt.s32.totalorder 0, %v9605
        %v9607 = vsel %vm9606, 0, %v9605
        %v9608 = vsub.s32 32, %v9607
        %v9609 = vshll.u32 %v9600, %v9607
        %v9610 = vshrl.u32 %v9592, %v9608
        %v9611 = vor.u32 %v9609, %v9610
        %v9612 = vsub.s32 4294967266, %v9607
        %v9613 = vadd.s32 %v9612, 127
        %v9614 = vshll.u32 %v9613, 23
        %v9615 = vor.u32 4788187, %v9614
        %v9616 = vand.u32 2147483647, %v9615
        %v9618 = vcvt.s32.f32 %v9611
        %v9619 = vmul.f32 %v9618, %v9616
        %v9620 = vxor.u32 %v9619, 2147483648
        %v9621 = vsel %vm9538, %v9620, %v9619
        %v9622 = vsub.s32 4, %v9598
        %v9623 = vsel %vm9538, %v9622, %v9598
        %v9624 = vsel %vm9537, %v7341, %v9621
        %v9625 = vsel %vm9537, 0, %v9623
        %v9626 = vcosq.f32.pop %v9624
        %v9627 = vsinq.f32.pop %v9624
        %vm9628 = vweird.f32 %v7341
        %v9629 = vadd.s32 %v9625, 3
        %v9630 = vand.u32 %v9629, 3
        %vm9631 = vcmp.lt.s32.totalorder %v9630, 2
        %vm9632 = vcmp.eq.s32.totalorder %v9630, 0
        %v9633 = vxor.u32 %v9627, 2147483648
        %v9634 = vsel %vm9632, %v9626, %v9633
        %vm9635 = vcmp.eq.s32.totalorder %v9630, 2
        %v9636 = vxor.u32 %v9626, 2147483648
        %v9637 = vsel %vm9635, %v9636, %v9627
        %v9638 = vsel %vm9631, %v9634, %v9637
        %v9639 = vsel %vm9628, nan, %v9638
        %v9640 = vand.u32 2147483647, %v7342
        %vm9641 = vcmp.le.f32.partialorder %v9640, 0.7853982
        %vm9642 = vcmp.lt.s32.totalorder %v7342, 0
        %v9643 = vand.u32 %v7342, 2139095040
        %v9644 = vshrl.u32 %v9643, 23
        %v9645 = vsub.s32 %v9644, 127
        %v9646 = vand.u32 2147483647, %v7342
        %v9647 = vand.u32 %v9646, 8388607
        %v9648 = vor.u32 %v9647, 8388608
        %v9649 = vsub.s32 0, %v9648
        %v9650 = vadd.s32 %v9645, 1
        %vm9651 = vcmp.gt.s32.totalorder %v9650, 0
        %v9652 = vsel %vm9651, %v9650, 0
        %v9653 = vshrl.u32 %v9652, 5
        %v9654 = vand.u32 %v9652, 31
        %v9655 = vsub.s32 32, %v9654
        %v9656 = vshrl.u32 683565275, %v9655
        %v9657 = vshll.u32 683565275, %v9654
        %v9658 = vshrl.u32 2475754826, %v9655
        %v9659 = vor.u32 %v9657, %v9658
        %v9660 = vshll.u32 2475754826, %v9654
        %v9661 = vshrl.u32 2131351028, %v9655
        %v9662 = vor.u32 %v9660, %v9661
        %v9663 = vshll.u32 2131351028, %v9654
        %v9664 = vshrl.u32 2102212464, %v9655
        %v9665 = vor.u32 %v9663, %v9664
        %v9666 = vshll.u32 2102212464, %v9654
        %v9667 = vshrl.u32 920167782, %v9655
        %v9668 = vor.u32 %v9666, %v9667
        %v9669 = vshll.u32 920167782, %v9654
        %v9670 = vshrl.u32 1326507024, %v9655
        %v9671 = vor.u32 %v9669, %v9670
        %vm9672 = vcmp.lt.s32.totalorder %v9653, 1
        %vm9673 = vcmp.lt.s32.totalorder %v9653, 2
        %vm9674 = vcmp.lt.s32.totalorder %v9653, 3
        %vm9675 = vcmp.lt.s32.totalorder %v9653, 4
        %v9676 = vsel %vm9672, %v9656, %v9659
        %v9677 = vsel %vm9675, %v9665, 2102212464
        %v9678 = vsel %vm9674, %v9662, %v9677
        %v9679 = vsel %vm9673, %v9676, %v9678
        %v9680 = vsel %vm9672, %v9659, %v9662
        %v9681 = vsel %vm9675, %v9668, 920167782
        %v9682 = vsel %vm9674, %v9665, %v9681
        %v9683 = vsel %vm9673, %v9680, %v9682
        %v9684 = vsel %vm9672, %v9662, %v9665
        %v9685 = vsel %vm9675, %v9671, 1326507024
        %v9686 = vsel %vm9674, %v9668, %v9685
        %v9687 = vsel %vm9673, %v9684, %v9686
        %v9688 = vshll.u32 %v9648, 8
        %v9689 = vmul.u32.u64.compose %v9688, %v9687
        %v9690 = vextract.low.u32 %v9689
        %v9691 = vextract.high.u32 %v9689
        %v9692 = vmul.u32.u64.compose %v9688, %v9683
        %v9693 = vextract.low.u32 %v9692
        %v9694 = vextract.high.u32 %v9692
        %v9695 = vmul.u32 %v9688, %v9679
        %v9696 = vadd.s32 %v9691, %v9693
        %vm9697 = vc.u32 %v9691, %v9693
        %v9698 = vadd.s32 %v9694, 1
        %v9699 = vsel %vm9697, %v9698, %v9694
        %v9700 = vadd.s32 %v9695, %v9699
        %v9701 = vadd.s32 %v9700, 536870912
        %v9702 = vshrl.u32 %v9701, 30
        %v9703 = vshll.u32 %v9702, 30
        %v9704 = vsub.s32 %v9700, %v9703
        %vm9705 = vcmp.lt.s32.totalorder %v9704, 0
        %v9706 = vsub.s32 0, %v9704
        %v9707 = vsel %vm9705, %v9706, %v9704
        %v9708 = vclz %v9707
        %v9709 = vsub.s32 %v9708, 2
        %vm9710 = vcmp.gt.s32.totalorder 0, %v9709
        %v9711 = vsel %vm9710, 0, %v9709
        %v9712 = vsub.s32 32, %v9711
        %v9713 = vshll.u32 %v9704, %v9711
        %v9714 = vshrl.u32 %v9696, %v9712
        %v9715 = vor.u32 %v9713, %v9714
        %v9716 = vsub.s32 4294967266, %v9711
        %v9717 = vadd.s32 %v9716, 127
        %v9718 = vshll.u32 %v9717, 23
        %v9719 = vor.u32 4788187, %v9718
        %v9720 = vand.u32 2147483647, %v9719
        %v9722 = vcvt.s32.f32 %v9715
        %v9723 = vmul.f32 %v9722, %v9720
        %v9724 = vxor.u32 %v9723, 2147483648
        %v9725 = vsel %vm9642, %v9724, %v9723
        %v9726 = vsub.s32 4, %v9702
        %v9727 = vsel %vm9642, %v9726, %v9702
        %v9728 = vsel %vm9641, %v7342, %v9725
        %v9729 = vsel %vm9641, 0, %v9727
        %v9730 = vcosq.f32.pop %v9728
        %v9731 = vsinq.f32.pop %v9728
        %vm9732 = vweird.f32 %v7342
        %v9733 = vadd.s32 %v9729, 3
        %v9734 = vand.u32 %v9733, 3
        %vm9735 = vcmp.lt.s32.totalorder %v9734, 2
        %vm9736 = vcmp.eq.s32.totalorder %v9734, 0
        %v9737 = vxor.u32 %v9731, 2147483648
        %v9738 = vsel %vm9736, %v9730, %v9737
        %vm9739 = vcmp.eq.s32.totalorder %v9734, 2
        %v9740 = vxor.u32 %v9730, 2147483648
        %v9741 = vsel %vm9739, %v9740, %v9731
        %v9742 = vsel %vm9735, %v9738, %v9741
        %v9743 = vsel %vm9732, nan, %v9742
        %v9744 = vand.u32 2147483647, %v7343
        %vm9745 = vcmp.le.f32.partialorder %v9744, 0.7853982
        %vm9746 = vcmp.lt.s32.totalorder %v7343, 0
        %v9747 = vand.u32 %v7343, 2139095040
        %v9748 = vshrl.u32 %v9747, 23
        %v9749 = vsub.s32 %v9748, 127
        %v9750 = vand.u32 2147483647, %v7343
        %v9751 = vand.u32 %v9750, 8388607
        %v9752 = vor.u32 %v9751, 8388608
        %v9753 = vsub.s32 0, %v9752
        %v9754 = vadd.s32 %v9749, 1
        %vm9755 = vcmp.gt.s32.totalorder %v9754, 0
        %v9756 = vsel %vm9755, %v9754, 0
        %v9757 = vshrl.u32 %v9756, 5
        %v9758 = vand.u32 %v9756, 31
        %v9759 = vsub.s32 32, %v9758
        %v9760 = vshrl.u32 683565275, %v9759
        %v9761 = vshll.u32 683565275, %v9758
        %v9762 = vshrl.u32 2475754826, %v9759
        %v9763 = vor.u32 %v9761, %v9762
        %v9764 = vshll.u32 2475754826, %v9758
        %v9765 = vshrl.u32 2131351028, %v9759
        %v9766 = vor.u32 %v9764, %v9765
        %v9767 = vshll.u32 2131351028, %v9758
        %v9768 = vshrl.u32 2102212464, %v9759
        %v9769 = vor.u32 %v9767, %v9768
        %v9770 = vshll.u32 2102212464, %v9758
        %v9771 = vshrl.u32 920167782, %v9759
        %v9772 = vor.u32 %v9770, %v9771
        %v9773 = vshll.u32 920167782, %v9758
        %v9774 = vshrl.u32 1326507024, %v9759
        %v9775 = vor.u32 %v9773, %v9774
        %vm9776 = vcmp.lt.s32.totalorder %v9757, 1
        %vm9777 = vcmp.lt.s32.totalorder %v9757, 2
        %vm9778 = vcmp.lt.s32.totalorder %v9757, 3
        %vm9779 = vcmp.lt.s32.totalorder %v9757, 4
        %v9780 = vsel %vm9776, %v9760, %v9763
        %v9781 = vsel %vm9779, %v9769, 2102212464
        %v9782 = vsel %vm9778, %v9766, %v9781
        %v9783 = vsel %vm9777, %v9780, %v9782
        %v9784 = vsel %vm9776, %v9763, %v9766
        %v9785 = vsel %vm9779, %v9772, 920167782
        %v9786 = vsel %vm9778, %v9769, %v9785
        %v9787 = vsel %vm9777, %v9784, %v9786
        %v9788 = vsel %vm9776, %v9766, %v9769
        %v9789 = vsel %vm9779, %v9775, 1326507024
        %v9790 = vsel %vm9778, %v9772, %v9789
        %v9791 = vsel %vm9777, %v9788, %v9790
        %v9792 = vshll.u32 %v9752, 8
        %v9793 = vmul.u32.u64.compose %v9792, %v9791
        %v9794 = vextract.low.u32 %v9793
        %v9795 = vextract.high.u32 %v9793
        %v9796 = vmul.u32.u64.compose %v9792, %v9787
        %v9797 = vextract.low.u32 %v9796
        %v9798 = vextract.high.u32 %v9796
        %v9799 = vmul.u32 %v9792, %v9783
        %v9800 = vadd.s32 %v9795, %v9797
        %vm9801 = vc.u32 %v9795, %v9797
        %v9802 = vadd.s32 %v9798, 1
        %v9803 = vsel %vm9801, %v9802, %v9798
        %v9804 = vadd.s32 %v9799, %v9803
        %v9805 = vadd.s32 %v9804, 536870912
        %v9806 = vshrl.u32 %v9805, 30
        %v9807 = vshll.u32 %v9806, 30
        %v9808 = vsub.s32 %v9804, %v9807
        %vm9809 = vcmp.lt.s32.totalorder %v9808, 0
        %v9810 = vsub.s32 0, %v9808
        %v9811 = vsel %vm9809, %v9810, %v9808
        %v9812 = vclz %v9811
        %v9813 = vsub.s32 %v9812, 2
        %vm9814 = vcmp.gt.s32.totalorder 0, %v9813
        %v9815 = vsel %vm9814, 0, %v9813
        %v9816 = vsub.s32 32, %v9815
        %v9817 = vshll.u32 %v9808, %v9815
        %v9818 = vshrl.u32 %v9800, %v9816
        %v9819 = vor.u32 %v9817, %v9818
        %v9820 = vsub.s32 4294967266, %v9815
        %v9821 = vadd.s32 %v9820, 127
        %v9822 = vshll.u32 %v9821, 23
        %v9823 = vor.u32 4788187, %v9822
        %v9824 = vand.u32 2147483647, %v9823
        %v9826 = vcvt.s32.f32 %v9819
        %v9827 = vmul.f32 %v9826, %v9824
        %v9828 = vxor.u32 %v9827, 2147483648
        %v9829 = vsel %vm9746, %v9828, %v9827
        %v9830 = vsub.s32 4, %v9806
        %v9831 = vsel %vm9746, %v9830, %v9806
        %v9832 = vsel %vm9745, %v7343, %v9829
        %v9833 = vsel %vm9745, 0, %v9831
        %v9834 = vcosq.f32.pop %v9832
        %v9835 = vsinq.f32.pop %v9832
        %vm9836 = vweird.f32 %v7343
        %v9837 = vadd.s32 %v9833, 3
        %v9838 = vand.u32 %v9837, 3
        %vm9839 = vcmp.lt.s32.totalorder %v9838, 2
        %vm9840 = vcmp.eq.s32.totalorder %v9838, 0
        %v9841 = vxor.u32 %v9835, 2147483648
        %v9842 = vsel %vm9840, %v9834, %v9841
        %vm9843 = vcmp.eq.s32.totalorder %v9838, 2
        %v9844 = vxor.u32 %v9834, 2147483648
        %v9845 = vsel %vm9843, %v9844, %v9835
        %v9846 = vsel %vm9839, %v9842, %v9845
        %v9847 = vsel %vm9836, nan, %v9846
        %v9848 = vand.u32 2147483647, %v7344
        %vm9849 = vcmp.le.f32.partialorder %v9848, 0.7853982
        %vm9850 = vcmp.lt.s32.totalorder %v7344, 0
        %v9851 = vand.u32 %v7344, 2139095040
        %v9852 = vshrl.u32 %v9851, 23
        %v9853 = vsub.s32 %v9852, 127
        %v9854 = vand.u32 2147483647, %v7344
        %v9855 = vand.u32 %v9854, 8388607
        %v9856 = vor.u32 %v9855, 8388608
        %v9857 = vsub.s32 0, %v9856
        %v9858 = vadd.s32 %v9853, 1
        %vm9859 = vcmp.gt.s32.totalorder %v9858, 0
        %v9860 = vsel %vm9859, %v9858, 0
        %v9861 = vshrl.u32 %v9860, 5
        %v9862 = vand.u32 %v9860, 31
        %v9863 = vsub.s32 32, %v9862
        %v9864 = vshrl.u32 683565275, %v9863
        %v9865 = vshll.u32 683565275, %v9862
        %v9866 = vshrl.u32 2475754826, %v9863
        %v9867 = vor.u32 %v9865, %v9866
        %v9868 = vshll.u32 2475754826, %v9862
        %v9869 = vshrl.u32 2131351028, %v9863
        %v9870 = vor.u32 %v9868, %v9869
        %v9871 = vshll.u32 2131351028, %v9862
        %v9872 = vshrl.u32 2102212464, %v9863
        %v9873 = vor.u32 %v9871, %v9872
        %v9874 = vshll.u32 2102212464, %v9862
        %v9875 = vshrl.u32 920167782, %v9863
        %v9876 = vor.u32 %v9874, %v9875
        %v9877 = vshll.u32 920167782, %v9862
        %v9878 = vshrl.u32 1326507024, %v9863
        %v9879 = vor.u32 %v9877, %v9878
        %vm9880 = vcmp.lt.s32.totalorder %v9861, 1
        %vm9881 = vcmp.lt.s32.totalorder %v9861, 2
        %vm9882 = vcmp.lt.s32.totalorder %v9861, 3
        %vm9883 = vcmp.lt.s32.totalorder %v9861, 4
        %v9884 = vsel %vm9880, %v9864, %v9867
        %v9885 = vsel %vm9883, %v9873, 2102212464
        %v9886 = vsel %vm9882, %v9870, %v9885
        %v9887 = vsel %vm9881, %v9884, %v9886
        %v9888 = vsel %vm9880, %v9867, %v9870
        %v9889 = vsel %vm9883, %v9876, 920167782
        %v9890 = vsel %vm9882, %v9873, %v9889
        %v9891 = vsel %vm9881, %v9888, %v9890
        %v9892 = vsel %vm9880, %v9870, %v9873
        %v9893 = vsel %vm9883, %v9879, 1326507024
        %v9894 = vsel %vm9882, %v9876, %v9893
        %v9895 = vsel %vm9881, %v9892, %v9894
        %v9896 = vshll.u32 %v9856, 8
        %v9897 = vmul.u32.u64.compose %v9896, %v9895
        %v9898 = vextract.low.u32 %v9897
        %v9899 = vextract.high.u32 %v9897
        %v9900 = vmul.u32.u64.compose %v9896, %v9891
        %v9901 = vextract.low.u32 %v9900
        %v9902 = vextract.high.u32 %v9900
        %v9903 = vmul.u32 %v9896, %v9887
        %v9904 = vadd.s32 %v9899, %v9901
        %vm9905 = vc.u32 %v9899, %v9901
        %v9906 = vadd.s32 %v9902, 1
        %v9907 = vsel %vm9905, %v9906, %v9902
        %v9908 = vadd.s32 %v9903, %v9907
        %v9909 = vadd.s32 %v9908, 536870912
        %v9910 = vshrl.u32 %v9909, 30
        %v9911 = vshll.u32 %v9910, 30
        %v9912 = vsub.s32 %v9908, %v9911
        %vm9913 = vcmp.lt.s32.totalorder %v9912, 0
        %v9914 = vsub.s32 0, %v9912
        %v9915 = vsel %vm9913, %v9914, %v9912
        %v9916 = vclz %v9915
        %v9917 = vsub.s32 %v9916, 2
        %vm9918 = vcmp.gt.s32.totalorder 0, %v9917
        %v9919 = vsel %vm9918, 0, %v9917
        %v9920 = vsub.s32 32, %v9919
        %v9921 = vshll.u32 %v9912, %v9919
        %v9922 = vshrl.u32 %v9904, %v9920
        %v9923 = vor.u32 %v9921, %v9922
        %v9924 = vsub.s32 4294967266, %v9919
        %v9925 = vadd.s32 %v9924, 127
        %v9926 = vshll.u32 %v9925, 23
        %v9927 = vor.u32 4788187, %v9926
        %v9928 = vand.u32 2147483647, %v9927
        %v9930 = vcvt.s32.f32 %v9923
        %v9931 = vmul.f32 %v9930, %v9928
        %v9932 = vxor.u32 %v9931, 2147483648
        %v9933 = vsel %vm9850, %v9932, %v9931
        %v9934 = vsub.s32 4, %v9910
        %v9935 = vsel %vm9850, %v9934, %v9910
        %v9936 = vsel %vm9849, %v7344, %v9933
        %v9937 = vsel %vm9849, 0, %v9935
        %v9938 = vcosq.f32.pop %v9936
        %v9939 = vsinq.f32.pop %v9936
        %vm9940 = vweird.f32 %v7344
        %v9941 = vadd.s32 %v9937, 3
        %v9942 = vand.u32 %v9941, 3
        %vm9943 = vcmp.lt.s32.totalorder %v9942, 2
        %vm9944 = vcmp.eq.s32.totalorder %v9942, 0
        %v9945 = vxor.u32 %v9939, 2147483648
        %v9946 = vsel %vm9944, %v9938, %v9945
        %vm9947 = vcmp.eq.s32.totalorder %v9942, 2
        %v9948 = vxor.u32 %v9938, 2147483648
        %v9949 = vsel %vm9947, %v9948, %v9939
        %v9950 = vsel %vm9943, %v9946, %v9949
        %v9951 = vsel %vm9940, nan, %v9950
        %v9952 = vand.u32 2147483647, %v7345
        %vm9953 = vcmp.le.f32.partialorder %v9952, 0.7853982
        %vm9954 = vcmp.lt.s32.totalorder %v7345, 0
        %v9955 = vand.u32 %v7345, 2139095040
        %v9956 = vshrl.u32 %v9955, 23
        %v9957 = vsub.s32 %v9956, 127
        %v9958 = vand.u32 2147483647, %v7345
        %v9959 = vand.u32 %v9958, 8388607
        %v9960 = vor.u32 %v9959, 8388608
        %v9961 = vsub.s32 0, %v9960
        %v9962 = vadd.s32 %v9957, 1
        %vm9963 = vcmp.gt.s32.totalorder %v9962, 0
        %v9964 = vsel %vm9963, %v9962, 0
        %v9965 = vshrl.u32 %v9964, 5
        %v9966 = vand.u32 %v9964, 31
        %v9967 = vsub.s32 32, %v9966
        %v9968 = vshrl.u32 683565275, %v9967
        %v9969 = vshll.u32 683565275, %v9966
        %v9970 = vshrl.u32 2475754826, %v9967
        %v9971 = vor.u32 %v9969, %v9970
        %v9972 = vshll.u32 2475754826, %v9966
        %v9973 = vshrl.u32 2131351028, %v9967
        %v9974 = vor.u32 %v9972, %v9973
        %v9975 = vshll.u32 2131351028, %v9966
        %v9976 = vshrl.u32 2102212464, %v9967
        %v9977 = vor.u32 %v9975, %v9976
        %v9978 = vshll.u32 2102212464, %v9966
        %v9979 = vshrl.u32 920167782, %v9967
        %v9980 = vor.u32 %v9978, %v9979
        %v9981 = vshll.u32 920167782, %v9966
        %v9982 = vshrl.u32 1326507024, %v9967
        %v9983 = vor.u32 %v9981, %v9982
        %vm9984 = vcmp.lt.s32.totalorder %v9965, 1
        %vm9985 = vcmp.lt.s32.totalorder %v9965, 2
        %vm9986 = vcmp.lt.s32.totalorder %v9965, 3
        %vm9987 = vcmp.lt.s32.totalorder %v9965, 4
        %v9988 = vsel %vm9984, %v9968, %v9971
        %v9989 = vsel %vm9987, %v9977, 2102212464
        %v9990 = vsel %vm9986, %v9974, %v9989
        %v9991 = vsel %vm9985, %v9988, %v9990
        %v9992 = vsel %vm9984, %v9971, %v9974
        %v9993 = vsel %vm9987, %v9980, 920167782
        %v9994 = vsel %vm9986, %v9977, %v9993
        %v9995 = vsel %vm9985, %v9992, %v9994
        %v9996 = vsel %vm9984, %v9974, %v9977
        %v9997 = vsel %vm9987, %v9983, 1326507024
        %v9998 = vsel %vm9986, %v9980, %v9997
        %v9999 = vsel %vm9985, %v9996, %v9998
        %v10000 = vshll.u32 %v9960, 8
        %v10001 = vmul.u32.u64.compose %v10000, %v9999
        %v10002 = vextract.low.u32 %v10001
        %v10003 = vextract.high.u32 %v10001
        %v10004 = vmul.u32.u64.compose %v10000, %v9995
        %v10005 = vextract.low.u32 %v10004
        %v10006 = vextract.high.u32 %v10004
        %v10007 = vmul.u32 %v10000, %v9991
        %v10008 = vadd.s32 %v10003, %v10005
        %vm10009 = vc.u32 %v10003, %v10005
        %v10010 = vadd.s32 %v10006, 1
        %v10011 = vsel %vm10009, %v10010, %v10006
        %v10012 = vadd.s32 %v10007, %v10011
        %v10013 = vadd.s32 %v10012, 536870912
        %v10014 = vshrl.u32 %v10013, 30
        %v10015 = vshll.u32 %v10014, 30
        %v10016 = vsub.s32 %v10012, %v10015
        %vm10017 = vcmp.lt.s32.totalorder %v10016, 0
        %v10018 = vsub.s32 0, %v10016
        %v10019 = vsel %vm10017, %v10018, %v10016
        %v10020 = vclz %v10019
        %v10021 = vsub.s32 %v10020, 2
        %vm10022 = vcmp.gt.s32.totalorder 0, %v10021
        %v10023 = vsel %vm10022, 0, %v10021
        %v10024 = vsub.s32 32, %v10023
        %v10025 = vshll.u32 %v10016, %v10023
        %v10026 = vshrl.u32 %v10008, %v10024
        %v10027 = vor.u32 %v10025, %v10026
        %v10028 = vsub.s32 4294967266, %v10023
        %v10029 = vadd.s32 %v10028, 127
        %v10030 = vshll.u32 %v10029, 23
        %v10031 = vor.u32 4788187, %v10030
        %v10032 = vand.u32 2147483647, %v10031
        %v10034 = vcvt.s32.f32 %v10027
        %v10035 = vmul.f32 %v10034, %v10032
        %v10036 = vxor.u32 %v10035, 2147483648
        %v10037 = vsel %vm9954, %v10036, %v10035
        %v10038 = vsub.s32 4, %v10014
        %v10039 = vsel %vm9954, %v10038, %v10014
        %v10040 = vsel %vm9953, %v7345, %v10037
        %v10041 = vsel %vm9953, 0, %v10039
        %v10042 = vcosq.f32.pop %v10040
        %v10043 = vsinq.f32.pop %v10040
        %vm10044 = vweird.f32 %v7345
        %v10045 = vadd.s32 %v10041, 3
        %v10046 = vand.u32 %v10045, 3
        %vm10047 = vcmp.lt.s32.totalorder %v10046, 2
        %vm10048 = vcmp.eq.s32.totalorder %v10046, 0
        %v10049 = vxor.u32 %v10043, 2147483648
        %v10050 = vsel %vm10048, %v10042, %v10049
        %vm10051 = vcmp.eq.s32.totalorder %v10046, 2
        %v10052 = vxor.u32 %v10042, 2147483648
        %v10053 = vsel %vm10051, %v10052, %v10043
        %v10054 = vsel %vm10047, %v10050, %v10053
        %v10055 = vsel %vm10044, nan, %v10054
        %v10056 = vand.u32 2147483647, %v7346
        %vm10057 = vcmp.le.f32.partialorder %v10056, 0.7853982
        %vm10058 = vcmp.lt.s32.totalorder %v7346, 0
        %v10059 = vand.u32 %v7346, 2139095040
        %v10060 = vshrl.u32 %v10059, 23
        %v10061 = vsub.s32 %v10060, 127
        %v10062 = vand.u32 2147483647, %v7346
        %v10063 = vand.u32 %v10062, 8388607
        %v10064 = vor.u32 %v10063, 8388608
        %v10065 = vsub.s32 0, %v10064
        %v10066 = vadd.s32 %v10061, 1
        %vm10067 = vcmp.gt.s32.totalorder %v10066, 0
        %v10068 = vsel %vm10067, %v10066, 0
        %v10069 = vshrl.u32 %v10068, 5
        %v10070 = vand.u32 %v10068, 31
        %v10071 = vsub.s32 32, %v10070
        %v10072 = vshrl.u32 683565275, %v10071
        %v10073 = vshll.u32 683565275, %v10070
        %v10074 = vshrl.u32 2475754826, %v10071
        %v10075 = vor.u32 %v10073, %v10074
        %v10076 = vshll.u32 2475754826, %v10070
        %v10077 = vshrl.u32 2131351028, %v10071
        %v10078 = vor.u32 %v10076, %v10077
        %v10079 = vshll.u32 2131351028, %v10070
        %v10080 = vshrl.u32 2102212464, %v10071
        %v10081 = vor.u32 %v10079, %v10080
        %v10082 = vshll.u32 2102212464, %v10070
        %v10083 = vshrl.u32 920167782, %v10071
        %v10084 = vor.u32 %v10082, %v10083
        %v10085 = vshll.u32 920167782, %v10070
        %v10086 = vshrl.u32 1326507024, %v10071
        %v10087 = vor.u32 %v10085, %v10086
        %vm10088 = vcmp.lt.s32.totalorder %v10069, 1
        %vm10089 = vcmp.lt.s32.totalorder %v10069, 2
        %vm10090 = vcmp.lt.s32.totalorder %v10069, 3
        %vm10091 = vcmp.lt.s32.totalorder %v10069, 4
        %v10092 = vsel %vm10088, %v10072, %v10075
        %v10093 = vsel %vm10091, %v10081, 2102212464
        %v10094 = vsel %vm10090, %v10078, %v10093
        %v10095 = vsel %vm10089, %v10092, %v10094
        %v10096 = vsel %vm10088, %v10075, %v10078
        %v10097 = vsel %vm10091, %v10084, 920167782
        %v10098 = vsel %vm10090, %v10081, %v10097
        %v10099 = vsel %vm10089, %v10096, %v10098
        %v10100 = vsel %vm10088, %v10078, %v10081
        %v10101 = vsel %vm10091, %v10087, 1326507024
        %v10102 = vsel %vm10090, %v10084, %v10101
        %v10103 = vsel %vm10089, %v10100, %v10102
        %v10104 = vshll.u32 %v10064, 8
        %v10105 = vmul.u32.u64.compose %v10104, %v10103
        %v10106 = vextract.low.u32 %v10105
        %v10107 = vextract.high.u32 %v10105
        %v10108 = vmul.u32.u64.compose %v10104, %v10099
        %v10109 = vextract.low.u32 %v10108
        %v10110 = vextract.high.u32 %v10108
        %v10111 = vmul.u32 %v10104, %v10095
        %v10112 = vadd.s32 %v10107, %v10109
        %vm10113 = vc.u32 %v10107, %v10109
        %v10114 = vadd.s32 %v10110, 1
        %v10115 = vsel %vm10113, %v10114, %v10110
        %v10116 = vadd.s32 %v10111, %v10115
        %v10117 = vadd.s32 %v10116, 536870912
        %v10118 = vshrl.u32 %v10117, 30
        %v10119 = vshll.u32 %v10118, 30
        %v10120 = vsub.s32 %v10116, %v10119
        %vm10121 = vcmp.lt.s32.totalorder %v10120, 0
        %v10122 = vsub.s32 0, %v10120
        %v10123 = vsel %vm10121, %v10122, %v10120
        %v10124 = vclz %v10123
        %v10125 = vsub.s32 %v10124, 2
        %vm10126 = vcmp.gt.s32.totalorder 0, %v10125
        %v10127 = vsel %vm10126, 0, %v10125
        %v10128 = vsub.s32 32, %v10127
        %v10129 = vshll.u32 %v10120, %v10127
        %v10130 = vshrl.u32 %v10112, %v10128
        %v10131 = vor.u32 %v10129, %v10130
        %v10132 = vsub.s32 4294967266, %v10127
        %v10133 = vadd.s32 %v10132, 127
        %v10134 = vshll.u32 %v10133, 23
        %v10135 = vor.u32 4788187, %v10134
        %v10136 = vand.u32 2147483647, %v10135
        %v10138 = vcvt.s32.f32 %v10131
        %v10139 = vmul.f32 %v10138, %v10136
        %v10140 = vxor.u32 %v10139, 2147483648
        %v10141 = vsel %vm10058, %v10140, %v10139
        %v10142 = vsub.s32 4, %v10118
        %v10143 = vsel %vm10058, %v10142, %v10118
        %v10144 = vsel %vm10057, %v7346, %v10141
        %v10145 = vsel %vm10057, 0, %v10143
        %v10146 = vcosq.f32.pop %v10144
        %v10147 = vsinq.f32.pop %v10144
        %vm10148 = vweird.f32 %v7346
        %v10149 = vadd.s32 %v10145, 3
        %v10150 = vand.u32 %v10149, 3
        %vm10151 = vcmp.lt.s32.totalorder %v10150, 2
        %vm10152 = vcmp.eq.s32.totalorder %v10150, 0
        %v10153 = vxor.u32 %v10147, 2147483648
        %v10154 = vsel %vm10152, %v10146, %v10153
        %vm10155 = vcmp.eq.s32.totalorder %v10150, 2
        %v10156 = vxor.u32 %v10146, 2147483648
        %v10157 = vsel %vm10155, %v10156, %v10147
        %v10158 = vsel %vm10151, %v10154, %v10157
        %v10159 = vsel %vm10148, nan, %v10158
        %v10160 = vand.u32 2147483647, %v7347
        %vm10161 = vcmp.le.f32.partialorder %v10160, 0.7853982
        %vm10162 = vcmp.lt.s32.totalorder %v7347, 0
        %v10163 = vand.u32 %v7347, 2139095040
        %v10164 = vshrl.u32 %v10163, 23
        %v10165 = vsub.s32 %v10164, 127
        %v10166 = vand.u32 2147483647, %v7347
        %v10167 = vand.u32 %v10166, 8388607
        %v10168 = vor.u32 %v10167, 8388608
        %v10169 = vsub.s32 0, %v10168
        %v10170 = vadd.s32 %v10165, 1
        %vm10171 = vcmp.gt.s32.totalorder %v10170, 0
        %v10172 = vsel %vm10171, %v10170, 0
        %v10173 = vshrl.u32 %v10172, 5
        %v10174 = vand.u32 %v10172, 31
        %v10175 = vsub.s32 32, %v10174
        %v10176 = vshrl.u32 683565275, %v10175
        %v10177 = vshll.u32 683565275, %v10174
        %v10178 = vshrl.u32 2475754826, %v10175
        %v10179 = vor.u32 %v10177, %v10178
        %v10180 = vshll.u32 2475754826, %v10174
        %v10181 = vshrl.u32 2131351028, %v10175
        %v10182 = vor.u32 %v10180, %v10181
        %v10183 = vshll.u32 2131351028, %v10174
        %v10184 = vshrl.u32 2102212464, %v10175
        %v10185 = vor.u32 %v10183, %v10184
        %v10186 = vshll.u32 2102212464, %v10174
        %v10187 = vshrl.u32 920167782, %v10175
        %v10188 = vor.u32 %v10186, %v10187
        %v10189 = vshll.u32 920167782, %v10174
        %v10190 = vshrl.u32 1326507024, %v10175
        %v10191 = vor.u32 %v10189, %v10190
        %vm10192 = vcmp.lt.s32.totalorder %v10173, 1
        %vm10193 = vcmp.lt.s32.totalorder %v10173, 2
        %vm10194 = vcmp.lt.s32.totalorder %v10173, 3
        %vm10195 = vcmp.lt.s32.totalorder %v10173, 4
        %v10196 = vsel %vm10192, %v10176, %v10179
        %v10197 = vsel %vm10195, %v10185, 2102212464
        %v10198 = vsel %vm10194, %v10182, %v10197
        %v10199 = vsel %vm10193, %v10196, %v10198
        %v10200 = vsel %vm10192, %v10179, %v10182
        %v10201 = vsel %vm10195, %v10188, 920167782
        %v10202 = vsel %vm10194, %v10185, %v10201
        %v10203 = vsel %vm10193, %v10200, %v10202
        %v10204 = vsel %vm10192, %v10182, %v10185
        %v10205 = vsel %vm10195, %v10191, 1326507024
        %v10206 = vsel %vm10194, %v10188, %v10205
        %v10207 = vsel %vm10193, %v10204, %v10206
        %v10208 = vshll.u32 %v10168, 8
        %v10209 = vmul.u32.u64.compose %v10208, %v10207
        %v10210 = vextract.low.u32 %v10209
        %v10211 = vextract.high.u32 %v10209
        %v10212 = vmul.u32.u64.compose %v10208, %v10203
        %v10213 = vextract.low.u32 %v10212
        %v10214 = vextract.high.u32 %v10212
        %v10215 = vmul.u32 %v10208, %v10199
        %v10216 = vadd.s32 %v10211, %v10213
        %vm10217 = vc.u32 %v10211, %v10213
        %v10218 = vadd.s32 %v10214, 1
        %v10219 = vsel %vm10217, %v10218, %v10214
        %v10220 = vadd.s32 %v10215, %v10219
        %v10221 = vadd.s32 %v10220, 536870912
        %v10222 = vshrl.u32 %v10221, 30
        %v10223 = vshll.u32 %v10222, 30
        %v10224 = vsub.s32 %v10220, %v10223
        %vm10225 = vcmp.lt.s32.totalorder %v10224, 0
        %v10226 = vsub.s32 0, %v10224
        %v10227 = vsel %vm10225, %v10226, %v10224
        %v10228 = vclz %v10227
        %v10229 = vsub.s32 %v10228, 2
        %vm10230 = vcmp.gt.s32.totalorder 0, %v10229
        %v10231 = vsel %vm10230, 0, %v10229
        %v10232 = vsub.s32 32, %v10231
        %v10233 = vshll.u32 %v10224, %v10231
        %v10234 = vshrl.u32 %v10216, %v10232
        %v10235 = vor.u32 %v10233, %v10234
        %v10236 = vsub.s32 4294967266, %v10231
        %v10237 = vadd.s32 %v10236, 127
        %v10238 = vshll.u32 %v10237, 23
        %v10239 = vor.u32 4788187, %v10238
        %v10240 = vand.u32 2147483647, %v10239
        %v10242 = vcvt.s32.f32 %v10235
        %v10243 = vmul.f32 %v10242, %v10240
        %v10244 = vxor.u32 %v10243, 2147483648
        %v10245 = vsel %vm10162, %v10244, %v10243
        %v10246 = vsub.s32 4, %v10222
        %v10247 = vsel %vm10162, %v10246, %v10222
        %v10248 = vsel %vm10161, %v7347, %v10245
        %v10249 = vsel %vm10161, 0, %v10247
        %v10250 = vcosq.f32.pop %v10248
        %v10251 = vsinq.f32.pop %v10248
        %vm10252 = vweird.f32 %v7347
        %v10253 = vadd.s32 %v10249, 3
        %v10254 = vand.u32 %v10253, 3
        %vm10255 = vcmp.lt.s32.totalorder %v10254, 2
        %vm10256 = vcmp.eq.s32.totalorder %v10254, 0
        %v10257 = vxor.u32 %v10251, 2147483648
        %v10258 = vsel %vm10256, %v10250, %v10257
        %vm10259 = vcmp.eq.s32.totalorder %v10254, 2
        %v10260 = vxor.u32 %v10250, 2147483648
        %v10261 = vsel %vm10259, %v10260, %v10251
        %v10262 = vsel %vm10255, %v10258, %v10261
        %v10263 = vsel %vm10252, nan, %v10262
        %v10264 = vand.u32 2147483647, %v7348
        %vm10265 = vcmp.le.f32.partialorder %v10264, 0.7853982
        %vm10266 = vcmp.lt.s32.totalorder %v7348, 0
        %v10267 = vand.u32 %v7348, 2139095040
        %v10268 = vshrl.u32 %v10267, 23
        %v10269 = vsub.s32 %v10268, 127
        %v10270 = vand.u32 2147483647, %v7348
        %v10271 = vand.u32 %v10270, 8388607
        %v10272 = vor.u32 %v10271, 8388608
        %v10273 = vsub.s32 0, %v10272
        %v10274 = vadd.s32 %v10269, 1
        %vm10275 = vcmp.gt.s32.totalorder %v10274, 0
        %v10276 = vsel %vm10275, %v10274, 0
        %v10277 = vshrl.u32 %v10276, 5
        %v10278 = vand.u32 %v10276, 31
        %v10279 = vsub.s32 32, %v10278
        %v10280 = vshrl.u32 683565275, %v10279
        %v10281 = vshll.u32 683565275, %v10278
        %v10282 = vshrl.u32 2475754826, %v10279
        %v10283 = vor.u32 %v10281, %v10282
        %v10284 = vshll.u32 2475754826, %v10278
        %v10285 = vshrl.u32 2131351028, %v10279
        %v10286 = vor.u32 %v10284, %v10285
        %v10287 = vshll.u32 2131351028, %v10278
        %v10288 = vshrl.u32 2102212464, %v10279
        %v10289 = vor.u32 %v10287, %v10288
        %v10290 = vshll.u32 2102212464, %v10278
        %v10291 = vshrl.u32 920167782, %v10279
        %v10292 = vor.u32 %v10290, %v10291
        %v10293 = vshll.u32 920167782, %v10278
        %v10294 = vshrl.u32 1326507024, %v10279
        %v10295 = vor.u32 %v10293, %v10294
        %vm10296 = vcmp.lt.s32.totalorder %v10277, 1
        %vm10297 = vcmp.lt.s32.totalorder %v10277, 2
        %vm10298 = vcmp.lt.s32.totalorder %v10277, 3
        %vm10299 = vcmp.lt.s32.totalorder %v10277, 4
        %v10300 = vsel %vm10296, %v10280, %v10283
        %v10301 = vsel %vm10299, %v10289, 2102212464
        %v10302 = vsel %vm10298, %v10286, %v10301
        %v10303 = vsel %vm10297, %v10300, %v10302
        %v10304 = vsel %vm10296, %v10283, %v10286
        %v10305 = vsel %vm10299, %v10292, 920167782
        %v10306 = vsel %vm10298, %v10289, %v10305
        %v10307 = vsel %vm10297, %v10304, %v10306
        %v10308 = vsel %vm10296, %v10286, %v10289
        %v10309 = vsel %vm10299, %v10295, 1326507024
        %v10310 = vsel %vm10298, %v10292, %v10309
        %v10311 = vsel %vm10297, %v10308, %v10310
        %v10312 = vshll.u32 %v10272, 8
        %v10313 = vmul.u32.u64.compose %v10312, %v10311
        %v10314 = vextract.low.u32 %v10313
        %v10315 = vextract.high.u32 %v10313
        %v10316 = vmul.u32.u64.compose %v10312, %v10307
        %v10317 = vextract.low.u32 %v10316
        %v10318 = vextract.high.u32 %v10316
        %v10319 = vmul.u32 %v10312, %v10303
        %v10320 = vadd.s32 %v10315, %v10317
        %vm10321 = vc.u32 %v10315, %v10317
        %v10322 = vadd.s32 %v10318, 1
        %v10323 = vsel %vm10321, %v10322, %v10318
        %v10324 = vadd.s32 %v10319, %v10323
        %v10325 = vadd.s32 %v10324, 536870912
        %v10326 = vshrl.u32 %v10325, 30
        %v10327 = vshll.u32 %v10326, 30
        %v10328 = vsub.s32 %v10324, %v10327
        %vm10329 = vcmp.lt.s32.totalorder %v10328, 0
        %v10330 = vsub.s32 0, %v10328
        %v10331 = vsel %vm10329, %v10330, %v10328
        %v10332 = vclz %v10331
        %v10333 = vsub.s32 %v10332, 2
        %vm10334 = vcmp.gt.s32.totalorder 0, %v10333
        %v10335 = vsel %vm10334, 0, %v10333
        %v10336 = vsub.s32 32, %v10335
        %v10337 = vshll.u32 %v10328, %v10335
        %v10338 = vshrl.u32 %v10320, %v10336
        %v10339 = vor.u32 %v10337, %v10338
        %v10340 = vsub.s32 4294967266, %v10335
        %v10341 = vadd.s32 %v10340, 127
        %v10342 = vshll.u32 %v10341, 23
        %v10343 = vor.u32 4788187, %v10342
        %v10344 = vand.u32 2147483647, %v10343
        %v10346 = vcvt.s32.f32 %v10339
        %v10347 = vmul.f32 %v10346, %v10344
        %v10348 = vxor.u32 %v10347, 2147483648
        %v10349 = vsel %vm10266, %v10348, %v10347
        %v10350 = vsub.s32 4, %v10326
        %v10351 = vsel %vm10266, %v10350, %v10326
        %v10352 = vsel %vm10265, %v7348, %v10349
        %v10353 = vsel %vm10265, 0, %v10351
        %v10354 = vcosq.f32.pop %v10352
        %v10355 = vsinq.f32.pop %v10352
        %vm10356 = vweird.f32 %v7348
        %v10357 = vadd.s32 %v10353, 3
        %v10358 = vand.u32 %v10357, 3
        %vm10359 = vcmp.lt.s32.totalorder %v10358, 2
        %vm10360 = vcmp.eq.s32.totalorder %v10358, 0
        %v10361 = vxor.u32 %v10355, 2147483648
        %v10362 = vsel %vm10360, %v10354, %v10361
        %vm10363 = vcmp.eq.s32.totalorder %v10358, 2
        %v10364 = vxor.u32 %v10354, 2147483648
        %v10365 = vsel %vm10363, %v10364, %v10355
        %v10366 = vsel %vm10359, %v10362, %v10365
        %v10367 = vsel %vm10356, nan, %v10366
        %v10368 = vand.u32 2147483647, %v7349
        %vm10369 = vcmp.le.f32.partialorder %v10368, 0.7853982
        %vm10370 = vcmp.lt.s32.totalorder %v7349, 0
        %v10371 = vand.u32 %v7349, 2139095040
        %v10372 = vshrl.u32 %v10371, 23
        %v10373 = vsub.s32 %v10372, 127
        %v10374 = vand.u32 2147483647, %v7349
        %v10375 = vand.u32 %v10374, 8388607
        %v10376 = vor.u32 %v10375, 8388608
        %v10377 = vsub.s32 0, %v10376
        %v10378 = vadd.s32 %v10373, 1
        %vm10379 = vcmp.gt.s32.totalorder %v10378, 0
        %v10380 = vsel %vm10379, %v10378, 0
        %v10381 = vshrl.u32 %v10380, 5
        %v10382 = vand.u32 %v10380, 31
        %v10383 = vsub.s32 32, %v10382
        %v10384 = vshrl.u32 683565275, %v10383
        %v10385 = vshll.u32 683565275, %v10382
        %v10386 = vshrl.u32 2475754826, %v10383
        %v10387 = vor.u32 %v10385, %v10386
        %v10388 = vshll.u32 2475754826, %v10382
        %v10389 = vshrl.u32 2131351028, %v10383
        %v10390 = vor.u32 %v10388, %v10389
        %v10391 = vshll.u32 2131351028, %v10382
        %v10392 = vshrl.u32 2102212464, %v10383
        %v10393 = vor.u32 %v10391, %v10392
        %v10394 = vshll.u32 2102212464, %v10382
        %v10395 = vshrl.u32 920167782, %v10383
        %v10396 = vor.u32 %v10394, %v10395
        %v10397 = vshll.u32 920167782, %v10382
        %v10398 = vshrl.u32 1326507024, %v10383
        %v10399 = vor.u32 %v10397, %v10398
        %vm10400 = vcmp.lt.s32.totalorder %v10381, 1
        %vm10401 = vcmp.lt.s32.totalorder %v10381, 2
        %vm10402 = vcmp.lt.s32.totalorder %v10381, 3
        %vm10403 = vcmp.lt.s32.totalorder %v10381, 4
        %v10404 = vsel %vm10400, %v10384, %v10387
        %v10405 = vsel %vm10403, %v10393, 2102212464
        %v10406 = vsel %vm10402, %v10390, %v10405
        %v10407 = vsel %vm10401, %v10404, %v10406
        %v10408 = vsel %vm10400, %v10387, %v10390
        %v10409 = vsel %vm10403, %v10396, 920167782
        %v10410 = vsel %vm10402, %v10393, %v10409
        %v10411 = vsel %vm10401, %v10408, %v10410
        %v10412 = vsel %vm10400, %v10390, %v10393
        %v10413 = vsel %vm10403, %v10399, 1326507024
        %v10414 = vsel %vm10402, %v10396, %v10413
        %v10415 = vsel %vm10401, %v10412, %v10414
        %v10416 = vshll.u32 %v10376, 8
        %v10417 = vmul.u32.u64.compose %v10416, %v10415
        %v10418 = vextract.low.u32 %v10417
        %v10419 = vextract.high.u32 %v10417
        %v10420 = vmul.u32.u64.compose %v10416, %v10411
        %v10421 = vextract.low.u32 %v10420
        %v10422 = vextract.high.u32 %v10420
        %v10423 = vmul.u32 %v10416, %v10407
        %v10424 = vadd.s32 %v10419, %v10421
        %vm10425 = vc.u32 %v10419, %v10421
        %v10426 = vadd.s32 %v10422, 1
        %v10427 = vsel %vm10425, %v10426, %v10422
        %v10428 = vadd.s32 %v10423, %v10427
        %v10429 = vadd.s32 %v10428, 536870912
        %v10430 = vshrl.u32 %v10429, 30
        %v10431 = vshll.u32 %v10430, 30
        %v10432 = vsub.s32 %v10428, %v10431
        %vm10433 = vcmp.lt.s32.totalorder %v10432, 0
        %v10434 = vsub.s32 0, %v10432
        %v10435 = vsel %vm10433, %v10434, %v10432
        %v10436 = vclz %v10435
        %v10437 = vsub.s32 %v10436, 2
        %vm10438 = vcmp.gt.s32.totalorder 0, %v10437
        %v10439 = vsel %vm10438, 0, %v10437
        %v10440 = vsub.s32 32, %v10439
        %v10441 = vshll.u32 %v10432, %v10439
        %v10442 = vshrl.u32 %v10424, %v10440
        %v10443 = vor.u32 %v10441, %v10442
        %v10444 = vsub.s32 4294967266, %v10439
        %v10445 = vadd.s32 %v10444, 127
        %v10446 = vshll.u32 %v10445, 23
        %v10447 = vor.u32 4788187, %v10446
        %v10448 = vand.u32 2147483647, %v10447
        %v10450 = vcvt.s32.f32 %v10443
        %v10451 = vmul.f32 %v10450, %v10448
        %v10452 = vxor.u32 %v10451, 2147483648
        %v10453 = vsel %vm10370, %v10452, %v10451
        %v10454 = vsub.s32 4, %v10430
        %v10455 = vsel %vm10370, %v10454, %v10430
        %v10456 = vsel %vm10369, %v7349, %v10453
        %v10457 = vsel %vm10369, 0, %v10455
        %v10458 = vcosq.f32.pop %v10456
        %v10459 = vsinq.f32.pop %v10456
        %vm10460 = vweird.f32 %v7349
        %v10461 = vadd.s32 %v10457, 3
        %v10462 = vand.u32 %v10461, 3
        %vm10463 = vcmp.lt.s32.totalorder %v10462, 2
        %vm10464 = vcmp.eq.s32.totalorder %v10462, 0
        %v10465 = vxor.u32 %v10459, 2147483648
        %v10466 = vsel %vm10464, %v10458, %v10465
        %vm10467 = vcmp.eq.s32.totalorder %v10462, 2
        %v10468 = vxor.u32 %v10458, 2147483648
        %v10469 = vsel %vm10467, %v10468, %v10459
        %v10470 = vsel %vm10463, %v10466, %v10469
        %v10471 = vsel %vm10460, nan, %v10470
        %v10472 = vand.u32 2147483647, %v7350
        %vm10473 = vcmp.le.f32.partialorder %v10472, 0.7853982
        %vm10474 = vcmp.lt.s32.totalorder %v7350, 0
        %v10475 = vand.u32 %v7350, 2139095040
        %v10476 = vshrl.u32 %v10475, 23
        %v10477 = vsub.s32 %v10476, 127
        %v10478 = vand.u32 2147483647, %v7350
        %v10479 = vand.u32 %v10478, 8388607
        %v10480 = vor.u32 %v10479, 8388608
        %v10481 = vsub.s32 0, %v10480
        %v10482 = vadd.s32 %v10477, 1
        %vm10483 = vcmp.gt.s32.totalorder %v10482, 0
        %v10484 = vsel %vm10483, %v10482, 0
        %v10485 = vshrl.u32 %v10484, 5
        %v10486 = vand.u32 %v10484, 31
        %v10487 = vsub.s32 32, %v10486
        %v10488 = vshrl.u32 683565275, %v10487
        %v10489 = vshll.u32 683565275, %v10486
        %v10490 = vshrl.u32 2475754826, %v10487
        %v10491 = vor.u32 %v10489, %v10490
        %v10492 = vshll.u32 2475754826, %v10486
        %v10493 = vshrl.u32 2131351028, %v10487
        %v10494 = vor.u32 %v10492, %v10493
        %v10495 = vshll.u32 2131351028, %v10486
        %v10496 = vshrl.u32 2102212464, %v10487
        %v10497 = vor.u32 %v10495, %v10496
        %v10498 = vshll.u32 2102212464, %v10486
        %v10499 = vshrl.u32 920167782, %v10487
        %v10500 = vor.u32 %v10498, %v10499
        %v10501 = vshll.u32 920167782, %v10486
        %v10502 = vshrl.u32 1326507024, %v10487
        %v10503 = vor.u32 %v10501, %v10502
        %vm10504 = vcmp.lt.s32.totalorder %v10485, 1
        %vm10505 = vcmp.lt.s32.totalorder %v10485, 2
        %vm10506 = vcmp.lt.s32.totalorder %v10485, 3
        %vm10507 = vcmp.lt.s32.totalorder %v10485, 4
        %v10508 = vsel %vm10504, %v10488, %v10491
        %v10509 = vsel %vm10507, %v10497, 2102212464
        %v10510 = vsel %vm10506, %v10494, %v10509
        %v10511 = vsel %vm10505, %v10508, %v10510
        %v10512 = vsel %vm10504, %v10491, %v10494
        %v10513 = vsel %vm10507, %v10500, 920167782
        %v10514 = vsel %vm10506, %v10497, %v10513
        %v10515 = vsel %vm10505, %v10512, %v10514
        %v10516 = vsel %vm10504, %v10494, %v10497
        %v10517 = vsel %vm10507, %v10503, 1326507024
        %v10518 = vsel %vm10506, %v10500, %v10517
        %v10519 = vsel %vm10505, %v10516, %v10518
        %v10520 = vshll.u32 %v10480, 8
        %v10521 = vmul.u32.u64.compose %v10520, %v10519
        %v10522 = vextract.low.u32 %v10521
        %v10523 = vextract.high.u32 %v10521
        %v10524 = vmul.u32.u64.compose %v10520, %v10515
        %v10525 = vextract.low.u32 %v10524
        %v10526 = vextract.high.u32 %v10524
        %v10527 = vmul.u32 %v10520, %v10511
        %v10528 = vadd.s32 %v10523, %v10525
        %vm10529 = vc.u32 %v10523, %v10525
        %v10530 = vadd.s32 %v10526, 1
        %v10531 = vsel %vm10529, %v10530, %v10526
        %v10532 = vadd.s32 %v10527, %v10531
        %v10533 = vadd.s32 %v10532, 536870912
        %v10534 = vshrl.u32 %v10533, 30
        %v10535 = vshll.u32 %v10534, 30
        %v10536 = vsub.s32 %v10532, %v10535
        %vm10537 = vcmp.lt.s32.totalorder %v10536, 0
        %v10538 = vsub.s32 0, %v10536
        %v10539 = vsel %vm10537, %v10538, %v10536
        %v10540 = vclz %v10539
        %v10541 = vsub.s32 %v10540, 2
        %vm10542 = vcmp.gt.s32.totalorder 0, %v10541
        %v10543 = vsel %vm10542, 0, %v10541
        %v10544 = vsub.s32 32, %v10543
        %v10545 = vshll.u32 %v10536, %v10543
        %v10546 = vshrl.u32 %v10528, %v10544
        %v10547 = vor.u32 %v10545, %v10546
        %v10548 = vsub.s32 4294967266, %v10543
        %v10549 = vadd.s32 %v10548, 127
        %v10550 = vshll.u32 %v10549, 23
        %v10551 = vor.u32 4788187, %v10550
        %v10552 = vand.u32 2147483647, %v10551
        %v10554 = vcvt.s32.f32 %v10547
        %v10555 = vmul.f32 %v10554, %v10552
        %v10556 = vxor.u32 %v10555, 2147483648
        %v10557 = vsel %vm10474, %v10556, %v10555
        %v10558 = vsub.s32 4, %v10534
        %v10559 = vsel %vm10474, %v10558, %v10534
        %v10560 = vsel %vm10473, %v7350, %v10557
        %v10561 = vsel %vm10473, 0, %v10559
        %v10562 = vcosq.f32.pop %v10560
        %v10563 = vsinq.f32.pop %v10560
        %vm10564 = vweird.f32 %v7350
        %v10565 = vadd.s32 %v10561, 3
        %v10566 = vand.u32 %v10565, 3
        %vm10567 = vcmp.lt.s32.totalorder %v10566, 2
        %vm10568 = vcmp.eq.s32.totalorder %v10566, 0
        %v10569 = vxor.u32 %v10563, 2147483648
        %v10570 = vsel %vm10568, %v10562, %v10569
        %vm10571 = vcmp.eq.s32.totalorder %v10566, 2
        %v10572 = vxor.u32 %v10562, 2147483648
        %v10573 = vsel %vm10571, %v10572, %v10563
        %v10574 = vsel %vm10567, %v10570, %v10573
        %v10575 = vsel %vm10564, nan, %v10574
        %v10576 = vand.u32 2147483647, %v7351
        %vm10577 = vcmp.le.f32.partialorder %v10576, 0.7853982
        %vm10578 = vcmp.lt.s32.totalorder %v7351, 0
        %v10579 = vand.u32 %v7351, 2139095040
        %v10580 = vshrl.u32 %v10579, 23
        %v10581 = vsub.s32 %v10580, 127
        %v10582 = vand.u32 2147483647, %v7351
        %v10583 = vand.u32 %v10582, 8388607
        %v10584 = vor.u32 %v10583, 8388608
        %v10585 = vsub.s32 0, %v10584
        %v10586 = vadd.s32 %v10581, 1
        %vm10587 = vcmp.gt.s32.totalorder %v10586, 0
        %v10588 = vsel %vm10587, %v10586, 0
        %v10589 = vshrl.u32 %v10588, 5
        %v10590 = vand.u32 %v10588, 31
        %v10591 = vsub.s32 32, %v10590
        %v10592 = vshrl.u32 683565275, %v10591
        %v10593 = vshll.u32 683565275, %v10590
        %v10594 = vshrl.u32 2475754826, %v10591
        %v10595 = vor.u32 %v10593, %v10594
        %v10596 = vshll.u32 2475754826, %v10590
        %v10597 = vshrl.u32 2131351028, %v10591
        %v10598 = vor.u32 %v10596, %v10597
        %v10599 = vshll.u32 2131351028, %v10590
        %v10600 = vshrl.u32 2102212464, %v10591
        %v10601 = vor.u32 %v10599, %v10600
        %v10602 = vshll.u32 2102212464, %v10590
        %v10603 = vshrl.u32 920167782, %v10591
        %v10604 = vor.u32 %v10602, %v10603
        %v10605 = vshll.u32 920167782, %v10590
        %v10606 = vshrl.u32 1326507024, %v10591
        %v10607 = vor.u32 %v10605, %v10606
        %vm10608 = vcmp.lt.s32.totalorder %v10589, 1
        %vm10609 = vcmp.lt.s32.totalorder %v10589, 2
        %vm10610 = vcmp.lt.s32.totalorder %v10589, 3
        %vm10611 = vcmp.lt.s32.totalorder %v10589, 4
        %v10612 = vsel %vm10608, %v10592, %v10595
        %v10613 = vsel %vm10611, %v10601, 2102212464
        %v10614 = vsel %vm10610, %v10598, %v10613
        %v10615 = vsel %vm10609, %v10612, %v10614
        %v10616 = vsel %vm10608, %v10595, %v10598
        %v10617 = vsel %vm10611, %v10604, 920167782
        %v10618 = vsel %vm10610, %v10601, %v10617
        %v10619 = vsel %vm10609, %v10616, %v10618
        %v10620 = vsel %vm10608, %v10598, %v10601
        %v10621 = vsel %vm10611, %v10607, 1326507024
        %v10622 = vsel %vm10610, %v10604, %v10621
        %v10623 = vsel %vm10609, %v10620, %v10622
        %v10624 = vshll.u32 %v10584, 8
        %v10625 = vmul.u32.u64.compose %v10624, %v10623
        %v10626 = vextract.low.u32 %v10625
        %v10627 = vextract.high.u32 %v10625
        %v10628 = vmul.u32.u64.compose %v10624, %v10619
        %v10629 = vextract.low.u32 %v10628
        %v10630 = vextract.high.u32 %v10628
        %v10631 = vmul.u32 %v10624, %v10615
        %v10632 = vadd.s32 %v10627, %v10629
        %vm10633 = vc.u32 %v10627, %v10629
        %v10634 = vadd.s32 %v10630, 1
        %v10635 = vsel %vm10633, %v10634, %v10630
        %v10636 = vadd.s32 %v10631, %v10635
        %v10637 = vadd.s32 %v10636, 536870912
        %v10638 = vshrl.u32 %v10637, 30
        %v10639 = vshll.u32 %v10638, 30
        %v10640 = vsub.s32 %v10636, %v10639
        %vm10641 = vcmp.lt.s32.totalorder %v10640, 0
        %v10642 = vsub.s32 0, %v10640
        %v10643 = vsel %vm10641, %v10642, %v10640
        %v10644 = vclz %v10643
        %v10645 = vsub.s32 %v10644, 2
        %vm10646 = vcmp.gt.s32.totalorder 0, %v10645
        %v10647 = vsel %vm10646, 0, %v10645
        %v10648 = vsub.s32 32, %v10647
        %v10649 = vshll.u32 %v10640, %v10647
        %v10650 = vshrl.u32 %v10632, %v10648
        %v10651 = vor.u32 %v10649, %v10650
        %v10652 = vsub.s32 4294967266, %v10647
        %v10653 = vadd.s32 %v10652, 127
        %v10654 = vshll.u32 %v10653, 23
        %v10655 = vor.u32 4788187, %v10654
        %v10656 = vand.u32 2147483647, %v10655
        %v10658 = vcvt.s32.f32 %v10651
        %v10659 = vmul.f32 %v10658, %v10656
        %v10660 = vxor.u32 %v10659, 2147483648
        %v10661 = vsel %vm10578, %v10660, %v10659
        %v10662 = vsub.s32 4, %v10638
        %v10663 = vsel %vm10578, %v10662, %v10638
        %v10664 = vsel %vm10577, %v7351, %v10661
        %v10665 = vsel %vm10577, 0, %v10663
        %v10666 = vcosq.f32.pop %v10664
        %v10667 = vsinq.f32.pop %v10664
        %vm10668 = vweird.f32 %v7351
        %v10669 = vadd.s32 %v10665, 3
        %v10670 = vand.u32 %v10669, 3
        %vm10671 = vcmp.lt.s32.totalorder %v10670, 2
        %vm10672 = vcmp.eq.s32.totalorder %v10670, 0
        %v10673 = vxor.u32 %v10667, 2147483648
        %v10674 = vsel %vm10672, %v10666, %v10673
        %vm10675 = vcmp.eq.s32.totalorder %v10670, 2
        %v10676 = vxor.u32 %v10666, 2147483648
        %v10677 = vsel %vm10675, %v10676, %v10667
        %v10678 = vsel %vm10671, %v10674, %v10677
        %v10679 = vsel %vm10668, nan, %v10678
        %10680 = vst [vmem:[%s159 + $0x200] sm:$0xff] %v7455
        %10681 = vst [vmem:[%s159 + $0x208] sm:$0xff] %v7559
        %10682 = vst [vmem:[%s159 + $0x210] sm:$0xff] %v7663
        %10683 = vst [vmem:[%s159 + $0x218] sm:$0xff] %v7767
        %10684 = vst [vmem:[%s159 + $0x220] sm:$0xff] %v7871
        %10685 = vst [vmem:[%s159 + $0x228] sm:$0xff] %v7975
        %10686 = vst [vmem:[%s159 + $0x230] sm:$0xff] %v8079
        %10687 = vst [vmem:[%s159 + $0x238] sm:$0xff] %v8183
        %10688 = vst [vmem:[%s159 + $0x240] sm:$0xff] %v8287
        %10689 = vst [vmem:[%s159 + $0x248] sm:$0xff] %v8391
        %10690 = vst [vmem:[%s159 + $0x250] sm:$0xff] %v8495
        %10691 = vst [vmem:[%s159 + $0x258] sm:$0xff] %v8599
        %10692 = vst [vmem:[%s159 + $0x260] sm:$0xff] %v8703
        %10693 = vst [vmem:[%s159 + $0x268] sm:$0xff] %v8807
        %10694 = vst [vmem:[%s159 + $0x270] sm:$0xff] %v8911
        %10695 = vst [vmem:[%s159 + $0x278] sm:$0xff] %v9015
        %10696 = vst [vmem:[%s159 + $0x280] sm:$0xff] %v9119
        %10697 = vst [vmem:[%s159 + $0x288] sm:$0xff] %v9223
        %10698 = vst [vmem:[%s159 + $0x290] sm:$0xff] %v9327
        %10699 = vst [vmem:[%s159 + $0x298] sm:$0xff] %v9431
        %10700 = vst [vmem:[%s159 + $0x2a0] sm:$0xff] %v9535
        %10701 = vst [vmem:[%s159 + $0x2a8] sm:$0xff] %v9639
        %10702 = vst [vmem:[%s159 + $0x2b0] sm:$0xff] %v9743
        %10703 = vst [vmem:[%s159 + $0x2b8] sm:$0xff] %v9847
        %10704 = vst [vmem:[%s159 + $0x2c0] sm:$0xff] %v9951
        %10705 = vst [vmem:[%s159 + $0x2c8] sm:$0xff] %v10055
        %10706 = vst [vmem:[%s159 + $0x2d0] sm:$0xff] %v10159
        %10707 = vst [vmem:[%s159 + $0x2d8] sm:$0xff] %v10263
        %10708 = vst [vmem:[%s159 + $0x2e0] sm:$0xff] %v10367
        %10709 = vst [vmem:[%s159 + $0x2e8] sm:$0xff] %v10471
        %10710 = vst [vmem:[%s159 + $0x2f0] sm:$0xff] %v10575
        %10711 = vst [vmem:[%s159 + $0x2f8] sm:$0xff] %v10679
        %s10712 = sand.u32 %s74, 1
        %s10713 = scalar_lea.sflag [#allocation4], %s10712
        %s10714 = sand.u32 %s74, 1
        %s10715 = smul.addr %s10714, 768
        %s10716 = scalar_lea.vmem [#allocation5], %s10715
        // Predicated region
        $region33: #{tpu_custom_call.1} parent=27 // pred_check
          %p10717 = pneg %p84
        $region34: #{tpu_custom_call.1} parent=27 // pred_check_branch
          %10719 = sbr.rel (%p10717) target = $region36
        $region35: #{tpu_custom_call.1} parent=27 // pred_region
          %s10720 = smul.u32 16, %s19
          %s10722 = ssub.s32 12288, 12288
          %10723 = vsyncadd %s10713, %s10722
          %s10724 = smul.addr %s10720, 128
          %s10725 = scalar_lea.hbm %s2, %s10724
          %s10726 = sshll.u32 %s10716, 4
          %s10727 = int_to_ptr.vmem [resolvable:$true] %s10726
          %10732 = dma.vmem_to_hbm [thread:$0]  %s10727, 12288, %s10725, %s10713, 2048, 4096, 128
        $region36: #{tpu_custom_call.1} parent=27 // pred_fallthru
          _
      $region28: #{tpu_custom_call.1} parent=5 // pred_fallthru
        _
      %p10733 = scmp.le.s32.totalorder 2, %s14
      // Predicated region
      $region37: #{tpu_custom_call.1} parent=5 // pred_check
        %p10734 = pneg %p10733
      $region38: #{tpu_custom_call.1} parent=5 // pred_check_branch
        %10736 = sbr.rel (%p10734) target = $region40
      $region39: #{tpu_custom_call.1} parent=5 // pred_region
        %s10737 = ssub.s32 %s14, 2
        // Predicated region
        $region41: #{tpu_custom_call.1} parent=39 // pred_check
          %p10738 = pneg %p90
        $region42: #{tpu_custom_call.1} parent=39 // pred_check_branch
          %10740 = sbr.rel (%p10738) target = $region44
        $region43: #{tpu_custom_call.1} parent=39 // pred_region
          %s10741 = sand.u32 %s75, 1
          %s10742 = scalar_lea.sflag [#allocation4], %s10741
          %s10743 = sand.u32 %s75, 1
          %s10744 = smul.addr %s10743, 768
          %s10745 = scalar_lea.vmem [#allocation5], %s10744
          %10746 = dma.done %s10742, 12288
        $region44: #{tpu_custom_call.1} parent=39 // pred_fallthru
          _
      $region40: #{tpu_custom_call.1} parent=5 // pred_fallthru
        _
    $region6: #{tpu_custom_call.1} parent=1 // loop_footer
      %s18 = sadd.s32 1, %s14
    $region7: #{tpu_custom_call.1} parent=1 // loop_footer_branch
      %13 = sbr.rel target = $region3
    $region8: #{tpu_custom_call.1} parent=1 // loop_exit
      _
    %10747 = vsyncpa [#allocation3], 1
    %s10748 = scalar_lea.sflag [#allocation3], 1
    %10749 = vsyncpa %s10748, 1
    %10750 = vsyncpa [#allocation4], 1
    %s10751 = scalar_lea.sflag [#allocation4], 1
    %10752 = vsyncpa %s10751, 1

</llo_original>
